<compile_context>
chip_gen: v7x
topology: tpu7x:2x2x1
jax: 0.10.0
libtpu: 0.0.40
codegen_flags: <defaults>
</compile_context>

<pallas_src>
import functools

import jax
import jax.numpy as jnp
from jax import lax
from jax.experimental import pallas as pl
from jax.experimental.pallas import tpu as pltpu


_LANES = 128


def _round_up(x, m):
    return (x + m - 1) // m * m


def _num_tensorcores():
    """TensorCores per chip: 2 on v7x, 1 on v5e/v6e.  Decides whether each
    pallas_call's grid is split across cores or runs as one big tile."""
    try:
        info = pltpu.get_tpu_info()
        for attr in ("num_cores", "core_count", "num_tensorcores",
                     "tensorcore_count", "cores_per_chip"):
            val = getattr(info, attr, None)
            if val:
                return max(1, min(int(val), 2))
    except Exception:
        pass
    try:
        if "v7" in jax.devices()[0].device_kind.lower():
            return 2
    except Exception:
        pass
    return 1


# ---------------------------------------------------------------------------
# Pallas kernels (the hot path)
# ---------------------------------------------------------------------------

def _conv_gemm_bn_kernel(a_ref, b_ref, ss_ref, o_ref, *, apply_relu):
    """One (TM, Kp) x (Kp, Cp) tile of the im2col conv GEMM fused with the
    folded BatchNorm per-channel scale/shift (f32 epilogue) and optional ReLU.

    a_ref : (TM, Kp)  bf16  im2col patch rows (K = real_Cin*kh*kw, padded to 128)
    b_ref : (Kp, Cp)  bf16  weights, Cout zero-padded to a 128-lane multiple
    ss_ref: (2, Cp)   f32   row 0 = scale, row 1 = shift
    o_ref : (TM, Cp)
    """
    acc = jnp.dot(a_ref[...], b_ref[...], preferred_element_type=jnp.float32)
    y = acc * ss_ref[0:1, :] + ss_ref[1:2, :]
    if apply_relu:
        y = jnp.maximum(y, 0.0)
    o_ref[...] = y.astype(o_ref.dtype)


def _maxpool3x3s2_relu_kernel(ee_ref, eo_ref, oe_ref, oo_ref, o_ref):
    """MaxPool2d(3, stride=2) + ReLU from the even/odd phase decomposition.
    Every tap of the 3x3/stride-2 window is a unit-stride static slice loaded
    directly from its phase ref and folded into a running max (no full-phase
    materialization -> minimal vreg pressure, pure vld+vmax).

      ee: (nb, Ho+1, Wo+1, C) = x[2p,   2q  ]   eo: (nb, Ho+1, Wo, C) = x[2p,   2q+1]
      oe: (nb, Ho,   Wo+1, C) = x[2p+1, 2q  ]   oo: (nb, Ho,   Wo, C) = x[2p+1, 2q+1]
    """
    _, ho, wo, _ = o_ref.shape
    m = jnp.maximum(ee_ref[:, :ho, :wo, :], ee_ref[:, :ho, 1:wo + 1, :])
    m = jnp.maximum(m, ee_ref[:, 1:ho + 1, :wo, :])
    m = jnp.maximum(m, ee_ref[:, 1:ho + 1, 1:wo + 1, :])
    m = jnp.maximum(m, eo_ref[:, :ho, :, :])
    m = jnp.maximum(m, eo_ref[:, 1:ho + 1, :, :])
    m = jnp.maximum(m, oe_ref[:, :, :wo, :])
    m = jnp.maximum(m, oe_ref[:, :, 1:wo + 1, :])
    m = jnp.maximum(m, oo_ref[...])
    o_ref[...] = jnp.maximum(m, 0).astype(o_ref.dtype)


# ---------------------------------------------------------------------------
# Wrappers (glue: fused patch extraction, minimal padding, pallas_call setup)
# ---------------------------------------------------------------------------

def conv_bn(x, b_mat, scale_shift, *, kh, kw, stride, relu, num_steps,
            out_dtype=jnp.bfloat16):
    """x: (N, H, W, Cin) bf16 with REAL channel count; b_mat: (Kp, Cp) bf16;
    scale_shift: (2, Cp) f32.  Returns (N, Ho, Wo, Cp)."""
    n, h, w, cin = x.shape
    ho = (h - kh) // stride + 1
    wo = (w - kw) // stride + 1
    k = cin * kh * kw
    kp, cp = b_mat.shape

    # Single fused XLA op for im2col.  Output feature order is (cin, kh, kw),
    # which matches the weight flattening done in init_params (validated at
    # runtime against the pure-JAX reference).
    patches = lax.conv_general_dilated_patches(
        x, (kh, kw), (stride, stride), "VALID",
        dimension_numbers=("NHWC", "HWIO", "NHWC"))        # (N, Ho, Wo, K) bf16

    m = n * ho * wo
    g = num_steps
    if g > 1 and m < g * 8:
        g = 1                                   # tiny GEMM: don't bother splitting
    if g > 1:
        tm = _round_up(pl.cdiv(m, g), 8)        # one tile per TensorCore (v7x)
        mp = g * tm
    else:
        tm = m                                  # single big tile (v5e / v6e)
        mp = m

    a = patches.reshape(m, k)
    if mp != m or kp != k:
        # Pad only the small K tail (and the M tail on the multi-step path).
        a = jnp.pad(a, ((0, mp - m), (0, kp - k)))

    out = pl.pallas_call(
        functools.partial(_conv_gemm_bn_kernel, apply_relu=relu),
        out_shape=jax.ShapeDtypeStruct((mp, cp), out_dtype),
        grid=(g,),
        in_specs=[
            pl.BlockSpec((tm, kp), lambda i: (i, 0)),
            pl.BlockSpec((kp, cp), lambda i: (0, 0)),
            pl.BlockSpec((2, cp), lambda i: (0, 0)),
        ],
        out_specs=pl.BlockSpec((tm, cp), lambda i: (i, 0)),
        compiler_params=pltpu.CompilerParams(dimension_semantics=("parallel",)),
    )(a, b_mat, scale_shift)

    if mp != m:
        out = out[:m]
    return out.reshape(n, ho, wo, cp)


def maxpool_relu(x, *, grid_batches=1):
    """MaxPool2d(kernel_size=3, stride=2) followed by ReLU.  x: (N, H, W, C)."""
    n, h, w, c = x.shape
    ho = (h - 3) // 2 + 1
    wo = (w - 3) // 2 + 1

    # Even/odd phase decomposition (4 cheap strided XLA slices, ~1x the input).
    ee = x[:, 0:2 * ho + 1:2, 0:2 * wo + 1:2, :]   # (N, Ho+1, Wo+1, C)
    eo = x[:, 0:2 * ho + 1:2, 1:2 * wo:2, :]       # (N, Ho+1, Wo,   C)
    oe = x[:, 1:2 * ho:2, 0:2 * wo + 1:2, :]       # (N, Ho,   Wo+1, C)
    oo = x[:, 1:2 * ho:2, 1:2 * wo:2, :]           # (N, Ho,   Wo,   C)

    g = grid_batches if (grid_batches > 1 and n % grid_batches == 0) else 1
    nb = n // g

    def spec(arr):
        return pl.BlockSpec((nb,) + tuple(arr.shape[1:]),
                            lambda b: (b, 0, 0, 0))

    out = pl.pallas_call(
        _maxpool3x3s2_relu_kernel,
        out_shape=jax.ShapeDtypeStruct((n, ho, wo, c), x.dtype),
        grid=(g,),
        in_specs=[spec(ee), spec(eo), spec(oe), spec(oo)],
        out_specs=pl.BlockSpec((nb, ho, wo, c), lambda b: (b, 0, 0, 0)),
        compiler_params=pltpu.CompilerParams(dimension_semantics=("parallel",)),
    )(ee, eo, oe, oo)
    return out


# ---------------------------------------------------------------------------
# Parameters (deterministic synthetic init, PyTorch layouts then folded/padded)
# ---------------------------------------------------------------------------

def _init_conv_bn(key, cin, cout, ksize):
    kw_, kb_, kg_, kbe_, km_, kv_ = jax.random.split(key, 6)
    fan_in = cin * ksize * ksize
    w = jax.random.normal(kw_, (cout, cin, ksize, ksize), jnp.float32) / jnp.sqrt(fan_in)
    bias = 0.1 * jax.random.normal(kb_, (cout,), jnp.float32)
    gamma = 1.0 + 0.1 * jax.random.normal(kg_, (cout,), jnp.float32)
    beta = 0.1 * jax.random.normal(kbe_, (cout,), jnp.float32)
    mean = 0.1 * jax.random.normal(km_, (cout,), jnp.float32)
    var = jax.random.uniform(kv_, (cout,), jnp.float32, minval=0.5, maxval=1.5)
    eps = 1e-5
    scale = gamma / jnp.sqrt(var + eps)
    shift = beta + scale * (bias - mean)

    # Kernel-ready tensors: flatten in (cin, kh, kw) order (matches
    # conv_general_dilated_patches), pad K to a multiple of 128 and Cout to a
    # multiple of 128 lanes.  Cin stays the REAL channel count.
    cout_p = _round_up(cout, _LANES)
    k = cin * ksize * ksize
    kp = _round_up(k, _LANES)
    b_mat = jnp.pad(w.reshape(cout, k).T, ((0, kp - k), (0, cout_p - cout)))
    scale_shift = jnp.stack([jnp.pad(scale, (0, cout_p - cout)),
                             jnp.pad(shift, (0, cout_p - cout))])
    return dict(
        b=b_mat.astype(jnp.bfloat16),           # (Kp, Cout_p) bf16
        ss=scale_shift.astype(jnp.float32),     # (2, Cout_p)  f32
        # Reference-layout copies (for the numerical check only).
        w_hwio=jnp.transpose(w, (2, 3, 1, 0)),
        scale=scale, shift=shift,
    )


def init_params(key, width_mult=0.25):
    cfg = [3 if c == 3 else int(c * width_mult) for c in [3, 96, 256, 384]]
    c0, c1, c2, c3 = cfg
    k1, k2, k3 = jax.random.split(key, 3)
    params = dict(
        l1=_init_conv_bn(k1, c0, c1, 11),
        l2=_init_conv_bn(k2, c1, c2, 5),
        l3=_init_conv_bn(k3, c2, c3, 3),
    )
    return params, cfg


# ---------------------------------------------------------------------------
# Forward pass (AlexNetP1.forward)
# ---------------------------------------------------------------------------

def alexnet_p1_forward(x_nchw, params, *, feature_size, mid_channels):
    c1, c2 = mid_channels                       # real channel counts (static)
    ncores = _num_tensorcores()
    x = jnp.transpose(x_nchw, (0, 2, 3, 1)).astype(jnp.bfloat16)   # NCHW -> NHWC
    n = x.shape[0]
    g_conv = 2 if ncores >= 2 else 1
    g_pool = ncores if (ncores >= 2 and n % ncores == 0) else 1

    # layer1: Conv(11, s=2) + BN -> MaxPool(3, s=2) -> ReLU
    p = params["l1"]
    x = conv_bn(x, p["b"], p["ss"], kh=11, kw=11, stride=2, relu=False,
                num_steps=g_conv)
    x = maxpool_relu(x, grid_batches=g_pool)
    x = x[..., :c1]            # drop padded lanes BEFORE the next im2col

    # layer2: Conv(5) + BN -> MaxPool(3, s=2) -> ReLU
    p = params["l2"]
    x = conv_bn(x, p["b"], p["ss"], kh=5, kw=5, stride=1, relu=False,
                num_steps=g_conv)
    x = maxpool_relu(x, grid_batches=g_pool)
    x = x[..., :c2]            # drop padded lanes BEFORE the next im2col

    # layer3: Conv(3) + BN -> ReLU  (final output in f32)
    p = params["l3"]
    x = conv_bn(x, p["b"], p["ss"], kh=3, kw=3, stride=1, relu=True,
                num_steps=g_conv, out_dtype=jnp.float32)

    # Drop the zero-padded lanes and return NCHW.
    return jnp.transpose(x[..., :feature_size], (0, 3, 1, 2)).astype(jnp.float32)


# ---------------------------------------------------------------------------
# Pure-JAX reference with the same bf16-operand rounding (numerical check).
# The only deviation from the f32 PyTorch module is the intentional bf16 cast
# of conv operands / inter-layer activations (accumulation stays f32).
# ---------------------------------------------------------------------------

def _ref_forward(x_nchw, params):
    def conv_ref(x, p, stride, relu, cast_out):
        y = lax.conv_general_dilated(
            x.astype(jnp.bfloat16), p["w_hwio"].astype(jnp.bfloat16),
            (stride, stride), "VALID",
            dimension_numbers=("NHWC", "HWIO", "NHWC"),
            preferred_element_type=jnp.float32)
        y = y * p["scale"] + p["shift"]
        if relu:
            y = jnp.maximum(y, 0.0)
        return y.astype(jnp.bfloat16) if cast_out else y

    def pool_ref(x):
        y = lax.reduce_window(x, jnp.array(-jnp.inf, x.dtype), lax.max,
                              (1, 3, 3, 1), (1, 2, 2, 1), "VALID")
        return jnp.maximum(y, 0).astype(x.dtype)

    x = jnp.transpose(x_nchw, (0, 2, 3, 1))
    x = pool_ref(conv_ref(x, params["l1"], 2, False, True))
    x = pool_ref(conv_ref(x, params["l2"], 1, False, True))
    x = conv_ref(x, params["l3"], 1, True, False)
    return jnp.transpose(x, (0, 3, 1, 2)).astype(jnp.float32)


if __name__ == "__main__":
    key = jax.random.PRNGKey(0)
    kp_, kx_ = jax.random.split(key)
    params, cfg = init_params(kp_, width_mult=0.25)      # cfg = [3, 24, 64, 96]
    x = jax.random.normal(kx_, (2, 3, 63, 63), jnp.float32)   # NCHW

    fwd = jax.jit(functools.partial(alexnet_p1_forward, feature_size=cfg[3],
                                    mid_channels=(cfg[1], cfg[2])))
    y = jax.block_until_ready(fwd(x, params))
    assert y.shape == (2, cfg[3], 2, 2), y.shape

    y_ref = jax.block_until_ready(jax.jit(_ref_forward)(x, params))
    max_err = float(jnp.max(jnp.abs(y - y_ref)))
    assert max_err < 5e-2, f"max abs error {max_err}"

    print("KERNEL_OK")
</pallas_src>

<mosaic_0001>
module attributes {stable_mosaic.version = 11 : i64} {
  func.func @_conv_gemm_bn_kernel(%arg0: i32, %arg1: memref<1458x384xbf16, #tpu.memory_space<vmem>>, %arg2: memref<384x128xbf16, #tpu.memory_space<vmem>>, %arg3: memref<2x128xf32, #tpu.memory_space<vmem>>, %arg4: memref<1458x128xbf16, #tpu.memory_space<vmem>>) attributes {dimension_semantics = [#tpu.dimension_semantics<parallel>], iteration_bounds = array<i64: 1>, scalar_prefetch = 0 : i64, scratch_operands = 0 : i64, tpu.core_type = #tpu.core_type<tc>, window_params = [{transform_indices = @transform_0, window_bounds = array<i64: 1458, 384>}, {pipeline_mode = #tpu.pipeline_mode<synchronous>, transform_indices = @transform_1, window_bounds = array<i64: 384, 128>}, {pipeline_mode = #tpu.pipeline_mode<synchronous>, transform_indices = @transform_2, window_bounds = array<i64: 2, 128>}, {transform_indices = @transform_3, window_bounds = array<i64: 1458, 128>}]} {
    %c0 = arith.constant 0 : index
    %c0_0 = arith.constant 0 : index
    %0 = vector.load %arg1[%c0, %c0_0] : memref<1458x384xbf16, #tpu.memory_space<vmem>>, vector<1458x384xbf16>
    %c0_1 = arith.constant 0 : index
    %c0_2 = arith.constant 0 : index
    %1 = vector.load %arg2[%c0_1, %c0_2] : memref<384x128xbf16, #tpu.memory_space<vmem>>, vector<384x128xbf16>
    %cst = arith.constant dense<0.000000e+00> : vector<1458x128xf32>
    %2 = tpu.matmul %0, %1, %cst {dimension_numbers = #tpu.dot_dimension_numbers<[1], [0], [0], [1], [0, 0, 1, 1], [], []>} : vector<1458x384xbf16>, vector<384x128xbf16>, vector<1458x128xf32> -> vector<1458x128xf32>
    %c0_3 = arith.constant 0 : index
    %c0_4 = arith.constant 0 : index
    %3 = vector.load %arg3[%c0_3, %c0_4] : memref<2x128xf32, #tpu.memory_space<vmem>>, vector<1x128xf32>
    %4 = vector.broadcast %3 : vector<1x128xf32> to vector<1458x128xf32>
    %5 = arith.mulf %2, %4 : vector<1458x128xf32>
    %c1 = arith.constant 1 : index
    %c0_5 = arith.constant 0 : index
    %6 = vector.load %arg3[%c1, %c0_5] : memref<2x128xf32, #tpu.memory_space<vmem>>, vector<1x128xf32>
    %7 = vector.broadcast %6 : vector<1x128xf32> to vector<1458x128xf32>
    %8 = arith.addf %5, %7 : vector<1458x128xf32>
    %9 = arith.truncf %8 : vector<1458x128xf32> to vector<1458x128xbf16>
    %c0_6 = arith.constant 0 : index
    %c0_7 = arith.constant 0 : index
    %10 = vector.load %arg4[%c0_6, %c0_7] : memref<1458x128xbf16, #tpu.memory_space<vmem>>, vector<1458x128xbf16>
    tpu.vector_store %arg4[%c0_6, %c0_7], %9 {strides = array<i32>} : memref<1458x128xbf16, #tpu.memory_space<vmem>>, vector<1458x128xbf16>,
    return
  }
  func.func @transform_0(%arg0: i32) -> (i32, i32) {
    %c0_i32 = arith.constant 0 : i32
    %c0_i32_0 = arith.constant 0 : i32
    return %arg0, %c0_i32 : i32, i32
  }
  func.func @transform_1(%arg0: i32) -> (i32, i32) {
    %c0_i32 = arith.constant 0 : i32
    %c0_i32_0 = arith.constant 0 : i32
    %c0_i32_1 = arith.constant 0 : i32
    return %c0_i32, %c0_i32_0 : i32, i32
  }
  func.func @transform_2(%arg0: i32) -> (i32, i32) {
    %c0_i32 = arith.constant 0 : i32
    %c0_i32_0 = arith.constant 0 : i32
    %c0_i32_1 = arith.constant 0 : i32
    return %c0_i32, %c0_i32_0 : i32, i32
  }
  func.func @transform_3(%arg0: i32) -> (i32, i32) {
    %c0_i32 = arith.constant 0 : i32
    %c0_i32_0 = arith.constant 0 : i32
    return %arg0, %c0_i32 : i32, i32
  }
}

module attributes {stable_mosaic.version = 11 : i64} {
  func.func @_maxpool3x3s2_relu_kernel(%arg0: i32, %arg1: memref<2x14x14x128xbf16, #tpu.memory_space<vmem>>, %arg2: memref<2x14x13x128xbf16, #tpu.memory_space<vmem>>, %arg3: memref<2x13x14x128xbf16, #tpu.memory_space<vmem>>, %arg4: memref<2x13x13x128xbf16, #tpu.memory_space<vmem>>, %arg5: memref<2x13x13x128xbf16, #tpu.memory_space<vmem>>) attributes {dimension_semantics = [#tpu.dimension_semantics<parallel>], iteration_bounds = array<i64: 1>, scalar_prefetch = 0 : i64, scratch_operands = 0 : i64, tpu.core_type = #tpu.core_type<tc>, window_params = [{transform_indices = @transform_0, window_bounds = array<i64: 2, 14, 14, 128>}, {transform_indices = @transform_1, window_bounds = array<i64: 2, 14, 13, 128>}, {transform_indices = @transform_2, window_bounds = array<i64: 2, 13, 14, 128>}, {transform_indices = @transform_3, window_bounds = array<i64: 2, 13, 13, 128>}, {transform_indices = @transform_4, window_bounds = array<i64: 2, 13, 13, 128>}]} {
    %c0 = arith.constant 0 : index
    %c0_0 = arith.constant 0 : index
    %c0_1 = arith.constant 0 : index
    %c0_2 = arith.constant 0 : index
    %0 = vector.load %arg1[%c0, %c0_0, %c0_1, %c0_2] : memref<2x14x14x128xbf16, #tpu.memory_space<vmem>>, vector<2x13x13x128xbf16>
    %c0_3 = arith.constant 0 : index
    %c0_4 = arith.constant 0 : index
    %c1 = arith.constant 1 : index
    %c0_5 = arith.constant 0 : index
    %1 = vector.load %arg1[%c0_3, %c0_4, %c1, %c0_5] : memref<2x14x14x128xbf16, #tpu.memory_space<vmem>>, vector<2x13x13x128xbf16>
    %2 = arith.maximumf %0, %1 : vector<2x13x13x128xbf16>
    %c0_6 = arith.constant 0 : index
    %c1_7 = arith.constant 1 : index
    %c0_8 = arith.constant 0 : index
    %c0_9 = arith.constant 0 : index
    %3 = vector.load %arg1[%c0_6, %c1_7, %c0_8, %c0_9] : memref<2x14x14x128xbf16, #tpu.memory_space<vmem>>, vector<2x13x13x128xbf16>
    %4 = arith.maximumf %2, %3 : vector<2x13x13x128xbf16>
    %c0_10 = arith.constant 0 : index
    %c1_11 = arith.constant 1 : index
    %c1_12 = arith.constant 1 : index
    %c0_13 = arith.constant 0 : index
    %5 = vector.load %arg1[%c0_10, %c1_11, %c1_12, %c0_13] : memref<2x14x14x128xbf16, #tpu.memory_space<vmem>>, vector<2x13x13x128xbf16>
    %6 = arith.maximumf %4, %5 : vector<2x13x13x128xbf16>
    %c0_14 = arith.constant 0 : index
    %c0_15 = arith.constant 0 : index
    %c0_16 = arith.constant 0 : index
    %c0_17 = arith.constant 0 : index
    %7 = vector.load %arg2[%c0_14, %c0_15, %c0_16, %c0_17] : memref<2x14x13x128xbf16, #tpu.memory_space<vmem>>, vector<2x13x13x128xbf16>
    %8 = arith.maximumf %6, %7 : vector<2x13x13x128xbf16>
    %c0_18 = arith.constant 0 : index
    %c1_19 = arith.constant 1 : index
    %c0_20 = arith.constant 0 : index
    %c0_21 = arith.constant 0 : index
    %9 = vector.load %arg2[%c0_18, %c1_19, %c0_20, %c0_21] : memref<2x14x13x128xbf16, #tpu.memory_space<vmem>>, vector<2x13x13x128xbf16>
    %10 = arith.maximumf %8, %9 : vector<2x13x13x128xbf16>
    %c0_22 = arith.constant 0 : index
    %c0_23 = arith.constant 0 : index
    %c0_24 = arith.constant 0 : index
    %c0_25 = arith.constant 0 : index
    %11 = vector.load %arg3[%c0_22, %c0_23, %c0_24, %c0_25] : memref<2x13x14x128xbf16, #tpu.memory_space<vmem>>, vector<2x13x13x128xbf16>
    %12 = arith.maximumf %10, %11 : vector<2x13x13x128xbf16>
    %c0_26 = arith.constant 0 : index
    %c0_27 = arith.constant 0 : index
    %c1_28 = arith.constant 1 : index
    %c0_29 = arith.constant 0 : index
    %13 = vector.load %arg3[%c0_26, %c0_27, %c1_28, %c0_29] : memref<2x13x14x128xbf16, #tpu.memory_space<vmem>>, vector<2x13x13x128xbf16>
    %14 = arith.maximumf %12, %13 : vector<2x13x13x128xbf16>
    %c0_30 = arith.constant 0 : index
    %c0_31 = arith.constant 0 : index
    %c0_32 = arith.constant 0 : index
    %c0_33 = arith.constant 0 : index
    %15 = vector.load %arg4[%c0_30, %c0_31, %c0_32, %c0_33] : memref<2x13x13x128xbf16, #tpu.memory_space<vmem>>, vector<2x13x13x128xbf16>
    %16 = arith.maximumf %14, %15 : vector<2x13x13x128xbf16>
    %cst = arith.constant 0.000000e+00 : bf16
    %17 = vector.broadcast %cst : bf16 to vector<2x13x13x128xbf16>
    %18 = arith.maximumf %16, %17 : vector<2x13x13x128xbf16>
    %c0_34 = arith.constant 0 : index
    %c0_35 = arith.constant 0 : index
    %c0_36 = arith.constant 0 : index
    %c0_37 = arith.constant 0 : index
    %19 = vector.load %arg5[%c0_34, %c0_35, %c0_36, %c0_37] : memref<2x13x13x128xbf16, #tpu.memory_space<vmem>>, vector<2x13x13x128xbf16>
    tpu.vector_store %arg5[%c0_34, %c0_35, %c0_36, %c0_37], %18 {strides = array<i32>} : memref<2x13x13x128xbf16, #tpu.memory_space<vmem>>, vector<2x13x13x128xbf16>,
    return
  }
  func.func @transform_0(%arg0: i32) -> (i32, i32, i32, i32) {
    %c0_i32 = arith.constant 0 : i32
    %c0_i32_0 = arith.constant 0 : i32
    %c0_i32_1 = arith.constant 0 : i32
    %c0_i32_2 = arith.constant 0 : i32
    return %arg0, %c0_i32, %c0_i32_0, %c0_i32_1 : i32, i32, i32, i32
  }
  func.func @transform_1(%arg0: i32) -> (i32, i32, i32, i32) {
    %c0_i32 = arith.constant 0 : i32
    %c0_i32_0 = arith.constant 0 : i32
    %c0_i32_1 = arith.constant 0 : i32
    %c0_i32_2 = arith.constant 0 : i32
    return %arg0, %c0_i32, %c0_i32_0, %c0_i32_1 : i32, i32, i32, i32
  }
  func.func @transform_2(%arg0: i32) -> (i32, i32, i32, i32) {
    %c0_i32 = arith.constant 0 : i32
    %c0_i32_0 = arith.constant 0 : i32
    %c0_i32_1 = arith.constant 0 : i32
    %c0_i32_2 = arith.constant 0 : i32
    return %arg0, %c0_i32, %c0_i32_0, %c0_i32_1 : i32, i32, i32, i32
  }
  func.func @transform_3(%arg0: i32) -> (i32, i32, i32, i32) {
    %c0_i32 = arith.constant 0 : i32
    %c0_i32_0 = arith.constant 0 : i32
    %c0_i32_1 = arith.constant 0 : i32
    %c0_i32_2 = arith.constant 0 : i32
    return %arg0, %c0_i32, %c0_i32_0, %c0_i32_1 : i32, i32, i32, i32
  }
  func.func @transform_4(%arg0: i32) -> (i32, i32, i32, i32) {
    %c0_i32 = arith.constant 0 : i32
    %c0_i32_0 = arith.constant 0 : i32
    %c0_i32_1 = arith.constant 0 : i32
    %c0_i32_2 = arith.constant 0 : i32
    return %arg0, %c0_i32, %c0_i32_0, %c0_i32_1 : i32, i32, i32, i32
  }
}

module attributes {stable_mosaic.version = 11 : i64} {
  func.func @_conv_gemm_bn_kernel(%arg0: i32, %arg1: memref<162x640xbf16, #tpu.memory_space<vmem>>, %arg2: memref<640x128xbf16, #tpu.memory_space<vmem>>, %arg3: memref<2x128xf32, #tpu.memory_space<vmem>>, %arg4: memref<162x128xbf16, #tpu.memory_space<vmem>>) attributes {dimension_semantics = [#tpu.dimension_semantics<parallel>], iteration_bounds = array<i64: 1>, scalar_prefetch = 0 : i64, scratch_operands = 0 : i64, tpu.core_type = #tpu.core_type<tc>, window_params = [{transform_indices = @transform_0, window_bounds = array<i64: 162, 640>}, {pipeline_mode = #tpu.pipeline_mode<synchronous>, transform_indices = @transform_1, window_bounds = array<i64: 640, 128>}, {pipeline_mode = #tpu.pipeline_mode<synchronous>, transform_indices = @transform_2, window_bounds = array<i64: 2, 128>}, {transform_indices = @transform_3, window_bounds = array<i64: 162, 128>}]} {
    %c0 = arith.constant 0 : index
    %c0_0 = arith.constant 0 : index
    %0 = vector.load %arg1[%c0, %c0_0] : memref<162x640xbf16, #tpu.memory_space<vmem>>, vector<162x640xbf16>
    %c0_1 = arith.constant 0 : index
    %c0_2 = arith.constant 0 : index
    %1 = vector.load %arg2[%c0_1, %c0_2] : memref<640x128xbf16, #tpu.memory_space<vmem>>, vector<640x128xbf16>
    %cst = arith.constant dense<0.000000e+00> : vector<162x128xf32>
    %2 = tpu.matmul %0, %1, %cst {dimension_numbers = #tpu.dot_dimension_numbers<[1], [0], [0], [1], [0, 0, 1, 1], [], []>} : vector<162x640xbf16>, vector<640x128xbf16>, vector<162x128xf32> -> vector<162x128xf32>
    %c0_3 = arith.constant 0 : index
    %c0_4 = arith.constant 0 : index
    %3 = vector.load %arg3[%c0_3, %c0_4] : memref<2x128xf32, #tpu.memory_space<vmem>>, vector<1x128xf32>
    %4 = vector.broadcast %3 : vector<1x128xf32> to vector<162x128xf32>
    %5 = arith.mulf %2, %4 : vector<162x128xf32>
    %c1 = arith.constant 1 : index
    %c0_5 = arith.constant 0 : index
    %6 = vector.load %arg3[%c1, %c0_5] : memref<2x128xf32, #tpu.memory_space<vmem>>, vector<1x128xf32>
    %7 = vector.broadcast %6 : vector<1x128xf32> to vector<162x128xf32>
    %8 = arith.addf %5, %7 : vector<162x128xf32>
    %9 = arith.truncf %8 : vector<162x128xf32> to vector<162x128xbf16>
    %c0_6 = arith.constant 0 : index
    %c0_7 = arith.constant 0 : index
    %10 = vector.load %arg4[%c0_6, %c0_7] : memref<162x128xbf16, #tpu.memory_space<vmem>>, vector<162x128xbf16>
    tpu.vector_store %arg4[%c0_6, %c0_7], %9 {strides = array<i32>} : memref<162x128xbf16, #tpu.memory_space<vmem>>, vector<162x128xbf16>,
    return
  }
  func.func @transform_0(%arg0: i32) -> (i32, i32) {
    %c0_i32 = arith.constant 0 : i32
    %c0_i32_0 = arith.constant 0 : i32
    return %arg0, %c0_i32 : i32, i32
  }
  func.func @transform_1(%arg0: i32) -> (i32, i32) {
    %c0_i32 = arith.constant 0 : i32
    %c0_i32_0 = arith.constant 0 : i32
    %c0_i32_1 = arith.constant 0 : i32
    return %c0_i32, %c0_i32_0 : i32, i32
  }
  func.func @transform_2(%arg0: i32) -> (i32, i32) {
    %c0_i32 = arith.constant 0 : i32
    %c0_i32_0 = arith.constant 0 : i32
    %c0_i32_1 = arith.constant 0 : i32
    return %c0_i32, %c0_i32_0 : i32, i32
  }
  func.func @transform_3(%arg0: i32) -> (i32, i32) {
    %c0_i32 = arith.constant 0 : i32
    %c0_i32_0 = arith.constant 0 : i32
    return %arg0, %c0_i32 : i32, i32
  }
}

module attributes {stable_mosaic.version = 11 : i64} {
  func.func @_maxpool3x3s2_relu_kernel(%arg0: i32, %arg1: memref<2x5x5x128xbf16, #tpu.memory_space<vmem>>, %arg2: memref<2x5x4x128xbf16, #tpu.memory_space<vmem>>, %arg3: memref<2x4x5x128xbf16, #tpu.memory_space<vmem>>, %arg4: memref<2x4x4x128xbf16, #tpu.memory_space<vmem>>, %arg5: memref<2x4x4x128xbf16, #tpu.memory_space<vmem>>) attributes {dimension_semantics = [#tpu.dimension_semantics<parallel>], iteration_bounds = array<i64: 1>, scalar_prefetch = 0 : i64, scratch_operands = 0 : i64, tpu.core_type = #tpu.core_type<tc>, window_params = [{transform_indices = @transform_0, window_bounds = array<i64: 2, 5, 5, 128>}, {transform_indices = @transform_1, window_bounds = array<i64: 2, 5, 4, 128>}, {transform_indices = @transform_2, window_bounds = array<i64: 2, 4, 5, 128>}, {transform_indices = @transform_3, window_bounds = array<i64: 2, 4, 4, 128>}, {transform_indices = @transform_4, window_bounds = array<i64: 2, 4, 4, 128>}]} {
    %c0 = arith.constant 0 : index
    %c0_0 = arith.constant 0 : index
    %c0_1 = arith.constant 0 : index
    %c0_2 = arith.constant 0 : index
    %0 = vector.load %arg1[%c0, %c0_0, %c0_1, %c0_2] : memref<2x5x5x128xbf16, #tpu.memory_space<vmem>>, vector<2x4x4x128xbf16>
    %c0_3 = arith.constant 0 : index
    %c0_4 = arith.constant 0 : index
    %c1 = arith.constant 1 : index
    %c0_5 = arith.constant 0 : index
    %1 = vector.load %arg1[%c0_3, %c0_4, %c1, %c0_5] : memref<2x5x5x128xbf16, #tpu.memory_space<vmem>>, vector<2x4x4x128xbf16>
    %2 = arith.maximumf %0, %1 : vector<2x4x4x128xbf16>
    %c0_6 = arith.constant 0 : index
    %c1_7 = arith.constant 1 : index
    %c0_8 = arith.constant 0 : index
    %c0_9 = arith.constant 0 : index
    %3 = vector.load %arg1[%c0_6, %c1_7, %c0_8, %c0_9] : memref<2x5x5x128xbf16, #tpu.memory_space<vmem>>, vector<2x4x4x128xbf16>
    %4 = arith.maximumf %2, %3 : vector<2x4x4x128xbf16>
    %c0_10 = arith.constant 0 : index
    %c1_11 = arith.constant 1 : index
    %c1_12 = arith.constant 1 : index
    %c0_13 = arith.constant 0 : index
    %5 = vector.load %arg1[%c0_10, %c1_11, %c1_12, %c0_13] : memref<2x5x5x128xbf16, #tpu.memory_space<vmem>>, vector<2x4x4x128xbf16>
    %6 = arith.maximumf %4, %5 : vector<2x4x4x128xbf16>
    %c0_14 = arith.constant 0 : index
    %c0_15 = arith.constant 0 : index
    %c0_16 = arith.constant 0 : index
    %c0_17 = arith.constant 0 : index
    %7 = vector.load %arg2[%c0_14, %c0_15, %c0_16, %c0_17] : memref<2x5x4x128xbf16, #tpu.memory_space<vmem>>, vector<2x4x4x128xbf16>
    %8 = arith.maximumf %6, %7 : vector<2x4x4x128xbf16>
    %c0_18 = arith.constant 0 : index
    %c1_19 = arith.constant 1 : index
    %c0_20 = arith.constant 0 : index
    %c0_21 = arith.constant 0 : index
    %9 = vector.load %arg2[%c0_18, %c1_19, %c0_20, %c0_21] : memref<2x5x4x128xbf16, #tpu.memory_space<vmem>>, vector<2x4x4x128xbf16>
    %10 = arith.maximumf %8, %9 : vector<2x4x4x128xbf16>
    %c0_22 = arith.constant 0 : index
    %c0_23 = arith.constant 0 : index
    %c0_24 = arith.constant 0 : index
    %c0_25 = arith.constant 0 : index
    %11 = vector.load %arg3[%c0_22, %c0_23, %c0_24, %c0_25] : memref<2x4x5x128xbf16, #tpu.memory_space<vmem>>, vector<2x4x4x128xbf16>
    %12 = arith.maximumf %10, %11 : vector<2x4x4x128xbf16>
    %c0_26 = arith.constant 0 : index
    %c0_27 = arith.constant 0 : index
    %c1_28 = arith.constant 1 : index
    %c0_29 = arith.constant 0 : index
    %13 = vector.load %arg3[%c0_26, %c0_27, %c1_28, %c0_29] : memref<2x4x5x128xbf16, #tpu.memory_space<vmem>>, vector<2x4x4x128xbf16>
    %14 = arith.maximumf %12, %13 : vector<2x4x4x128xbf16>
    %c0_30 = arith.constant 0 : index
    %c0_31 = arith.constant 0 : index
    %c0_32 = arith.constant 0 : index
    %c0_33 = arith.constant 0 : index
    %15 = vector.load %arg4[%c0_30, %c0_31, %c0_32, %c0_33] : memref<2x4x4x128xbf16, #tpu.memory_space<vmem>>, vector<2x4x4x128xbf16>
    %16 = arith.maximumf %14, %15 : vector<2x4x4x128xbf16>
    %cst = arith.constant 0.000000e+00 : bf16
    %17 = vector.broadcast %cst : bf16 to vector<2x4x4x128xbf16>
    %18 = arith.maximumf %16, %17 : vector<2x4x4x128xbf16>
    %c0_34 = arith.constant 0 : index
    %c0_35 = arith.constant 0 : index
    %c0_36 = arith.constant 0 : index
    %c0_37 = arith.constant 0 : index
    %19 = vector.load %arg5[%c0_34, %c0_35, %c0_36, %c0_37] : memref<2x4x4x128xbf16, #tpu.memory_space<vmem>>, vector<2x4x4x128xbf16>
    tpu.vector_store %arg5[%c0_34, %c0_35, %c0_36, %c0_37], %18 {strides = array<i32>} : memref<2x4x4x128xbf16, #tpu.memory_space<vmem>>, vector<2x4x4x128xbf16>,
    return
  }
  func.func @transform_0(%arg0: i32) -> (i32, i32, i32, i32) {
    %c0_i32 = arith.constant 0 : i32
    %c0_i32_0 = arith.constant 0 : i32
    %c0_i32_1 = arith.constant 0 : i32
    %c0_i32_2 = arith.constant 0 : i32
    return %arg0, %c0_i32, %c0_i32_0, %c0_i32_1 : i32, i32, i32, i32
  }
  func.func @transform_1(%arg0: i32) -> (i32, i32, i32, i32) {
    %c0_i32 = arith.constant 0 : i32
    %c0_i32_0 = arith.constant 0 : i32
    %c0_i32_1 = arith.constant 0 : i32
    %c0_i32_2 = arith.constant 0 : i32
    return %arg0, %c0_i32, %c0_i32_0, %c0_i32_1 : i32, i32, i32, i32
  }
  func.func @transform_2(%arg0: i32) -> (i32, i32, i32, i32) {
    %c0_i32 = arith.constant 0 : i32
    %c0_i32_0 = arith.constant 0 : i32
    %c0_i32_1 = arith.constant 0 : i32
    %c0_i32_2 = arith.constant 0 : i32
    return %arg0, %c0_i32, %c0_i32_0, %c0_i32_1 : i32, i32, i32, i32
  }
  func.func @transform_3(%arg0: i32) -> (i32, i32, i32, i32) {
    %c0_i32 = arith.constant 0 : i32
    %c0_i32_0 = arith.constant 0 : i32
    %c0_i32_1 = arith.constant 0 : i32
    %c0_i32_2 = arith.constant 0 : i32
    return %arg0, %c0_i32, %c0_i32_0, %c0_i32_1 : i32, i32, i32, i32
  }
  func.func @transform_4(%arg0: i32) -> (i32, i32, i32, i32) {
    %c0_i32 = arith.constant 0 : i32
    %c0_i32_0 = arith.constant 0 : i32
    %c0_i32_1 = arith.constant 0 : i32
    %c0_i32_2 = arith.constant 0 : i32
    return %arg0, %c0_i32, %c0_i32_0, %c0_i32_1 : i32, i32, i32, i32
  }
}

module attributes {stable_mosaic.version = 11 : i64} {
  func.func @_conv_gemm_bn_kernel(%arg0: i32, %arg1: memref<8x640xbf16, #tpu.memory_space<vmem>>, %arg2: memref<640x128xbf16, #tpu.memory_space<vmem>>, %arg3: memref<2x128xf32, #tpu.memory_space<vmem>>, %arg4: memref<8x128xf32, #tpu.memory_space<vmem>>) attributes {dimension_semantics = [#tpu.dimension_semantics<parallel>], iteration_bounds = array<i64: 1>, scalar_prefetch = 0 : i64, scratch_operands = 0 : i64, tpu.core_type = #tpu.core_type<tc>, window_params = [{transform_indices = @transform_0, window_bounds = array<i64: 8, 640>}, {pipeline_mode = #tpu.pipeline_mode<synchronous>, transform_indices = @transform_1, window_bounds = array<i64: 640, 128>}, {pipeline_mode = #tpu.pipeline_mode<synchronous>, transform_indices = @transform_2, window_bounds = array<i64: 2, 128>}, {transform_indices = @transform_3, window_bounds = array<i64: 8, 128>}]} {
    %c0 = arith.constant 0 : index
    %c0_0 = arith.constant 0 : index
    %0 = vector.load %arg1[%c0, %c0_0] : memref<8x640xbf16, #tpu.memory_space<vmem>>, vector<8x640xbf16>
    %c0_1 = arith.constant 0 : index
    %c0_2 = arith.constant 0 : index
    %1 = vector.load %arg2[%c0_1, %c0_2] : memref<640x128xbf16, #tpu.memory_space<vmem>>, vector<640x128xbf16>
    %cst = arith.constant dense<0.000000e+00> : vector<8x128xf32>
    %2 = tpu.matmul %0, %1, %cst {dimension_numbers = #tpu.dot_dimension_numbers<[1], [0], [0], [1], [0, 0, 1, 1], [], []>} : vector<8x640xbf16>, vector<640x128xbf16>, vector<8x128xf32> -> vector<8x128xf32>
    %c0_3 = arith.constant 0 : index
    %c0_4 = arith.constant 0 : index
    %3 = vector.load %arg3[%c0_3, %c0_4] : memref<2x128xf32, #tpu.memory_space<vmem>>, vector<1x128xf32>
    %4 = vector.broadcast %3 : vector<1x128xf32> to vector<8x128xf32>
    %5 = arith.mulf %2, %4 : vector<8x128xf32>
    %c1 = arith.constant 1 : index
    %c0_5 = arith.constant 0 : index
    %6 = vector.load %arg3[%c1, %c0_5] : memref<2x128xf32, #tpu.memory_space<vmem>>, vector<1x128xf32>
    %7 = vector.broadcast %6 : vector<1x128xf32> to vector<8x128xf32>
    %8 = arith.addf %5, %7 : vector<8x128xf32>
    %cst_6 = arith.constant 0.000000e+00 : f32
    %9 = vector.broadcast %cst_6 : f32 to vector<8x128xf32>
    %10 = arith.maximumf %8, %9 : vector<8x128xf32>
    %c0_7 = arith.constant 0 : index
    %c0_8 = arith.constant 0 : index
    %11 = vector.load %arg4[%c0_7, %c0_8] : memref<8x128xf32, #tpu.memory_space<vmem>>, vector<8x128xf32>
    tpu.vector_store %arg4[%c0_7, %c0_8], %10 {strides = array<i32>} : memref<8x128xf32, #tpu.memory_space<vmem>>, vector<8x128xf32>,
    return
  }
  func.func @transform_0(%arg0: i32) -> (i32, i32) {
    %c0_i32 = arith.constant 0 : i32
    %c0_i32_0 = arith.constant 0 : i32
    return %arg0, %c0_i32 : i32, i32
  }
  func.func @transform_1(%arg0: i32) -> (i32, i32) {
    %c0_i32 = arith.constant 0 : i32
    %c0_i32_0 = arith.constant 0 : i32
    %c0_i32_1 = arith.constant 0 : i32
    return %c0_i32, %c0_i32_0 : i32, i32
  }
  func.func @transform_2(%arg0: i32) -> (i32, i32) {
    %c0_i32 = arith.constant 0 : i32
    %c0_i32_0 = arith.constant 0 : i32
    %c0_i32_1 = arith.constant 0 : i32
    return %c0_i32, %c0_i32_0 : i32, i32
  }
  func.func @transform_3(%arg0: i32) -> (i32, i32) {
    %c0_i32 = arith.constant 0 : i32
    %c0_i32_0 = arith.constant 0 : i32
    return %arg0, %c0_i32 : i32, i32
  }
}

</mosaic_0001>

<llo_original>
// kernel: alexnet_p1_forward.5
$region0: #{alexnet_p1_forward.5}
  #allocation0 [shape = 'u32[]', space=smem, size = 0x4, offset = 0x4, fixed_abs, tag = 'smem constant byte address 0x4 - core index']
  #allocation1 [shape = 'u32[144,128]{1,0:T(1,128)}', space=vmem, size = 0x12000, scoped, tag = 'internal scratch']
  %s0 = inlined_call_operand.vmem [shape: bf16[1458,384], index: 0, kind: input, shape index: {}]
  %s1 = inlined_call_operand.vmem [shape: bf16[384,128], index: 1, kind: input, shape index: {}]
  %s2 = inlined_call_operand.vmem [shape: f32[2,128], index: 2, kind: input, shape index: {}]
  %s3 = inlined_call_operand.vmem [shape: bf16[1458,128], index: 3, kind: output, shape index: {}]
  %s4 = sld [smem:[#allocation0]]
  $region22: #{alexnet_p1_forward.5} parent=0
    _
  %s6 = ssub.s32 1, %s4
  %s7 = scalar_select 0, %s6, %s4
  // Predicated region
  $region2: #{alexnet_p1_forward.5} parent=0 // pred_check
    _
  $region3: #{alexnet_p1_forward.5} parent=0 // pred_check_branch
    %9 = sbr.rel (0) target = $region5
  $region4: #{alexnet_p1_forward.5} parent=0 // pred_region
    _
  $region5: #{alexnet_p1_forward.5} parent=0 // pred_fallthru
    _
  // Predicated region
  $region6: #{alexnet_p1_forward.5} parent=0 // pred_check
    _
  $region7: #{alexnet_p1_forward.5} parent=0 // pred_check_branch
    %11 = sbr.rel (0) target = $region9
  $region8: #{alexnet_p1_forward.5} parent=0 // pred_region
    _
  $region9: #{alexnet_p1_forward.5} parent=0 // pred_fallthru
    _
  // Predicated region
  $region10: #{alexnet_p1_forward.5} parent=0 // pred_check
    _
  $region11: #{alexnet_p1_forward.5} parent=0 // pred_check_branch
    %13 = sbr.rel (0) target = $region13
  $region12: #{alexnet_p1_forward.5} parent=0 // pred_region
    _
  $region13: #{alexnet_p1_forward.5} parent=0 // pred_fallthru
    _
  %v15 = vld [vmem:[%s0] sm:$0xff]
  %v16 = vld [vmem:[%s0 + $0x8] sm:$0xf]
  %v17 = vld [vmem:[%s0 + $0xc] sm:$0xff]
  %v18 = vld [vmem:[%s0 + $0x14] sm:$0xf]
  %v19 = vld [vmem:[%s0 + $0x18] sm:$0xff]
  %v20 = vld [vmem:[%s0 + $0x20] sm:$0xf]
  %v21 = vld [vmem:[%s0 + $0x24] sm:$0xff]
  %v22 = vld [vmem:[%s0 + $0x2c] sm:$0xf]
  %v23 = vld [vmem:[%s0 + $0x30] sm:$0xff]
  %v24 = vld [vmem:[%s0 + $0x38] sm:$0xf]
  %v25 = vld [vmem:[%s0 + $0x3c] sm:$0xff]
  %v26 = vld [vmem:[%s0 + $0x44] sm:$0xf]
  %v27 = vld [vmem:[%s0 + $0x48] sm:$0xff]
  %v28 = vld [vmem:[%s0 + $0x50] sm:$0xf]
  %v29 = vld [vmem:[%s0 + $0x54] sm:$0xff]
  %v30 = vld [vmem:[%s0 + $0x5c] sm:$0xf]
  %v31 = vld [vmem:[%s0 + $0x60] sm:$0xff]
  %v32 = vld [vmem:[%s0 + $0x68] sm:$0xf]
  %v33 = vld [vmem:[%s0 + $0x6c] sm:$0xff]
  %v34 = vld [vmem:[%s0 + $0x74] sm:$0xf]
  %v35 = vld [vmem:[%s0 + $0x78] sm:$0xff]
  %v36 = vld [vmem:[%s0 + $0x80] sm:$0xf]
  %v37 = vld [vmem:[%s0 + $0x84] sm:$0xff]
  %v38 = vld [vmem:[%s0 + $0x8c] sm:$0xf]
  %v39 = vld [vmem:[%s0 + $0x90] sm:$0xff]
  %v40 = vld [vmem:[%s0 + $0x98] sm:$0xf]
  %v41 = vld [vmem:[%s0 + $0x9c] sm:$0xff]
  %v42 = vld [vmem:[%s0 + $0xa4] sm:$0xf]
  %v43 = vld [vmem:[%s0 + $0xa8] sm:$0xff]
  %v44 = vld [vmem:[%s0 + $0xb0] sm:$0xf]
  %v45 = vld [vmem:[%s0 + $0xb4] sm:$0xff]
  %v46 = vld [vmem:[%s0 + $0xbc] sm:$0xf]
  %v47 = vld [vmem:[%s0 + $0xc0] sm:$0xff]
  %v48 = vld [vmem:[%s0 + $0xc8] sm:$0xf]
  %v49 = vld [vmem:[%s0 + $0xcc] sm:$0xff]
  %v50 = vld [vmem:[%s0 + $0xd4] sm:$0xf]
  %v51 = vld [vmem:[%s0 + $0xd8] sm:$0xff]
  %v52 = vld [vmem:[%s0 + $0xe0] sm:$0xf]
  %v53 = vld [vmem:[%s0 + $0xe4] sm:$0xff]
  %v54 = vld [vmem:[%s0 + $0xec] sm:$0xf]
  %v55 = vld [vmem:[%s0 + $0xf0] sm:$0xff]
  %v56 = vld [vmem:[%s0 + $0xf8] sm:$0xf]
  %v57 = vld [vmem:[%s0 + $0xfc] sm:$0xff]
  %v58 = vld [vmem:[%s0 + $0x104] sm:$0xf]
  %v59 = vld [vmem:[%s0 + $0x108] sm:$0xff]
  %v60 = vld [vmem:[%s0 + $0x110] sm:$0xf]
  %v61 = vld [vmem:[%s0 + $0x114] sm:$0xff]
  %v62 = vld [vmem:[%s0 + $0x11c] sm:$0xf]
  %v63 = vld [vmem:[%s0 + $0x120] sm:$0xff]
  %v64 = vld [vmem:[%s0 + $0x128] sm:$0xf]
  %v65 = vld [vmem:[%s0 + $0x12c] sm:$0xff]
  %v66 = vld [vmem:[%s0 + $0x134] sm:$0xf]
  %v67 = vld [vmem:[%s0 + $0x138] sm:$0xff]
  %v68 = vld [vmem:[%s0 + $0x140] sm:$0xf]
  %v69 = vld [vmem:[%s0 + $0x144] sm:$0xff]
  %v70 = vld [vmem:[%s0 + $0x14c] sm:$0xf]
  %v71 = vld [vmem:[%s0 + $0x150] sm:$0xff]
  %v72 = vld [vmem:[%s0 + $0x158] sm:$0xf]
  %v73 = vld [vmem:[%s0 + $0x15c] sm:$0xff]
  %v74 = vld [vmem:[%s0 + $0x164] sm:$0xf]
  %v75 = vld [vmem:[%s0 + $0x168] sm:$0xff]
  %v76 = vld [vmem:[%s0 + $0x170] sm:$0xf]
  %v77 = vld [vmem:[%s0 + $0x174] sm:$0xff]
  %v78 = vld [vmem:[%s0 + $0x17c] sm:$0xf]
  %v79 = vld [vmem:[%s0 + $0x180] sm:$0xff]
  %v80 = vld [vmem:[%s0 + $0x188] sm:$0xf]
  %v81 = vld [vmem:[%s0 + $0x18c] sm:$0xff]
  %v82 = vld [vmem:[%s0 + $0x194] sm:$0xf]
  %v83 = vld [vmem:[%s0 + $0x198] sm:$0xff]
  %v84 = vld [vmem:[%s0 + $0x1a0] sm:$0xf]
  %v85 = vld [vmem:[%s0 + $0x1a4] sm:$0xff]
  %v86 = vld [vmem:[%s0 + $0x1ac] sm:$0xf]
  %v87 = vld [vmem:[%s0 + $0x1b0] sm:$0xff]
  %v88 = vld [vmem:[%s0 + $0x1b8] sm:$0xf]
  %v89 = vld [vmem:[%s0 + $0x1bc] sm:$0xff]
  %v90 = vld [vmem:[%s0 + $0x1c4] sm:$0xf]
  %v91 = vld [vmem:[%s0 + $0x1c8] sm:$0xff]
  %v92 = vld [vmem:[%s0 + $0x1d0] sm:$0xf]
  %v93 = vld [vmem:[%s0 + $0x1d4] sm:$0xff]
  %v94 = vld [vmem:[%s0 + $0x1dc] sm:$0xf]
  %v95 = vld [vmem:[%s0 + $0x1e0] sm:$0xff]
  %v96 = vld [vmem:[%s0 + $0x1e8] sm:$0xf]
  %v97 = vld [vmem:[%s0 + $0x1ec] sm:$0xff]
  %v98 = vld [vmem:[%s0 + $0x1f4] sm:$0xf]
  %v99 = vld [vmem:[%s0 + $0x1f8] sm:$0xff]
  %v100 = vld [vmem:[%s0 + $0x200] sm:$0xf]
  %v101 = vld [vmem:[%s0 + $0x204] sm:$0xff]
  %v102 = vld [vmem:[%s0 + $0x20c] sm:$0xf]
  %v103 = vld [vmem:[%s0 + $0x210] sm:$0xff]
  %v104 = vld [vmem:[%s0 + $0x218] sm:$0xf]
  %v105 = vld [vmem:[%s0 + $0x21c] sm:$0xff]
  %v106 = vld [vmem:[%s0 + $0x224] sm:$0xf]
  %v107 = vld [vmem:[%s0 + $0x228] sm:$0xff]
  %v108 = vld [vmem:[%s0 + $0x230] sm:$0xf]
  %v109 = vld [vmem:[%s0 + $0x234] sm:$0xff]
  %v110 = vld [vmem:[%s0 + $0x23c] sm:$0xf]
  %v111 = vld [vmem:[%s0 + $0x240] sm:$0xff]
  %v112 = vld [vmem:[%s0 + $0x248] sm:$0xf]
  %v113 = vld [vmem:[%s0 + $0x24c] sm:$0xff]
  %v114 = vld [vmem:[%s0 + $0x254] sm:$0xf]
  %v115 = vld [vmem:[%s0 + $0x258] sm:$0xff]
  %v116 = vld [vmem:[%s0 + $0x260] sm:$0xf]
  %v117 = vld [vmem:[%s0 + $0x264] sm:$0xff]
  %v118 = vld [vmem:[%s0 + $0x26c] sm:$0xf]
  %v119 = vld [vmem:[%s0 + $0x270] sm:$0xff]
  %v120 = vld [vmem:[%s0 + $0x278] sm:$0xf]
  %v121 = vld [vmem:[%s0 + $0x27c] sm:$0xff]
  %v122 = vld [vmem:[%s0 + $0x284] sm:$0xf]
  %v123 = vld [vmem:[%s0 + $0x288] sm:$0xff]
  %v124 = vld [vmem:[%s0 + $0x290] sm:$0xf]
  %v125 = vld [vmem:[%s0 + $0x294] sm:$0xff]
  %v126 = vld [vmem:[%s0 + $0x29c] sm:$0xf]
  %v127 = vld [vmem:[%s0 + $0x2a0] sm:$0xff]
  %v128 = vld [vmem:[%s0 + $0x2a8] sm:$0xf]
  %v129 = vld [vmem:[%s0 + $0x2ac] sm:$0xff]
  %v130 = vld [vmem:[%s0 + $0x2b4] sm:$0xf]
  %v131 = vld [vmem:[%s0 + $0x2b8] sm:$0xff]
  %v132 = vld [vmem:[%s0 + $0x2c0] sm:$0xf]
  %v133 = vld [vmem:[%s0 + $0x2c4] sm:$0xff]
  %v134 = vld [vmem:[%s0 + $0x2cc] sm:$0xf]
  %v135 = vld [vmem:[%s0 + $0x2d0] sm:$0xff]
  %v136 = vld [vmem:[%s0 + $0x2d8] sm:$0xf]
  %v137 = vld [vmem:[%s0 + $0x2dc] sm:$0xff]
  %v138 = vld [vmem:[%s0 + $0x2e4] sm:$0xf]
  %v139 = vld [vmem:[%s0 + $0x2e8] sm:$0xff]
  %v140 = vld [vmem:[%s0 + $0x2f0] sm:$0xf]
  %v141 = vld [vmem:[%s0 + $0x2f4] sm:$0xff]
  %v142 = vld [vmem:[%s0 + $0x2fc] sm:$0xf]
  %v143 = vld [vmem:[%s0 + $0x300] sm:$0xff]
  %v144 = vld [vmem:[%s0 + $0x308] sm:$0xf]
  %v145 = vld [vmem:[%s0 + $0x30c] sm:$0xff]
  %v146 = vld [vmem:[%s0 + $0x314] sm:$0xf]
  %v147 = vld [vmem:[%s0 + $0x318] sm:$0xff]
  %v148 = vld [vmem:[%s0 + $0x320] sm:$0xf]
  %v149 = vld [vmem:[%s0 + $0x324] sm:$0xff]
  %v150 = vld [vmem:[%s0 + $0x32c] sm:$0xf]
  %v151 = vld [vmem:[%s0 + $0x330] sm:$0xff]
  %v152 = vld [vmem:[%s0 + $0x338] sm:$0xf]
  %v153 = vld [vmem:[%s0 + $0x33c] sm:$0xff]
  %v154 = vld [vmem:[%s0 + $0x344] sm:$0xf]
  %v155 = vld [vmem:[%s0 + $0x348] sm:$0xff]
  %v156 = vld [vmem:[%s0 + $0x350] sm:$0xf]
  %v157 = vld [vmem:[%s0 + $0x354] sm:$0xff]
  %v158 = vld [vmem:[%s0 + $0x35c] sm:$0xf]
  %v159 = vld [vmem:[%s0 + $0x360] sm:$0xff]
  %v160 = vld [vmem:[%s0 + $0x368] sm:$0xf]
  %v161 = vld [vmem:[%s0 + $0x36c] sm:$0xff]
  %v162 = vld [vmem:[%s0 + $0x374] sm:$0xf]
  %v163 = vld [vmem:[%s0 + $0x378] sm:$0xff]
  %v164 = vld [vmem:[%s0 + $0x380] sm:$0xf]
  %v165 = vld [vmem:[%s0 + $0x384] sm:$0xff]
  %v166 = vld [vmem:[%s0 + $0x38c] sm:$0xf]
  %v167 = vld [vmem:[%s0 + $0x390] sm:$0xff]
  %v168 = vld [vmem:[%s0 + $0x398] sm:$0xf]
  %v169 = vld [vmem:[%s0 + $0x39c] sm:$0xff]
  %v170 = vld [vmem:[%s0 + $0x3a4] sm:$0xf]
  %v171 = vld [vmem:[%s0 + $0x3a8] sm:$0xff]
  %v172 = vld [vmem:[%s0 + $0x3b0] sm:$0xf]
  %v173 = vld [vmem:[%s0 + $0x3b4] sm:$0xff]
  %v174 = vld [vmem:[%s0 + $0x3bc] sm:$0xf]
  %v175 = vld [vmem:[%s0 + $0x3c0] sm:$0xff]
  %v176 = vld [vmem:[%s0 + $0x3c8] sm:$0xf]
  %v177 = vld [vmem:[%s0 + $0x3cc] sm:$0xff]
  %v178 = vld [vmem:[%s0 + $0x3d4] sm:$0xf]
  %v179 = vld [vmem:[%s0 + $0x3d8] sm:$0xff]
  %v180 = vld [vmem:[%s0 + $0x3e0] sm:$0xf]
  %v181 = vld [vmem:[%s0 + $0x3e4] sm:$0xff]
  %v182 = vld [vmem:[%s0 + $0x3ec] sm:$0xf]
  %v183 = vld [vmem:[%s0 + $0x3f0] sm:$0xff]
  %v184 = vld [vmem:[%s0 + $0x3f8] sm:$0xf]
  %v185 = vld [vmem:[%s0 + $0x3fc] sm:$0xff]
  %v186 = vld [vmem:[%s0 + $0x404] sm:$0xf]
  %v187 = vld [vmem:[%s0 + $0x408] sm:$0xff]
  %v188 = vld [vmem:[%s0 + $0x410] sm:$0xf]
  %v189 = vld [vmem:[%s0 + $0x414] sm:$0xff]
  %v190 = vld [vmem:[%s0 + $0x41c] sm:$0xf]
  %v191 = vld [vmem:[%s0 + $0x420] sm:$0xff]
  %v192 = vld [vmem:[%s0 + $0x428] sm:$0xf]
  %v193 = vld [vmem:[%s0 + $0x42c] sm:$0xff]
  %v194 = vld [vmem:[%s0 + $0x434] sm:$0xf]
  %v195 = vld [vmem:[%s0 + $0x438] sm:$0xff]
  %v196 = vld [vmem:[%s0 + $0x440] sm:$0xf]
  %v197 = vld [vmem:[%s0 + $0x444] sm:$0xff]
  %v198 = vld [vmem:[%s0 + $0x44c] sm:$0xf]
  %v199 = vld [vmem:[%s0 + $0x450] sm:$0xff]
  %v200 = vld [vmem:[%s0 + $0x458] sm:$0xf]
  %v201 = vld [vmem:[%s0 + $0x45c] sm:$0xff]
  %v202 = vld [vmem:[%s0 + $0x464] sm:$0xf]
  %v203 = vld [vmem:[%s0 + $0x468] sm:$0xff]
  %v204 = vld [vmem:[%s0 + $0x470] sm:$0xf]
  %v205 = vld [vmem:[%s0 + $0x474] sm:$0xff]
  %v206 = vld [vmem:[%s0 + $0x47c] sm:$0xf]
  %v207 = vld [vmem:[%s0 + $0x480] sm:$0xff]
  %v208 = vld [vmem:[%s0 + $0x488] sm:$0xf]
  %v209 = vld [vmem:[%s0 + $0x48c] sm:$0xff]
  %v210 = vld [vmem:[%s0 + $0x494] sm:$0xf]
  %v211 = vld [vmem:[%s0 + $0x498] sm:$0xff]
  %v212 = vld [vmem:[%s0 + $0x4a0] sm:$0xf]
  %v213 = vld [vmem:[%s0 + $0x4a4] sm:$0xff]
  %v214 = vld [vmem:[%s0 + $0x4ac] sm:$0xf]
  %v215 = vld [vmem:[%s0 + $0x4b0] sm:$0xff]
  %v216 = vld [vmem:[%s0 + $0x4b8] sm:$0xf]
  %v217 = vld [vmem:[%s0 + $0x4bc] sm:$0xff]
  %v218 = vld [vmem:[%s0 + $0x4c4] sm:$0xf]
  %v219 = vld [vmem:[%s0 + $0x4c8] sm:$0xff]
  %v220 = vld [vmem:[%s0 + $0x4d0] sm:$0xf]
  %v221 = vld [vmem:[%s0 + $0x4d4] sm:$0xff]
  %v222 = vld [vmem:[%s0 + $0x4dc] sm:$0xf]
  %v223 = vld [vmem:[%s0 + $0x4e0] sm:$0xff]
  %v224 = vld [vmem:[%s0 + $0x4e8] sm:$0xf]
  %v225 = vld [vmem:[%s0 + $0x4ec] sm:$0xff]
  %v226 = vld [vmem:[%s0 + $0x4f4] sm:$0xf]
  %v227 = vld [vmem:[%s0 + $0x4f8] sm:$0xff]
  %v228 = vld [vmem:[%s0 + $0x500] sm:$0xf]
  %v229 = vld [vmem:[%s0 + $0x504] sm:$0xff]
  %v230 = vld [vmem:[%s0 + $0x50c] sm:$0xf]
  %v231 = vld [vmem:[%s0 + $0x510] sm:$0xff]
  %v232 = vld [vmem:[%s0 + $0x518] sm:$0xf]
  %v233 = vld [vmem:[%s0 + $0x51c] sm:$0xff]
  %v234 = vld [vmem:[%s0 + $0x524] sm:$0xf]
  %v235 = vld [vmem:[%s0 + $0x528] sm:$0xff]
  %v236 = vld [vmem:[%s0 + $0x530] sm:$0xf]
  %v237 = vld [vmem:[%s0 + $0x534] sm:$0xff]
  %v238 = vld [vmem:[%s0 + $0x53c] sm:$0xf]
  %v239 = vld [vmem:[%s0 + $0x540] sm:$0xff]
  %v240 = vld [vmem:[%s0 + $0x548] sm:$0xf]
  %v241 = vld [vmem:[%s0 + $0x54c] sm:$0xff]
  %v242 = vld [vmem:[%s0 + $0x554] sm:$0xf]
  %v243 = vld [vmem:[%s0 + $0x558] sm:$0xff]
  %v244 = vld [vmem:[%s0 + $0x560] sm:$0xf]
  %v245 = vld [vmem:[%s0 + $0x564] sm:$0xff]
  %v246 = vld [vmem:[%s0 + $0x56c] sm:$0xf]
  %v247 = vld [vmem:[%s0 + $0x570] sm:$0xff]
  %v248 = vld [vmem:[%s0 + $0x578] sm:$0xf]
  %v249 = vld [vmem:[%s0 + $0x57c] sm:$0xff]
  %v250 = vld [vmem:[%s0 + $0x584] sm:$0xf]
  %v251 = vld [vmem:[%s0 + $0x588] sm:$0xff]
  %v252 = vld [vmem:[%s0 + $0x590] sm:$0xf]
  %v253 = vld [vmem:[%s0 + $0x594] sm:$0xff]
  %v254 = vld [vmem:[%s0 + $0x59c] sm:$0xf]
  %v255 = vld [vmem:[%s0 + $0x5a0] sm:$0xff]
  %v256 = vld [vmem:[%s0 + $0x5a8] sm:$0xf]
  %v257 = vld [vmem:[%s0 + $0x5ac] sm:$0xff]
  %v258 = vld [vmem:[%s0 + $0x5b4] sm:$0xf]
  %v259 = vld [vmem:[%s0 + $0x5b8] sm:$0xff]
  %v260 = vld [vmem:[%s0 + $0x5c0] sm:$0xf]
  %v261 = vld [vmem:[%s0 + $0x5c4] sm:$0xff]
  %v262 = vld [vmem:[%s0 + $0x5cc] sm:$0xf]
  %v263 = vld [vmem:[%s0 + $0x5d0] sm:$0xff]
  %v264 = vld [vmem:[%s0 + $0x5d8] sm:$0xf]
  %v265 = vld [vmem:[%s0 + $0x5dc] sm:$0xff]
  %v266 = vld [vmem:[%s0 + $0x5e4] sm:$0xf]
  %v267 = vld [vmem:[%s0 + $0x5e8] sm:$0xff]
  %v268 = vld [vmem:[%s0 + $0x5f0] sm:$0xf]
  %v269 = vld [vmem:[%s0 + $0x5f4] sm:$0xff]
  %v270 = vld [vmem:[%s0 + $0x5fc] sm:$0xf]
  %v271 = vld [vmem:[%s0 + $0x600] sm:$0xff]
  %v272 = vld [vmem:[%s0 + $0x608] sm:$0xf]
  %v273 = vld [vmem:[%s0 + $0x60c] sm:$0xff]
  %v274 = vld [vmem:[%s0 + $0x614] sm:$0xf]
  %v275 = vld [vmem:[%s0 + $0x618] sm:$0xff]
  %v276 = vld [vmem:[%s0 + $0x620] sm:$0xf]
  %v277 = vld [vmem:[%s0 + $0x624] sm:$0xff]
  %v278 = vld [vmem:[%s0 + $0x62c] sm:$0xf]
  %v279 = vld [vmem:[%s0 + $0x630] sm:$0xff]
  %v280 = vld [vmem:[%s0 + $0x638] sm:$0xf]
  %v281 = vld [vmem:[%s0 + $0x63c] sm:$0xff]
  %v282 = vld [vmem:[%s0 + $0x644] sm:$0xf]
  %v283 = vld [vmem:[%s0 + $0x648] sm:$0xff]
  %v284 = vld [vmem:[%s0 + $0x650] sm:$0xf]
  %v285 = vld [vmem:[%s0 + $0x654] sm:$0xff]
  %v286 = vld [vmem:[%s0 + $0x65c] sm:$0xf]
  %v287 = vld [vmem:[%s0 + $0x660] sm:$0xff]
  %v288 = vld [vmem:[%s0 + $0x668] sm:$0xf]
  %v289 = vld [vmem:[%s0 + $0x66c] sm:$0xff]
  %v290 = vld [vmem:[%s0 + $0x674] sm:$0xf]
  %v291 = vld [vmem:[%s0 + $0x678] sm:$0xff]
  %v292 = vld [vmem:[%s0 + $0x680] sm:$0xf]
  %v293 = vld [vmem:[%s0 + $0x684] sm:$0xff]
  %v294 = vld [vmem:[%s0 + $0x68c] sm:$0xf]
  %v295 = vld [vmem:[%s0 + $0x690] sm:$0xff]
  %v296 = vld [vmem:[%s0 + $0x698] sm:$0xf]
  %v297 = vld [vmem:[%s0 + $0x69c] sm:$0xff]
  %v298 = vld [vmem:[%s0 + $0x6a4] sm:$0xf]
  %v299 = vld [vmem:[%s0 + $0x6a8] sm:$0xff]
  %v300 = vld [vmem:[%s0 + $0x6b0] sm:$0xf]
  %v301 = vld [vmem:[%s0 + $0x6b4] sm:$0xff]
  %v302 = vld [vmem:[%s0 + $0x6bc] sm:$0xf]
  %v303 = vld [vmem:[%s0 + $0x6c0] sm:$0xff]
  %v304 = vld [vmem:[%s0 + $0x6c8] sm:$0xf]
  %v305 = vld [vmem:[%s0 + $0x6cc] sm:$0xff]
  %v306 = vld [vmem:[%s0 + $0x6d4] sm:$0xf]
  %v307 = vld [vmem:[%s0 + $0x6d8] sm:$0xff]
  %v308 = vld [vmem:[%s0 + $0x6e0] sm:$0xf]
  %v309 = vld [vmem:[%s0 + $0x6e4] sm:$0xff]
  %v310 = vld [vmem:[%s0 + $0x6ec] sm:$0xf]
  %v311 = vld [vmem:[%s0 + $0x6f0] sm:$0xff]
  %v312 = vld [vmem:[%s0 + $0x6f8] sm:$0xf]
  %v313 = vld [vmem:[%s0 + $0x6fc] sm:$0xff]
  %v314 = vld [vmem:[%s0 + $0x704] sm:$0xf]
  %v315 = vld [vmem:[%s0 + $0x708] sm:$0xff]
  %v316 = vld [vmem:[%s0 + $0x710] sm:$0xf]
  %v317 = vld [vmem:[%s0 + $0x714] sm:$0xff]
  %v318 = vld [vmem:[%s0 + $0x71c] sm:$0xf]
  %v319 = vld [vmem:[%s0 + $0x720] sm:$0xff]
  %v320 = vld [vmem:[%s0 + $0x728] sm:$0xf]
  %v321 = vld [vmem:[%s0 + $0x72c] sm:$0xff]
  %v322 = vld [vmem:[%s0 + $0x734] sm:$0xf]
  %v323 = vld [vmem:[%s0 + $0x738] sm:$0xff]
  %v324 = vld [vmem:[%s0 + $0x740] sm:$0xf]
  %v325 = vld [vmem:[%s0 + $0x744] sm:$0xff]
  %v326 = vld [vmem:[%s0 + $0x74c] sm:$0xf]
  %v327 = vld [vmem:[%s0 + $0x750] sm:$0xff]
  %v328 = vld [vmem:[%s0 + $0x758] sm:$0xf]
  %v329 = vld [vmem:[%s0 + $0x75c] sm:$0xff]
  %v330 = vld [vmem:[%s0 + $0x764] sm:$0xf]
  %v331 = vld [vmem:[%s0 + $0x768] sm:$0xff]
  %v332 = vld [vmem:[%s0 + $0x770] sm:$0xf]
  %v333 = vld [vmem:[%s0 + $0x774] sm:$0xff]
  %v334 = vld [vmem:[%s0 + $0x77c] sm:$0xf]
  %v335 = vld [vmem:[%s0 + $0x780] sm:$0xff]
  %v336 = vld [vmem:[%s0 + $0x788] sm:$0xf]
  %v337 = vld [vmem:[%s0 + $0x78c] sm:$0xff]
  %v338 = vld [vmem:[%s0 + $0x794] sm:$0xf]
  %v339 = vld [vmem:[%s0 + $0x798] sm:$0xff]
  %v340 = vld [vmem:[%s0 + $0x7a0] sm:$0xf]
  %v341 = vld [vmem:[%s0 + $0x7a4] sm:$0xff]
  %v342 = vld [vmem:[%s0 + $0x7ac] sm:$0xf]
  %v343 = vld [vmem:[%s0 + $0x7b0] sm:$0xff]
  %v344 = vld [vmem:[%s0 + $0x7b8] sm:$0xf]
  %v345 = vld [vmem:[%s0 + $0x7bc] sm:$0xff]
  %v346 = vld [vmem:[%s0 + $0x7c4] sm:$0xf]
  %v347 = vld [vmem:[%s0 + $0x7c8] sm:$0xff]
  %v348 = vld [vmem:[%s0 + $0x7d0] sm:$0xf]
  %v349 = vld [vmem:[%s0 + $0x7d4] sm:$0xff]
  %v350 = vld [vmem:[%s0 + $0x7dc] sm:$0xf]
  %v351 = vld [vmem:[%s0 + $0x7e0] sm:$0xff]
  %v352 = vld [vmem:[%s0 + $0x7e8] sm:$0xf]
  %v353 = vld [vmem:[%s0 + $0x7ec] sm:$0xff]
  %v354 = vld [vmem:[%s0 + $0x7f4] sm:$0xf]
  %v355 = vld [vmem:[%s0 + $0x7f8] sm:$0xff]
  %v356 = vld [vmem:[%s0 + $0x800] sm:$0xf]
  %v357 = vld [vmem:[%s0 + $0x804] sm:$0xff]
  %v358 = vld [vmem:[%s0 + $0x80c] sm:$0xf]
  %v359 = vld [vmem:[%s0 + $0x810] sm:$0xff]
  %v360 = vld [vmem:[%s0 + $0x818] sm:$0xf]
  %v361 = vld [vmem:[%s0 + $0x81c] sm:$0xff]
  %v362 = vld [vmem:[%s0 + $0x824] sm:$0xf]
  %v363 = vld [vmem:[%s0 + $0x828] sm:$0xff]
  %v364 = vld [vmem:[%s0 + $0x830] sm:$0xf]
  %v365 = vld [vmem:[%s0 + $0x834] sm:$0xff]
  %v366 = vld [vmem:[%s0 + $0x83c] sm:$0xf]
  %v367 = vld [vmem:[%s0 + $0x840] sm:$0xff]
  %v368 = vld [vmem:[%s0 + $0x848] sm:$0xf]
  %v369 = vld [vmem:[%s0 + $0x84c] sm:$0xff]
  %v370 = vld [vmem:[%s0 + $0x854] sm:$0xf]
  %v371 = vld [vmem:[%s0 + $0x858] sm:$0xff]
  %v372 = vld [vmem:[%s0 + $0x860] sm:$0xf]
  %v373 = vld [vmem:[%s0 + $0x864] sm:$0xff]
  %v374 = vld [vmem:[%s0 + $0x86c] sm:$0xf]
  %v375 = vld [vmem:[%s0 + $0x870] sm:$0xff]
  %v376 = vld [vmem:[%s0 + $0x878] sm:$0xf]
  %v377 = vld [vmem:[%s0 + $0x87c] sm:$0xff]
  %v378 = vld [vmem:[%s0 + $0x884] sm:$0xf]
  %v379 = vld [vmem:[%s0 + $0x888] sm:$0x11]
  %v380 = vld [vmem:[%s0 + $0x890] sm:$0x1]
  %v381 = vld [vmem:[%s1] sm:$0xf]
  %v382 = vld [vmem:[%s1 + $0x4] sm:$0xf]
  %v383 = vld [vmem:[%s1 + $0x8] sm:$0xf]
  %v384 = vld [vmem:[%s1 + $0xc] sm:$0xf]
  %v385 = vld [vmem:[%s1 + $0x10] sm:$0xf]
  %v386 = vld [vmem:[%s1 + $0x14] sm:$0xf]
  %v387 = vld [vmem:[%s1 + $0x18] sm:$0xf]
  %v388 = vld [vmem:[%s1 + $0x1c] sm:$0xf]
  %v389 = vld [vmem:[%s1 + $0x20] sm:$0xf]
  %v390 = vld [vmem:[%s1 + $0x24] sm:$0xf]
  %v391 = vld [vmem:[%s1 + $0x28] sm:$0xf]
  %v392 = vld [vmem:[%s1 + $0x2c] sm:$0xf]
  %v393 = vld [vmem:[%s1 + $0x30] sm:$0xf]
  %v394 = vld [vmem:[%s1 + $0x34] sm:$0xf]
  %v395 = vld [vmem:[%s1 + $0x38] sm:$0xf]
  %v396 = vld [vmem:[%s1 + $0x3c] sm:$0xf]
  %v397 = vld [vmem:[%s1 + $0x40] sm:$0xf]
  %v398 = vld [vmem:[%s1 + $0x44] sm:$0xf]
  %v399 = vld [vmem:[%s1 + $0x48] sm:$0xf]
  %v400 = vld [vmem:[%s1 + $0x4c] sm:$0xf]
  %v401 = vld [vmem:[%s1 + $0x50] sm:$0xf]
  %v402 = vld [vmem:[%s1 + $0x54] sm:$0xf]
  %v403 = vld [vmem:[%s1 + $0x58] sm:$0xf]
  %v404 = vld [vmem:[%s1 + $0x5c] sm:$0xf]
  %v405 = vld [vmem:[%s1 + $0x60] sm:$0xf]
  %v406 = vld [vmem:[%s1 + $0x64] sm:$0xf]
  %v407 = vld [vmem:[%s1 + $0x68] sm:$0xf]
  %v408 = vld [vmem:[%s1 + $0x6c] sm:$0xf]
  %v409 = vld [vmem:[%s1 + $0x70] sm:$0xf]
  %v410 = vld [vmem:[%s1 + $0x74] sm:$0xf]
  %v411 = vld [vmem:[%s1 + $0x78] sm:$0xf]
  %v412 = vld [vmem:[%s1 + $0x7c] sm:$0xf]
  %v413 = vld [vmem:[%s1 + $0x80] sm:$0xf]
  %v414 = vld [vmem:[%s1 + $0x84] sm:$0xf]
  %v415 = vld [vmem:[%s1 + $0x88] sm:$0xf]
  %v416 = vld [vmem:[%s1 + $0x8c] sm:$0xf]
  %v417 = vld [vmem:[%s1 + $0x90] sm:$0xf]
  %v418 = vld [vmem:[%s1 + $0x94] sm:$0xf]
  %v419 = vld [vmem:[%s1 + $0x98] sm:$0xf]
  %v420 = vld [vmem:[%s1 + $0x9c] sm:$0xf]
  %v421 = vld [vmem:[%s1 + $0xa0] sm:$0xf]
  %v422 = vld [vmem:[%s1 + $0xa4] sm:$0xf]
  %v423 = vld [vmem:[%s1 + $0xa8] sm:$0xf]
  %v424 = vld [vmem:[%s1 + $0xac] sm:$0xf]
  %v425 = vld [vmem:[%s1 + $0xb0] sm:$0xf]
  %v426 = vld [vmem:[%s1 + $0xb4] sm:$0xf]
  %v427 = vld [vmem:[%s1 + $0xb8] sm:$0xf]
  %v428 = vld [vmem:[%s1 + $0xbc] sm:$0xf]
  %v795 = vunpack.c.l.b16 %v15
  %v796 = vunpack.c.h.b16 %v15
  %v797 = vunpack.c.l.b16 %v16
  %v798 = vunpack.c.l.b16 %v17
  %v799 = vunpack.c.h.b16 %v17
  %v800 = vunpack.c.l.b16 %v18
  %v801 = vunpack.c.l.b16 %v19
  %v802 = vunpack.c.h.b16 %v19
  %v803 = vunpack.c.l.b16 %v20
  %v804 = vunpack.c.l.b16 %v21
  %v805 = vunpack.c.h.b16 %v21
  %v806 = vunpack.c.l.b16 %v22
  %v807 = vunpack.c.l.b16 %v23
  %v808 = vunpack.c.h.b16 %v23
  %v809 = vunpack.c.l.b16 %v24
  %v810 = vunpack.c.l.b16 %v25
  %v811 = vunpack.c.h.b16 %v25
  %v812 = vunpack.c.l.b16 %v26
  %v813 = vunpack.c.l.b16 %v27
  %v814 = vunpack.c.h.b16 %v27
  %v815 = vunpack.c.l.b16 %v28
  %v816 = vunpack.c.l.b16 %v29
  %v817 = vunpack.c.h.b16 %v29
  %v818 = vunpack.c.l.b16 %v30
  %v819 = vunpack.c.l.b16 %v31
  %v820 = vunpack.c.h.b16 %v31
  %v821 = vunpack.c.l.b16 %v32
  %v822 = vunpack.c.l.b16 %v33
  %v823 = vunpack.c.h.b16 %v33
  %v824 = vunpack.c.l.b16 %v34
  %v825 = vunpack.c.l.b16 %v35
  %v826 = vunpack.c.h.b16 %v35
  %v827 = vunpack.c.l.b16 %v36
  %v828 = vunpack.c.l.b16 %v37
  %v829 = vunpack.c.h.b16 %v37
  %v830 = vunpack.c.l.b16 %v38
  %v831 = vunpack.c.l.b16 %v39
  %v832 = vunpack.c.h.b16 %v39
  %v833 = vunpack.c.l.b16 %v40
  %v834 = vunpack.c.l.b16 %v41
  %v835 = vunpack.c.h.b16 %v41
  %v836 = vunpack.c.l.b16 %v42
  %v837 = vunpack.c.l.b16 %v43
  %v838 = vunpack.c.h.b16 %v43
  %v839 = vunpack.c.l.b16 %v44
  %v840 = vunpack.c.l.b16 %v45
  %v841 = vunpack.c.h.b16 %v45
  %v842 = vunpack.c.l.b16 %v46
  %v843 = vunpack.c.l.b16 %v47
  %v844 = vunpack.c.h.b16 %v47
  %v845 = vunpack.c.l.b16 %v48
  %v846 = vunpack.c.l.b16 %v49
  %v847 = vunpack.c.h.b16 %v49
  %v848 = vunpack.c.l.b16 %v50
  %v849 = vunpack.c.l.b16 %v51
  %v850 = vunpack.c.h.b16 %v51
  %v851 = vunpack.c.l.b16 %v52
  %v852 = vunpack.c.l.b16 %v53
  %v853 = vunpack.c.h.b16 %v53
  %v854 = vunpack.c.l.b16 %v54
  %v855 = vunpack.c.l.b16 %v55
  %v856 = vunpack.c.h.b16 %v55
  %v857 = vunpack.c.l.b16 %v56
  %v858 = vunpack.c.l.b16 %v57
  %v859 = vunpack.c.h.b16 %v57
  %v860 = vunpack.c.l.b16 %v58
  %v861 = vunpack.c.l.b16 %v59
  %v862 = vunpack.c.h.b16 %v59
  %v863 = vunpack.c.l.b16 %v60
  %v864 = vunpack.c.l.b16 %v61
  %v865 = vunpack.c.h.b16 %v61
  %v866 = vunpack.c.l.b16 %v62
  %v867 = vunpack.c.l.b16 %v63
  %v868 = vunpack.c.h.b16 %v63
  %v869 = vunpack.c.l.b16 %v64
  %v870 = vunpack.c.l.b16 %v65
  %v871 = vunpack.c.h.b16 %v65
  %v872 = vunpack.c.l.b16 %v66
  %v873 = vunpack.c.l.b16 %v67
  %v874 = vunpack.c.h.b16 %v67
  %v875 = vunpack.c.l.b16 %v68
  %v876 = vunpack.c.l.b16 %v69
  %v877 = vunpack.c.h.b16 %v69
  %v878 = vunpack.c.l.b16 %v70
  %v879 = vunpack.c.l.b16 %v71
  %v880 = vunpack.c.h.b16 %v71
  %v881 = vunpack.c.l.b16 %v72
  %v882 = vunpack.c.l.b16 %v73
  %v883 = vunpack.c.h.b16 %v73
  %v884 = vunpack.c.l.b16 %v74
  %v885 = vunpack.c.l.b16 %v75
  %v886 = vunpack.c.h.b16 %v75
  %v887 = vunpack.c.l.b16 %v76
  %v888 = vunpack.c.l.b16 %v77
  %v889 = vunpack.c.h.b16 %v77
  %v890 = vunpack.c.l.b16 %v78
  %v891 = vunpack.c.l.b16 %v79
  %v892 = vunpack.c.h.b16 %v79
  %v893 = vunpack.c.l.b16 %v80
  %v894 = vunpack.c.l.b16 %v81
  %v895 = vunpack.c.h.b16 %v81
  %v896 = vunpack.c.l.b16 %v82
  %v897 = vunpack.c.l.b16 %v83
  %v898 = vunpack.c.h.b16 %v83
  %v899 = vunpack.c.l.b16 %v84
  %v900 = vunpack.c.l.b16 %v85
  %v901 = vunpack.c.h.b16 %v85
  %v902 = vunpack.c.l.b16 %v86
  %v903 = vunpack.c.l.b16 %v87
  %v904 = vunpack.c.h.b16 %v87
  %v905 = vunpack.c.l.b16 %v88
  %v906 = vunpack.c.l.b16 %v89
  %v907 = vunpack.c.h.b16 %v89
  %v908 = vunpack.c.l.b16 %v90
  %v909 = vunpack.c.l.b16 %v91
  %v910 = vunpack.c.h.b16 %v91
  %v911 = vunpack.c.l.b16 %v92
  %v912 = vunpack.c.l.b16 %v93
  %v913 = vunpack.c.h.b16 %v93
  %v914 = vunpack.c.l.b16 %v94
  %v915 = vunpack.c.l.b16 %v95
  %v916 = vunpack.c.h.b16 %v95
  %v917 = vunpack.c.l.b16 %v96
  %v918 = vunpack.c.l.b16 %v97
  %v919 = vunpack.c.h.b16 %v97
  %v920 = vunpack.c.l.b16 %v98
  %v921 = vunpack.c.l.b16 %v99
  %v922 = vunpack.c.h.b16 %v99
  %v923 = vunpack.c.l.b16 %v100
  %v924 = vunpack.c.l.b16 %v101
  %v925 = vunpack.c.h.b16 %v101
  %v926 = vunpack.c.l.b16 %v102
  %v927 = vunpack.c.l.b16 %v103
  %v928 = vunpack.c.h.b16 %v103
  %v929 = vunpack.c.l.b16 %v104
  %v930 = vunpack.c.l.b16 %v105
  %v931 = vunpack.c.h.b16 %v105
  %v932 = vunpack.c.l.b16 %v106
  %v933 = vunpack.c.l.b16 %v107
  %v934 = vunpack.c.h.b16 %v107
  %v935 = vunpack.c.l.b16 %v108
  %v936 = vunpack.c.l.b16 %v109
  %v937 = vunpack.c.h.b16 %v109
  %v938 = vunpack.c.l.b16 %v110
  %v939 = vunpack.c.l.b16 %v111
  %v940 = vunpack.c.h.b16 %v111
  %v941 = vunpack.c.l.b16 %v112
  %v942 = vunpack.c.l.b16 %v113
  %v943 = vunpack.c.h.b16 %v113
  %v944 = vunpack.c.l.b16 %v114
  %v945 = vunpack.c.l.b16 %v115
  %v946 = vunpack.c.h.b16 %v115
  %v947 = vunpack.c.l.b16 %v116
  %v948 = vunpack.c.l.b16 %v117
  %v949 = vunpack.c.h.b16 %v117
  %v950 = vunpack.c.l.b16 %v118
  %v951 = vunpack.c.l.b16 %v119
  %v952 = vunpack.c.h.b16 %v119
  %v953 = vunpack.c.l.b16 %v120
  %v954 = vunpack.c.l.b16 %v121
  %v955 = vunpack.c.h.b16 %v121
  %v956 = vunpack.c.l.b16 %v122
  %v957 = vunpack.c.l.b16 %v123
  %v958 = vunpack.c.h.b16 %v123
  %v959 = vunpack.c.l.b16 %v124
  %v960 = vunpack.c.l.b16 %v125
  %v961 = vunpack.c.h.b16 %v125
  %v962 = vunpack.c.l.b16 %v126
  %v963 = vunpack.c.l.b16 %v127
  %v964 = vunpack.c.h.b16 %v127
  %v965 = vunpack.c.l.b16 %v128
  %v966 = vunpack.c.l.b16 %v129
  %v967 = vunpack.c.h.b16 %v129
  %v968 = vunpack.c.l.b16 %v130
  %v969 = vunpack.c.l.b16 %v131
  %v970 = vunpack.c.h.b16 %v131
  %v971 = vunpack.c.l.b16 %v132
  %v972 = vunpack.c.l.b16 %v133
  %v973 = vunpack.c.h.b16 %v133
  %v974 = vunpack.c.l.b16 %v134
  %v975 = vunpack.c.l.b16 %v135
  %v976 = vunpack.c.h.b16 %v135
  %v977 = vunpack.c.l.b16 %v136
  %v978 = vunpack.c.l.b16 %v137
  %v979 = vunpack.c.h.b16 %v137
  %v980 = vunpack.c.l.b16 %v138
  %v981 = vunpack.c.l.b16 %v139
  %v982 = vunpack.c.h.b16 %v139
  %v983 = vunpack.c.l.b16 %v140
  %v984 = vunpack.c.l.b16 %v141
  %v985 = vunpack.c.h.b16 %v141
  %v986 = vunpack.c.l.b16 %v142
  %v987 = vunpack.c.l.b16 %v143
  %v988 = vunpack.c.h.b16 %v143
  %v989 = vunpack.c.l.b16 %v144
  %v990 = vunpack.c.l.b16 %v145
  %v991 = vunpack.c.h.b16 %v145
  %v992 = vunpack.c.l.b16 %v146
  %v993 = vunpack.c.l.b16 %v147
  %v994 = vunpack.c.h.b16 %v147
  %v995 = vunpack.c.l.b16 %v148
  %v996 = vunpack.c.l.b16 %v149
  %v997 = vunpack.c.h.b16 %v149
  %v998 = vunpack.c.l.b16 %v150
  %v999 = vunpack.c.l.b16 %v151
  %v1000 = vunpack.c.h.b16 %v151
  %v1001 = vunpack.c.l.b16 %v152
  %v1002 = vunpack.c.l.b16 %v153
  %v1003 = vunpack.c.h.b16 %v153
  %v1004 = vunpack.c.l.b16 %v154
  %v1005 = vunpack.c.l.b16 %v155
  %v1006 = vunpack.c.h.b16 %v155
  %v1007 = vunpack.c.l.b16 %v156
  %v1008 = vunpack.c.l.b16 %v157
  %v1009 = vunpack.c.h.b16 %v157
  %v1010 = vunpack.c.l.b16 %v158
  %v1011 = vunpack.c.l.b16 %v159
  %v1012 = vunpack.c.h.b16 %v159
  %v1013 = vunpack.c.l.b16 %v160
  %v1014 = vunpack.c.l.b16 %v161
  %v1015 = vunpack.c.h.b16 %v161
  %v1016 = vunpack.c.l.b16 %v162
  %v1017 = vunpack.c.l.b16 %v163
  %v1018 = vunpack.c.h.b16 %v163
  %v1019 = vunpack.c.l.b16 %v164
  %v1020 = vunpack.c.l.b16 %v165
  %v1021 = vunpack.c.h.b16 %v165
  %v1022 = vunpack.c.l.b16 %v166
  %v1023 = vunpack.c.l.b16 %v167
  %v1024 = vunpack.c.h.b16 %v167
  %v1025 = vunpack.c.l.b16 %v168
  %v1026 = vunpack.c.l.b16 %v169
  %v1027 = vunpack.c.h.b16 %v169
  %v1028 = vunpack.c.l.b16 %v170
  %v1029 = vunpack.c.l.b16 %v171
  %v1030 = vunpack.c.h.b16 %v171
  %v1031 = vunpack.c.l.b16 %v172
  %v1032 = vunpack.c.l.b16 %v173
  %v1033 = vunpack.c.h.b16 %v173
  %v1034 = vunpack.c.l.b16 %v174
  %v1035 = vunpack.c.l.b16 %v175
  %v1036 = vunpack.c.h.b16 %v175
  %v1037 = vunpack.c.l.b16 %v176
  %v1038 = vunpack.c.l.b16 %v177
  %v1039 = vunpack.c.h.b16 %v177
  %v1040 = vunpack.c.l.b16 %v178
  %v1041 = vunpack.c.l.b16 %v179
  %v1042 = vunpack.c.h.b16 %v179
  %v1043 = vunpack.c.l.b16 %v180
  %v1044 = vunpack.c.l.b16 %v181
  %v1045 = vunpack.c.h.b16 %v181
  %v1046 = vunpack.c.l.b16 %v182
  %v1047 = vunpack.c.l.b16 %v183
  %v1048 = vunpack.c.h.b16 %v183
  %v1049 = vunpack.c.l.b16 %v184
  %v1050 = vunpack.c.l.b16 %v185
  %v1051 = vunpack.c.h.b16 %v185
  %v1052 = vunpack.c.l.b16 %v186
  %v1053 = vunpack.c.l.b16 %v187
  %v1054 = vunpack.c.h.b16 %v187
  %v1055 = vunpack.c.l.b16 %v188
  %v1056 = vunpack.c.l.b16 %v189
  %v1057 = vunpack.c.h.b16 %v189
  %v1058 = vunpack.c.l.b16 %v190
  %v1059 = vunpack.c.l.b16 %v191
  %v1060 = vunpack.c.h.b16 %v191
  %v1061 = vunpack.c.l.b16 %v192
  %v1062 = vunpack.c.l.b16 %v193
  %v1063 = vunpack.c.h.b16 %v193
  %v1064 = vunpack.c.l.b16 %v194
  %v1065 = vunpack.c.l.b16 %v195
  %v1066 = vunpack.c.h.b16 %v195
  %v1067 = vunpack.c.l.b16 %v196
  %v1068 = vunpack.c.l.b16 %v197
  %v1069 = vunpack.c.h.b16 %v197
  %v1070 = vunpack.c.l.b16 %v198
  %v1071 = vunpack.c.l.b16 %v199
  %v1072 = vunpack.c.h.b16 %v199
  %v1073 = vunpack.c.l.b16 %v200
  %v1074 = vunpack.c.l.b16 %v201
  %v1075 = vunpack.c.h.b16 %v201
  %v1076 = vunpack.c.l.b16 %v202
  %v1077 = vunpack.c.l.b16 %v203
  %v1078 = vunpack.c.h.b16 %v203
  %v1079 = vunpack.c.l.b16 %v204
  %v1080 = vunpack.c.l.b16 %v205
  %v1081 = vunpack.c.h.b16 %v205
  %v1082 = vunpack.c.l.b16 %v206
  %v1083 = vunpack.c.l.b16 %v207
  %v1084 = vunpack.c.h.b16 %v207
  %v1085 = vunpack.c.l.b16 %v208
  %v1086 = vunpack.c.l.b16 %v209
  %v1087 = vunpack.c.h.b16 %v209
  %v1088 = vunpack.c.l.b16 %v210
  %v1089 = vunpack.c.l.b16 %v211
  %v1090 = vunpack.c.h.b16 %v211
  %v1091 = vunpack.c.l.b16 %v212
  %v1092 = vunpack.c.l.b16 %v213
  %v1093 = vunpack.c.h.b16 %v213
  %v1094 = vunpack.c.l.b16 %v214
  %v1095 = vunpack.c.l.b16 %v215
  %v1096 = vunpack.c.h.b16 %v215
  %v1097 = vunpack.c.l.b16 %v216
  %v1098 = vunpack.c.l.b16 %v217
  %v1099 = vunpack.c.h.b16 %v217
  %v1100 = vunpack.c.l.b16 %v218
  %v1101 = vunpack.c.l.b16 %v219
  %v1102 = vunpack.c.h.b16 %v219
  %v1103 = vunpack.c.l.b16 %v220
  %v1104 = vunpack.c.l.b16 %v221
  %v1105 = vunpack.c.h.b16 %v221
  %v1106 = vunpack.c.l.b16 %v222
  %v1107 = vunpack.c.l.b16 %v223
  %v1108 = vunpack.c.h.b16 %v223
  %v1109 = vunpack.c.l.b16 %v224
  %v1110 = vunpack.c.l.b16 %v225
  %v1111 = vunpack.c.h.b16 %v225
  %v1112 = vunpack.c.l.b16 %v226
  %v1113 = vunpack.c.l.b16 %v227
  %v1114 = vunpack.c.h.b16 %v227
  %v1115 = vunpack.c.l.b16 %v228
  %v1116 = vunpack.c.l.b16 %v229
  %v1117 = vunpack.c.h.b16 %v229
  %v1118 = vunpack.c.l.b16 %v230
  %v1119 = vunpack.c.l.b16 %v231
  %v1120 = vunpack.c.h.b16 %v231
  %v1121 = vunpack.c.l.b16 %v232
  %v1122 = vunpack.c.l.b16 %v233
  %v1123 = vunpack.c.h.b16 %v233
  %v1124 = vunpack.c.l.b16 %v234
  %v1125 = vunpack.c.l.b16 %v235
  %v1126 = vunpack.c.h.b16 %v235
  %v1127 = vunpack.c.l.b16 %v236
  %v1128 = vunpack.c.l.b16 %v237
  %v1129 = vunpack.c.h.b16 %v237
  %v1130 = vunpack.c.l.b16 %v238
  %v1131 = vunpack.c.l.b16 %v239
  %v1132 = vunpack.c.h.b16 %v239
  %v1133 = vunpack.c.l.b16 %v240
  %v1134 = vunpack.c.l.b16 %v241
  %v1135 = vunpack.c.h.b16 %v241
  %v1136 = vunpack.c.l.b16 %v242
  %v1137 = vunpack.c.l.b16 %v243
  %v1138 = vunpack.c.h.b16 %v243
  %v1139 = vunpack.c.l.b16 %v244
  %v1140 = vunpack.c.l.b16 %v245
  %v1141 = vunpack.c.h.b16 %v245
  %v1142 = vunpack.c.l.b16 %v246
  %v1143 = vunpack.c.l.b16 %v247
  %v1144 = vunpack.c.h.b16 %v247
  %v1145 = vunpack.c.l.b16 %v248
  %v1146 = vunpack.c.l.b16 %v249
  %v1147 = vunpack.c.h.b16 %v249
  %v1148 = vunpack.c.l.b16 %v250
  %v1149 = vunpack.c.l.b16 %v251
  %v1150 = vunpack.c.h.b16 %v251
  %v1151 = vunpack.c.l.b16 %v252
  %v1152 = vunpack.c.l.b16 %v253
  %v1153 = vunpack.c.h.b16 %v253
  %v1154 = vunpack.c.l.b16 %v254
  %v1155 = vunpack.c.l.b16 %v255
  %v1156 = vunpack.c.h.b16 %v255
  %v1157 = vunpack.c.l.b16 %v256
  %v1158 = vunpack.c.l.b16 %v257
  %v1159 = vunpack.c.h.b16 %v257
  %v1160 = vunpack.c.l.b16 %v258
  %v1161 = vunpack.c.l.b16 %v259
  %v1162 = vunpack.c.h.b16 %v259
  %v1163 = vunpack.c.l.b16 %v260
  %v1164 = vunpack.c.l.b16 %v261
  %v1165 = vunpack.c.h.b16 %v261
  %v1166 = vunpack.c.l.b16 %v262
  %v1167 = vunpack.c.l.b16 %v263
  %v1168 = vunpack.c.h.b16 %v263
  %v1169 = vunpack.c.l.b16 %v264
  %v1170 = vunpack.c.l.b16 %v265
  %v1171 = vunpack.c.h.b16 %v265
  %v1172 = vunpack.c.l.b16 %v266
  %v1173 = vunpack.c.l.b16 %v267
  %v1174 = vunpack.c.h.b16 %v267
  %v1175 = vunpack.c.l.b16 %v268
  %v1176 = vunpack.c.l.b16 %v269
  %v1177 = vunpack.c.h.b16 %v269
  %v1178 = vunpack.c.l.b16 %v270
  %v1179 = vunpack.c.l.b16 %v271
  %v1180 = vunpack.c.h.b16 %v271
  %v1181 = vunpack.c.l.b16 %v272
  %v1182 = vunpack.c.l.b16 %v273
  %v1183 = vunpack.c.h.b16 %v273
  %v1184 = vunpack.c.l.b16 %v274
  %v1185 = vunpack.c.l.b16 %v275
  %v1186 = vunpack.c.h.b16 %v275
  %v1187 = vunpack.c.l.b16 %v276
  %v1188 = vunpack.c.l.b16 %v277
  %v1189 = vunpack.c.h.b16 %v277
  %v1190 = vunpack.c.l.b16 %v278
  %v1191 = vunpack.c.l.b16 %v279
  %v1192 = vunpack.c.h.b16 %v279
  %v1193 = vunpack.c.l.b16 %v280
  %v1194 = vunpack.c.l.b16 %v281
  %v1195 = vunpack.c.h.b16 %v281
  %v1196 = vunpack.c.l.b16 %v282
  %v1197 = vunpack.c.l.b16 %v283
  %v1198 = vunpack.c.h.b16 %v283
  %v1199 = vunpack.c.l.b16 %v284
  %v1200 = vunpack.c.l.b16 %v285
  %v1201 = vunpack.c.h.b16 %v285
  %v1202 = vunpack.c.l.b16 %v286
  %v1203 = vunpack.c.l.b16 %v287
  %v1204 = vunpack.c.h.b16 %v287
  %v1205 = vunpack.c.l.b16 %v288
  %v1206 = vunpack.c.l.b16 %v289
  %v1207 = vunpack.c.h.b16 %v289
  %v1208 = vunpack.c.l.b16 %v290
  %v1209 = vunpack.c.l.b16 %v291
  %v1210 = vunpack.c.h.b16 %v291
  %v1211 = vunpack.c.l.b16 %v292
  %v1212 = vunpack.c.l.b16 %v293
  %v1213 = vunpack.c.h.b16 %v293
  %v1214 = vunpack.c.l.b16 %v294
  %v1215 = vunpack.c.l.b16 %v295
  %v1216 = vunpack.c.h.b16 %v295
  %v1217 = vunpack.c.l.b16 %v296
  %v1218 = vunpack.c.l.b16 %v297
  %v1219 = vunpack.c.h.b16 %v297
  %v1220 = vunpack.c.l.b16 %v298
  %v1221 = vunpack.c.l.b16 %v299
  %v1222 = vunpack.c.h.b16 %v299
  %v1223 = vunpack.c.l.b16 %v300
  %v1224 = vunpack.c.l.b16 %v301
  %v1225 = vunpack.c.h.b16 %v301
  %v1226 = vunpack.c.l.b16 %v302
  %v1227 = vunpack.c.l.b16 %v303
  %v1228 = vunpack.c.h.b16 %v303
  %v1229 = vunpack.c.l.b16 %v304
  %v1230 = vunpack.c.l.b16 %v305
  %v1231 = vunpack.c.h.b16 %v305
  %v1232 = vunpack.c.l.b16 %v306
  %v1233 = vunpack.c.l.b16 %v307
  %v1234 = vunpack.c.h.b16 %v307
  %v1235 = vunpack.c.l.b16 %v308
  %v1236 = vunpack.c.l.b16 %v309
  %v1237 = vunpack.c.h.b16 %v309
  %v1238 = vunpack.c.l.b16 %v310
  %v1239 = vunpack.c.l.b16 %v311
  %v1240 = vunpack.c.h.b16 %v311
  %v1241 = vunpack.c.l.b16 %v312
  %v1242 = vunpack.c.l.b16 %v313
  %v1243 = vunpack.c.h.b16 %v313
  %v1244 = vunpack.c.l.b16 %v314
  %v1245 = vunpack.c.l.b16 %v315
  %v1246 = vunpack.c.h.b16 %v315
  %v1247 = vunpack.c.l.b16 %v316
  %v1248 = vunpack.c.l.b16 %v317
  %v1249 = vunpack.c.h.b16 %v317
  %v1250 = vunpack.c.l.b16 %v318
  %v1251 = vunpack.c.l.b16 %v319
  %v1252 = vunpack.c.h.b16 %v319
  %v1253 = vunpack.c.l.b16 %v320
  %v1254 = vunpack.c.l.b16 %v321
  %v1255 = vunpack.c.h.b16 %v321
  %v1256 = vunpack.c.l.b16 %v322
  %v1257 = vunpack.c.l.b16 %v323
  %v1258 = vunpack.c.h.b16 %v323
  %v1259 = vunpack.c.l.b16 %v324
  %v1260 = vunpack.c.l.b16 %v325
  %v1261 = vunpack.c.h.b16 %v325
  %v1262 = vunpack.c.l.b16 %v326
  %v1263 = vunpack.c.l.b16 %v327
  %v1264 = vunpack.c.h.b16 %v327
  %v1265 = vunpack.c.l.b16 %v328
  %v1266 = vunpack.c.l.b16 %v329
  %v1267 = vunpack.c.h.b16 %v329
  %v1268 = vunpack.c.l.b16 %v330
  %v1269 = vunpack.c.l.b16 %v331
  %v1270 = vunpack.c.h.b16 %v331
  %v1271 = vunpack.c.l.b16 %v332
  %v1272 = vunpack.c.l.b16 %v333
  %v1273 = vunpack.c.h.b16 %v333
  %v1274 = vunpack.c.l.b16 %v334
  %v1275 = vunpack.c.l.b16 %v335
  %v1276 = vunpack.c.h.b16 %v335
  %v1277 = vunpack.c.l.b16 %v336
  %v1278 = vunpack.c.l.b16 %v337
  %v1279 = vunpack.c.h.b16 %v337
  %v1280 = vunpack.c.l.b16 %v338
  %v1281 = vunpack.c.l.b16 %v339
  %v1282 = vunpack.c.h.b16 %v339
  %v1283 = vunpack.c.l.b16 %v340
  %v1284 = vunpack.c.l.b16 %v341
  %v1285 = vunpack.c.h.b16 %v341
  %v1286 = vunpack.c.l.b16 %v342
  %v1287 = vunpack.c.l.b16 %v343
  %v1288 = vunpack.c.h.b16 %v343
  %v1289 = vunpack.c.l.b16 %v344
  %v1290 = vunpack.c.l.b16 %v345
  %v1291 = vunpack.c.h.b16 %v345
  %v1292 = vunpack.c.l.b16 %v346
  %v1293 = vunpack.c.l.b16 %v347
  %v1294 = vunpack.c.h.b16 %v347
  %v1295 = vunpack.c.l.b16 %v348
  %v1296 = vunpack.c.l.b16 %v349
  %v1297 = vunpack.c.h.b16 %v349
  %v1298 = vunpack.c.l.b16 %v350
  %v1299 = vunpack.c.l.b16 %v351
  %v1300 = vunpack.c.h.b16 %v351
  %v1301 = vunpack.c.l.b16 %v352
  %v1302 = vunpack.c.l.b16 %v353
  %v1303 = vunpack.c.h.b16 %v353
  %v1304 = vunpack.c.l.b16 %v354
  %v1305 = vunpack.c.l.b16 %v355
  %v1306 = vunpack.c.h.b16 %v355
  %v1307 = vunpack.c.l.b16 %v356
  %v1308 = vunpack.c.l.b16 %v357
  %v1309 = vunpack.c.h.b16 %v357
  %v1310 = vunpack.c.l.b16 %v358
  %v1311 = vunpack.c.l.b16 %v359
  %v1312 = vunpack.c.h.b16 %v359
  %v1313 = vunpack.c.l.b16 %v360
  %v1314 = vunpack.c.l.b16 %v361
  %v1315 = vunpack.c.h.b16 %v361
  %v1316 = vunpack.c.l.b16 %v362
  %v1317 = vunpack.c.l.b16 %v363
  %v1318 = vunpack.c.h.b16 %v363
  %v1319 = vunpack.c.l.b16 %v364
  %v1320 = vunpack.c.l.b16 %v365
  %v1321 = vunpack.c.h.b16 %v365
  %v1322 = vunpack.c.l.b16 %v366
  %v1323 = vunpack.c.l.b16 %v367
  %v1324 = vunpack.c.h.b16 %v367
  %v1325 = vunpack.c.l.b16 %v368
  %v1326 = vunpack.c.l.b16 %v369
  %v1327 = vunpack.c.h.b16 %v369
  %v1328 = vunpack.c.l.b16 %v370
  %v1329 = vunpack.c.l.b16 %v371
  %v1330 = vunpack.c.h.b16 %v371
  %v1331 = vunpack.c.l.b16 %v372
  %v1332 = vunpack.c.l.b16 %v373
  %v1333 = vunpack.c.h.b16 %v373
  %v1334 = vunpack.c.l.b16 %v374
  %v1335 = vunpack.c.l.b16 %v375
  %v1336 = vunpack.c.h.b16 %v375
  %v1337 = vunpack.c.l.b16 %v376
  %v1338 = vunpack.c.l.b16 %v377
  %v1339 = vunpack.c.h.b16 %v377
  %v1340 = vunpack.c.l.b16 %v378
  %v1341 = vunpack.c.l.b16 %v379
  %v1342 = vunpack.c.h.b16 %v379
  %v1343 = vunpack.c.l.b16 %v380
  %v1344 = vpack.c.b16 %v798, %v795
  %v1345 = vpack.c.b16 %v799, %v796
  %v1346 = vpack.c.b16 %v800, %v797
  %v1347 = vpack.c.b16 %v804, %v801
  %v1348 = vpack.c.b16 %v805, %v802
  %v1349 = vpack.c.b16 %v806, %v803
  %v1350 = vpack.c.b16 %v810, %v807
  %v1351 = vpack.c.b16 %v811, %v808
  %v1352 = vpack.c.b16 %v812, %v809
  %v1353 = vpack.c.b16 %v816, %v813
  %v1354 = vpack.c.b16 %v817, %v814
  %v1355 = vpack.c.b16 %v818, %v815
  %v1356 = vpack.c.b16 %v822, %v819
  %v1357 = vpack.c.b16 %v823, %v820
  %v1358 = vpack.c.b16 %v824, %v821
  %v1359 = vpack.c.b16 %v828, %v825
  %v1360 = vpack.c.b16 %v829, %v826
  %v1361 = vpack.c.b16 %v830, %v827
  %v1362 = vpack.c.b16 %v834, %v831
  %v1363 = vpack.c.b16 %v835, %v832
  %v1364 = vpack.c.b16 %v836, %v833
  %v1365 = vpack.c.b16 %v840, %v837
  %v1366 = vpack.c.b16 %v841, %v838
  %v1367 = vpack.c.b16 %v842, %v839
  %v1368 = vpack.c.b16 %v846, %v843
  %v1369 = vpack.c.b16 %v847, %v844
  %v1370 = vpack.c.b16 %v848, %v845
  %v1371 = vpack.c.b16 %v852, %v849
  %v1372 = vpack.c.b16 %v853, %v850
  %v1373 = vpack.c.b16 %v854, %v851
  %v1374 = vpack.c.b16 %v858, %v855
  %v1375 = vpack.c.b16 %v859, %v856
  %v1376 = vpack.c.b16 %v860, %v857
  %v1377 = vpack.c.b16 %v864, %v861
  %v1378 = vpack.c.b16 %v865, %v862
  %v1379 = vpack.c.b16 %v866, %v863
  %v1380 = vpack.c.b16 %v870, %v867
  %v1381 = vpack.c.b16 %v871, %v868
  %v1382 = vpack.c.b16 %v872, %v869
  %v1383 = vpack.c.b16 %v876, %v873
  %v1384 = vpack.c.b16 %v877, %v874
  %v1385 = vpack.c.b16 %v878, %v875
  %v1386 = vpack.c.b16 %v882, %v879
  %v1387 = vpack.c.b16 %v883, %v880
  %v1388 = vpack.c.b16 %v884, %v881
  %v1389 = vpack.c.b16 %v888, %v885
  %v1390 = vpack.c.b16 %v889, %v886
  %v1391 = vpack.c.b16 %v890, %v887
  %v1392 = vpack.c.b16 %v894, %v891
  %v1393 = vpack.c.b16 %v895, %v892
  %v1394 = vpack.c.b16 %v896, %v893
  %v1395 = vpack.c.b16 %v900, %v897
  %v1396 = vpack.c.b16 %v901, %v898
  %v1397 = vpack.c.b16 %v902, %v899
  %v1398 = vpack.c.b16 %v906, %v903
  %v1399 = vpack.c.b16 %v907, %v904
  %v1400 = vpack.c.b16 %v908, %v905
  %v1401 = vpack.c.b16 %v912, %v909
  %v1402 = vpack.c.b16 %v913, %v910
  %v1403 = vpack.c.b16 %v914, %v911
  %v1404 = vpack.c.b16 %v918, %v915
  %v1405 = vpack.c.b16 %v919, %v916
  %v1406 = vpack.c.b16 %v920, %v917
  %v1407 = vpack.c.b16 %v924, %v921
  %v1408 = vpack.c.b16 %v925, %v922
  %v1409 = vpack.c.b16 %v926, %v923
  %v1410 = vpack.c.b16 %v930, %v927
  %v1411 = vpack.c.b16 %v931, %v928
  %v1412 = vpack.c.b16 %v932, %v929
  %v1413 = vpack.c.b16 %v936, %v933
  %v1414 = vpack.c.b16 %v937, %v934
  %v1415 = vpack.c.b16 %v938, %v935
  %v1416 = vpack.c.b16 %v942, %v939
  %v1417 = vpack.c.b16 %v943, %v940
  %v1418 = vpack.c.b16 %v944, %v941
  %v1419 = vpack.c.b16 %v948, %v945
  %v1420 = vpack.c.b16 %v949, %v946
  %v1421 = vpack.c.b16 %v950, %v947
  %v1422 = vpack.c.b16 %v954, %v951
  %v1423 = vpack.c.b16 %v955, %v952
  %v1424 = vpack.c.b16 %v956, %v953
  %v1425 = vpack.c.b16 %v960, %v957
  %v1426 = vpack.c.b16 %v961, %v958
  %v1427 = vpack.c.b16 %v962, %v959
  %v1428 = vpack.c.b16 %v966, %v963
  %v1429 = vpack.c.b16 %v967, %v964
  %v1430 = vpack.c.b16 %v968, %v965
  %v1431 = vpack.c.b16 %v972, %v969
  %v1432 = vpack.c.b16 %v973, %v970
  %v1433 = vpack.c.b16 %v974, %v971
  %v1434 = vpack.c.b16 %v978, %v975
  %v1435 = vpack.c.b16 %v979, %v976
  %v1436 = vpack.c.b16 %v980, %v977
  %v1437 = vpack.c.b16 %v984, %v981
  %v1438 = vpack.c.b16 %v985, %v982
  %v1439 = vpack.c.b16 %v986, %v983
  %v1440 = vpack.c.b16 %v990, %v987
  %v1441 = vpack.c.b16 %v991, %v988
  %v1442 = vpack.c.b16 %v992, %v989
  %v1443 = vpack.c.b16 %v996, %v993
  %v1444 = vpack.c.b16 %v997, %v994
  %v1445 = vpack.c.b16 %v998, %v995
  %v1446 = vpack.c.b16 %v1002, %v999
  %v1447 = vpack.c.b16 %v1003, %v1000
  %v1448 = vpack.c.b16 %v1004, %v1001
  %v1449 = vpack.c.b16 %v1008, %v1005
  %v1450 = vpack.c.b16 %v1009, %v1006
  %v1451 = vpack.c.b16 %v1010, %v1007
  %v1452 = vpack.c.b16 %v1014, %v1011
  %v1453 = vpack.c.b16 %v1015, %v1012
  %v1454 = vpack.c.b16 %v1016, %v1013
  %v1455 = vpack.c.b16 %v1020, %v1017
  %v1456 = vpack.c.b16 %v1021, %v1018
  %v1457 = vpack.c.b16 %v1022, %v1019
  %v1458 = vpack.c.b16 %v1026, %v1023
  %v1459 = vpack.c.b16 %v1027, %v1024
  %v1460 = vpack.c.b16 %v1028, %v1025
  %v1461 = vpack.c.b16 %v1032, %v1029
  %v1462 = vpack.c.b16 %v1033, %v1030
  %v1463 = vpack.c.b16 %v1034, %v1031
  %v1464 = vpack.c.b16 %v1038, %v1035
  %v1465 = vpack.c.b16 %v1039, %v1036
  %v1466 = vpack.c.b16 %v1040, %v1037
  %v1467 = vpack.c.b16 %v1044, %v1041
  %v1468 = vpack.c.b16 %v1045, %v1042
  %v1469 = vpack.c.b16 %v1046, %v1043
  %v1470 = vpack.c.b16 %v1050, %v1047
  %v1471 = vpack.c.b16 %v1051, %v1048
  %v1472 = vpack.c.b16 %v1052, %v1049
  %v1473 = vpack.c.b16 %v1056, %v1053
  %v1474 = vpack.c.b16 %v1057, %v1054
  %v1475 = vpack.c.b16 %v1058, %v1055
  %v1476 = vpack.c.b16 %v1062, %v1059
  %v1477 = vpack.c.b16 %v1063, %v1060
  %v1478 = vpack.c.b16 %v1064, %v1061
  %v1479 = vpack.c.b16 %v1068, %v1065
  %v1480 = vpack.c.b16 %v1069, %v1066
  %v1481 = vpack.c.b16 %v1070, %v1067
  %v1482 = vpack.c.b16 %v1074, %v1071
  %v1483 = vpack.c.b16 %v1075, %v1072
  %v1484 = vpack.c.b16 %v1076, %v1073
  %v1485 = vpack.c.b16 %v1080, %v1077
  %v1486 = vpack.c.b16 %v1081, %v1078
  %v1487 = vpack.c.b16 %v1082, %v1079
  %v1488 = vpack.c.b16 %v1086, %v1083
  %v1489 = vpack.c.b16 %v1087, %v1084
  %v1490 = vpack.c.b16 %v1088, %v1085
  %v1491 = vpack.c.b16 %v1092, %v1089
  %v1492 = vpack.c.b16 %v1093, %v1090
  %v1493 = vpack.c.b16 %v1094, %v1091
  %v1494 = vpack.c.b16 %v1098, %v1095
  %v1495 = vpack.c.b16 %v1099, %v1096
  %v1496 = vpack.c.b16 %v1100, %v1097
  %v1497 = vpack.c.b16 %v1104, %v1101
  %v1498 = vpack.c.b16 %v1105, %v1102
  %v1499 = vpack.c.b16 %v1106, %v1103
  %v1500 = vpack.c.b16 %v1110, %v1107
  %v1501 = vpack.c.b16 %v1111, %v1108
  %v1502 = vpack.c.b16 %v1112, %v1109
  %v1503 = vpack.c.b16 %v1116, %v1113
  %v1504 = vpack.c.b16 %v1117, %v1114
  %v1505 = vpack.c.b16 %v1118, %v1115
  %v1506 = vpack.c.b16 %v1122, %v1119
  %v1507 = vpack.c.b16 %v1123, %v1120
  %v1508 = vpack.c.b16 %v1124, %v1121
  %v1509 = vpack.c.b16 %v1128, %v1125
  %v1510 = vpack.c.b16 %v1129, %v1126
  %v1511 = vpack.c.b16 %v1130, %v1127
  %v1512 = vpack.c.b16 %v1134, %v1131
  %v1513 = vpack.c.b16 %v1135, %v1132
  %v1514 = vpack.c.b16 %v1136, %v1133
  %v1515 = vpack.c.b16 %v1140, %v1137
  %v1516 = vpack.c.b16 %v1141, %v1138
  %v1517 = vpack.c.b16 %v1142, %v1139
  %v1518 = vpack.c.b16 %v1146, %v1143
  %v1519 = vpack.c.b16 %v1147, %v1144
  %v1520 = vpack.c.b16 %v1148, %v1145
  %v1521 = vpack.c.b16 %v1152, %v1149
  %v1522 = vpack.c.b16 %v1153, %v1150
  %v1523 = vpack.c.b16 %v1154, %v1151
  %v1524 = vpack.c.b16 %v1158, %v1155
  %v1525 = vpack.c.b16 %v1159, %v1156
  %v1526 = vpack.c.b16 %v1160, %v1157
  %v1527 = vpack.c.b16 %v1164, %v1161
  %v1528 = vpack.c.b16 %v1165, %v1162
  %v1529 = vpack.c.b16 %v1166, %v1163
  %v1530 = vpack.c.b16 %v1170, %v1167
  %v1531 = vpack.c.b16 %v1171, %v1168
  %v1532 = vpack.c.b16 %v1172, %v1169
  %v1533 = vpack.c.b16 %v1176, %v1173
  %v1534 = vpack.c.b16 %v1177, %v1174
  %v1535 = vpack.c.b16 %v1178, %v1175
  %v1536 = vpack.c.b16 %v1182, %v1179
  %v1537 = vpack.c.b16 %v1183, %v1180
  %v1538 = vpack.c.b16 %v1184, %v1181
  %v1539 = vpack.c.b16 %v1188, %v1185
  %v1540 = vpack.c.b16 %v1189, %v1186
  %v1541 = vpack.c.b16 %v1190, %v1187
  %v1542 = vpack.c.b16 %v1194, %v1191
  %v1543 = vpack.c.b16 %v1195, %v1192
  %v1544 = vpack.c.b16 %v1196, %v1193
  %v1545 = vpack.c.b16 %v1200, %v1197
  %v1546 = vpack.c.b16 %v1201, %v1198
  %v1547 = vpack.c.b16 %v1202, %v1199
  %v1548 = vpack.c.b16 %v1206, %v1203
  %v1549 = vpack.c.b16 %v1207, %v1204
  %v1550 = vpack.c.b16 %v1208, %v1205
  %v1551 = vpack.c.b16 %v1212, %v1209
  %v1552 = vpack.c.b16 %v1213, %v1210
  %v1553 = vpack.c.b16 %v1214, %v1211
  %v1554 = vpack.c.b16 %v1218, %v1215
  %v1555 = vpack.c.b16 %v1219, %v1216
  %v1556 = vpack.c.b16 %v1220, %v1217
  %v1557 = vpack.c.b16 %v1224, %v1221
  %v1558 = vpack.c.b16 %v1225, %v1222
  %v1559 = vpack.c.b16 %v1226, %v1223
  %v1560 = vpack.c.b16 %v1230, %v1227
  %v1561 = vpack.c.b16 %v1231, %v1228
  %v1562 = vpack.c.b16 %v1232, %v1229
  %v1563 = vpack.c.b16 %v1236, %v1233
  %v1564 = vpack.c.b16 %v1237, %v1234
  %v1565 = vpack.c.b16 %v1238, %v1235
  %v1566 = vpack.c.b16 %v1242, %v1239
  %v1567 = vpack.c.b16 %v1243, %v1240
  %v1568 = vpack.c.b16 %v1244, %v1241
  %v1569 = vpack.c.b16 %v1248, %v1245
  %v1570 = vpack.c.b16 %v1249, %v1246
  %v1571 = vpack.c.b16 %v1250, %v1247
  %v1572 = vpack.c.b16 %v1254, %v1251
  %v1573 = vpack.c.b16 %v1255, %v1252
  %v1574 = vpack.c.b16 %v1256, %v1253
  %v1575 = vpack.c.b16 %v1260, %v1257
  %v1576 = vpack.c.b16 %v1261, %v1258
  %v1577 = vpack.c.b16 %v1262, %v1259
  %v1578 = vpack.c.b16 %v1266, %v1263
  %v1579 = vpack.c.b16 %v1267, %v1264
  %v1580 = vpack.c.b16 %v1268, %v1265
  %v1581 = vpack.c.b16 %v1272, %v1269
  %v1582 = vpack.c.b16 %v1273, %v1270
  %v1583 = vpack.c.b16 %v1274, %v1271
  %v1584 = vpack.c.b16 %v1278, %v1275
  %v1585 = vpack.c.b16 %v1279, %v1276
  %v1586 = vpack.c.b16 %v1280, %v1277
  %v1587 = vpack.c.b16 %v1284, %v1281
  %v1588 = vpack.c.b16 %v1285, %v1282
  %v1589 = vpack.c.b16 %v1286, %v1283
  %v1590 = vpack.c.b16 %v1290, %v1287
  %v1591 = vpack.c.b16 %v1291, %v1288
  %v1592 = vpack.c.b16 %v1292, %v1289
  %v1593 = vpack.c.b16 %v1296, %v1293
  %v1594 = vpack.c.b16 %v1297, %v1294
  %v1595 = vpack.c.b16 %v1298, %v1295
  %v1596 = vpack.c.b16 %v1302, %v1299
  %v1597 = vpack.c.b16 %v1303, %v1300
  %v1598 = vpack.c.b16 %v1304, %v1301
  %v1599 = vpack.c.b16 %v1308, %v1305
  %v1600 = vpack.c.b16 %v1309, %v1306
  %v1601 = vpack.c.b16 %v1310, %v1307
  %v1602 = vpack.c.b16 %v1314, %v1311
  %v1603 = vpack.c.b16 %v1315, %v1312
  %v1604 = vpack.c.b16 %v1316, %v1313
  %v1605 = vpack.c.b16 %v1320, %v1317
  %v1606 = vpack.c.b16 %v1321, %v1318
  %v1607 = vpack.c.b16 %v1322, %v1319
  %v1608 = vpack.c.b16 %v1326, %v1323
  %v1609 = vpack.c.b16 %v1327, %v1324
  %v1610 = vpack.c.b16 %v1328, %v1325
  %v1611 = vpack.c.b16 %v1332, %v1329
  %v1612 = vpack.c.b16 %v1333, %v1330
  %v1613 = vpack.c.b16 %v1334, %v1331
  %v1614 = vpack.c.b16 %v1338, %v1335
  %v1615 = vpack.c.b16 %v1339, %v1336
  %v1616 = vpack.c.b16 %v1340, %v1337
  %v1617 = vpack.c.b16 %v1341, %v1341
  %v1618 = vpack.c.b16 %v1342, %v1342
  %v1619 = vpack.c.b16 %v1343, %v1343
  %v1944 = vunpack.c.l.b16 %v381
  %v1945 = vunpack.c.l.b16 %v382
  %v1946 = vunpack.c.l.b16 %v383
  %v1947 = vunpack.c.l.b16 %v384
  %v1948 = vunpack.c.l.b16 %v385
  %v1949 = vunpack.c.l.b16 %v386
  %v1950 = vunpack.c.l.b16 %v387
  %v1951 = vunpack.c.l.b16 %v388
  %v1952 = vunpack.c.l.b16 %v389
  %v1953 = vunpack.c.l.b16 %v390
  %v1954 = vunpack.c.l.b16 %v391
  %v1955 = vunpack.c.l.b16 %v392
  %v1956 = vunpack.c.l.b16 %v393
  %v1957 = vunpack.c.l.b16 %v394
  %v1958 = vunpack.c.l.b16 %v395
  %v1959 = vunpack.c.l.b16 %v396
  %v1960 = vunpack.c.l.b16 %v397
  %v1961 = vunpack.c.l.b16 %v398
  %v1962 = vunpack.c.l.b16 %v399
  %v1963 = vunpack.c.l.b16 %v400
  %v1964 = vunpack.c.l.b16 %v401
  %v1965 = vunpack.c.l.b16 %v402
  %v1966 = vunpack.c.l.b16 %v403
  %v1967 = vunpack.c.l.b16 %v404
  %v1968 = vunpack.c.l.b16 %v405
  %v1969 = vunpack.c.l.b16 %v406
  %v1970 = vunpack.c.l.b16 %v407
  %v1971 = vunpack.c.l.b16 %v408
  %v1972 = vunpack.c.l.b16 %v409
  %v1973 = vunpack.c.l.b16 %v410
  %v1974 = vunpack.c.l.b16 %v411
  %v1975 = vunpack.c.l.b16 %v412
  %v1976 = vunpack.c.l.b16 %v413
  %v1977 = vunpack.c.l.b16 %v414
  %v1978 = vunpack.c.l.b16 %v415
  %v1979 = vunpack.c.l.b16 %v416
  %v1980 = vunpack.c.l.b16 %v417
  %v1981 = vunpack.c.l.b16 %v418
  %v1982 = vunpack.c.l.b16 %v419
  %v1983 = vunpack.c.l.b16 %v420
  %v1984 = vunpack.c.l.b16 %v421
  %v1985 = vunpack.c.l.b16 %v422
  %v1986 = vunpack.c.l.b16 %v423
  %v1987 = vunpack.c.l.b16 %v424
  %v1988 = vunpack.c.l.b16 %v425
  %v1989 = vunpack.c.l.b16 %v426
  %v1990 = vunpack.c.l.b16 %v427
  %v1991 = vunpack.c.l.b16 %v428
  %v1992 = vpack.c.b16 %v1945, %v1944
  %v1993 = vpack.c.b16 %v1947, %v1946
  %v1994 = vpack.c.b16 %v1949, %v1948
  %v1995 = vpack.c.b16 %v1951, %v1950
  %v1996 = vpack.c.b16 %v1953, %v1952
  %v1997 = vpack.c.b16 %v1955, %v1954
  %v1998 = vpack.c.b16 %v1957, %v1956
  %v1999 = vpack.c.b16 %v1959, %v1958
  %v2000 = vpack.c.b16 %v1961, %v1960
  %v2001 = vpack.c.b16 %v1963, %v1962
  %v2002 = vpack.c.b16 %v1965, %v1964
  %v2003 = vpack.c.b16 %v1967, %v1966
  %v2004 = vpack.c.b16 %v1969, %v1968
  %v2005 = vpack.c.b16 %v1971, %v1970
  %v2006 = vpack.c.b16 %v1973, %v1972
  %v2007 = vpack.c.b16 %v1975, %v1974
  %v2008 = vpack.c.b16 %v1977, %v1976
  %v2009 = vpack.c.b16 %v1979, %v1978
  %v2010 = vpack.c.b16 %v1981, %v1980
  %v2011 = vpack.c.b16 %v1983, %v1982
  %v2012 = vpack.c.b16 %v1985, %v1984
  %v2013 = vpack.c.b16 %v1987, %v1986
  %v2014 = vpack.c.b16 %v1989, %v1988
  %v2015 = vpack.c.b16 %v1991, %v1990
  %2040 = vmatprep.subr.bf16.mxu0 0
  %2041 = vmatpush1.bf16.msra.mxu0 %v1992
  %2042 = vmatprep.subr.bf16.mxu0 0
  %2043 = vmatpush1.bf16.msra.mxu0 %v1993
  %2044 = vmatprep.subr.bf16.mxu0 0
  %2045 = vmatpush1.bf16.msra.mxu0 %v1994
  %2046 = vmatprep.subr.bf16.mxu0 0
  %2047 = vmatpush1.bf16.msra.mxu0 %v1995
  %2048 = vmatprep.subr.bf16.mxu0 0
  %2049 = vmatpush1.bf16.msra.mxu0 %v1996
  %2050 = vmatprep.subr.bf16.mxu0 0
  %2051 = vmatpush1.bf16.msra.mxu0 %v1997
  %2052 = vmatprep.subr.bf16.mxu0 0
  %2053 = vmatpush1.bf16.msra.mxu0 %v1998
  %2054 = vmatprep.subr.bf16.mxu0 0
  %2055 = vmatpush1.bf16.msra.mxu0 %v1999
  %2056 = vmatprep.subr.bf16.mxu0 0
  %2057 = vmatpush1.bf16.msra.mxu0 %v2000
  %2058 = vmatprep.subr.bf16.mxu0 0
  %2059 = vmatpush1.bf16.msra.mxu0 %v2001
  %2060 = vmatprep.subr.bf16.mxu0 0
  %2061 = vmatpush1.bf16.msra.mxu0 %v2002
  %2062 = vmatprep.subr.bf16.mxu0 0
  %2063 = vmatpush1.bf16.msra.mxu0 %v2003
  %2064 = vmatprep.subr.bf16.mxu0 0
  %2065 = vmatpush1.bf16.msra.mxu0 %v2004
  %2066 = vmatprep.subr.bf16.mxu0 0
  %2067 = vmatpush1.bf16.msra.mxu0 %v2005
  %2068 = vmatprep.subr.bf16.mxu0 0
  %2069 = vmatpush1.bf16.msra.mxu0 %v2006
  %2070 = vmatprep.subr.bf16.mxu0 0
  %2071 = vmatpush1.bf16.msra.mxu0 %v2007
  %2072 = vmatprep.mubr.bf16.mxu0 %v1345
  %2073 = vmatmul.mubr.bf16.gmra.mrb[0].mxu0 %v1344
  %v2074 = vpop.f32.mrb[0].mxu0
  %v2075 = vadd.f32 0.0, %v2074
  %v2076 = vpop.f32.mrb[0].mxu0
  %v2077 = vpop.f32.mrb[0].mxu0
  %v2078 = vadd.f32 0.0, %v2077
  %v2079 = vpop.f32.mrb[0].mxu0
  %2080 = vmatprep.mubr.bf16.mxu0 %v1348
  %2081 = vmatmul.mubr.bf16.gmra.mrb[0].mxu0 %v1347
  %v2082 = vpop.f32.mrb[0].mxu0
  %v2083 = vadd.f32 0.0, %v2082
  %v2084 = vpop.f32.mrb[0].mxu0
  %v2085 = vpop.f32.mrb[0].mxu0
  %v2086 = vadd.f32 0.0, %v2085
  %v2087 = vpop.f32.mrb[0].mxu0
  %2088 = vmatprep.mubr.bf16.mxu0 %v1351
  %2089 = vmatmul.mubr.bf16.gmra.mrb[0].mxu0 %v1350
  %v2090 = vpop.f32.mrb[0].mxu0
  %v2091 = vadd.f32 0.0, %v2090
  %v2092 = vpop.f32.mrb[0].mxu0
  %v2093 = vpop.f32.mrb[0].mxu0
  %v2094 = vadd.f32 0.0, %v2093
  %v2095 = vpop.f32.mrb[0].mxu0
  %2096 = vmatprep.mubr.bf16.mxu0 %v1354
  %2097 = vmatmul.mubr.bf16.gmra.mrb[0].mxu0 %v1353
  %v2098 = vpop.f32.mrb[0].mxu0
  %v2099 = vadd.f32 0.0, %v2098
  %v2100 = vpop.f32.mrb[0].mxu0
  %v2101 = vpop.f32.mrb[0].mxu0
  %v2102 = vadd.f32 0.0, %v2101
  %v2103 = vpop.f32.mrb[0].mxu0
  %2104 = vmatprep.mubr.bf16.mxu0 %v1357
  %2105 = vmatmul.mubr.bf16.gmra.mrb[0].mxu0 %v1356
  %v2106 = vpop.f32.mrb[0].mxu0
  %v2107 = vadd.f32 0.0, %v2106
  %v2108 = vpop.f32.mrb[0].mxu0
  %v2109 = vpop.f32.mrb[0].mxu0
  %v2110 = vadd.f32 0.0, %v2109
  %v2111 = vpop.f32.mrb[0].mxu0
  %2112 = vmatprep.mubr.bf16.mxu0 %v1360
  %2113 = vmatmul.mubr.bf16.gmra.mrb[0].mxu0 %v1359
  %v2114 = vpop.f32.mrb[0].mxu0
  %v2115 = vadd.f32 0.0, %v2114
  %v2116 = vpop.f32.mrb[0].mxu0
  %v2117 = vpop.f32.mrb[0].mxu0
  %v2118 = vadd.f32 0.0, %v2117
  %v2119 = vpop.f32.mrb[0].mxu0
  %2120 = vmatprep.mubr.bf16.mxu0 %v1363
  %2121 = vmatmul.mubr.bf16.gmra.mrb[0].mxu0 %v1362
  %v2122 = vpop.f32.mrb[0].mxu0
  %v2123 = vadd.f32 0.0, %v2122
  %v2124 = vpop.f32.mrb[0].mxu0
  %v2125 = vpop.f32.mrb[0].mxu0
  %v2126 = vadd.f32 0.0, %v2125
  %v2127 = vpop.f32.mrb[0].mxu0
  %2128 = vmatprep.mubr.bf16.mxu0 %v1366
  %2129 = vmatmul.mubr.bf16.gmra.mrb[0].mxu0 %v1365
  %v2130 = vpop.f32.mrb[0].mxu0
  %v2131 = vadd.f32 0.0, %v2130
  %v2132 = vpop.f32.mrb[0].mxu0
  %v2133 = vpop.f32.mrb[0].mxu0
  %v2134 = vadd.f32 0.0, %v2133
  %v2135 = vpop.f32.mrb[0].mxu0
  %2136 = vmatprep.mubr.bf16.mxu0 %v1369
  %2137 = vmatmul.mubr.bf16.gmra.mrb[0].mxu0 %v1368
  %v2138 = vpop.f32.mrb[0].mxu0
  %v2139 = vadd.f32 0.0, %v2138
  %v2140 = vpop.f32.mrb[0].mxu0
  %v2141 = vpop.f32.mrb[0].mxu0
  %v2142 = vadd.f32 0.0, %v2141
  %v2143 = vpop.f32.mrb[0].mxu0
  %2144 = vmatprep.mubr.bf16.mxu0 %v1372
  %2145 = vmatmul.mubr.bf16.gmra.mrb[0].mxu0 %v1371
  %v2146 = vpop.f32.mrb[0].mxu0
  %v2147 = vadd.f32 0.0, %v2146
  %v2148 = vpop.f32.mrb[0].mxu0
  %v2149 = vpop.f32.mrb[0].mxu0
  %v2150 = vadd.f32 0.0, %v2149
  %v2151 = vpop.f32.mrb[0].mxu0
  %2152 = vmatprep.mubr.bf16.mxu0 %v1375
  %2153 = vmatmul.mubr.bf16.gmra.mrb[0].mxu0 %v1374
  %v2154 = vpop.f32.mrb[0].mxu0
  %v2155 = vadd.f32 0.0, %v2154
  %v2156 = vpop.f32.mrb[0].mxu0
  %v2157 = vpop.f32.mrb[0].mxu0
  %v2158 = vadd.f32 0.0, %v2157
  %v2159 = vpop.f32.mrb[0].mxu0
  %2160 = vmatprep.mubr.bf16.mxu0 %v1378
  %2161 = vmatmul.mubr.bf16.gmra.mrb[0].mxu0 %v1377
  %v2162 = vpop.f32.mrb[0].mxu0
  %v2163 = vadd.f32 0.0, %v2162
  %v2164 = vpop.f32.mrb[0].mxu0
  %v2165 = vpop.f32.mrb[0].mxu0
  %v2166 = vadd.f32 0.0, %v2165
  %v2167 = vpop.f32.mrb[0].mxu0
  %2168 = vmatprep.mubr.bf16.mxu0 %v1381
  %2169 = vmatmul.mubr.bf16.gmra.mrb[0].mxu0 %v1380
  %v2170 = vpop.f32.mrb[0].mxu0
  %v2171 = vadd.f32 0.0, %v2170
  %v2172 = vpop.f32.mrb[0].mxu0
  %v2173 = vpop.f32.mrb[0].mxu0
  %v2174 = vadd.f32 0.0, %v2173
  %v2175 = vpop.f32.mrb[0].mxu0
  %2176 = vmatprep.mubr.bf16.mxu0 %v1384
  %2177 = vmatmul.mubr.bf16.gmra.mrb[0].mxu0 %v1383
  %v2178 = vpop.f32.mrb[0].mxu0
  %v2179 = vadd.f32 0.0, %v2178
  %v2180 = vpop.f32.mrb[0].mxu0
  %v2181 = vpop.f32.mrb[0].mxu0
  %v2182 = vadd.f32 0.0, %v2181
  %v2183 = vpop.f32.mrb[0].mxu0
  %2184 = vmatprep.mubr.bf16.mxu0 %v1387
  %2185 = vmatmul.mubr.bf16.gmra.mrb[0].mxu0 %v1386
  %v2186 = vpop.f32.mrb[0].mxu0
  %v2187 = vadd.f32 0.0, %v2186
  %v2188 = vpop.f32.mrb[0].mxu0
  %v2189 = vpop.f32.mrb[0].mxu0
  %v2190 = vadd.f32 0.0, %v2189
  %v2191 = vpop.f32.mrb[0].mxu0
  %2192 = vmatprep.mubr.bf16.mxu0 %v1390
  %2193 = vmatmul.mubr.bf16.gmra.mrb[0].mxu0 %v1389
  %v2194 = vpop.f32.mrb[0].mxu0
  %v2195 = vadd.f32 0.0, %v2194
  %v2196 = vpop.f32.mrb[0].mxu0
  %v2197 = vpop.f32.mrb[0].mxu0
  %v2198 = vadd.f32 0.0, %v2197
  %v2199 = vpop.f32.mrb[0].mxu0
  %2200 = vmatprep.mubr.bf16.mxu0 %v1393
  %2201 = vmatmul.mubr.bf16.gmra.mrb[0].mxu0 %v1392
  %v2202 = vpop.f32.mrb[0].mxu0
  %v2203 = vadd.f32 0.0, %v2202
  %v2204 = vpop.f32.mrb[0].mxu0
  %v2205 = vpop.f32.mrb[0].mxu0
  %v2206 = vadd.f32 0.0, %v2205
  %v2207 = vpop.f32.mrb[0].mxu0
  %2208 = vmatprep.mubr.bf16.mxu0 %v1396
  %2209 = vmatmul.mubr.bf16.gmra.mrb[0].mxu0 %v1395
  %v2210 = vpop.f32.mrb[0].mxu0
  %v2211 = vadd.f32 0.0, %v2210
  %v2212 = vpop.f32.mrb[0].mxu0
  %v2213 = vpop.f32.mrb[0].mxu0
  %v2214 = vadd.f32 0.0, %v2213
  %v2215 = vpop.f32.mrb[0].mxu0
  %2216 = vmatprep.mubr.bf16.mxu0 %v1399
  %2217 = vmatmul.mubr.bf16.gmra.mrb[0].mxu0 %v1398
  %v2218 = vpop.f32.mrb[0].mxu0
  %v2219 = vadd.f32 0.0, %v2218
  %v2220 = vpop.f32.mrb[0].mxu0
  %v2221 = vpop.f32.mrb[0].mxu0
  %v2222 = vadd.f32 0.0, %v2221
  %v2223 = vpop.f32.mrb[0].mxu0
  %2224 = vmatprep.mubr.bf16.mxu0 %v1402
  %2225 = vmatmul.mubr.bf16.gmra.mrb[0].mxu0 %v1401
  %v2226 = vpop.f32.mrb[0].mxu0
  %v2227 = vadd.f32 0.0, %v2226
  %v2228 = vpop.f32.mrb[0].mxu0
  %v2229 = vpop.f32.mrb[0].mxu0
  %v2230 = vadd.f32 0.0, %v2229
  %v2231 = vpop.f32.mrb[0].mxu0
  %2232 = vmatprep.mubr.bf16.mxu0 %v1405
  %2233 = vmatmul.mubr.bf16.gmra.mrb[0].mxu0 %v1404
  %v2234 = vpop.f32.mrb[0].mxu0
  %v2235 = vadd.f32 0.0, %v2234
  %v2236 = vpop.f32.mrb[0].mxu0
  %v2237 = vpop.f32.mrb[0].mxu0
  %v2238 = vadd.f32 0.0, %v2237
  %v2239 = vpop.f32.mrb[0].mxu0
  %2240 = vmatprep.mubr.bf16.mxu0 %v1408
  %2241 = vmatmul.mubr.bf16.gmra.mrb[0].mxu0 %v1407
  %v2242 = vpop.f32.mrb[0].mxu0
  %v2243 = vadd.f32 0.0, %v2242
  %v2244 = vpop.f32.mrb[0].mxu0
  %v2245 = vpop.f32.mrb[0].mxu0
  %v2246 = vadd.f32 0.0, %v2245
  %v2247 = vpop.f32.mrb[0].mxu0
  %2248 = vmatprep.mubr.bf16.mxu0 %v1411
  %2249 = vmatmul.mubr.bf16.gmra.mrb[0].mxu0 %v1410
  %v2250 = vpop.f32.mrb[0].mxu0
  %v2251 = vadd.f32 0.0, %v2250
  %v2252 = vpop.f32.mrb[0].mxu0
  %v2253 = vpop.f32.mrb[0].mxu0
  %v2254 = vadd.f32 0.0, %v2253
  %v2255 = vpop.f32.mrb[0].mxu0
  %2256 = vmatprep.mubr.bf16.mxu0 %v1414
  %2257 = vmatmul.mubr.bf16.gmra.mrb[0].mxu0 %v1413
  %v2258 = vpop.f32.mrb[0].mxu0
  %v2259 = vadd.f32 0.0, %v2258
  %v2260 = vpop.f32.mrb[0].mxu0
  %v2261 = vpop.f32.mrb[0].mxu0
  %v2262 = vadd.f32 0.0, %v2261
  %v2263 = vpop.f32.mrb[0].mxu0
  %2264 = vmatprep.mubr.bf16.mxu0 %v1417
  %2265 = vmatmul.mubr.bf16.gmra.mrb[0].mxu0 %v1416
  %v2266 = vpop.f32.mrb[0].mxu0
  %v2267 = vadd.f32 0.0, %v2266
  %v2268 = vpop.f32.mrb[0].mxu0
  %v2269 = vpop.f32.mrb[0].mxu0
  %v2270 = vadd.f32 0.0, %v2269
  %v2271 = vpop.f32.mrb[0].mxu0
  %2272 = vmatprep.mubr.bf16.mxu0 %v1420
  %2273 = vmatmul.mubr.bf16.gmra.mrb[0].mxu0 %v1419
  %v2274 = vpop.f32.mrb[0].mxu0
  %v2275 = vadd.f32 0.0, %v2274
  %v2276 = vpop.f32.mrb[0].mxu0
  %v2277 = vpop.f32.mrb[0].mxu0
  %v2278 = vadd.f32 0.0, %v2277
  %v2279 = vpop.f32.mrb[0].mxu0
  %2280 = vmatprep.mubr.bf16.mxu0 %v1423
  %2281 = vmatmul.mubr.bf16.gmra.mrb[0].mxu0 %v1422
  %v2282 = vpop.f32.mrb[0].mxu0
  %v2283 = vadd.f32 0.0, %v2282
  %v2284 = vpop.f32.mrb[0].mxu0
  %v2285 = vpop.f32.mrb[0].mxu0
  %v2286 = vadd.f32 0.0, %v2285
  %v2287 = vpop.f32.mrb[0].mxu0
  %2288 = vmatprep.mubr.bf16.mxu0 %v1426
  %2289 = vmatmul.mubr.bf16.gmra.mrb[0].mxu0 %v1425
  %v2290 = vpop.f32.mrb[0].mxu0
  %v2291 = vadd.f32 0.0, %v2290
  %v2292 = vpop.f32.mrb[0].mxu0
  %v2293 = vpop.f32.mrb[0].mxu0
  %v2294 = vadd.f32 0.0, %v2293
  %v2295 = vpop.f32.mrb[0].mxu0
  %2296 = vmatprep.mubr.bf16.mxu0 %v1429
  %2297 = vmatmul.mubr.bf16.gmra.mrb[0].mxu0 %v1428
  %v2298 = vpop.f32.mrb[0].mxu0
  %v2299 = vadd.f32 0.0, %v2298
  %v2300 = vpop.f32.mrb[0].mxu0
  %v2301 = vpop.f32.mrb[0].mxu0
  %v2302 = vadd.f32 0.0, %v2301
  %v2303 = vpop.f32.mrb[0].mxu0
  %2304 = vmatprep.mubr.bf16.mxu0 %v1432
  %2305 = vmatmul.mubr.bf16.gmra.mrb[0].mxu0 %v1431
  %v2306 = vpop.f32.mrb[0].mxu0
  %v2307 = vadd.f32 0.0, %v2306
  %v2308 = vpop.f32.mrb[0].mxu0
  %v2309 = vpop.f32.mrb[0].mxu0
  %v2310 = vadd.f32 0.0, %v2309
  %v2311 = vpop.f32.mrb[0].mxu0
  %2312 = vmatprep.mubr.bf16.mxu0 %v1435
  %2313 = vmatmul.mubr.bf16.gmra.mrb[0].mxu0 %v1434
  %v2314 = vpop.f32.mrb[0].mxu0
  %v2315 = vadd.f32 0.0, %v2314
  %v2316 = vpop.f32.mrb[0].mxu0
  %v2317 = vpop.f32.mrb[0].mxu0
  %v2318 = vadd.f32 0.0, %v2317
  %v2319 = vpop.f32.mrb[0].mxu0
  %2320 = vmatprep.mubr.bf16.mxu0 %v1438
  %2321 = vmatmul.mubr.bf16.gmra.mrb[0].mxu0 %v1437
  %v2322 = vpop.f32.mrb[0].mxu0
  %v2323 = vadd.f32 0.0, %v2322
  %v2324 = vpop.f32.mrb[0].mxu0
  %v2325 = vpop.f32.mrb[0].mxu0
  %v2326 = vadd.f32 0.0, %v2325
  %v2327 = vpop.f32.mrb[0].mxu0
  %2328 = vmatprep.mubr.bf16.mxu0 %v1441
  %2329 = vmatmul.mubr.bf16.gmra.mrb[0].mxu0 %v1440
  %v2330 = vpop.f32.mrb[0].mxu0
  %v2331 = vadd.f32 0.0, %v2330
  %v2332 = vpop.f32.mrb[0].mxu0
  %v2333 = vpop.f32.mrb[0].mxu0
  %v2334 = vadd.f32 0.0, %v2333
  %v2335 = vpop.f32.mrb[0].mxu0
  %2336 = vmatprep.mubr.bf16.mxu0 %v1444
  %2337 = vmatmul.mubr.bf16.gmra.mrb[0].mxu0 %v1443
  %v2338 = vpop.f32.mrb[0].mxu0
  %v2339 = vadd.f32 0.0, %v2338
  %v2340 = vpop.f32.mrb[0].mxu0
  %v2341 = vpop.f32.mrb[0].mxu0
  %v2342 = vadd.f32 0.0, %v2341
  %v2343 = vpop.f32.mrb[0].mxu0
  %2344 = vmatprep.mubr.bf16.mxu0 %v1447
  %2345 = vmatmul.mubr.bf16.gmra.mrb[0].mxu0 %v1446
  %v2346 = vpop.f32.mrb[0].mxu0
  %v2347 = vadd.f32 0.0, %v2346
  %v2348 = vpop.f32.mrb[0].mxu0
  %v2349 = vpop.f32.mrb[0].mxu0
  %v2350 = vadd.f32 0.0, %v2349
  %v2351 = vpop.f32.mrb[0].mxu0
  %2352 = vmatprep.mubr.bf16.mxu0 %v1450
  %2353 = vmatmul.mubr.bf16.gmra.mrb[0].mxu0 %v1449
  %v2354 = vpop.f32.mrb[0].mxu0
  %v2355 = vadd.f32 0.0, %v2354
  %v2356 = vpop.f32.mrb[0].mxu0
  %v2357 = vpop.f32.mrb[0].mxu0
  %v2358 = vadd.f32 0.0, %v2357
  %v2359 = vpop.f32.mrb[0].mxu0
  %2360 = vmatprep.mubr.bf16.mxu0 %v1453
  %2361 = vmatmul.mubr.bf16.gmra.mrb[0].mxu0 %v1452
  %v2362 = vpop.f32.mrb[0].mxu0
  %v2363 = vadd.f32 0.0, %v2362
  %v2364 = vpop.f32.mrb[0].mxu0
  %v2365 = vpop.f32.mrb[0].mxu0
  %v2366 = vadd.f32 0.0, %v2365
  %v2367 = vpop.f32.mrb[0].mxu0
  %2368 = vmatprep.mubr.bf16.mxu0 %v1456
  %2369 = vmatmul.mubr.bf16.gmra.mrb[0].mxu0 %v1455
  %v2370 = vpop.f32.mrb[0].mxu0
  %v2371 = vadd.f32 0.0, %v2370
  %v2372 = vpop.f32.mrb[0].mxu0
  %v2373 = vpop.f32.mrb[0].mxu0
  %v2374 = vadd.f32 0.0, %v2373
  %v2375 = vpop.f32.mrb[0].mxu0
  %2376 = vmatprep.mubr.bf16.mxu0 %v1459
  %2377 = vmatmul.mubr.bf16.gmra.mrb[0].mxu0 %v1458
  %v2378 = vpop.f32.mrb[0].mxu0
  %v2379 = vadd.f32 0.0, %v2378
  %v2380 = vpop.f32.mrb[0].mxu0
  %v2381 = vpop.f32.mrb[0].mxu0
  %v2382 = vadd.f32 0.0, %v2381
  %v2383 = vpop.f32.mrb[0].mxu0
  %2384 = vmatprep.mubr.bf16.mxu0 %v1462
  %2385 = vmatmul.mubr.bf16.gmra.mrb[0].mxu0 %v1461
  %v2386 = vpop.f32.mrb[0].mxu0
  %v2387 = vadd.f32 0.0, %v2386
  %v2388 = vpop.f32.mrb[0].mxu0
  %v2389 = vpop.f32.mrb[0].mxu0
  %v2390 = vadd.f32 0.0, %v2389
  %v2391 = vpop.f32.mrb[0].mxu0
  %2392 = vmatprep.mubr.bf16.mxu0 %v1465
  %2393 = vmatmul.mubr.bf16.gmra.mrb[0].mxu0 %v1464
  %v2394 = vpop.f32.mrb[0].mxu0
  %v2395 = vadd.f32 0.0, %v2394
  %v2396 = vpop.f32.mrb[0].mxu0
  %v2397 = vpop.f32.mrb[0].mxu0
  %v2398 = vadd.f32 0.0, %v2397
  %v2399 = vpop.f32.mrb[0].mxu0
  %2400 = vmatprep.mubr.bf16.mxu0 %v1468
  %2401 = vmatmul.mubr.bf16.gmra.mrb[0].mxu0 %v1467
  %v2402 = vpop.f32.mrb[0].mxu0
  %v2403 = vadd.f32 0.0, %v2402
  %v2404 = vpop.f32.mrb[0].mxu0
  %v2405 = vpop.f32.mrb[0].mxu0
  %v2406 = vadd.f32 0.0, %v2405
  %v2407 = vpop.f32.mrb[0].mxu0
  %2408 = vmatprep.mubr.bf16.mxu0 %v1471
  %2409 = vmatmul.mubr.bf16.gmra.mrb[0].mxu0 %v1470
  %v2410 = vpop.f32.mrb[0].mxu0
  %v2411 = vadd.f32 0.0, %v2410
  %v2412 = vpop.f32.mrb[0].mxu0
  %v2413 = vpop.f32.mrb[0].mxu0
  %v2414 = vadd.f32 0.0, %v2413
  %v2415 = vpop.f32.mrb[0].mxu0
  %2416 = vmatprep.mubr.bf16.mxu0 %v1474
  %2417 = vmatmul.mubr.bf16.gmra.mrb[0].mxu0 %v1473
  %v2418 = vpop.f32.mrb[0].mxu0
  %v2419 = vadd.f32 0.0, %v2418
  %v2420 = vpop.f32.mrb[0].mxu0
  %v2421 = vpop.f32.mrb[0].mxu0
  %v2422 = vadd.f32 0.0, %v2421
  %v2423 = vpop.f32.mrb[0].mxu0
  %2424 = vmatprep.mubr.bf16.mxu0 %v1477
  %2425 = vmatmul.mubr.bf16.gmra.mrb[0].mxu0 %v1476
  %v2426 = vpop.f32.mrb[0].mxu0
  %v2427 = vadd.f32 0.0, %v2426
  %v2428 = vpop.f32.mrb[0].mxu0
  %v2429 = vpop.f32.mrb[0].mxu0
  %v2430 = vadd.f32 0.0, %v2429
  %v2431 = vpop.f32.mrb[0].mxu0
  %2432 = vmatprep.mubr.bf16.mxu0 %v1480
  %2433 = vmatmul.mubr.bf16.gmra.mrb[0].mxu0 %v1479
  %v2434 = vpop.f32.mrb[0].mxu0
  %v2435 = vadd.f32 0.0, %v2434
  %v2436 = vpop.f32.mrb[0].mxu0
  %v2437 = vpop.f32.mrb[0].mxu0
  %v2438 = vadd.f32 0.0, %v2437
  %v2439 = vpop.f32.mrb[0].mxu0
  %2440 = vmatprep.mubr.bf16.mxu0 %v1483
  %2441 = vmatmul.mubr.bf16.gmra.mrb[0].mxu0 %v1482
  %v2442 = vpop.f32.mrb[0].mxu0
  %v2443 = vadd.f32 0.0, %v2442
  %v2444 = vpop.f32.mrb[0].mxu0
  %v2445 = vpop.f32.mrb[0].mxu0
  %v2446 = vadd.f32 0.0, %v2445
  %v2447 = vpop.f32.mrb[0].mxu0
  %2448 = vmatprep.mubr.bf16.mxu0 %v1486
  %2449 = vmatmul.mubr.bf16.gmra.mrb[0].mxu0 %v1485
  %v2450 = vpop.f32.mrb[0].mxu0
  %v2451 = vadd.f32 0.0, %v2450
  %v2452 = vpop.f32.mrb[0].mxu0
  %v2453 = vpop.f32.mrb[0].mxu0
  %v2454 = vadd.f32 0.0, %v2453
  %v2455 = vpop.f32.mrb[0].mxu0
  %2456 = vmatprep.mubr.bf16.mxu0 %v1489
  %2457 = vmatmul.mubr.bf16.gmra.mrb[0].mxu0 %v1488
  %v2458 = vpop.f32.mrb[0].mxu0
  %v2459 = vadd.f32 0.0, %v2458
  %v2460 = vpop.f32.mrb[0].mxu0
  %v2461 = vpop.f32.mrb[0].mxu0
  %v2462 = vadd.f32 0.0, %v2461
  %v2463 = vpop.f32.mrb[0].mxu0
  %2464 = vmatprep.mubr.bf16.mxu0 %v1492
  %2465 = vmatmul.mubr.bf16.gmra.mrb[0].mxu0 %v1491
  %v2466 = vpop.f32.mrb[0].mxu0
  %v2467 = vadd.f32 0.0, %v2466
  %v2468 = vpop.f32.mrb[0].mxu0
  %v2469 = vpop.f32.mrb[0].mxu0
  %v2470 = vadd.f32 0.0, %v2469
  %v2471 = vpop.f32.mrb[0].mxu0
  %2472 = vmatprep.mubr.bf16.mxu0 %v1495
  %2473 = vmatmul.mubr.bf16.gmra.mrb[0].mxu0 %v1494
  %v2474 = vpop.f32.mrb[0].mxu0
  %v2475 = vadd.f32 0.0, %v2474
  %v2476 = vpop.f32.mrb[0].mxu0
  %v2477 = vpop.f32.mrb[0].mxu0
  %v2478 = vadd.f32 0.0, %v2477
  %v2479 = vpop.f32.mrb[0].mxu0
  %2480 = vmatprep.mubr.bf16.mxu0 %v1498
  %2481 = vmatmul.mubr.bf16.gmra.mrb[0].mxu0 %v1497
  %v2482 = vpop.f32.mrb[0].mxu0
  %v2483 = vadd.f32 0.0, %v2482
  %v2484 = vpop.f32.mrb[0].mxu0
  %v2485 = vpop.f32.mrb[0].mxu0
  %v2486 = vadd.f32 0.0, %v2485
  %v2487 = vpop.f32.mrb[0].mxu0
  %2488 = vmatprep.mubr.bf16.mxu0 %v1501
  %2489 = vmatmul.mubr.bf16.gmra.mrb[0].mxu0 %v1500
  %v2490 = vpop.f32.mrb[0].mxu0
  %v2491 = vadd.f32 0.0, %v2490
  %v2492 = vpop.f32.mrb[0].mxu0
  %v2493 = vpop.f32.mrb[0].mxu0
  %v2494 = vadd.f32 0.0, %v2493
  %v2495 = vpop.f32.mrb[0].mxu0
  %2496 = vmatprep.mubr.bf16.mxu0 %v1504
  %2497 = vmatmul.mubr.bf16.gmra.mrb[0].mxu0 %v1503
  %v2498 = vpop.f32.mrb[0].mxu0
  %v2499 = vadd.f32 0.0, %v2498
  %v2500 = vpop.f32.mrb[0].mxu0
  %v2501 = vpop.f32.mrb[0].mxu0
  %v2502 = vadd.f32 0.0, %v2501
  %v2503 = vpop.f32.mrb[0].mxu0
  %2504 = vmatprep.mubr.bf16.mxu0 %v1507
  %2505 = vmatmul.mubr.bf16.gmra.mrb[0].mxu0 %v1506
  %v2506 = vpop.f32.mrb[0].mxu0
  %v2507 = vadd.f32 0.0, %v2506
  %v2508 = vpop.f32.mrb[0].mxu0
  %v2509 = vpop.f32.mrb[0].mxu0
  %v2510 = vadd.f32 0.0, %v2509
  %v2511 = vpop.f32.mrb[0].mxu0
  %2512 = vmatprep.mubr.bf16.mxu0 %v1510
  %2513 = vmatmul.mubr.bf16.gmra.mrb[0].mxu0 %v1509
  %v2514 = vpop.f32.mrb[0].mxu0
  %v2515 = vadd.f32 0.0, %v2514
  %v2516 = vpop.f32.mrb[0].mxu0
  %v2517 = vpop.f32.mrb[0].mxu0
  %v2518 = vadd.f32 0.0, %v2517
  %v2519 = vpop.f32.mrb[0].mxu0
  %2520 = vmatprep.mubr.bf16.mxu0 %v1513
  %2521 = vmatmul.mubr.bf16.gmra.mrb[0].mxu0 %v1512
  %v2522 = vpop.f32.mrb[0].mxu0
  %v2523 = vadd.f32 0.0, %v2522
  %v2524 = vpop.f32.mrb[0].mxu0
  %v2525 = vpop.f32.mrb[0].mxu0
  %v2526 = vadd.f32 0.0, %v2525
  %v2527 = vpop.f32.mrb[0].mxu0
  %2528 = vmatprep.mubr.bf16.mxu0 %v1516
  %2529 = vmatmul.mubr.bf16.gmra.mrb[0].mxu0 %v1515
  %v2530 = vpop.f32.mrb[0].mxu0
  %v2531 = vadd.f32 0.0, %v2530
  %v2532 = vpop.f32.mrb[0].mxu0
  %v2533 = vpop.f32.mrb[0].mxu0
  %v2534 = vadd.f32 0.0, %v2533
  %v2535 = vpop.f32.mrb[0].mxu0
  %2536 = vmatprep.mubr.bf16.mxu0 %v1519
  %2537 = vmatmul.mubr.bf16.gmra.mrb[0].mxu0 %v1518
  %v2538 = vpop.f32.mrb[0].mxu0
  %v2539 = vadd.f32 0.0, %v2538
  %v2540 = vpop.f32.mrb[0].mxu0
  %v2541 = vpop.f32.mrb[0].mxu0
  %v2542 = vadd.f32 0.0, %v2541
  %v2543 = vpop.f32.mrb[0].mxu0
  %2544 = vmatprep.mubr.bf16.mxu0 %v1522
  %2545 = vmatmul.mubr.bf16.gmra.mrb[0].mxu0 %v1521
  %v2546 = vpop.f32.mrb[0].mxu0
  %v2547 = vadd.f32 0.0, %v2546
  %v2548 = vpop.f32.mrb[0].mxu0
  %v2549 = vpop.f32.mrb[0].mxu0
  %v2550 = vadd.f32 0.0, %v2549
  %v2551 = vpop.f32.mrb[0].mxu0
  %2552 = vmatprep.mubr.bf16.mxu0 %v1525
  %2553 = vmatmul.mubr.bf16.gmra.mrb[0].mxu0 %v1524
  %v2554 = vpop.f32.mrb[0].mxu0
  %v2555 = vadd.f32 0.0, %v2554
  %v2556 = vpop.f32.mrb[0].mxu0
  %v2557 = vpop.f32.mrb[0].mxu0
  %v2558 = vadd.f32 0.0, %v2557
  %v2559 = vpop.f32.mrb[0].mxu0
  %2560 = vmatprep.mubr.bf16.mxu0 %v1528
  %2561 = vmatmul.mubr.bf16.gmra.mrb[0].mxu0 %v1527
  %v2562 = vpop.f32.mrb[0].mxu0
  %v2563 = vadd.f32 0.0, %v2562
  %v2564 = vpop.f32.mrb[0].mxu0
  %v2565 = vpop.f32.mrb[0].mxu0
  %v2566 = vadd.f32 0.0, %v2565
  %v2567 = vpop.f32.mrb[0].mxu0
  %2568 = vmatprep.mubr.bf16.mxu0 %v1531
  %2569 = vmatmul.mubr.bf16.gmra.mrb[0].mxu0 %v1530
  %v2570 = vpop.f32.mrb[0].mxu0
  %v2571 = vadd.f32 0.0, %v2570
  %v2572 = vpop.f32.mrb[0].mxu0
  %v2573 = vpop.f32.mrb[0].mxu0
  %v2574 = vadd.f32 0.0, %v2573
  %v2575 = vpop.f32.mrb[0].mxu0
  %2576 = vmatprep.mubr.bf16.mxu0 %v1534
  %2577 = vmatmul.mubr.bf16.gmra.mrb[0].mxu0 %v1533
  %v2578 = vpop.f32.mrb[0].mxu0
  %v2579 = vadd.f32 0.0, %v2578
  %v2580 = vpop.f32.mrb[0].mxu0
  %v2581 = vpop.f32.mrb[0].mxu0
  %v2582 = vadd.f32 0.0, %v2581
  %v2583 = vpop.f32.mrb[0].mxu0
  %2584 = vmatprep.mubr.bf16.mxu0 %v1537
  %2585 = vmatmul.mubr.bf16.gmra.mrb[0].mxu0 %v1536
  %v2586 = vpop.f32.mrb[0].mxu0
  %v2587 = vadd.f32 0.0, %v2586
  %v2588 = vpop.f32.mrb[0].mxu0
  %v2589 = vpop.f32.mrb[0].mxu0
  %v2590 = vadd.f32 0.0, %v2589
  %v2591 = vpop.f32.mrb[0].mxu0
  %2592 = vmatprep.mubr.bf16.mxu0 %v1540
  %2593 = vmatmul.mubr.bf16.gmra.mrb[0].mxu0 %v1539
  %v2594 = vpop.f32.mrb[0].mxu0
  %v2595 = vadd.f32 0.0, %v2594
  %v2596 = vpop.f32.mrb[0].mxu0
  %v2597 = vpop.f32.mrb[0].mxu0
  %v2598 = vadd.f32 0.0, %v2597
  %v2599 = vpop.f32.mrb[0].mxu0
  %2600 = vmatprep.mubr.bf16.mxu0 %v1543
  %2601 = vmatmul.mubr.bf16.gmra.mrb[0].mxu0 %v1542
  %v2602 = vpop.f32.mrb[0].mxu0
  %v2603 = vadd.f32 0.0, %v2602
  %v2604 = vpop.f32.mrb[0].mxu0
  %v2605 = vpop.f32.mrb[0].mxu0
  %v2606 = vadd.f32 0.0, %v2605
  %v2607 = vpop.f32.mrb[0].mxu0
  %2608 = vmatprep.mubr.bf16.mxu0 %v1546
  %2609 = vmatmul.mubr.bf16.gmra.mrb[0].mxu0 %v1545
  %v2610 = vpop.f32.mrb[0].mxu0
  %v2611 = vadd.f32 0.0, %v2610
  %v2612 = vpop.f32.mrb[0].mxu0
  %v2613 = vpop.f32.mrb[0].mxu0
  %v2614 = vadd.f32 0.0, %v2613
  %v2615 = vpop.f32.mrb[0].mxu0
  %2616 = vmatprep.mubr.bf16.mxu0 %v1549
  %2617 = vmatmul.mubr.bf16.gmra.mrb[0].mxu0 %v1548
  %v2618 = vpop.f32.mrb[0].mxu0
  %v2619 = vadd.f32 0.0, %v2618
  %v2620 = vpop.f32.mrb[0].mxu0
  %v2621 = vpop.f32.mrb[0].mxu0
  %v2622 = vadd.f32 0.0, %v2621
  %v2623 = vpop.f32.mrb[0].mxu0
  %2624 = vmatprep.mubr.bf16.mxu0 %v1552
  %2625 = vmatmul.mubr.bf16.gmra.mrb[0].mxu0 %v1551
  %v2626 = vpop.f32.mrb[0].mxu0
  %v2627 = vadd.f32 0.0, %v2626
  %v2628 = vpop.f32.mrb[0].mxu0
  %v2629 = vpop.f32.mrb[0].mxu0
  %v2630 = vadd.f32 0.0, %v2629
  %v2631 = vpop.f32.mrb[0].mxu0
  %2632 = vmatprep.mubr.bf16.mxu0 %v1555
  %2633 = vmatmul.mubr.bf16.gmra.mrb[0].mxu0 %v1554
  %v2634 = vpop.f32.mrb[0].mxu0
  %v2635 = vadd.f32 0.0, %v2634
  %v2636 = vpop.f32.mrb[0].mxu0
  %v2637 = vpop.f32.mrb[0].mxu0
  %v2638 = vadd.f32 0.0, %v2637
  %v2639 = vpop.f32.mrb[0].mxu0
  %2640 = vmatprep.mubr.bf16.mxu0 %v1558
  %2641 = vmatmul.mubr.bf16.gmra.mrb[0].mxu0 %v1557
  %v2642 = vpop.f32.mrb[0].mxu0
  %v2643 = vadd.f32 0.0, %v2642
  %v2644 = vpop.f32.mrb[0].mxu0
  %v2645 = vpop.f32.mrb[0].mxu0
  %v2646 = vadd.f32 0.0, %v2645
  %v2647 = vpop.f32.mrb[0].mxu0
  %2648 = vmatprep.mubr.bf16.mxu0 %v1561
  %2649 = vmatmul.mubr.bf16.gmra.mrb[0].mxu0 %v1560
  %v2650 = vpop.f32.mrb[0].mxu0
  %v2651 = vadd.f32 0.0, %v2650
  %v2652 = vpop.f32.mrb[0].mxu0
  %v2653 = vpop.f32.mrb[0].mxu0
  %v2654 = vadd.f32 0.0, %v2653
  %v2655 = vpop.f32.mrb[0].mxu0
  %2656 = vmatprep.mubr.bf16.mxu0 %v1564
  %2657 = vmatmul.mubr.bf16.gmra.mrb[0].mxu0 %v1563
  %v2658 = vpop.f32.mrb[0].mxu0
  %v2659 = vadd.f32 0.0, %v2658
  %v2660 = vpop.f32.mrb[0].mxu0
  %v2661 = vpop.f32.mrb[0].mxu0
  %v2662 = vadd.f32 0.0, %v2661
  %v2663 = vpop.f32.mrb[0].mxu0
  %2664 = vmatprep.mubr.bf16.mxu0 %v1567
  %2665 = vmatmul.mubr.bf16.gmra.mrb[0].mxu0 %v1566
  %v2666 = vpop.f32.mrb[0].mxu0
  %v2667 = vadd.f32 0.0, %v2666
  %v2668 = vpop.f32.mrb[0].mxu0
  %v2669 = vpop.f32.mrb[0].mxu0
  %v2670 = vadd.f32 0.0, %v2669
  %v2671 = vpop.f32.mrb[0].mxu0
  %2672 = vmatprep.mubr.bf16.mxu0 %v1570
  %2673 = vmatmul.mubr.bf16.gmra.mrb[0].mxu0 %v1569
  %v2674 = vpop.f32.mrb[0].mxu0
  %v2675 = vadd.f32 0.0, %v2674
  %v2676 = vpop.f32.mrb[0].mxu0
  %v2677 = vpop.f32.mrb[0].mxu0
  %v2678 = vadd.f32 0.0, %v2677
  %v2679 = vpop.f32.mrb[0].mxu0
  %2680 = vmatprep.mubr.bf16.mxu0 %v1573
  %2681 = vmatmul.mubr.bf16.gmra.mrb[0].mxu0 %v1572
  %v2682 = vpop.f32.mrb[0].mxu0
  %v2683 = vadd.f32 0.0, %v2682
  %v2684 = vpop.f32.mrb[0].mxu0
  %v2685 = vpop.f32.mrb[0].mxu0
  %v2686 = vadd.f32 0.0, %v2685
  %v2687 = vpop.f32.mrb[0].mxu0
  %2688 = vmatprep.mubr.bf16.mxu0 %v1576
  %2689 = vmatmul.mubr.bf16.gmra.mrb[0].mxu0 %v1575
  %v2690 = vpop.f32.mrb[0].mxu0
  %v2691 = vadd.f32 0.0, %v2690
  %v2692 = vpop.f32.mrb[0].mxu0
  %v2693 = vpop.f32.mrb[0].mxu0
  %v2694 = vadd.f32 0.0, %v2693
  %v2695 = vpop.f32.mrb[0].mxu0
  %2696 = vmatprep.mubr.bf16.mxu0 %v1579
  %2697 = vmatmul.mubr.bf16.gmra.mrb[0].mxu0 %v1578
  %v2698 = vpop.f32.mrb[0].mxu0
  %v2699 = vadd.f32 0.0, %v2698
  %v2700 = vpop.f32.mrb[0].mxu0
  %v2701 = vpop.f32.mrb[0].mxu0
  %v2702 = vadd.f32 0.0, %v2701
  %v2703 = vpop.f32.mrb[0].mxu0
  %2704 = vmatprep.mubr.bf16.mxu0 %v1582
  %2705 = vmatmul.mubr.bf16.gmra.mrb[0].mxu0 %v1581
  %v2706 = vpop.f32.mrb[0].mxu0
  %v2707 = vadd.f32 0.0, %v2706
  %v2708 = vpop.f32.mrb[0].mxu0
  %v2709 = vpop.f32.mrb[0].mxu0
  %v2710 = vadd.f32 0.0, %v2709
  %v2711 = vpop.f32.mrb[0].mxu0
  %2712 = vmatprep.mubr.bf16.mxu0 %v1585
  %2713 = vmatmul.mubr.bf16.gmra.mrb[0].mxu0 %v1584
  %v2714 = vpop.f32.mrb[0].mxu0
  %v2715 = vadd.f32 0.0, %v2714
  %v2716 = vpop.f32.mrb[0].mxu0
  %v2717 = vpop.f32.mrb[0].mxu0
  %v2718 = vadd.f32 0.0, %v2717
  %v2719 = vpop.f32.mrb[0].mxu0
  %2720 = vmatprep.mubr.bf16.mxu0 %v1588
  %2721 = vmatmul.mubr.bf16.gmra.mrb[0].mxu0 %v1587
  %v2722 = vpop.f32.mrb[0].mxu0
  %v2723 = vadd.f32 0.0, %v2722
  %v2724 = vpop.f32.mrb[0].mxu0
  %v2725 = vpop.f32.mrb[0].mxu0
  %v2726 = vadd.f32 0.0, %v2725
  %v2727 = vpop.f32.mrb[0].mxu0
  %2728 = vmatprep.mubr.bf16.mxu0 %v1591
  %2729 = vmatmul.mubr.bf16.gmra.mrb[0].mxu0 %v1590
  %v2730 = vpop.f32.mrb[0].mxu0
  %v2731 = vadd.f32 0.0, %v2730
  %v2732 = vpop.f32.mrb[0].mxu0
  %v2733 = vpop.f32.mrb[0].mxu0
  %v2734 = vadd.f32 0.0, %v2733
  %v2735 = vpop.f32.mrb[0].mxu0
  %2736 = vmatprep.mubr.bf16.mxu0 %v1594
  %2737 = vmatmul.mubr.bf16.gmra.mrb[0].mxu0 %v1593
  %v2738 = vpop.f32.mrb[0].mxu0
  %v2739 = vadd.f32 0.0, %v2738
  %v2740 = vpop.f32.mrb[0].mxu0
  %v2741 = vpop.f32.mrb[0].mxu0
  %v2742 = vadd.f32 0.0, %v2741
  %v2743 = vpop.f32.mrb[0].mxu0
  %2744 = vmatprep.mubr.bf16.mxu0 %v1597
  %2745 = vmatmul.mubr.bf16.gmra.mrb[0].mxu0 %v1596
  %v2746 = vpop.f32.mrb[0].mxu0
  %v2747 = vadd.f32 0.0, %v2746
  %v2748 = vpop.f32.mrb[0].mxu0
  %v2749 = vpop.f32.mrb[0].mxu0
  %v2750 = vadd.f32 0.0, %v2749
  %v2751 = vpop.f32.mrb[0].mxu0
  %2752 = vmatprep.mubr.bf16.mxu0 %v1600
  %2753 = vmatmul.mubr.bf16.gmra.mrb[0].mxu0 %v1599
  %v2754 = vpop.f32.mrb[0].mxu0
  %v2755 = vadd.f32 0.0, %v2754
  %v2756 = vpop.f32.mrb[0].mxu0
  %v2757 = vpop.f32.mrb[0].mxu0
  %v2758 = vadd.f32 0.0, %v2757
  %v2759 = vpop.f32.mrb[0].mxu0
  %2760 = vmatprep.mubr.bf16.mxu0 %v1603
  %2761 = vmatmul.mubr.bf16.gmra.mrb[0].mxu0 %v1602
  %v2762 = vpop.f32.mrb[0].mxu0
  %v2763 = vadd.f32 0.0, %v2762
  %v2764 = vpop.f32.mrb[0].mxu0
  %v2765 = vpop.f32.mrb[0].mxu0
  %v2766 = vadd.f32 0.0, %v2765
  %v2767 = vpop.f32.mrb[0].mxu0
  %2768 = vmatprep.mubr.bf16.mxu0 %v1606
  %2769 = vmatmul.mubr.bf16.gmra.mrb[0].mxu0 %v1605
  %v2770 = vpop.f32.mrb[0].mxu0
  %v2771 = vadd.f32 0.0, %v2770
  %v2772 = vpop.f32.mrb[0].mxu0
  %v2773 = vpop.f32.mrb[0].mxu0
  %v2774 = vadd.f32 0.0, %v2773
  %v2775 = vpop.f32.mrb[0].mxu0
  %2776 = vmatprep.mubr.bf16.mxu0 %v1609
  %2777 = vmatmul.mubr.bf16.gmra.mrb[0].mxu0 %v1608
  %v2778 = vpop.f32.mrb[0].mxu0
  %v2779 = vadd.f32 0.0, %v2778
  %v2780 = vpop.f32.mrb[0].mxu0
  %v2781 = vpop.f32.mrb[0].mxu0
  %v2782 = vadd.f32 0.0, %v2781
  %v2783 = vpop.f32.mrb[0].mxu0
  %2784 = vmatprep.mubr.bf16.mxu0 %v1612
  %2785 = vmatmul.mubr.bf16.gmra.mrb[0].mxu0 %v1611
  %v2786 = vpop.f32.mrb[0].mxu0
  %v2787 = vadd.f32 0.0, %v2786
  %v2788 = vpop.f32.mrb[0].mxu0
  %v2789 = vpop.f32.mrb[0].mxu0
  %v2790 = vadd.f32 0.0, %v2789
  %v2791 = vpop.f32.mrb[0].mxu0
  %2792 = vmatprep.mubr.bf16.mxu0 %v1615
  %2793 = vmatmul.mubr.bf16.gmra.mrb[0].mxu0 %v1614
  %v2794 = vpop.f32.mrb[0].mxu0
  %v2795 = vadd.f32 0.0, %v2794
  %v2796 = vpop.f32.mrb[0].mxu0
  %v2797 = vpop.f32.mrb[0].mxu0
  %v2798 = vadd.f32 0.0, %v2797
  %v2799 = vpop.f32.mrb[0].mxu0
  %2800 = vmatprep.mubr.bf16.mxu0 %v1618
  %2801 = vmatmul.mubr.bf16.gmra.mrb[0].mxu0 %v1617
  %v2802 = vpop.f32.mrb[0].mxu0
  %v2803 = vadd.f32 0.0, %v2802
  %v2804 = vpop.f32.mrb[0].mxu0
  %v2805 = vpop.f32.mrb[0].mxu0
  %v2806 = vpop.f32.mrb[0].mxu0
  %2807 = vdwg.mxu0
  %2808 = vmatprep.subr.bf16.mxu0 0
  %2809 = vmatpush1.bf16.msra.mxu0 %v2008
  %2810 = vmatprep.subr.bf16.mxu0 0
  %2811 = vmatpush1.bf16.msra.mxu0 %v2009
  %2812 = vmatprep.subr.bf16.mxu0 0
  %2813 = vmatpush1.bf16.msra.mxu0 %v2010
  %2814 = vmatprep.subr.bf16.mxu0 0
  %2815 = vmatpush1.bf16.msra.mxu0 %v2011
  %2816 = vmatprep.subr.bf16.mxu0 0
  %2817 = vmatpush1.bf16.msra.mxu0 %v2012
  %2818 = vmatprep.subr.bf16.mxu0 0
  %2819 = vmatpush1.bf16.msra.mxu0 %v2013
  %2820 = vmatprep.subr.bf16.mxu0 0
  %2821 = vmatpush1.bf16.msra.mxu0 %v2014
  %2822 = vmatprep.subr.bf16.mxu0 0
  %2823 = vmatpush1.bf16.msra.mxu0 %v2015
  %2824 = vmatprep.subr.bf16.mxu0 0
  %2825 = vmatpush1.bf16.msra.mxu0 0
  %2826 = vmatprep.subr.bf16.mxu0 0
  %2827 = vmatpush1.bf16.msra.mxu0 0
  %2828 = vmatprep.subr.bf16.mxu0 0
  %2829 = vmatpush1.bf16.msra.mxu0 0
  %2830 = vmatprep.subr.bf16.mxu0 0
  %2831 = vmatpush1.bf16.msra.mxu0 0
  %2832 = vmatprep.subr.bf16.mxu0 0
  %2833 = vmatpush1.bf16.msra.mxu0 0
  %2834 = vmatprep.subr.bf16.mxu0 0
  %2835 = vmatpush1.bf16.msra.mxu0 0
  %2836 = vmatprep.subr.bf16.mxu0 0
  %2837 = vmatpush1.bf16.msra.mxu0 0
  %2838 = vmatprep.subr.bf16.mxu0 0
  %2839 = vmatpush1.bf16.msra.mxu0 0
  %2840 = vmatprep.mubr.bf16.mxu0 0
  %2841 = vmatmul.mubr.bf16.gmra.mrb[0].mxu0 %v1346
  %v2842 = vpop.f32.mrb[0].mxu0
  %v2843 = vadd.f32 %v2075, %v2842
  %v2844 = vpop.f32.mrb[0].mxu0
  %v2845 = vpop.f32.mrb[0].mxu0
  %v2846 = vadd.f32 %v2078, %v2845
  %v2847 = vpop.f32.mrb[0].mxu0
  %2848 = vmatprep.mubr.bf16.mxu0 0
  %2849 = vmatmul.mubr.bf16.gmra.mrb[0].mxu0 %v1349
  %v2850 = vpop.f32.mrb[0].mxu0
  %v2851 = vadd.f32 %v2083, %v2850
  %v2852 = vpop.f32.mrb[0].mxu0
  %v2853 = vpop.f32.mrb[0].mxu0
  %v2854 = vadd.f32 %v2086, %v2853
  %v2855 = vpop.f32.mrb[0].mxu0
  %2856 = vmatprep.mubr.bf16.mxu0 0
  %2857 = vmatmul.mubr.bf16.gmra.mrb[0].mxu0 %v1352
  %v2858 = vpop.f32.mrb[0].mxu0
  %v2859 = vadd.f32 %v2091, %v2858
  %v2860 = vpop.f32.mrb[0].mxu0
  %v2861 = vpop.f32.mrb[0].mxu0
  %v2862 = vadd.f32 %v2094, %v2861
  %v2863 = vpop.f32.mrb[0].mxu0
  %2864 = vmatprep.mubr.bf16.mxu0 0
  %2865 = vmatmul.mubr.bf16.gmra.mrb[0].mxu0 %v1355
  %v2866 = vpop.f32.mrb[0].mxu0
  %v2867 = vadd.f32 %v2099, %v2866
  %v2868 = vpop.f32.mrb[0].mxu0
  %v2869 = vpop.f32.mrb[0].mxu0
  %v2870 = vadd.f32 %v2102, %v2869
  %v2871 = vpop.f32.mrb[0].mxu0
  %2872 = vmatprep.mubr.bf16.mxu0 0
  %2873 = vmatmul.mubr.bf16.gmra.mrb[0].mxu0 %v1358
  %v2874 = vpop.f32.mrb[0].mxu0
  %v2875 = vadd.f32 %v2107, %v2874
  %v2876 = vpop.f32.mrb[0].mxu0
  %v2877 = vpop.f32.mrb[0].mxu0
  %v2878 = vadd.f32 %v2110, %v2877
  %v2879 = vpop.f32.mrb[0].mxu0
  %2880 = vmatprep.mubr.bf16.mxu0 0
  %2881 = vmatmul.mubr.bf16.gmra.mrb[0].mxu0 %v1361
  %v2882 = vpop.f32.mrb[0].mxu0
  %v2883 = vadd.f32 %v2115, %v2882
  %v2884 = vpop.f32.mrb[0].mxu0
  %v2885 = vpop.f32.mrb[0].mxu0
  %v2886 = vadd.f32 %v2118, %v2885
  %v2887 = vpop.f32.mrb[0].mxu0
  %2888 = vmatprep.mubr.bf16.mxu0 0
  %2889 = vmatmul.mubr.bf16.gmra.mrb[0].mxu0 %v1364
  %v2890 = vpop.f32.mrb[0].mxu0
  %v2891 = vadd.f32 %v2123, %v2890
  %v2892 = vpop.f32.mrb[0].mxu0
  %v2893 = vpop.f32.mrb[0].mxu0
  %v2894 = vadd.f32 %v2126, %v2893
  %v2895 = vpop.f32.mrb[0].mxu0
  %2896 = vmatprep.mubr.bf16.mxu0 0
  %2897 = vmatmul.mubr.bf16.gmra.mrb[0].mxu0 %v1367
  %v2898 = vpop.f32.mrb[0].mxu0
  %v2899 = vadd.f32 %v2131, %v2898
  %v2900 = vpop.f32.mrb[0].mxu0
  %v2901 = vpop.f32.mrb[0].mxu0
  %v2902 = vadd.f32 %v2134, %v2901
  %v2903 = vpop.f32.mrb[0].mxu0
  %2904 = vmatprep.mubr.bf16.mxu0 0
  %2905 = vmatmul.mubr.bf16.gmra.mrb[0].mxu0 %v1370
  %v2906 = vpop.f32.mrb[0].mxu0
  %v2907 = vadd.f32 %v2139, %v2906
  %v2908 = vpop.f32.mrb[0].mxu0
  %v2909 = vpop.f32.mrb[0].mxu0
  %v2910 = vadd.f32 %v2142, %v2909
  %v2911 = vpop.f32.mrb[0].mxu0
  %2912 = vmatprep.mubr.bf16.mxu0 0
  %2913 = vmatmul.mubr.bf16.gmra.mrb[0].mxu0 %v1373
  %v2914 = vpop.f32.mrb[0].mxu0
  %v2915 = vadd.f32 %v2147, %v2914
  %v2916 = vpop.f32.mrb[0].mxu0
  %v2917 = vpop.f32.mrb[0].mxu0
  %v2918 = vadd.f32 %v2150, %v2917
  %v2919 = vpop.f32.mrb[0].mxu0
  %2920 = vmatprep.mubr.bf16.mxu0 0
  %2921 = vmatmul.mubr.bf16.gmra.mrb[0].mxu0 %v1376
  %v2922 = vpop.f32.mrb[0].mxu0
  %v2923 = vadd.f32 %v2155, %v2922
  %v2924 = vpop.f32.mrb[0].mxu0
  %v2925 = vpop.f32.mrb[0].mxu0
  %v2926 = vadd.f32 %v2158, %v2925
  %v2927 = vpop.f32.mrb[0].mxu0
  %2928 = vmatprep.mubr.bf16.mxu0 0
  %2929 = vmatmul.mubr.bf16.gmra.mrb[0].mxu0 %v1379
  %v2930 = vpop.f32.mrb[0].mxu0
  %v2931 = vadd.f32 %v2163, %v2930
  %v2932 = vpop.f32.mrb[0].mxu0
  %v2933 = vpop.f32.mrb[0].mxu0
  %v2934 = vadd.f32 %v2166, %v2933
  %v2935 = vpop.f32.mrb[0].mxu0
  %2936 = vmatprep.mubr.bf16.mxu0 0
  %2937 = vmatmul.mubr.bf16.gmra.mrb[0].mxu0 %v1382
  %v2938 = vpop.f32.mrb[0].mxu0
  %v2939 = vadd.f32 %v2171, %v2938
  %v2940 = vpop.f32.mrb[0].mxu0
  %v2941 = vpop.f32.mrb[0].mxu0
  %v2942 = vadd.f32 %v2174, %v2941
  %v2943 = vpop.f32.mrb[0].mxu0
  %2944 = vmatprep.mubr.bf16.mxu0 0
  %2945 = vmatmul.mubr.bf16.gmra.mrb[0].mxu0 %v1385
  %v2946 = vpop.f32.mrb[0].mxu0
  %v2947 = vadd.f32 %v2179, %v2946
  %v2948 = vpop.f32.mrb[0].mxu0
  %v2949 = vpop.f32.mrb[0].mxu0
  %v2950 = vadd.f32 %v2182, %v2949
  %v2951 = vpop.f32.mrb[0].mxu0
  %2952 = vmatprep.mubr.bf16.mxu0 0
  %2953 = vmatmul.mubr.bf16.gmra.mrb[0].mxu0 %v1388
  %v2954 = vpop.f32.mrb[0].mxu0
  %v2955 = vadd.f32 %v2187, %v2954
  %v2956 = vpop.f32.mrb[0].mxu0
  %v2957 = vpop.f32.mrb[0].mxu0
  %v2958 = vadd.f32 %v2190, %v2957
  %v2959 = vpop.f32.mrb[0].mxu0
  %2960 = vmatprep.mubr.bf16.mxu0 0
  %2961 = vmatmul.mubr.bf16.gmra.mrb[0].mxu0 %v1391
  %v2962 = vpop.f32.mrb[0].mxu0
  %v2963 = vadd.f32 %v2195, %v2962
  %v2964 = vpop.f32.mrb[0].mxu0
  %v2965 = vpop.f32.mrb[0].mxu0
  %v2966 = vadd.f32 %v2198, %v2965
  %v2967 = vpop.f32.mrb[0].mxu0
  %2968 = vmatprep.mubr.bf16.mxu0 0
  %2969 = vmatmul.mubr.bf16.gmra.mrb[0].mxu0 %v1394
  %v2970 = vpop.f32.mrb[0].mxu0
  %v2971 = vadd.f32 %v2203, %v2970
  %v2972 = vpop.f32.mrb[0].mxu0
  %v2973 = vpop.f32.mrb[0].mxu0
  %v2974 = vadd.f32 %v2206, %v2973
  %v2975 = vpop.f32.mrb[0].mxu0
  %2976 = vmatprep.mubr.bf16.mxu0 0
  %2977 = vmatmul.mubr.bf16.gmra.mrb[0].mxu0 %v1397
  %v2978 = vpop.f32.mrb[0].mxu0
  %v2979 = vadd.f32 %v2211, %v2978
  %v2980 = vpop.f32.mrb[0].mxu0
  %v2981 = vpop.f32.mrb[0].mxu0
  %v2982 = vadd.f32 %v2214, %v2981
  %v2983 = vpop.f32.mrb[0].mxu0
  %2984 = vmatprep.mubr.bf16.mxu0 0
  %2985 = vmatmul.mubr.bf16.gmra.mrb[0].mxu0 %v1400
  %v2986 = vpop.f32.mrb[0].mxu0
  %v2987 = vadd.f32 %v2219, %v2986
  %v2988 = vpop.f32.mrb[0].mxu0
  %v2989 = vpop.f32.mrb[0].mxu0
  %v2990 = vadd.f32 %v2222, %v2989
  %v2991 = vpop.f32.mrb[0].mxu0
  %2992 = vmatprep.mubr.bf16.mxu0 0
  %2993 = vmatmul.mubr.bf16.gmra.mrb[0].mxu0 %v1403
  %v2994 = vpop.f32.mrb[0].mxu0
  %v2995 = vadd.f32 %v2227, %v2994
  %v2996 = vpop.f32.mrb[0].mxu0
  %v2997 = vpop.f32.mrb[0].mxu0
  %v2998 = vadd.f32 %v2230, %v2997
  %v2999 = vpop.f32.mrb[0].mxu0
  %3000 = vmatprep.mubr.bf16.mxu0 0
  %3001 = vmatmul.mubr.bf16.gmra.mrb[0].mxu0 %v1406
  %v3002 = vpop.f32.mrb[0].mxu0
  %v3003 = vadd.f32 %v2235, %v3002
  %v3004 = vpop.f32.mrb[0].mxu0
  %v3005 = vpop.f32.mrb[0].mxu0
  %v3006 = vadd.f32 %v2238, %v3005
  %v3007 = vpop.f32.mrb[0].mxu0
  %3008 = vmatprep.mubr.bf16.mxu0 0
  %3009 = vmatmul.mubr.bf16.gmra.mrb[0].mxu0 %v1409
  %v3010 = vpop.f32.mrb[0].mxu0
  %v3011 = vadd.f32 %v2243, %v3010
  %v3012 = vpop.f32.mrb[0].mxu0
  %v3013 = vpop.f32.mrb[0].mxu0
  %v3014 = vadd.f32 %v2246, %v3013
  %v3015 = vpop.f32.mrb[0].mxu0
  %3016 = vmatprep.mubr.bf16.mxu0 0
  %3017 = vmatmul.mubr.bf16.gmra.mrb[0].mxu0 %v1412
  %v3018 = vpop.f32.mrb[0].mxu0
  %v3019 = vadd.f32 %v2251, %v3018
  %v3020 = vpop.f32.mrb[0].mxu0
  %v3021 = vpop.f32.mrb[0].mxu0
  %v3022 = vadd.f32 %v2254, %v3021
  %v3023 = vpop.f32.mrb[0].mxu0
  %3024 = vmatprep.mubr.bf16.mxu0 0
  %3025 = vmatmul.mubr.bf16.gmra.mrb[0].mxu0 %v1415
  %v3026 = vpop.f32.mrb[0].mxu0
  %v3027 = vadd.f32 %v2259, %v3026
  %v3028 = vpop.f32.mrb[0].mxu0
  %v3029 = vpop.f32.mrb[0].mxu0
  %v3030 = vadd.f32 %v2262, %v3029
  %v3031 = vpop.f32.mrb[0].mxu0
  %3032 = vmatprep.mubr.bf16.mxu0 0
  %3033 = vmatmul.mubr.bf16.gmra.mrb[0].mxu0 %v1418
  %v3034 = vpop.f32.mrb[0].mxu0
  %v3035 = vadd.f32 %v2267, %v3034
  %v3036 = vpop.f32.mrb[0].mxu0
  %v3037 = vpop.f32.mrb[0].mxu0
  %v3038 = vadd.f32 %v2270, %v3037
  %v3039 = vpop.f32.mrb[0].mxu0
  %3040 = vmatprep.mubr.bf16.mxu0 0
  %3041 = vmatmul.mubr.bf16.gmra.mrb[0].mxu0 %v1421
  %v3042 = vpop.f32.mrb[0].mxu0
  %v3043 = vadd.f32 %v2275, %v3042
  %v3044 = vpop.f32.mrb[0].mxu0
  %v3045 = vpop.f32.mrb[0].mxu0
  %v3046 = vadd.f32 %v2278, %v3045
  %v3047 = vpop.f32.mrb[0].mxu0
  %3048 = vmatprep.mubr.bf16.mxu0 0
  %3049 = vmatmul.mubr.bf16.gmra.mrb[0].mxu0 %v1424
  %v3050 = vpop.f32.mrb[0].mxu0
  %v3051 = vadd.f32 %v2283, %v3050
  %v3052 = vpop.f32.mrb[0].mxu0
  %v3053 = vpop.f32.mrb[0].mxu0
  %v3054 = vadd.f32 %v2286, %v3053
  %v3055 = vpop.f32.mrb[0].mxu0
  %3056 = vmatprep.mubr.bf16.mxu0 0
  %3057 = vmatmul.mubr.bf16.gmra.mrb[0].mxu0 %v1427
  %v3058 = vpop.f32.mrb[0].mxu0
  %v3059 = vadd.f32 %v2291, %v3058
  %v3060 = vpop.f32.mrb[0].mxu0
  %v3061 = vpop.f32.mrb[0].mxu0
  %v3062 = vadd.f32 %v2294, %v3061
  %v3063 = vpop.f32.mrb[0].mxu0
  %3064 = vmatprep.mubr.bf16.mxu0 0
  %3065 = vmatmul.mubr.bf16.gmra.mrb[0].mxu0 %v1430
  %v3066 = vpop.f32.mrb[0].mxu0
  %v3067 = vadd.f32 %v2299, %v3066
  %v3068 = vpop.f32.mrb[0].mxu0
  %v3069 = vpop.f32.mrb[0].mxu0
  %v3070 = vadd.f32 %v2302, %v3069
  %v3071 = vpop.f32.mrb[0].mxu0
  %3072 = vmatprep.mubr.bf16.mxu0 0
  %3073 = vmatmul.mubr.bf16.gmra.mrb[0].mxu0 %v1433
  %v3074 = vpop.f32.mrb[0].mxu0
  %v3075 = vadd.f32 %v2307, %v3074
  %v3076 = vpop.f32.mrb[0].mxu0
  %v3077 = vpop.f32.mrb[0].mxu0
  %v3078 = vadd.f32 %v2310, %v3077
  %v3079 = vpop.f32.mrb[0].mxu0
  %3080 = vmatprep.mubr.bf16.mxu0 0
  %3081 = vmatmul.mubr.bf16.gmra.mrb[0].mxu0 %v1436
  %v3082 = vpop.f32.mrb[0].mxu0
  %v3083 = vadd.f32 %v2315, %v3082
  %v3084 = vpop.f32.mrb[0].mxu0
  %v3085 = vpop.f32.mrb[0].mxu0
  %v3086 = vadd.f32 %v2318, %v3085
  %v3087 = vpop.f32.mrb[0].mxu0
  %3088 = vmatprep.mubr.bf16.mxu0 0
  %3089 = vmatmul.mubr.bf16.gmra.mrb[0].mxu0 %v1439
  %v3090 = vpop.f32.mrb[0].mxu0
  %v3091 = vadd.f32 %v2323, %v3090
  %v3092 = vpop.f32.mrb[0].mxu0
  %v3093 = vpop.f32.mrb[0].mxu0
  %v3094 = vadd.f32 %v2326, %v3093
  %v3095 = vpop.f32.mrb[0].mxu0
  %3096 = vmatprep.mubr.bf16.mxu0 0
  %3097 = vmatmul.mubr.bf16.gmra.mrb[0].mxu0 %v1442
  %v3098 = vpop.f32.mrb[0].mxu0
  %v3099 = vadd.f32 %v2331, %v3098
  %v3100 = vpop.f32.mrb[0].mxu0
  %v3101 = vpop.f32.mrb[0].mxu0
  %v3102 = vadd.f32 %v2334, %v3101
  %v3103 = vpop.f32.mrb[0].mxu0
  %3104 = vmatprep.mubr.bf16.mxu0 0
  %3105 = vmatmul.mubr.bf16.gmra.mrb[0].mxu0 %v1445
  %v3106 = vpop.f32.mrb[0].mxu0
  %v3107 = vadd.f32 %v2339, %v3106
  %v3108 = vpop.f32.mrb[0].mxu0
  %v3109 = vpop.f32.mrb[0].mxu0
  %v3110 = vadd.f32 %v2342, %v3109
  %v3111 = vpop.f32.mrb[0].mxu0
  %3112 = vmatprep.mubr.bf16.mxu0 0
  %3113 = vmatmul.mubr.bf16.gmra.mrb[0].mxu0 %v1448
  %v3114 = vpop.f32.mrb[0].mxu0
  %v3115 = vadd.f32 %v2347, %v3114
  %v3116 = vpop.f32.mrb[0].mxu0
  %v3117 = vpop.f32.mrb[0].mxu0
  %v3118 = vadd.f32 %v2350, %v3117
  %v3119 = vpop.f32.mrb[0].mxu0
  %3120 = vmatprep.mubr.bf16.mxu0 0
  %3121 = vmatmul.mubr.bf16.gmra.mrb[0].mxu0 %v1451
  %v3122 = vpop.f32.mrb[0].mxu0
  %v3123 = vadd.f32 %v2355, %v3122
  %v3124 = vpop.f32.mrb[0].mxu0
  %v3125 = vpop.f32.mrb[0].mxu0
  %v3126 = vadd.f32 %v2358, %v3125
  %v3127 = vpop.f32.mrb[0].mxu0
  %3128 = vmatprep.mubr.bf16.mxu0 0
  %3129 = vmatmul.mubr.bf16.gmra.mrb[0].mxu0 %v1454
  %v3130 = vpop.f32.mrb[0].mxu0
  %v3131 = vadd.f32 %v2363, %v3130
  %v3132 = vpop.f32.mrb[0].mxu0
  %v3133 = vpop.f32.mrb[0].mxu0
  %v3134 = vadd.f32 %v2366, %v3133
  %v3135 = vpop.f32.mrb[0].mxu0
  %3136 = vmatprep.mubr.bf16.mxu0 0
  %3137 = vmatmul.mubr.bf16.gmra.mrb[0].mxu0 %v1457
  %v3138 = vpop.f32.mrb[0].mxu0
  %v3139 = vadd.f32 %v2371, %v3138
  %v3140 = vpop.f32.mrb[0].mxu0
  %v3141 = vpop.f32.mrb[0].mxu0
  %v3142 = vadd.f32 %v2374, %v3141
  %v3143 = vpop.f32.mrb[0].mxu0
  %3144 = vmatprep.mubr.bf16.mxu0 0
  %3145 = vmatmul.mubr.bf16.gmra.mrb[0].mxu0 %v1460
  %v3146 = vpop.f32.mrb[0].mxu0
  %v3147 = vadd.f32 %v2379, %v3146
  %v3148 = vpop.f32.mrb[0].mxu0
  %v3149 = vpop.f32.mrb[0].mxu0
  %v3150 = vadd.f32 %v2382, %v3149
  %v3151 = vpop.f32.mrb[0].mxu0
  %3152 = vmatprep.mubr.bf16.mxu0 0
  %3153 = vmatmul.mubr.bf16.gmra.mrb[0].mxu0 %v1463
  %v3154 = vpop.f32.mrb[0].mxu0
  %v3155 = vadd.f32 %v2387, %v3154
  %v3156 = vpop.f32.mrb[0].mxu0
  %v3157 = vpop.f32.mrb[0].mxu0
  %v3158 = vadd.f32 %v2390, %v3157
  %v3159 = vpop.f32.mrb[0].mxu0
  %3160 = vmatprep.mubr.bf16.mxu0 0
  %3161 = vmatmul.mubr.bf16.gmra.mrb[0].mxu0 %v1466
  %v3162 = vpop.f32.mrb[0].mxu0
  %v3163 = vadd.f32 %v2395, %v3162
  %v3164 = vpop.f32.mrb[0].mxu0
  %v3165 = vpop.f32.mrb[0].mxu0
  %v3166 = vadd.f32 %v2398, %v3165
  %v3167 = vpop.f32.mrb[0].mxu0
  %3168 = vmatprep.mubr.bf16.mxu0 0
  %3169 = vmatmul.mubr.bf16.gmra.mrb[0].mxu0 %v1469
  %v3170 = vpop.f32.mrb[0].mxu0
  %v3171 = vadd.f32 %v2403, %v3170
  %v3172 = vpop.f32.mrb[0].mxu0
  %v3173 = vpop.f32.mrb[0].mxu0
  %v3174 = vadd.f32 %v2406, %v3173
  %v3175 = vpop.f32.mrb[0].mxu0
  %3176 = vmatprep.mubr.bf16.mxu0 0
  %3177 = vmatmul.mubr.bf16.gmra.mrb[0].mxu0 %v1472
  %v3178 = vpop.f32.mrb[0].mxu0
  %v3179 = vadd.f32 %v2411, %v3178
  %v3180 = vpop.f32.mrb[0].mxu0
  %v3181 = vpop.f32.mrb[0].mxu0
  %v3182 = vadd.f32 %v2414, %v3181
  %v3183 = vpop.f32.mrb[0].mxu0
  %3184 = vmatprep.mubr.bf16.mxu0 0
  %3185 = vmatmul.mubr.bf16.gmra.mrb[0].mxu0 %v1475
  %v3186 = vpop.f32.mrb[0].mxu0
  %v3187 = vadd.f32 %v2419, %v3186
  %v3188 = vpop.f32.mrb[0].mxu0
  %v3189 = vpop.f32.mrb[0].mxu0
  %v3190 = vadd.f32 %v2422, %v3189
  %v3191 = vpop.f32.mrb[0].mxu0
  %3192 = vmatprep.mubr.bf16.mxu0 0
  %3193 = vmatmul.mubr.bf16.gmra.mrb[0].mxu0 %v1478
  %v3194 = vpop.f32.mrb[0].mxu0
  %v3195 = vadd.f32 %v2427, %v3194
  %v3196 = vpop.f32.mrb[0].mxu0
  %v3197 = vpop.f32.mrb[0].mxu0
  %v3198 = vadd.f32 %v2430, %v3197
  %v3199 = vpop.f32.mrb[0].mxu0
  %3200 = vmatprep.mubr.bf16.mxu0 0
  %3201 = vmatmul.mubr.bf16.gmra.mrb[0].mxu0 %v1481
  %v3202 = vpop.f32.mrb[0].mxu0
  %v3203 = vadd.f32 %v2435, %v3202
  %v3204 = vpop.f32.mrb[0].mxu0
  %v3205 = vpop.f32.mrb[0].mxu0
  %v3206 = vadd.f32 %v2438, %v3205
  %v3207 = vpop.f32.mrb[0].mxu0
  %3208 = vmatprep.mubr.bf16.mxu0 0
  %3209 = vmatmul.mubr.bf16.gmra.mrb[0].mxu0 %v1484
  %v3210 = vpop.f32.mrb[0].mxu0
  %v3211 = vadd.f32 %v2443, %v3210
  %v3212 = vpop.f32.mrb[0].mxu0
  %v3213 = vpop.f32.mrb[0].mxu0
  %v3214 = vadd.f32 %v2446, %v3213
  %v3215 = vpop.f32.mrb[0].mxu0
  %3216 = vmatprep.mubr.bf16.mxu0 0
  %3217 = vmatmul.mubr.bf16.gmra.mrb[0].mxu0 %v1487
  %v3218 = vpop.f32.mrb[0].mxu0
  %v3219 = vadd.f32 %v2451, %v3218
  %v3220 = vpop.f32.mrb[0].mxu0
  %v3221 = vpop.f32.mrb[0].mxu0
  %v3222 = vadd.f32 %v2454, %v3221
  %v3223 = vpop.f32.mrb[0].mxu0
  %3224 = vmatprep.mubr.bf16.mxu0 0
  %3225 = vmatmul.mubr.bf16.gmra.mrb[0].mxu0 %v1490
  %v3226 = vpop.f32.mrb[0].mxu0
  %v3227 = vadd.f32 %v2459, %v3226
  %v3228 = vpop.f32.mrb[0].mxu0
  %v3229 = vpop.f32.mrb[0].mxu0
  %v3230 = vadd.f32 %v2462, %v3229
  %v3231 = vpop.f32.mrb[0].mxu0
  %3232 = vmatprep.mubr.bf16.mxu0 0
  %3233 = vmatmul.mubr.bf16.gmra.mrb[0].mxu0 %v1493
  %v3234 = vpop.f32.mrb[0].mxu0
  %v3235 = vadd.f32 %v2467, %v3234
  %v3236 = vpop.f32.mrb[0].mxu0
  %v3237 = vpop.f32.mrb[0].mxu0
  %v3238 = vadd.f32 %v2470, %v3237
  %v3239 = vpop.f32.mrb[0].mxu0
  %3240 = vmatprep.mubr.bf16.mxu0 0
  %3241 = vmatmul.mubr.bf16.gmra.mrb[0].mxu0 %v1496
  %v3242 = vpop.f32.mrb[0].mxu0
  %v3243 = vadd.f32 %v2475, %v3242
  %v3244 = vpop.f32.mrb[0].mxu0
  %v3245 = vpop.f32.mrb[0].mxu0
  %v3246 = vadd.f32 %v2478, %v3245
  %v3247 = vpop.f32.mrb[0].mxu0
  %3248 = vmatprep.mubr.bf16.mxu0 0
  %3249 = vmatmul.mubr.bf16.gmra.mrb[0].mxu0 %v1499
  %v3250 = vpop.f32.mrb[0].mxu0
  %v3251 = vadd.f32 %v2483, %v3250
  %v3252 = vpop.f32.mrb[0].mxu0
  %v3253 = vpop.f32.mrb[0].mxu0
  %v3254 = vadd.f32 %v2486, %v3253
  %v3255 = vpop.f32.mrb[0].mxu0
  %3256 = vmatprep.mubr.bf16.mxu0 0
  %3257 = vmatmul.mubr.bf16.gmra.mrb[0].mxu0 %v1502
  %v3258 = vpop.f32.mrb[0].mxu0
  %v3259 = vadd.f32 %v2491, %v3258
  %v3260 = vpop.f32.mrb[0].mxu0
  %v3261 = vpop.f32.mrb[0].mxu0
  %v3262 = vadd.f32 %v2494, %v3261
  %v3263 = vpop.f32.mrb[0].mxu0
  %3264 = vmatprep.mubr.bf16.mxu0 0
  %3265 = vmatmul.mubr.bf16.gmra.mrb[0].mxu0 %v1505
  %v3266 = vpop.f32.mrb[0].mxu0
  %v3267 = vadd.f32 %v2499, %v3266
  %v3268 = vpop.f32.mrb[0].mxu0
  %v3269 = vpop.f32.mrb[0].mxu0
  %v3270 = vadd.f32 %v2502, %v3269
  %v3271 = vpop.f32.mrb[0].mxu0
  %3272 = vmatprep.mubr.bf16.mxu0 0
  %3273 = vmatmul.mubr.bf16.gmra.mrb[0].mxu0 %v1508
  %v3274 = vpop.f32.mrb[0].mxu0
  %v3275 = vadd.f32 %v2507, %v3274
  %v3276 = vpop.f32.mrb[0].mxu0
  %v3277 = vpop.f32.mrb[0].mxu0
  %v3278 = vadd.f32 %v2510, %v3277
  %v3279 = vpop.f32.mrb[0].mxu0
  %3280 = vmatprep.mubr.bf16.mxu0 0
  %3281 = vmatmul.mubr.bf16.gmra.mrb[0].mxu0 %v1511
  %v3282 = vpop.f32.mrb[0].mxu0
  %v3283 = vadd.f32 %v2515, %v3282
  %v3284 = vpop.f32.mrb[0].mxu0
  %v3285 = vpop.f32.mrb[0].mxu0
  %v3286 = vadd.f32 %v2518, %v3285
  %v3287 = vpop.f32.mrb[0].mxu0
  %3288 = vmatprep.mubr.bf16.mxu0 0
  %3289 = vmatmul.mubr.bf16.gmra.mrb[0].mxu0 %v1514
  %v3290 = vpop.f32.mrb[0].mxu0
  %v3291 = vadd.f32 %v2523, %v3290
  %v3292 = vpop.f32.mrb[0].mxu0
  %v3293 = vpop.f32.mrb[0].mxu0
  %v3294 = vadd.f32 %v2526, %v3293
  %v3295 = vpop.f32.mrb[0].mxu0
  %3296 = vmatprep.mubr.bf16.mxu0 0
  %3297 = vmatmul.mubr.bf16.gmra.mrb[0].mxu0 %v1517
  %v3298 = vpop.f32.mrb[0].mxu0
  %v3299 = vadd.f32 %v2531, %v3298
  %v3300 = vpop.f32.mrb[0].mxu0
  %v3301 = vpop.f32.mrb[0].mxu0
  %v3302 = vadd.f32 %v2534, %v3301
  %v3303 = vpop.f32.mrb[0].mxu0
  %3304 = vmatprep.mubr.bf16.mxu0 0
  %3305 = vmatmul.mubr.bf16.gmra.mrb[0].mxu0 %v1520
  %v3306 = vpop.f32.mrb[0].mxu0
  %v3307 = vadd.f32 %v2539, %v3306
  %v3308 = vpop.f32.mrb[0].mxu0
  %v3309 = vpop.f32.mrb[0].mxu0
  %v3310 = vadd.f32 %v2542, %v3309
  %v3311 = vpop.f32.mrb[0].mxu0
  %3312 = vmatprep.mubr.bf16.mxu0 0
  %3313 = vmatmul.mubr.bf16.gmra.mrb[0].mxu0 %v1523
  %v3314 = vpop.f32.mrb[0].mxu0
  %v3315 = vadd.f32 %v2547, %v3314
  %v3316 = vpop.f32.mrb[0].mxu0
  %v3317 = vpop.f32.mrb[0].mxu0
  %v3318 = vadd.f32 %v2550, %v3317
  %v3319 = vpop.f32.mrb[0].mxu0
  %3320 = vmatprep.mubr.bf16.mxu0 0
  %3321 = vmatmul.mubr.bf16.gmra.mrb[0].mxu0 %v1526
  %v3322 = vpop.f32.mrb[0].mxu0
  %v3323 = vadd.f32 %v2555, %v3322
  %v3324 = vpop.f32.mrb[0].mxu0
  %v3325 = vpop.f32.mrb[0].mxu0
  %v3326 = vadd.f32 %v2558, %v3325
  %v3327 = vpop.f32.mrb[0].mxu0
  %3328 = vmatprep.mubr.bf16.mxu0 0
  %3329 = vmatmul.mubr.bf16.gmra.mrb[0].mxu0 %v1529
  %v3330 = vpop.f32.mrb[0].mxu0
  %v3331 = vadd.f32 %v2563, %v3330
  %v3332 = vpop.f32.mrb[0].mxu0
  %v3333 = vpop.f32.mrb[0].mxu0
  %v3334 = vadd.f32 %v2566, %v3333
  %v3335 = vpop.f32.mrb[0].mxu0
  %3336 = vmatprep.mubr.bf16.mxu0 0
  %3337 = vmatmul.mubr.bf16.gmra.mrb[0].mxu0 %v1532
  %v3338 = vpop.f32.mrb[0].mxu0
  %v3339 = vadd.f32 %v2571, %v3338
  %v3340 = vpop.f32.mrb[0].mxu0
  %v3341 = vpop.f32.mrb[0].mxu0
  %v3342 = vadd.f32 %v2574, %v3341
  %v3343 = vpop.f32.mrb[0].mxu0
  %3344 = vmatprep.mubr.bf16.mxu0 0
  %3345 = vmatmul.mubr.bf16.gmra.mrb[0].mxu0 %v1535
  %v3346 = vpop.f32.mrb[0].mxu0
  %v3347 = vadd.f32 %v2579, %v3346
  %v3348 = vpop.f32.mrb[0].mxu0
  %v3349 = vpop.f32.mrb[0].mxu0
  %v3350 = vadd.f32 %v2582, %v3349
  %v3351 = vpop.f32.mrb[0].mxu0
  %3352 = vmatprep.mubr.bf16.mxu0 0
  %3353 = vmatmul.mubr.bf16.gmra.mrb[0].mxu0 %v1538
  %v3354 = vpop.f32.mrb[0].mxu0
  %v3355 = vadd.f32 %v2587, %v3354
  %v3356 = vpop.f32.mrb[0].mxu0
  %v3357 = vpop.f32.mrb[0].mxu0
  %v3358 = vadd.f32 %v2590, %v3357
  %v3359 = vpop.f32.mrb[0].mxu0
  %3360 = vmatprep.mubr.bf16.mxu0 0
  %3361 = vmatmul.mubr.bf16.gmra.mrb[0].mxu0 %v1541
  %v3362 = vpop.f32.mrb[0].mxu0
  %v3363 = vadd.f32 %v2595, %v3362
  %v3364 = vpop.f32.mrb[0].mxu0
  %v3365 = vpop.f32.mrb[0].mxu0
  %v3366 = vadd.f32 %v2598, %v3365
  %v3367 = vpop.f32.mrb[0].mxu0
  %3368 = vmatprep.mubr.bf16.mxu0 0
  %3369 = vmatmul.mubr.bf16.gmra.mrb[0].mxu0 %v1544
  %v3370 = vpop.f32.mrb[0].mxu0
  %v3371 = vadd.f32 %v2603, %v3370
  %v3372 = vpop.f32.mrb[0].mxu0
  %v3373 = vpop.f32.mrb[0].mxu0
  %v3374 = vadd.f32 %v2606, %v3373
  %v3375 = vpop.f32.mrb[0].mxu0
  %3376 = vmatprep.mubr.bf16.mxu0 0
  %3377 = vmatmul.mubr.bf16.gmra.mrb[0].mxu0 %v1547
  %v3378 = vpop.f32.mrb[0].mxu0
  %v3379 = vadd.f32 %v2611, %v3378
  %v3380 = vpop.f32.mrb[0].mxu0
  %v3381 = vpop.f32.mrb[0].mxu0
  %v3382 = vadd.f32 %v2614, %v3381
  %v3383 = vpop.f32.mrb[0].mxu0
  %3384 = vmatprep.mubr.bf16.mxu0 0
  %3385 = vmatmul.mubr.bf16.gmra.mrb[0].mxu0 %v1550
  %v3386 = vpop.f32.mrb[0].mxu0
  %v3387 = vadd.f32 %v2619, %v3386
  %v3388 = vpop.f32.mrb[0].mxu0
  %v3389 = vpop.f32.mrb[0].mxu0
  %v3390 = vadd.f32 %v2622, %v3389
  %v3391 = vpop.f32.mrb[0].mxu0
  %3392 = vmatprep.mubr.bf16.mxu0 0
  %3393 = vmatmul.mubr.bf16.gmra.mrb[0].mxu0 %v1553
  %v3394 = vpop.f32.mrb[0].mxu0
  %v3395 = vadd.f32 %v2627, %v3394
  %v3396 = vpop.f32.mrb[0].mxu0
  %v3397 = vpop.f32.mrb[0].mxu0
  %v3398 = vadd.f32 %v2630, %v3397
  %v3399 = vpop.f32.mrb[0].mxu0
  %3400 = vmatprep.mubr.bf16.mxu0 0
  %3401 = vmatmul.mubr.bf16.gmra.mrb[0].mxu0 %v1556
  %v3402 = vpop.f32.mrb[0].mxu0
  %v3403 = vadd.f32 %v2635, %v3402
  %v3404 = vpop.f32.mrb[0].mxu0
  %v3405 = vpop.f32.mrb[0].mxu0
  %v3406 = vadd.f32 %v2638, %v3405
  %v3407 = vpop.f32.mrb[0].mxu0
  %3408 = vmatprep.mubr.bf16.mxu0 0
  %3409 = vmatmul.mubr.bf16.gmra.mrb[0].mxu0 %v1559
  %v3410 = vpop.f32.mrb[0].mxu0
  %v3411 = vadd.f32 %v2643, %v3410
  %v3412 = vpop.f32.mrb[0].mxu0
  %v3413 = vpop.f32.mrb[0].mxu0
  %v3414 = vadd.f32 %v2646, %v3413
  %v3415 = vpop.f32.mrb[0].mxu0
  %3416 = vmatprep.mubr.bf16.mxu0 0
  %3417 = vmatmul.mubr.bf16.gmra.mrb[0].mxu0 %v1562
  %v3418 = vpop.f32.mrb[0].mxu0
  %v3419 = vadd.f32 %v2651, %v3418
  %v3420 = vpop.f32.mrb[0].mxu0
  %v3421 = vpop.f32.mrb[0].mxu0
  %v3422 = vadd.f32 %v2654, %v3421
  %v3423 = vpop.f32.mrb[0].mxu0
  %3424 = vmatprep.mubr.bf16.mxu0 0
  %3425 = vmatmul.mubr.bf16.gmra.mrb[0].mxu0 %v1565
  %v3426 = vpop.f32.mrb[0].mxu0
  %v3427 = vadd.f32 %v2659, %v3426
  %v3428 = vpop.f32.mrb[0].mxu0
  %v3429 = vpop.f32.mrb[0].mxu0
  %v3430 = vadd.f32 %v2662, %v3429
  %v3431 = vpop.f32.mrb[0].mxu0
  %3432 = vmatprep.mubr.bf16.mxu0 0
  %3433 = vmatmul.mubr.bf16.gmra.mrb[0].mxu0 %v1568
  %v3434 = vpop.f32.mrb[0].mxu0
  %v3435 = vadd.f32 %v2667, %v3434
  %v3436 = vpop.f32.mrb[0].mxu0
  %v3437 = vpop.f32.mrb[0].mxu0
  %v3438 = vadd.f32 %v2670, %v3437
  %v3439 = vpop.f32.mrb[0].mxu0
  %3440 = vmatprep.mubr.bf16.mxu0 0
  %3441 = vmatmul.mubr.bf16.gmra.mrb[0].mxu0 %v1571
  %v3442 = vpop.f32.mrb[0].mxu0
  %v3443 = vadd.f32 %v2675, %v3442
  %v3444 = vpop.f32.mrb[0].mxu0
  %v3445 = vpop.f32.mrb[0].mxu0
  %v3446 = vadd.f32 %v2678, %v3445
  %v3447 = vpop.f32.mrb[0].mxu0
  %3448 = vmatprep.mubr.bf16.mxu0 0
  %3449 = vmatmul.mubr.bf16.gmra.mrb[0].mxu0 %v1574
  %v3450 = vpop.f32.mrb[0].mxu0
  %v3451 = vadd.f32 %v2683, %v3450
  %v3452 = vpop.f32.mrb[0].mxu0
  %v3453 = vpop.f32.mrb[0].mxu0
  %v3454 = vadd.f32 %v2686, %v3453
  %v3455 = vpop.f32.mrb[0].mxu0
  %3456 = vmatprep.mubr.bf16.mxu0 0
  %3457 = vmatmul.mubr.bf16.gmra.mrb[0].mxu0 %v1577
  %v3458 = vpop.f32.mrb[0].mxu0
  %v3459 = vadd.f32 %v2691, %v3458
  %v3460 = vpop.f32.mrb[0].mxu0
  %v3461 = vpop.f32.mrb[0].mxu0
  %v3462 = vadd.f32 %v2694, %v3461
  %v3463 = vpop.f32.mrb[0].mxu0
  %3464 = vmatprep.mubr.bf16.mxu0 0
  %3465 = vmatmul.mubr.bf16.gmra.mrb[0].mxu0 %v1580
  %v3466 = vpop.f32.mrb[0].mxu0
  %v3467 = vadd.f32 %v2699, %v3466
  %v3468 = vpop.f32.mrb[0].mxu0
  %v3469 = vpop.f32.mrb[0].mxu0
  %v3470 = vadd.f32 %v2702, %v3469
  %v3471 = vpop.f32.mrb[0].mxu0
  %3472 = vmatprep.mubr.bf16.mxu0 0
  %3473 = vmatmul.mubr.bf16.gmra.mrb[0].mxu0 %v1583
  %v3474 = vpop.f32.mrb[0].mxu0
  %v3475 = vadd.f32 %v2707, %v3474
  %v3476 = vpop.f32.mrb[0].mxu0
  %v3477 = vpop.f32.mrb[0].mxu0
  %v3478 = vadd.f32 %v2710, %v3477
  %v3479 = vpop.f32.mrb[0].mxu0
  %3480 = vmatprep.mubr.bf16.mxu0 0
  %3481 = vmatmul.mubr.bf16.gmra.mrb[0].mxu0 %v1586
  %v3482 = vpop.f32.mrb[0].mxu0
  %v3483 = vadd.f32 %v2715, %v3482
  %v3484 = vpop.f32.mrb[0].mxu0
  %v3485 = vpop.f32.mrb[0].mxu0
  %v3486 = vadd.f32 %v2718, %v3485
  %v3487 = vpop.f32.mrb[0].mxu0
  %3488 = vmatprep.mubr.bf16.mxu0 0
  %3489 = vmatmul.mubr.bf16.gmra.mrb[0].mxu0 %v1589
  %v3490 = vpop.f32.mrb[0].mxu0
  %v3491 = vadd.f32 %v2723, %v3490
  %v3492 = vpop.f32.mrb[0].mxu0
  %v3493 = vpop.f32.mrb[0].mxu0
  %v3494 = vadd.f32 %v2726, %v3493
  %v3495 = vpop.f32.mrb[0].mxu0
  %3496 = vmatprep.mubr.bf16.mxu0 0
  %3497 = vmatmul.mubr.bf16.gmra.mrb[0].mxu0 %v1592
  %v3498 = vpop.f32.mrb[0].mxu0
  %v3499 = vadd.f32 %v2731, %v3498
  %v3500 = vpop.f32.mrb[0].mxu0
  %v3501 = vpop.f32.mrb[0].mxu0
  %v3502 = vadd.f32 %v2734, %v3501
  %v3503 = vpop.f32.mrb[0].mxu0
  %3504 = vmatprep.mubr.bf16.mxu0 0
  %3505 = vmatmul.mubr.bf16.gmra.mrb[0].mxu0 %v1595
  %v3506 = vpop.f32.mrb[0].mxu0
  %v3507 = vadd.f32 %v2739, %v3506
  %v3508 = vpop.f32.mrb[0].mxu0
  %v3509 = vpop.f32.mrb[0].mxu0
  %v3510 = vadd.f32 %v2742, %v3509
  %v3511 = vpop.f32.mrb[0].mxu0
  %3512 = vmatprep.mubr.bf16.mxu0 0
  %3513 = vmatmul.mubr.bf16.gmra.mrb[0].mxu0 %v1598
  %v3514 = vpop.f32.mrb[0].mxu0
  %v3515 = vadd.f32 %v2747, %v3514
  %v3516 = vpop.f32.mrb[0].mxu0
  %v3517 = vpop.f32.mrb[0].mxu0
  %v3518 = vadd.f32 %v2750, %v3517
  %v3519 = vpop.f32.mrb[0].mxu0
  %3520 = vmatprep.mubr.bf16.mxu0 0
  %3521 = vmatmul.mubr.bf16.gmra.mrb[0].mxu0 %v1601
  %v3522 = vpop.f32.mrb[0].mxu0
  %v3523 = vadd.f32 %v2755, %v3522
  %v3524 = vpop.f32.mrb[0].mxu0
  %v3525 = vpop.f32.mrb[0].mxu0
  %v3526 = vadd.f32 %v2758, %v3525
  %v3527 = vpop.f32.mrb[0].mxu0
  %3528 = vmatprep.mubr.bf16.mxu0 0
  %3529 = vmatmul.mubr.bf16.gmra.mrb[0].mxu0 %v1604
  %v3530 = vpop.f32.mrb[0].mxu0
  %v3531 = vadd.f32 %v2763, %v3530
  %v3532 = vpop.f32.mrb[0].mxu0
  %v3533 = vpop.f32.mrb[0].mxu0
  %v3534 = vadd.f32 %v2766, %v3533
  %v3535 = vpop.f32.mrb[0].mxu0
  %3536 = vmatprep.mubr.bf16.mxu0 0
  %3537 = vmatmul.mubr.bf16.gmra.mrb[0].mxu0 %v1607
  %v3538 = vpop.f32.mrb[0].mxu0
  %v3539 = vadd.f32 %v2771, %v3538
  %v3540 = vpop.f32.mrb[0].mxu0
  %v3541 = vpop.f32.mrb[0].mxu0
  %v3542 = vadd.f32 %v2774, %v3541
  %v3543 = vpop.f32.mrb[0].mxu0
  %3544 = vmatprep.mubr.bf16.mxu0 0
  %3545 = vmatmul.mubr.bf16.gmra.mrb[0].mxu0 %v1610
  %v3546 = vpop.f32.mrb[0].mxu0
  %v3547 = vadd.f32 %v2779, %v3546
  %v3548 = vpop.f32.mrb[0].mxu0
  %v3549 = vpop.f32.mrb[0].mxu0
  %v3550 = vadd.f32 %v2782, %v3549
  %v3551 = vpop.f32.mrb[0].mxu0
  %3552 = vmatprep.mubr.bf16.mxu0 0
  %3553 = vmatmul.mubr.bf16.gmra.mrb[0].mxu0 %v1613
  %v3554 = vpop.f32.mrb[0].mxu0
  %v3555 = vadd.f32 %v2787, %v3554
  %v3556 = vpop.f32.mrb[0].mxu0
  %v3557 = vpop.f32.mrb[0].mxu0
  %v3558 = vadd.f32 %v2790, %v3557
  %v3559 = vpop.f32.mrb[0].mxu0
  %3560 = vmatprep.mubr.bf16.mxu0 0
  %3561 = vmatmul.mubr.bf16.gmra.mrb[0].mxu0 %v1616
  %v3562 = vpop.f32.mrb[0].mxu0
  %v3563 = vadd.f32 %v2795, %v3562
  %v3564 = vpop.f32.mrb[0].mxu0
  %v3565 = vpop.f32.mrb[0].mxu0
  %v3566 = vadd.f32 %v2798, %v3565
  %v3567 = vpop.f32.mrb[0].mxu0
  %3568 = vmatprep.mubr.bf16.mxu0 0
  %3569 = vmatmul.mubr.bf16.gmra.mrb[0].mxu0 %v1619
  %v3570 = vpop.f32.mrb[0].mxu0
  %v3571 = vadd.f32 %v2803, %v3570
  %v3572 = vpop.f32.mrb[0].mxu0
  %v3573 = vpop.f32.mrb[0].mxu0
  %v3574 = vpop.f32.mrb[0].mxu0
  %3575 = vdwg.mxu0
  %v3576 = vld [vmem:[%s2] sm:$0x1]
  %v3577 = vlaneseq
  %v3578 = vshrl.u32 %v3577, 7
  %v3579 = vsub.s32 0, %v3578
  %v3580 = vrot.slane %v3576, %v3579
  %v3581 = vmul.f32 %v2843, %v3580
  %v3582 = vmul.f32 %v2846, %v3580
  %v3583 = vmul.f32 %v2851, %v3580
  %v3584 = vmul.f32 %v2854, %v3580
  %v3585 = vmul.f32 %v2859, %v3580
  %v3586 = vmul.f32 %v2862, %v3580
  %v3587 = vmul.f32 %v2867, %v3580
  %v3588 = vmul.f32 %v2870, %v3580
  %v3589 = vmul.f32 %v2875, %v3580
  %v3590 = vmul.f32 %v2878, %v3580
  %v3591 = vmul.f32 %v2883, %v3580
  %v3592 = vmul.f32 %v2886, %v3580
  %v3593 = vmul.f32 %v2891, %v3580
  %v3594 = vmul.f32 %v2894, %v3580
  %v3595 = vmul.f32 %v2899, %v3580
  %v3596 = vmul.f32 %v2902, %v3580
  %v3597 = vmul.f32 %v2907, %v3580
  %v3598 = vmul.f32 %v2910, %v3580
  %v3599 = vmul.f32 %v2915, %v3580
  %v3600 = vmul.f32 %v2918, %v3580
  %v3601 = vmul.f32 %v2923, %v3580
  %v3602 = vmul.f32 %v2926, %v3580
  %v3603 = vmul.f32 %v2931, %v3580
  %v3604 = vmul.f32 %v2934, %v3580
  %v3605 = vmul.f32 %v2939, %v3580
  %v3606 = vmul.f32 %v2942, %v3580
  %v3607 = vmul.f32 %v2947, %v3580
  %v3608 = vmul.f32 %v2950, %v3580
  %v3609 = vmul.f32 %v2955, %v3580
  %v3610 = vmul.f32 %v2958, %v3580
  %v3611 = vmul.f32 %v2963, %v3580
  %v3612 = vmul.f32 %v2966, %v3580
  %v3613 = vmul.f32 %v2971, %v3580
  %v3614 = vmul.f32 %v2974, %v3580
  %v3615 = vmul.f32 %v2979, %v3580
  %v3616 = vmul.f32 %v2982, %v3580
  %v3617 = vmul.f32 %v2987, %v3580
  %v3618 = vmul.f32 %v2990, %v3580
  %v3619 = vmul.f32 %v2995, %v3580
  %v3620 = vmul.f32 %v2998, %v3580
  %v3621 = vmul.f32 %v3003, %v3580
  %v3622 = vmul.f32 %v3006, %v3580
  %v3623 = vmul.f32 %v3011, %v3580
  %v3624 = vmul.f32 %v3014, %v3580
  %v3625 = vmul.f32 %v3019, %v3580
  %v3626 = vmul.f32 %v3022, %v3580
  %v3627 = vmul.f32 %v3027, %v3580
  %v3628 = vmul.f32 %v3030, %v3580
  %v3629 = vmul.f32 %v3035, %v3580
  %v3630 = vmul.f32 %v3038, %v3580
  %v3631 = vmul.f32 %v3043, %v3580
  %v3632 = vmul.f32 %v3046, %v3580
  %v3633 = vmul.f32 %v3051, %v3580
  %v3634 = vmul.f32 %v3054, %v3580
  %v3635 = vmul.f32 %v3059, %v3580
  %v3636 = vmul.f32 %v3062, %v3580
  %v3637 = vmul.f32 %v3067, %v3580
  %v3638 = vmul.f32 %v3070, %v3580
  %v3639 = vmul.f32 %v3075, %v3580
  %v3640 = vmul.f32 %v3078, %v3580
  %v3641 = vmul.f32 %v3083, %v3580
  %v3642 = vmul.f32 %v3086, %v3580
  %v3643 = vmul.f32 %v3091, %v3580
  %v3644 = vmul.f32 %v3094, %v3580
  %v3645 = vmul.f32 %v3099, %v3580
  %v3646 = vmul.f32 %v3102, %v3580
  %v3647 = vmul.f32 %v3107, %v3580
  %v3648 = vmul.f32 %v3110, %v3580
  %v3649 = vmul.f32 %v3115, %v3580
  %v3650 = vmul.f32 %v3118, %v3580
  %v3651 = vmul.f32 %v3123, %v3580
  %v3652 = vmul.f32 %v3126, %v3580
  %v3653 = vmul.f32 %v3131, %v3580
  %v3654 = vmul.f32 %v3134, %v3580
  %v3655 = vmul.f32 %v3139, %v3580
  %v3656 = vmul.f32 %v3142, %v3580
  %v3657 = vmul.f32 %v3147, %v3580
  %v3658 = vmul.f32 %v3150, %v3580
  %v3659 = vmul.f32 %v3155, %v3580
  %v3660 = vmul.f32 %v3158, %v3580
  %v3661 = vmul.f32 %v3163, %v3580
  %v3662 = vmul.f32 %v3166, %v3580
  %v3663 = vmul.f32 %v3171, %v3580
  %v3664 = vmul.f32 %v3174, %v3580
  %v3665 = vmul.f32 %v3179, %v3580
  %v3666 = vmul.f32 %v3182, %v3580
  %v3667 = vmul.f32 %v3187, %v3580
  %v3668 = vmul.f32 %v3190, %v3580
  %v3669 = vmul.f32 %v3195, %v3580
  %v3670 = vmul.f32 %v3198, %v3580
  %v3671 = vmul.f32 %v3203, %v3580
  %v3672 = vmul.f32 %v3206, %v3580
  %v3673 = vmul.f32 %v3211, %v3580
  %v3674 = vmul.f32 %v3214, %v3580
  %v3675 = vmul.f32 %v3219, %v3580
  %v3676 = vmul.f32 %v3222, %v3580
  %v3677 = vmul.f32 %v3227, %v3580
  %v3678 = vmul.f32 %v3230, %v3580
  %v3679 = vmul.f32 %v3235, %v3580
  %v3680 = vmul.f32 %v3238, %v3580
  %v3681 = vmul.f32 %v3243, %v3580
  %v3682 = vmul.f32 %v3246, %v3580
  %v3683 = vmul.f32 %v3251, %v3580
  %v3684 = vmul.f32 %v3254, %v3580
  %v3685 = vmul.f32 %v3259, %v3580
  %v3686 = vmul.f32 %v3262, %v3580
  %v3687 = vmul.f32 %v3267, %v3580
  %v3688 = vmul.f32 %v3270, %v3580
  %v3689 = vmul.f32 %v3275, %v3580
  %v3690 = vmul.f32 %v3278, %v3580
  %v3691 = vmul.f32 %v3283, %v3580
  %v3692 = vmul.f32 %v3286, %v3580
  %v3693 = vmul.f32 %v3291, %v3580
  %v3694 = vmul.f32 %v3294, %v3580
  %v3695 = vmul.f32 %v3299, %v3580
  %v3696 = vmul.f32 %v3302, %v3580
  %v3697 = vmul.f32 %v3307, %v3580
  %v3698 = vmul.f32 %v3310, %v3580
  %v3699 = vmul.f32 %v3315, %v3580
  %v3700 = vmul.f32 %v3318, %v3580
  %v3701 = vmul.f32 %v3323, %v3580
  %v3702 = vmul.f32 %v3326, %v3580
  %v3703 = vmul.f32 %v3331, %v3580
  %v3704 = vmul.f32 %v3334, %v3580
  %v3705 = vmul.f32 %v3339, %v3580
  %v3706 = vmul.f32 %v3342, %v3580
  %v3707 = vmul.f32 %v3347, %v3580
  %v3708 = vmul.f32 %v3350, %v3580
  %v3709 = vmul.f32 %v3355, %v3580
  %v3710 = vmul.f32 %v3358, %v3580
  %v3711 = vmul.f32 %v3363, %v3580
  %v3712 = vmul.f32 %v3366, %v3580
  %v3713 = vmul.f32 %v3371, %v3580
  %v3714 = vmul.f32 %v3374, %v3580
  %v3715 = vmul.f32 %v3379, %v3580
  %v3716 = vmul.f32 %v3382, %v3580
  %v3717 = vmul.f32 %v3387, %v3580
  %v3718 = vmul.f32 %v3390, %v3580
  %v3719 = vmul.f32 %v3395, %v3580
  %v3720 = vmul.f32 %v3398, %v3580
  %v3721 = vmul.f32 %v3403, %v3580
  %v3722 = vmul.f32 %v3406, %v3580
  %v3723 = vmul.f32 %v3411, %v3580
  %v3724 = vmul.f32 %v3414, %v3580
  %v3725 = vmul.f32 %v3419, %v3580
  %v3726 = vmul.f32 %v3422, %v3580
  %v3727 = vmul.f32 %v3427, %v3580
  %v3728 = vmul.f32 %v3430, %v3580
  %v3729 = vmul.f32 %v3435, %v3580
  %v3730 = vmul.f32 %v3438, %v3580
  %v3731 = vmul.f32 %v3443, %v3580
  %v3732 = vmul.f32 %v3446, %v3580
  %v3733 = vmul.f32 %v3451, %v3580
  %v3734 = vmul.f32 %v3454, %v3580
  %v3735 = vmul.f32 %v3459, %v3580
  %v3736 = vmul.f32 %v3462, %v3580
  %v3737 = vmul.f32 %v3467, %v3580
  %v3738 = vmul.f32 %v3470, %v3580
  %v3739 = vmul.f32 %v3475, %v3580
  %v3740 = vmul.f32 %v3478, %v3580
  %v3741 = vmul.f32 %v3483, %v3580
  %v3742 = vmul.f32 %v3486, %v3580
  %v3743 = vmul.f32 %v3491, %v3580
  %v3744 = vmul.f32 %v3494, %v3580
  %v3745 = vmul.f32 %v3499, %v3580
  %v3746 = vmul.f32 %v3502, %v3580
  %v3747 = vmul.f32 %v3507, %v3580
  %v3748 = vmul.f32 %v3510, %v3580
  %v3749 = vmul.f32 %v3515, %v3580
  %v3750 = vmul.f32 %v3518, %v3580
  %v3751 = vmul.f32 %v3523, %v3580
  %v3752 = vmul.f32 %v3526, %v3580
  %v3753 = vmul.f32 %v3531, %v3580
  %v3754 = vmul.f32 %v3534, %v3580
  %v3755 = vmul.f32 %v3539, %v3580
  %v3756 = vmul.f32 %v3542, %v3580
  %v3757 = vmul.f32 %v3547, %v3580
  %v3758 = vmul.f32 %v3550, %v3580
  %v3759 = vmul.f32 %v3555, %v3580
  %v3760 = vmul.f32 %v3558, %v3580
  %v3761 = vmul.f32 %v3563, %v3580
  %v3762 = vmul.f32 %v3566, %v3580
  %v3763 = vmul.f32 %v3571, %v3580
  %v3764 = vld [vmem:[%s2 + $0x1] sm:$0x1]
  %v3765 = vlaneseq
  %v3766 = vshrl.u32 %v3765, 7
  %v3767 = vsub.s32 0, %v3766
  %v3768 = vrot.slane %v3764, %v3767
  %v3769 = vadd.f32 %v3581, %v3768
  %v3770 = vadd.f32 %v3582, %v3768
  %v3771 = vadd.f32 %v3583, %v3768
  %v3772 = vadd.f32 %v3584, %v3768
  %v3773 = vadd.f32 %v3585, %v3768
  %v3774 = vadd.f32 %v3586, %v3768
  %v3775 = vadd.f32 %v3587, %v3768
  %v3776 = vadd.f32 %v3588, %v3768
  %v3777 = vadd.f32 %v3589, %v3768
  %v3778 = vadd.f32 %v3590, %v3768
  %v3779 = vadd.f32 %v3591, %v3768
  %v3780 = vadd.f32 %v3592, %v3768
  %v3781 = vadd.f32 %v3593, %v3768
  %v3782 = vadd.f32 %v3594, %v3768
  %v3783 = vadd.f32 %v3595, %v3768
  %v3784 = vadd.f32 %v3596, %v3768
  %v3785 = vadd.f32 %v3597, %v3768
  %v3786 = vadd.f32 %v3598, %v3768
  %v3787 = vadd.f32 %v3599, %v3768
  %v3788 = vadd.f32 %v3600, %v3768
  %v3789 = vadd.f32 %v3601, %v3768
  %v3790 = vadd.f32 %v3602, %v3768
  %v3791 = vadd.f32 %v3603, %v3768
  %v3792 = vadd.f32 %v3604, %v3768
  %v3793 = vadd.f32 %v3605, %v3768
  %v3794 = vadd.f32 %v3606, %v3768
  %v3795 = vadd.f32 %v3607, %v3768
  %v3796 = vadd.f32 %v3608, %v3768
  %v3797 = vadd.f32 %v3609, %v3768
  %v3798 = vadd.f32 %v3610, %v3768
  %v3799 = vadd.f32 %v3611, %v3768
  %v3800 = vadd.f32 %v3612, %v3768
  %v3801 = vadd.f32 %v3613, %v3768
  %v3802 = vadd.f32 %v3614, %v3768
  %v3803 = vadd.f32 %v3615, %v3768
  %v3804 = vadd.f32 %v3616, %v3768
  %v3805 = vadd.f32 %v3617, %v3768
  %v3806 = vadd.f32 %v3618, %v3768
  %v3807 = vadd.f32 %v3619, %v3768
  %v3808 = vadd.f32 %v3620, %v3768
  %v3809 = vadd.f32 %v3621, %v3768
  %v3810 = vadd.f32 %v3622, %v3768
  %v3811 = vadd.f32 %v3623, %v3768
  %v3812 = vadd.f32 %v3624, %v3768
  %v3813 = vadd.f32 %v3625, %v3768
  %v3814 = vadd.f32 %v3626, %v3768
  %v3815 = vadd.f32 %v3627, %v3768
  %v3816 = vadd.f32 %v3628, %v3768
  %v3817 = vadd.f32 %v3629, %v3768
  %v3818 = vadd.f32 %v3630, %v3768
  %v3819 = vadd.f32 %v3631, %v3768
  %v3820 = vadd.f32 %v3632, %v3768
  %v3821 = vadd.f32 %v3633, %v3768
  %v3822 = vadd.f32 %v3634, %v3768
  %v3823 = vadd.f32 %v3635, %v3768
  %v3824 = vadd.f32 %v3636, %v3768
  %v3825 = vadd.f32 %v3637, %v3768
  %v3826 = vadd.f32 %v3638, %v3768
  %v3827 = vadd.f32 %v3639, %v3768
  %v3828 = vadd.f32 %v3640, %v3768
  %v3829 = vadd.f32 %v3641, %v3768
  %v3830 = vadd.f32 %v3642, %v3768
  %v3831 = vadd.f32 %v3643, %v3768
  %v3832 = vadd.f32 %v3644, %v3768
  %v3833 = vadd.f32 %v3645, %v3768
  %v3834 = vadd.f32 %v3646, %v3768
  %v3835 = vadd.f32 %v3647, %v3768
  %v3836 = vadd.f32 %v3648, %v3768
  %v3837 = vadd.f32 %v3649, %v3768
  %v3838 = vadd.f32 %v3650, %v3768
  %v3839 = vadd.f32 %v3651, %v3768
  %v3840 = vadd.f32 %v3652, %v3768
  %v3841 = vadd.f32 %v3653, %v3768
  %v3842 = vadd.f32 %v3654, %v3768
  %v3843 = vadd.f32 %v3655, %v3768
  %v3844 = vadd.f32 %v3656, %v3768
  %v3845 = vadd.f32 %v3657, %v3768
  %v3846 = vadd.f32 %v3658, %v3768
  %v3847 = vadd.f32 %v3659, %v3768
  %v3848 = vadd.f32 %v3660, %v3768
  %v3849 = vadd.f32 %v3661, %v3768
  %v3850 = vadd.f32 %v3662, %v3768
  %v3851 = vadd.f32 %v3663, %v3768
  %v3852 = vadd.f32 %v3664, %v3768
  %v3853 = vadd.f32 %v3665, %v3768
  %v3854 = vadd.f32 %v3666, %v3768
  %v3855 = vadd.f32 %v3667, %v3768
  %v3856 = vadd.f32 %v3668, %v3768
  %v3857 = vadd.f32 %v3669, %v3768
  %v3858 = vadd.f32 %v3670, %v3768
  %v3859 = vadd.f32 %v3671, %v3768
  %v3860 = vadd.f32 %v3672, %v3768
  %v3861 = vadd.f32 %v3673, %v3768
  %v3862 = vadd.f32 %v3674, %v3768
  %v3863 = vadd.f32 %v3675, %v3768
  %v3864 = vadd.f32 %v3676, %v3768
  %v3865 = vadd.f32 %v3677, %v3768
  %v3866 = vadd.f32 %v3678, %v3768
  %v3867 = vadd.f32 %v3679, %v3768
  %v3868 = vadd.f32 %v3680, %v3768
  %v3869 = vadd.f32 %v3681, %v3768
  %v3870 = vadd.f32 %v3682, %v3768
  %v3871 = vadd.f32 %v3683, %v3768
  %v3872 = vadd.f32 %v3684, %v3768
  %v3873 = vadd.f32 %v3685, %v3768
  %v3874 = vadd.f32 %v3686, %v3768
  %v3875 = vadd.f32 %v3687, %v3768
  %v3876 = vadd.f32 %v3688, %v3768
  %v3877 = vadd.f32 %v3689, %v3768
  %v3878 = vadd.f32 %v3690, %v3768
  %v3879 = vadd.f32 %v3691, %v3768
  %v3880 = vadd.f32 %v3692, %v3768
  %v3881 = vadd.f32 %v3693, %v3768
  %v3882 = vadd.f32 %v3694, %v3768
  %v3883 = vadd.f32 %v3695, %v3768
  %v3884 = vadd.f32 %v3696, %v3768
  %v3885 = vadd.f32 %v3697, %v3768
  %v3886 = vadd.f32 %v3698, %v3768
  %v3887 = vadd.f32 %v3699, %v3768
  %v3888 = vadd.f32 %v3700, %v3768
  %v3889 = vadd.f32 %v3701, %v3768
  %v3890 = vadd.f32 %v3702, %v3768
  %v3891 = vadd.f32 %v3703, %v3768
  %v3892 = vadd.f32 %v3704, %v3768
  %v3893 = vadd.f32 %v3705, %v3768
  %v3894 = vadd.f32 %v3706, %v3768
  %v3895 = vadd.f32 %v3707, %v3768
  %v3896 = vadd.f32 %v3708, %v3768
  %v3897 = vadd.f32 %v3709, %v3768
  %v3898 = vadd.f32 %v3710, %v3768
  %v3899 = vadd.f32 %v3711, %v3768
  %v3900 = vadd.f32 %v3712, %v3768
  %v3901 = vadd.f32 %v3713, %v3768
  %v3902 = vadd.f32 %v3714, %v3768
  %v3903 = vadd.f32 %v3715, %v3768
  %v3904 = vadd.f32 %v3716, %v3768
  %v3905 = vadd.f32 %v3717, %v3768
  %v3906 = vadd.f32 %v3718, %v3768
  %v3907 = vadd.f32 %v3719, %v3768
  %v3908 = vadd.f32 %v3720, %v3768
  %v3909 = vadd.f32 %v3721, %v3768
  %v3910 = vadd.f32 %v3722, %v3768
  %v3911 = vadd.f32 %v3723, %v3768
  %v3912 = vadd.f32 %v3724, %v3768
  %v3913 = vadd.f32 %v3725, %v3768
  %v3914 = vadd.f32 %v3726, %v3768
  %v3915 = vadd.f32 %v3727, %v3768
  %v3916 = vadd.f32 %v3728, %v3768
  %v3917 = vadd.f32 %v3729, %v3768
  %v3918 = vadd.f32 %v3730, %v3768
  %v3919 = vadd.f32 %v3731, %v3768
  %v3920 = vadd.f32 %v3732, %v3768
  %v3921 = vadd.f32 %v3733, %v3768
  %v3922 = vadd.f32 %v3734, %v3768
  %v3923 = vadd.f32 %v3735, %v3768
  %v3924 = vadd.f32 %v3736, %v3768
  %v3925 = vadd.f32 %v3737, %v3768
  %v3926 = vadd.f32 %v3738, %v3768
  %v3927 = vadd.f32 %v3739, %v3768
  %v3928 = vadd.f32 %v3740, %v3768
  %v3929 = vadd.f32 %v3741, %v3768
  %v3930 = vadd.f32 %v3742, %v3768
  %v3931 = vadd.f32 %v3743, %v3768
  %v3932 = vadd.f32 %v3744, %v3768
  %v3933 = vadd.f32 %v3745, %v3768
  %v3934 = vadd.f32 %v3746, %v3768
  %v3935 = vadd.f32 %v3747, %v3768
  %v3936 = vadd.f32 %v3748, %v3768
  %v3937 = vadd.f32 %v3749, %v3768
  %v3938 = vadd.f32 %v3750, %v3768
  %v3939 = vadd.f32 %v3751, %v3768
  %v3940 = vadd.f32 %v3752, %v3768
  %v3941 = vadd.f32 %v3753, %v3768
  %v3942 = vadd.f32 %v3754, %v3768
  %v3943 = vadd.f32 %v3755, %v3768
  %v3944 = vadd.f32 %v3756, %v3768
  %v3945 = vadd.f32 %v3757, %v3768
  %v3946 = vadd.f32 %v3758, %v3768
  %v3947 = vadd.f32 %v3759, %v3768
  %v3948 = vadd.f32 %v3760, %v3768
  %v3949 = vadd.f32 %v3761, %v3768
  %v3950 = vadd.f32 %v3762, %v3768
  %v3951 = vadd.f32 %v3763, %v3768
  %v3952 = vpack.c.bf16 %v3770, %v3769
  %v3953 = vpack.c.bf16 %v3772, %v3771
  %v3954 = vpack.c.bf16 %v3774, %v3773
  %v3955 = vpack.c.bf16 %v3776, %v3775
  %v3956 = vpack.c.bf16 %v3778, %v3777
  %v3957 = vpack.c.bf16 %v3780, %v3779
  %v3958 = vpack.c.bf16 %v3782, %v3781
  %v3959 = vpack.c.bf16 %v3784, %v3783
  %v3960 = vpack.c.bf16 %v3786, %v3785
  %v3961 = vpack.c.bf16 %v3788, %v3787
  %v3962 = vpack.c.bf16 %v3790, %v3789
  %v3963 = vpack.c.bf16 %v3792, %v3791
  %v3964 = vpack.c.bf16 %v3794, %v3793
  %v3965 = vpack.c.bf16 %v3796, %v3795
  %v3966 = vpack.c.bf16 %v3798, %v3797
  %v3967 = vpack.c.bf16 %v3800, %v3799
  %v3968 = vpack.c.bf16 %v3802, %v3801
  %v3969 = vpack.c.bf16 %v3804, %v3803
  %v3970 = vpack.c.bf16 %v3806, %v3805
  %v3971 = vpack.c.bf16 %v3808, %v3807
  %v3972 = vpack.c.bf16 %v3810, %v3809
  %v3973 = vpack.c.bf16 %v3812, %v3811
  %v3974 = vpack.c.bf16 %v3814, %v3813
  %v3975 = vpack.c.bf16 %v3816, %v3815
  %v3976 = vpack.c.bf16 %v3818, %v3817
  %v3977 = vpack.c.bf16 %v3820, %v3819
  %v3978 = vpack.c.bf16 %v3822, %v3821
  %v3979 = vpack.c.bf16 %v3824, %v3823
  %v3980 = vpack.c.bf16 %v3826, %v3825
  %v3981 = vpack.c.bf16 %v3828, %v3827
  %v3982 = vpack.c.bf16 %v3830, %v3829
  %v3983 = vpack.c.bf16 %v3832, %v3831
  %v3984 = vpack.c.bf16 %v3834, %v3833
  %v3985 = vpack.c.bf16 %v3836, %v3835
  %v3986 = vpack.c.bf16 %v3838, %v3837
  %v3987 = vpack.c.bf16 %v3840, %v3839
  %v3988 = vpack.c.bf16 %v3842, %v3841
  %v3989 = vpack.c.bf16 %v3844, %v3843
  %v3990 = vpack.c.bf16 %v3846, %v3845
  %v3991 = vpack.c.bf16 %v3848, %v3847
  %v3992 = vpack.c.bf16 %v3850, %v3849
  %v3993 = vpack.c.bf16 %v3852, %v3851
  %v3994 = vpack.c.bf16 %v3854, %v3853
  %v3995 = vpack.c.bf16 %v3856, %v3855
  %v3996 = vpack.c.bf16 %v3858, %v3857
  %v3997 = vpack.c.bf16 %v3860, %v3859
  %v3998 = vpack.c.bf16 %v3862, %v3861
  %v3999 = vpack.c.bf16 %v3864, %v3863
  %v4000 = vpack.c.bf16 %v3866, %v3865
  %v4001 = vpack.c.bf16 %v3868, %v3867
  %v4002 = vpack.c.bf16 %v3870, %v3869
  %v4003 = vpack.c.bf16 %v3872, %v3871
  %v4004 = vpack.c.bf16 %v3874, %v3873
  %v4005 = vpack.c.bf16 %v3876, %v3875
  %v4006 = vpack.c.bf16 %v3878, %v3877
  %v4007 = vpack.c.bf16 %v3880, %v3879
  %v4008 = vpack.c.bf16 %v3882, %v3881
  %v4009 = vpack.c.bf16 %v3884, %v3883
  %v4010 = vpack.c.bf16 %v3886, %v3885
  %v4011 = vpack.c.bf16 %v3888, %v3887
  %v4012 = vpack.c.bf16 %v3890, %v3889
  %v4013 = vpack.c.bf16 %v3892, %v3891
  %v4014 = vpack.c.bf16 %v3894, %v3893
  %v4015 = vpack.c.bf16 %v3896, %v3895
  %v4016 = vpack.c.bf16 %v3898, %v3897
  %v4017 = vpack.c.bf16 %v3900, %v3899
  %v4018 = vpack.c.bf16 %v3902, %v3901
  %v4019 = vpack.c.bf16 %v3904, %v3903
  %v4020 = vpack.c.bf16 %v3906, %v3905
  %v4021 = vpack.c.bf16 %v3908, %v3907
  %v4022 = vpack.c.bf16 %v3910, %v3909
  %v4023 = vpack.c.bf16 %v3912, %v3911
  %v4024 = vpack.c.bf16 %v3914, %v3913
  %v4025 = vpack.c.bf16 %v3916, %v3915
  %v4026 = vpack.c.bf16 %v3918, %v3917
  %v4027 = vpack.c.bf16 %v3920, %v3919
  %v4028 = vpack.c.bf16 %v3922, %v3921
  %v4029 = vpack.c.bf16 %v3924, %v3923
  %v4030 = vpack.c.bf16 %v3926, %v3925
  %v4031 = vpack.c.bf16 %v3928, %v3927
  %v4032 = vpack.c.bf16 %v3930, %v3929
  %v4033 = vpack.c.bf16 %v3932, %v3931
  %v4034 = vpack.c.bf16 %v3934, %v3933
  %v4035 = vpack.c.bf16 %v3936, %v3935
  %v4036 = vpack.c.bf16 %v3938, %v3937
  %v4037 = vpack.c.bf16 %v3940, %v3939
  %v4038 = vpack.c.bf16 %v3942, %v3941
  %v4039 = vpack.c.bf16 %v3944, %v3943
  %v4040 = vpack.c.bf16 %v3946, %v3945
  %v4041 = vpack.c.bf16 %v3948, %v3947
  %v4042 = vpack.c.bf16 %v3950, %v3949
  %v4043 = vpack.c.bf16 %v3951, %v3951
  %v4136 = vunpack.c.l.b16 %v3952
  %v4137 = vunpack.c.h.b16 %v3952
  %v4138 = vunpack.c.l.b16 %v3953
  %v4139 = vunpack.c.h.b16 %v3953
  %v4140 = vunpack.c.l.b16 %v3954
  %v4141 = vunpack.c.h.b16 %v3954
  %v4142 = vunpack.c.l.b16 %v3955
  %v4143 = vunpack.c.h.b16 %v3955
  %v4144 = vunpack.c.l.b16 %v3956
  %v4145 = vunpack.c.h.b16 %v3956
  %v4146 = vunpack.c.l.b16 %v3957
  %v4147 = vunpack.c.h.b16 %v3957
  %v4148 = vunpack.c.l.b16 %v3958
  %v4149 = vunpack.c.h.b16 %v3958
  %v4150 = vunpack.c.l.b16 %v3959
  %v4151 = vunpack.c.h.b16 %v3959
  %v4152 = vunpack.c.l.b16 %v3960
  %v4153 = vunpack.c.h.b16 %v3960
  %v4154 = vunpack.c.l.b16 %v3961
  %v4155 = vunpack.c.h.b16 %v3961
  %v4156 = vunpack.c.l.b16 %v3962
  %v4157 = vunpack.c.h.b16 %v3962
  %v4158 = vunpack.c.l.b16 %v3963
  %v4159 = vunpack.c.h.b16 %v3963
  %v4160 = vunpack.c.l.b16 %v3964
  %v4161 = vunpack.c.h.b16 %v3964
  %v4162 = vunpack.c.l.b16 %v3965
  %v4163 = vunpack.c.h.b16 %v3965
  %v4164 = vunpack.c.l.b16 %v3966
  %v4165 = vunpack.c.h.b16 %v3966
  %v4166 = vunpack.c.l.b16 %v3967
  %v4167 = vunpack.c.h.b16 %v3967
  %v4168 = vunpack.c.l.b16 %v3968
  %v4169 = vunpack.c.h.b16 %v3968
  %v4170 = vunpack.c.l.b16 %v3969
  %v4171 = vunpack.c.h.b16 %v3969
  %v4172 = vunpack.c.l.b16 %v3970
  %v4173 = vunpack.c.h.b16 %v3970
  %v4174 = vunpack.c.l.b16 %v3971
  %v4175 = vunpack.c.h.b16 %v3971
  %v4176 = vunpack.c.l.b16 %v3972
  %v4177 = vunpack.c.h.b16 %v3972
  %v4178 = vunpack.c.l.b16 %v3973
  %v4179 = vunpack.c.h.b16 %v3973
  %v4180 = vunpack.c.l.b16 %v3974
  %v4181 = vunpack.c.h.b16 %v3974
  %v4182 = vunpack.c.l.b16 %v3975
  %v4183 = vunpack.c.h.b16 %v3975
  %v4184 = vunpack.c.l.b16 %v3976
  %v4185 = vunpack.c.h.b16 %v3976
  %v4186 = vunpack.c.l.b16 %v3977
  %v4187 = vunpack.c.h.b16 %v3977
  %v4188 = vunpack.c.l.b16 %v3978
  %v4189 = vunpack.c.h.b16 %v3978
  %v4190 = vunpack.c.l.b16 %v3979
  %v4191 = vunpack.c.h.b16 %v3979
  %v4192 = vunpack.c.l.b16 %v3980
  %v4193 = vunpack.c.h.b16 %v3980
  %v4194 = vunpack.c.l.b16 %v3981
  %v4195 = vunpack.c.h.b16 %v3981
  %v4196 = vunpack.c.l.b16 %v3982
  %v4197 = vunpack.c.h.b16 %v3982
  %v4198 = vunpack.c.l.b16 %v3983
  %v4199 = vunpack.c.h.b16 %v3983
  %v4200 = vunpack.c.l.b16 %v3984
  %v4201 = vunpack.c.h.b16 %v3984
  %v4202 = vunpack.c.l.b16 %v3985
  %v4203 = vunpack.c.h.b16 %v3985
  %v4204 = vunpack.c.l.b16 %v3986
  %v4205 = vunpack.c.h.b16 %v3986
  %v4206 = vunpack.c.l.b16 %v3987
  %v4207 = vunpack.c.h.b16 %v3987
  %v4208 = vunpack.c.l.b16 %v3988
  %v4209 = vunpack.c.h.b16 %v3988
  %v4210 = vunpack.c.l.b16 %v3989
  %v4211 = vunpack.c.h.b16 %v3989
  %v4212 = vunpack.c.l.b16 %v3990
  %v4213 = vunpack.c.h.b16 %v3990
  %v4214 = vunpack.c.l.b16 %v3991
  %v4215 = vunpack.c.h.b16 %v3991
  %v4216 = vunpack.c.l.b16 %v3992
  %v4217 = vunpack.c.h.b16 %v3992
  %v4218 = vunpack.c.l.b16 %v3993
  %v4219 = vunpack.c.h.b16 %v3993
  %v4220 = vunpack.c.l.b16 %v3994
  %v4221 = vunpack.c.h.b16 %v3994
  %v4222 = vunpack.c.l.b16 %v3995
  %v4223 = vunpack.c.h.b16 %v3995
  %v4224 = vunpack.c.l.b16 %v3996
  %v4225 = vunpack.c.h.b16 %v3996
  %v4226 = vunpack.c.l.b16 %v3997
  %v4227 = vunpack.c.h.b16 %v3997
  %v4228 = vunpack.c.l.b16 %v3998
  %v4229 = vunpack.c.h.b16 %v3998
  %v4230 = vunpack.c.l.b16 %v3999
  %v4231 = vunpack.c.h.b16 %v3999
  %v4232 = vunpack.c.l.b16 %v4000
  %v4233 = vunpack.c.h.b16 %v4000
  %v4234 = vunpack.c.l.b16 %v4001
  %v4235 = vunpack.c.h.b16 %v4001
  %v4236 = vunpack.c.l.b16 %v4002
  %v4237 = vunpack.c.h.b16 %v4002
  %v4238 = vunpack.c.l.b16 %v4003
  %v4239 = vunpack.c.h.b16 %v4003
  %v4240 = vunpack.c.l.b16 %v4004
  %v4241 = vunpack.c.h.b16 %v4004
  %v4242 = vunpack.c.l.b16 %v4005
  %v4243 = vunpack.c.h.b16 %v4005
  %v4244 = vunpack.c.l.b16 %v4006
  %v4245 = vunpack.c.h.b16 %v4006
  %v4246 = vunpack.c.l.b16 %v4007
  %v4247 = vunpack.c.h.b16 %v4007
  %v4248 = vunpack.c.l.b16 %v4008
  %v4249 = vunpack.c.h.b16 %v4008
  %v4250 = vunpack.c.l.b16 %v4009
  %v4251 = vunpack.c.h.b16 %v4009
  %v4252 = vunpack.c.l.b16 %v4010
  %v4253 = vunpack.c.h.b16 %v4010
  %v4254 = vunpack.c.l.b16 %v4011
  %v4255 = vunpack.c.h.b16 %v4011
  %v4256 = vunpack.c.l.b16 %v4012
  %v4257 = vunpack.c.h.b16 %v4012
  %v4258 = vunpack.c.l.b16 %v4013
  %v4259 = vunpack.c.h.b16 %v4013
  %v4260 = vunpack.c.l.b16 %v4014
  %v4261 = vunpack.c.h.b16 %v4014
  %v4262 = vunpack.c.l.b16 %v4015
  %v4263 = vunpack.c.h.b16 %v4015
  %v4264 = vunpack.c.l.b16 %v4016
  %v4265 = vunpack.c.h.b16 %v4016
  %v4266 = vunpack.c.l.b16 %v4017
  %v4267 = vunpack.c.h.b16 %v4017
  %v4268 = vunpack.c.l.b16 %v4018
  %v4269 = vunpack.c.h.b16 %v4018
  %v4270 = vunpack.c.l.b16 %v4019
  %v4271 = vunpack.c.h.b16 %v4019
  %v4272 = vunpack.c.l.b16 %v4020
  %v4273 = vunpack.c.h.b16 %v4020
  %v4274 = vunpack.c.l.b16 %v4021
  %v4275 = vunpack.c.h.b16 %v4021
  %v4276 = vunpack.c.l.b16 %v4022
  %v4277 = vunpack.c.h.b16 %v4022
  %v4278 = vunpack.c.l.b16 %v4023
  %v4279 = vunpack.c.h.b16 %v4023
  %v4280 = vunpack.c.l.b16 %v4024
  %v4281 = vunpack.c.h.b16 %v4024
  %v4282 = vunpack.c.l.b16 %v4025
  %v4283 = vunpack.c.h.b16 %v4025
  %v4284 = vunpack.c.l.b16 %v4026
  %v4285 = vunpack.c.h.b16 %v4026
  %v4286 = vunpack.c.l.b16 %v4027
  %v4287 = vunpack.c.h.b16 %v4027
  %v4288 = vunpack.c.l.b16 %v4028
  %v4289 = vunpack.c.h.b16 %v4028
  %v4290 = vunpack.c.l.b16 %v4029
  %v4291 = vunpack.c.h.b16 %v4029
  %v4292 = vunpack.c.l.b16 %v4030
  %v4293 = vunpack.c.h.b16 %v4030
  %v4294 = vunpack.c.l.b16 %v4031
  %v4295 = vunpack.c.h.b16 %v4031
  %v4296 = vunpack.c.l.b16 %v4032
  %v4297 = vunpack.c.h.b16 %v4032
  %v4298 = vunpack.c.l.b16 %v4033
  %v4299 = vunpack.c.h.b16 %v4033
  %v4300 = vunpack.c.l.b16 %v4034
  %v4301 = vunpack.c.h.b16 %v4034
  %v4302 = vunpack.c.l.b16 %v4035
  %v4303 = vunpack.c.h.b16 %v4035
  %v4304 = vunpack.c.l.b16 %v4036
  %v4305 = vunpack.c.h.b16 %v4036
  %v4306 = vunpack.c.l.b16 %v4037
  %v4307 = vunpack.c.h.b16 %v4037
  %v4308 = vunpack.c.l.b16 %v4038
  %v4309 = vunpack.c.h.b16 %v4038
  %v4310 = vunpack.c.l.b16 %v4039
  %v4311 = vunpack.c.h.b16 %v4039
  %v4312 = vunpack.c.l.b16 %v4040
  %v4313 = vunpack.c.h.b16 %v4040
  %v4314 = vunpack.c.l.b16 %v4041
  %v4315 = vunpack.c.h.b16 %v4041
  %v4316 = vunpack.c.l.b16 %v4042
  %v4317 = vunpack.c.h.b16 %v4042
  %v4318 = vunpack.c.l.b16 %v4043
  %v4319 = vpack.c.b16 %v4136, %v4136
  %v4320 = vpack.c.b16 %v4137, %v4137
  %v4321 = vpack.c.b16 %v4138, %v4138
  %v4322 = vpack.c.b16 %v4139, %v4139
  %v4323 = vpack.c.b16 %v4140, %v4140
  %v4324 = vpack.c.b16 %v4141, %v4141
  %v4325 = vpack.c.b16 %v4142, %v4142
  %v4326 = vpack.c.b16 %v4143, %v4143
  %v4327 = vpack.c.b16 %v4144, %v4144
  %v4328 = vpack.c.b16 %v4145, %v4145
  %v4329 = vpack.c.b16 %v4146, %v4146
  %v4330 = vpack.c.b16 %v4147, %v4147
  %v4331 = vpack.c.b16 %v4148, %v4148
  %v4332 = vpack.c.b16 %v4149, %v4149
  %v4333 = vpack.c.b16 %v4150, %v4150
  %v4334 = vpack.c.b16 %v4151, %v4151
  %v4335 = vpack.c.b16 %v4152, %v4152
  %v4336 = vpack.c.b16 %v4153, %v4153
  %v4337 = vpack.c.b16 %v4154, %v4154
  %v4338 = vpack.c.b16 %v4155, %v4155
  %v4339 = vpack.c.b16 %v4156, %v4156
  %v4340 = vpack.c.b16 %v4157, %v4157
  %v4341 = vpack.c.b16 %v4158, %v4158
  %v4342 = vpack.c.b16 %v4159, %v4159
  %v4343 = vpack.c.b16 %v4160, %v4160
  %v4344 = vpack.c.b16 %v4161, %v4161
  %v4345 = vpack.c.b16 %v4162, %v4162
  %v4346 = vpack.c.b16 %v4163, %v4163
  %v4347 = vpack.c.b16 %v4164, %v4164
  %v4348 = vpack.c.b16 %v4165, %v4165
  %v4349 = vpack.c.b16 %v4166, %v4166
  %v4350 = vpack.c.b16 %v4167, %v4167
  %v4351 = vpack.c.b16 %v4168, %v4168
  %v4352 = vpack.c.b16 %v4169, %v4169
  %v4353 = vpack.c.b16 %v4170, %v4170
  %v4354 = vpack.c.b16 %v4171, %v4171
  %v4355 = vpack.c.b16 %v4172, %v4172
  %v4356 = vpack.c.b16 %v4173, %v4173
  %v4357 = vpack.c.b16 %v4174, %v4174
  %v4358 = vpack.c.b16 %v4175, %v4175
  %v4359 = vpack.c.b16 %v4176, %v4176
  %v4360 = vpack.c.b16 %v4177, %v4177
  %v4361 = vpack.c.b16 %v4178, %v4178
  %v4362 = vpack.c.b16 %v4179, %v4179
  %v4363 = vpack.c.b16 %v4180, %v4180
  %v4364 = vpack.c.b16 %v4181, %v4181
  %v4365 = vpack.c.b16 %v4182, %v4182
  %v4366 = vpack.c.b16 %v4183, %v4183
  %v4367 = vpack.c.b16 %v4184, %v4184
  %v4368 = vpack.c.b16 %v4185, %v4185
  %v4369 = vpack.c.b16 %v4186, %v4186
  %v4370 = vpack.c.b16 %v4187, %v4187
  %v4371 = vpack.c.b16 %v4188, %v4188
  %v4372 = vpack.c.b16 %v4189, %v4189
  %v4373 = vpack.c.b16 %v4190, %v4190
  %v4374 = vpack.c.b16 %v4191, %v4191
  %v4375 = vpack.c.b16 %v4192, %v4192
  %v4376 = vpack.c.b16 %v4193, %v4193
  %v4377 = vpack.c.b16 %v4194, %v4194
  %v4378 = vpack.c.b16 %v4195, %v4195
  %v4379 = vpack.c.b16 %v4196, %v4196
  %v4380 = vpack.c.b16 %v4197, %v4197
  %v4381 = vpack.c.b16 %v4198, %v4198
  %v4382 = vpack.c.b16 %v4199, %v4199
  %v4383 = vpack.c.b16 %v4200, %v4200
  %v4384 = vpack.c.b16 %v4201, %v4201
  %v4385 = vpack.c.b16 %v4202, %v4202
  %v4386 = vpack.c.b16 %v4203, %v4203
  %v4387 = vpack.c.b16 %v4204, %v4204
  %v4388 = vpack.c.b16 %v4205, %v4205
  %v4389 = vpack.c.b16 %v4206, %v4206
  %v4390 = vpack.c.b16 %v4207, %v4207
  %v4391 = vpack.c.b16 %v4208, %v4208
  %v4392 = vpack.c.b16 %v4209, %v4209
  %v4393 = vpack.c.b16 %v4210, %v4210
  %v4394 = vpack.c.b16 %v4211, %v4211
  %v4395 = vpack.c.b16 %v4212, %v4212
  %v4396 = vpack.c.b16 %v4213, %v4213
  %v4397 = vpack.c.b16 %v4214, %v4214
  %v4398 = vpack.c.b16 %v4215, %v4215
  %v4399 = vpack.c.b16 %v4216, %v4216
  %v4400 = vpack.c.b16 %v4217, %v4217
  %v4401 = vpack.c.b16 %v4218, %v4218
  %v4402 = vpack.c.b16 %v4219, %v4219
  %v4403 = vpack.c.b16 %v4220, %v4220
  %v4404 = vpack.c.b16 %v4221, %v4221
  %v4405 = vpack.c.b16 %v4222, %v4222
  %v4406 = vpack.c.b16 %v4223, %v4223
  %v4407 = vpack.c.b16 %v4224, %v4224
  %v4408 = vpack.c.b16 %v4225, %v4225
  %v4409 = vpack.c.b16 %v4226, %v4226
  %v4410 = vpack.c.b16 %v4227, %v4227
  %v4411 = vpack.c.b16 %v4228, %v4228
  %v4412 = vpack.c.b16 %v4229, %v4229
  %v4413 = vpack.c.b16 %v4230, %v4230
  %v4414 = vpack.c.b16 %v4231, %v4231
  %v4415 = vpack.c.b16 %v4232, %v4232
  %v4416 = vpack.c.b16 %v4233, %v4233
  %v4417 = vpack.c.b16 %v4234, %v4234
  %v4418 = vpack.c.b16 %v4235, %v4235
  %v4419 = vpack.c.b16 %v4236, %v4236
  %v4420 = vpack.c.b16 %v4237, %v4237
  %v4421 = vpack.c.b16 %v4238, %v4238
  %v4422 = vpack.c.b16 %v4239, %v4239
  %v4423 = vpack.c.b16 %v4240, %v4240
  %v4424 = vpack.c.b16 %v4241, %v4241
  %v4425 = vpack.c.b16 %v4242, %v4242
  %v4426 = vpack.c.b16 %v4243, %v4243
  %v4427 = vpack.c.b16 %v4244, %v4244
  %v4428 = vpack.c.b16 %v4245, %v4245
  %v4429 = vpack.c.b16 %v4246, %v4246
  %v4430 = vpack.c.b16 %v4247, %v4247
  %v4431 = vpack.c.b16 %v4248, %v4248
  %v4432 = vpack.c.b16 %v4249, %v4249
  %v4433 = vpack.c.b16 %v4250, %v4250
  %v4434 = vpack.c.b16 %v4251, %v4251
  %v4435 = vpack.c.b16 %v4252, %v4252
  %v4436 = vpack.c.b16 %v4253, %v4253
  %v4437 = vpack.c.b16 %v4254, %v4254
  %v4438 = vpack.c.b16 %v4255, %v4255
  %v4439 = vpack.c.b16 %v4256, %v4256
  %v4440 = vpack.c.b16 %v4257, %v4257
  %v4441 = vpack.c.b16 %v4258, %v4258
  %v4442 = vpack.c.b16 %v4259, %v4259
  %v4443 = vpack.c.b16 %v4260, %v4260
  %v4444 = vpack.c.b16 %v4261, %v4261
  %v4445 = vpack.c.b16 %v4262, %v4262
  %v4446 = vpack.c.b16 %v4263, %v4263
  %v4447 = vpack.c.b16 %v4264, %v4264
  %v4448 = vpack.c.b16 %v4265, %v4265
  %v4449 = vpack.c.b16 %v4266, %v4266
  %v4450 = vpack.c.b16 %v4267, %v4267
  %v4451 = vpack.c.b16 %v4268, %v4268
  %v4452 = vpack.c.b16 %v4269, %v4269
  %v4453 = vpack.c.b16 %v4270, %v4270
  %v4454 = vpack.c.b16 %v4271, %v4271
  %v4455 = vpack.c.b16 %v4272, %v4272
  %v4456 = vpack.c.b16 %v4273, %v4273
  %v4457 = vpack.c.b16 %v4274, %v4274
  %v4458 = vpack.c.b16 %v4275, %v4275
  %v4459 = vpack.c.b16 %v4276, %v4276
  %v4460 = vpack.c.b16 %v4277, %v4277
  %v4461 = vpack.c.b16 %v4278, %v4278
  %v4462 = vpack.c.b16 %v4279, %v4279
  %v4463 = vpack.c.b16 %v4280, %v4280
  %v4464 = vpack.c.b16 %v4281, %v4281
  %v4465 = vpack.c.b16 %v4282, %v4282
  %v4466 = vpack.c.b16 %v4283, %v4283
  %v4467 = vpack.c.b16 %v4284, %v4284
  %v4468 = vpack.c.b16 %v4285, %v4285
  %v4469 = vpack.c.b16 %v4286, %v4286
  %v4470 = vpack.c.b16 %v4287, %v4287
  %v4471 = vpack.c.b16 %v4288, %v4288
  %v4472 = vpack.c.b16 %v4289, %v4289
  %v4473 = vpack.c.b16 %v4290, %v4290
  %v4474 = vpack.c.b16 %v4291, %v4291
  %v4475 = vpack.c.b16 %v4292, %v4292
  %v4476 = vpack.c.b16 %v4293, %v4293
  %v4477 = vpack.c.b16 %v4294, %v4294
  %v4478 = vpack.c.b16 %v4295, %v4295
  %v4479 = vpack.c.b16 %v4296, %v4296
  %v4480 = vpack.c.b16 %v4297, %v4297
  %v4481 = vpack.c.b16 %v4298, %v4298
  %v4482 = vpack.c.b16 %v4299, %v4299
  %v4483 = vpack.c.b16 %v4300, %v4300
  %v4484 = vpack.c.b16 %v4301, %v4301
  %v4485 = vpack.c.b16 %v4302, %v4302
  %v4486 = vpack.c.b16 %v4303, %v4303
  %v4487 = vpack.c.b16 %v4304, %v4304
  %v4488 = vpack.c.b16 %v4305, %v4305
  %v4489 = vpack.c.b16 %v4306, %v4306
  %v4490 = vpack.c.b16 %v4307, %v4307
  %v4491 = vpack.c.b16 %v4308, %v4308
  %v4492 = vpack.c.b16 %v4309, %v4309
  %v4493 = vpack.c.b16 %v4310, %v4310
  %v4494 = vpack.c.b16 %v4311, %v4311
  %v4495 = vpack.c.b16 %v4312, %v4312
  %v4496 = vpack.c.b16 %v4313, %v4313
  %v4497 = vpack.c.b16 %v4314, %v4314
  %v4498 = vpack.c.b16 %v4315, %v4315
  %v4499 = vpack.c.b16 %v4316, %v4316
  %v4500 = vpack.c.b16 %v4317, %v4317
  %v4501 = vpack.c.b16 %v4318, %v4318
  %4685 = vst [vmem:[%s3] sm:$0xf] %v4319
  %4686 = vst [vmem:[%s3 + $0x4] sm:$0xf] %v4320
  %4687 = vst [vmem:[%s3 + $0x8] sm:$0xf] %v4321
  %4688 = vst [vmem:[%s3 + $0xc] sm:$0xf] %v4322
  %4689 = vst [vmem:[%s3 + $0x10] sm:$0xf] %v4323
  %4690 = vst [vmem:[%s3 + $0x14] sm:$0xf] %v4324
  %4691 = vst [vmem:[%s3 + $0x18] sm:$0xf] %v4325
  %4692 = vst [vmem:[%s3 + $0x1c] sm:$0xf] %v4326
  %4693 = vst [vmem:[%s3 + $0x20] sm:$0xf] %v4327
  %4694 = vst [vmem:[%s3 + $0x24] sm:$0xf] %v4328
  %4695 = vst [vmem:[%s3 + $0x28] sm:$0xf] %v4329
  %4696 = vst [vmem:[%s3 + $0x2c] sm:$0xf] %v4330
  %4697 = vst [vmem:[%s3 + $0x30] sm:$0xf] %v4331
  %4698 = vst [vmem:[%s3 + $0x34] sm:$0xf] %v4332
  %4699 = vst [vmem:[%s3 + $0x38] sm:$0xf] %v4333
  %4700 = vst [vmem:[%s3 + $0x3c] sm:$0xf] %v4334
  %4701 = vst [vmem:[%s3 + $0x40] sm:$0xf] %v4335
  %4702 = vst [vmem:[%s3 + $0x44] sm:$0xf] %v4336
  %4703 = vst [vmem:[%s3 + $0x48] sm:$0xf] %v4337
  %4704 = vst [vmem:[%s3 + $0x4c] sm:$0xf] %v4338
  %4705 = vst [vmem:[%s3 + $0x50] sm:$0xf] %v4339
  %4706 = vst [vmem:[%s3 + $0x54] sm:$0xf] %v4340
  %4707 = vst [vmem:[%s3 + $0x58] sm:$0xf] %v4341
  %4708 = vst [vmem:[%s3 + $0x5c] sm:$0xf] %v4342
  %4709 = vst [vmem:[%s3 + $0x60] sm:$0xf] %v4343
  %4710 = vst [vmem:[%s3 + $0x64] sm:$0xf] %v4344
  %4711 = vst [vmem:[%s3 + $0x68] sm:$0xf] %v4345
  %4712 = vst [vmem:[%s3 + $0x6c] sm:$0xf] %v4346
  %4713 = vst [vmem:[%s3 + $0x70] sm:$0xf] %v4347
  %4714 = vst [vmem:[%s3 + $0x74] sm:$0xf] %v4348
  %4715 = vst [vmem:[%s3 + $0x78] sm:$0xf] %v4349
  %4716 = vst [vmem:[%s3 + $0x7c] sm:$0xf] %v4350
  %4717 = vst [vmem:[%s3 + $0x80] sm:$0xf] %v4351
  %4718 = vst [vmem:[%s3 + $0x84] sm:$0xf] %v4352
  %4719 = vst [vmem:[%s3 + $0x88] sm:$0xf] %v4353
  %4720 = vst [vmem:[%s3 + $0x8c] sm:$0xf] %v4354
  %4721 = vst [vmem:[%s3 + $0x90] sm:$0xf] %v4355
  %4722 = vst [vmem:[%s3 + $0x94] sm:$0xf] %v4356
  %4723 = vst [vmem:[%s3 + $0x98] sm:$0xf] %v4357
  %4724 = vst [vmem:[%s3 + $0x9c] sm:$0xf] %v4358
  %4725 = vst [vmem:[%s3 + $0xa0] sm:$0xf] %v4359
  %4726 = vst [vmem:[%s3 + $0xa4] sm:$0xf] %v4360
  %4727 = vst [vmem:[%s3 + $0xa8] sm:$0xf] %v4361
  %4728 = vst [vmem:[%s3 + $0xac] sm:$0xf] %v4362
  %4729 = vst [vmem:[%s3 + $0xb0] sm:$0xf] %v4363
  %4730 = vst [vmem:[%s3 + $0xb4] sm:$0xf] %v4364
  %4731 = vst [vmem:[%s3 + $0xb8] sm:$0xf] %v4365
  %4732 = vst [vmem:[%s3 + $0xbc] sm:$0xf] %v4366
  %4733 = vst [vmem:[%s3 + $0xc0] sm:$0xf] %v4367
  %4734 = vst [vmem:[%s3 + $0xc4] sm:$0xf] %v4368
  %4735 = vst [vmem:[%s3 + $0xc8] sm:$0xf] %v4369
  %4736 = vst [vmem:[%s3 + $0xcc] sm:$0xf] %v4370
  %4737 = vst [vmem:[%s3 + $0xd0] sm:$0xf] %v4371
  %4738 = vst [vmem:[%s3 + $0xd4] sm:$0xf] %v4372
  %4739 = vst [vmem:[%s3 + $0xd8] sm:$0xf] %v4373
  %4740 = vst [vmem:[%s3 + $0xdc] sm:$0xf] %v4374
  %4741 = vst [vmem:[%s3 + $0xe0] sm:$0xf] %v4375
  %4742 = vst [vmem:[%s3 + $0xe4] sm:$0xf] %v4376
  %4743 = vst [vmem:[%s3 + $0xe8] sm:$0xf] %v4377
  %4744 = vst [vmem:[%s3 + $0xec] sm:$0xf] %v4378
  %4745 = vst [vmem:[%s3 + $0xf0] sm:$0xf] %v4379
  %4746 = vst [vmem:[%s3 + $0xf4] sm:$0xf] %v4380
  %4747 = vst [vmem:[%s3 + $0xf8] sm:$0xf] %v4381
  %4748 = vst [vmem:[%s3 + $0xfc] sm:$0xf] %v4382
  %4749 = vst [vmem:[%s3 + $0x100] sm:$0xf] %v4383
  %4750 = vst [vmem:[%s3 + $0x104] sm:$0xf] %v4384
  %4751 = vst [vmem:[%s3 + $0x108] sm:$0xf] %v4385
  %4752 = vst [vmem:[%s3 + $0x10c] sm:$0xf] %v4386
  %4753 = vst [vmem:[%s3 + $0x110] sm:$0xf] %v4387
  %4754 = vst [vmem:[%s3 + $0x114] sm:$0xf] %v4388
  %4755 = vst [vmem:[%s3 + $0x118] sm:$0xf] %v4389
  %4756 = vst [vmem:[%s3 + $0x11c] sm:$0xf] %v4390
  %4757 = vst [vmem:[%s3 + $0x120] sm:$0xf] %v4391
  %4758 = vst [vmem:[%s3 + $0x124] sm:$0xf] %v4392
  %4759 = vst [vmem:[%s3 + $0x128] sm:$0xf] %v4393
  %4760 = vst [vmem:[%s3 + $0x12c] sm:$0xf] %v4394
  %4761 = vst [vmem:[%s3 + $0x130] sm:$0xf] %v4395
  %4762 = vst [vmem:[%s3 + $0x134] sm:$0xf] %v4396
  %4763 = vst [vmem:[%s3 + $0x138] sm:$0xf] %v4397
  %4764 = vst [vmem:[%s3 + $0x13c] sm:$0xf] %v4398
  %4765 = vst [vmem:[%s3 + $0x140] sm:$0xf] %v4399
  %4766 = vst [vmem:[%s3 + $0x144] sm:$0xf] %v4400
  %4767 = vst [vmem:[%s3 + $0x148] sm:$0xf] %v4401
  %4768 = vst [vmem:[%s3 + $0x14c] sm:$0xf] %v4402
  %4769 = vst [vmem:[%s3 + $0x150] sm:$0xf] %v4403
  %4770 = vst [vmem:[%s3 + $0x154] sm:$0xf] %v4404
  %4771 = vst [vmem:[%s3 + $0x158] sm:$0xf] %v4405
  %4772 = vst [vmem:[%s3 + $0x15c] sm:$0xf] %v4406
  %4773 = vst [vmem:[%s3 + $0x160] sm:$0xf] %v4407
  %4774 = vst [vmem:[%s3 + $0x164] sm:$0xf] %v4408
  %4775 = vst [vmem:[%s3 + $0x168] sm:$0xf] %v4409
  %4776 = vst [vmem:[%s3 + $0x16c] sm:$0xf] %v4410
  %4777 = vst [vmem:[%s3 + $0x170] sm:$0xf] %v4411
  %4778 = vst [vmem:[%s3 + $0x174] sm:$0xf] %v4412
  %4779 = vst [vmem:[%s3 + $0x178] sm:$0xf] %v4413
  %4780 = vst [vmem:[%s3 + $0x17c] sm:$0xf] %v4414
  %4781 = vst [vmem:[%s3 + $0x180] sm:$0xf] %v4415
  %4782 = vst [vmem:[%s3 + $0x184] sm:$0xf] %v4416
  %4783 = vst [vmem:[%s3 + $0x188] sm:$0xf] %v4417
  %4784 = vst [vmem:[%s3 + $0x18c] sm:$0xf] %v4418
  %4785 = vst [vmem:[%s3 + $0x190] sm:$0xf] %v4419
  %4786 = vst [vmem:[%s3 + $0x194] sm:$0xf] %v4420
  %4787 = vst [vmem:[%s3 + $0x198] sm:$0xf] %v4421
  %4788 = vst [vmem:[%s3 + $0x19c] sm:$0xf] %v4422
  %4789 = vst [vmem:[%s3 + $0x1a0] sm:$0xf] %v4423
  %4790 = vst [vmem:[%s3 + $0x1a4] sm:$0xf] %v4424
  %4791 = vst [vmem:[%s3 + $0x1a8] sm:$0xf] %v4425
  %4792 = vst [vmem:[%s3 + $0x1ac] sm:$0xf] %v4426
  %4793 = vst [vmem:[%s3 + $0x1b0] sm:$0xf] %v4427
  %4794 = vst [vmem:[%s3 + $0x1b4] sm:$0xf] %v4428
  %4795 = vst [vmem:[%s3 + $0x1b8] sm:$0xf] %v4429
  %4796 = vst [vmem:[%s3 + $0x1bc] sm:$0xf] %v4430
  %4797 = vst [vmem:[%s3 + $0x1c0] sm:$0xf] %v4431
  %4798 = vst [vmem:[%s3 + $0x1c4] sm:$0xf] %v4432
  %4799 = vst [vmem:[%s3 + $0x1c8] sm:$0xf] %v4433
  %4800 = vst [vmem:[%s3 + $0x1cc] sm:$0xf] %v4434
  %4801 = vst [vmem:[%s3 + $0x1d0] sm:$0xf] %v4435
  %4802 = vst [vmem:[%s3 + $0x1d4] sm:$0xf] %v4436
  %4803 = vst [vmem:[%s3 + $0x1d8] sm:$0xf] %v4437
  %4804 = vst [vmem:[%s3 + $0x1dc] sm:$0xf] %v4438
  %4805 = vst [vmem:[%s3 + $0x1e0] sm:$0xf] %v4439
  %4806 = vst [vmem:[%s3 + $0x1e4] sm:$0xf] %v4440
  %4807 = vst [vmem:[%s3 + $0x1e8] sm:$0xf] %v4441
  %4808 = vst [vmem:[%s3 + $0x1ec] sm:$0xf] %v4442
  %4809 = vst [vmem:[%s3 + $0x1f0] sm:$0xf] %v4443
  %4810 = vst [vmem:[%s3 + $0x1f4] sm:$0xf] %v4444
  %4811 = vst [vmem:[%s3 + $0x1f8] sm:$0xf] %v4445
  %4812 = vst [vmem:[%s3 + $0x1fc] sm:$0xf] %v4446
  %4813 = vst [vmem:[%s3 + $0x200] sm:$0xf] %v4447
  %4814 = vst [vmem:[%s3 + $0x204] sm:$0xf] %v4448
  %4815 = vst [vmem:[%s3 + $0x208] sm:$0xf] %v4449
  %4816 = vst [vmem:[%s3 + $0x20c] sm:$0xf] %v4450
  %4817 = vst [vmem:[%s3 + $0x210] sm:$0xf] %v4451
  %4818 = vst [vmem:[%s3 + $0x214] sm:$0xf] %v4452
  %4819 = vst [vmem:[%s3 + $0x218] sm:$0xf] %v4453
  %4820 = vst [vmem:[%s3 + $0x21c] sm:$0xf] %v4454
  %4821 = vst [vmem:[%s3 + $0x220] sm:$0xf] %v4455
  %4822 = vst [vmem:[%s3 + $0x224] sm:$0xf] %v4456
  %4823 = vst [vmem:[%s3 + $0x228] sm:$0xf] %v4457
  %4824 = vst [vmem:[%s3 + $0x22c] sm:$0xf] %v4458
  %4825 = vst [vmem:[%s3 + $0x230] sm:$0xf] %v4459
  %4826 = vst [vmem:[%s3 + $0x234] sm:$0xf] %v4460
  %4827 = vst [vmem:[%s3 + $0x238] sm:$0xf] %v4461
  %4828 = vst [vmem:[%s3 + $0x23c] sm:$0xf] %v4462
  %4829 = vst [vmem:[%s3 + $0x240] sm:$0xf] %v4463
  %4830 = vst [vmem:[%s3 + $0x244] sm:$0xf] %v4464
  %4831 = vst [vmem:[%s3 + $0x248] sm:$0xf] %v4465
  %4832 = vst [vmem:[%s3 + $0x24c] sm:$0xf] %v4466
  %4833 = vst [vmem:[%s3 + $0x250] sm:$0xf] %v4467
  %4834 = vst [vmem:[%s3 + $0x254] sm:$0xf] %v4468
  %4835 = vst [vmem:[%s3 + $0x258] sm:$0xf] %v4469
  %4836 = vst [vmem:[%s3 + $0x25c] sm:$0xf] %v4470
  %4837 = vst [vmem:[%s3 + $0x260] sm:$0xf] %v4471
  %4838 = vst [vmem:[%s3 + $0x264] sm:$0xf] %v4472
  %4839 = vst [vmem:[%s3 + $0x268] sm:$0xf] %v4473
  %4840 = vst [vmem:[%s3 + $0x26c] sm:$0xf] %v4474
  %4841 = vst [vmem:[%s3 + $0x270] sm:$0xf] %v4475
  %4842 = vst [vmem:[%s3 + $0x274] sm:$0xf] %v4476
  %4843 = vst [vmem:[%s3 + $0x278] sm:$0xf] %v4477
  %4844 = vst [vmem:[%s3 + $0x27c] sm:$0xf] %v4478
  %4845 = vst [vmem:[%s3 + $0x280] sm:$0xf] %v4479
  %4846 = vst [vmem:[%s3 + $0x284] sm:$0xf] %v4480
  %4847 = vst [vmem:[%s3 + $0x288] sm:$0xf] %v4481
  %4848 = vst [vmem:[%s3 + $0x28c] sm:$0xf] %v4482
  %4849 = vst [vmem:[%s3 + $0x290] sm:$0xf] %v4483
  %4850 = vst [vmem:[%s3 + $0x294] sm:$0xf] %v4484
  %4851 = vst [vmem:[%s3 + $0x298] sm:$0xf] %v4485
  %4852 = vst [vmem:[%s3 + $0x29c] sm:$0xf] %v4486
  %4853 = vst [vmem:[%s3 + $0x2a0] sm:$0xf] %v4487
  %4854 = vst [vmem:[%s3 + $0x2a4] sm:$0xf] %v4488
  %4855 = vst [vmem:[%s3 + $0x2a8] sm:$0xf] %v4489
  %4856 = vst [vmem:[%s3 + $0x2ac] sm:$0xf] %v4490
  %4857 = vst [vmem:[%s3 + $0x2b0] sm:$0xf] %v4491
  %4858 = vst [vmem:[%s3 + $0x2b4] sm:$0xf] %v4492
  %4859 = vst [vmem:[%s3 + $0x2b8] sm:$0xf] %v4493
  %4860 = vst [vmem:[%s3 + $0x2bc] sm:$0xf] %v4494
  %4861 = vst [vmem:[%s3 + $0x2c0] sm:$0xf] %v4495
  %4862 = vst [vmem:[%s3 + $0x2c4] sm:$0xf] %v4496
  %4863 = vst [vmem:[%s3 + $0x2c8] sm:$0xf] %v4497
  %4864 = vst [vmem:[%s3 + $0x2cc] sm:$0xf] %v4498
  %4865 = vst [vmem:[%s3 + $0x2d0] sm:$0xf] %v4499
  %4866 = vst [vmem:[%s3 + $0x2d4] sm:$0xf] %v4500
  %4867 = vst [vmem:[%s3 + $0x2d8] sm:$0x1] %v4501
  // Predicated region
  $region14: #{alexnet_p1_forward.5} parent=0 // pred_check
    _
  $region15: #{alexnet_p1_forward.5} parent=0 // pred_check_branch
    %4869 = sbr.rel (0) target = $region17
  $region16: #{alexnet_p1_forward.5} parent=0 // pred_region
    _
  $region17: #{alexnet_p1_forward.5} parent=0 // pred_fallthru
    _
  // Predicated region
  $region18: #{alexnet_p1_forward.5} parent=0 // pred_check
    _
  $region19: #{alexnet_p1_forward.5} parent=0 // pred_check_branch
    %4871 = sbr.rel (0) target = $region21
  $region20: #{alexnet_p1_forward.5} parent=0 // pred_region
    _
  $region21: #{alexnet_p1_forward.5} parent=0 // pred_fallthru
    _

// kernel: alexnet_p1_forward.6
$region0: #{alexnet_p1_forward.6}
  #allocation0 [shape = 'u32[]', space=smem, size = 0x4, offset = 0x4, fixed_abs, tag = 'smem constant byte address 0x4 - core index']
  #allocation1 [shape = 'u32[144,128]{1,0:T(1,128)}', space=vmem, size = 0x12000, scoped, tag = 'internal scratch']
  %s0 = inlined_call_operand.vmem [shape: bf16[2,14,14,128], index: 0, kind: input, shape index: {}]
  %s1 = inlined_call_operand.vmem [shape: bf16[2,14,13,128], index: 1, kind: input, shape index: {}]
  %s2 = inlined_call_operand.vmem [shape: bf16[2,13,14,128], index: 2, kind: input, shape index: {}]
  %s3 = inlined_call_operand.vmem [shape: bf16[2,13,13,128], index: 3, kind: input, shape index: {}]
  %s4 = inlined_call_operand.vmem [shape: bf16[2,13,13,128], index: 4, kind: output, shape index: {}]
  %s5 = sld [smem:[#allocation0]]
  $region26: #{alexnet_p1_forward.6} parent=0
    _
  %s7 = ssub.s32 1, %s5
  %s8 = scalar_select 0, %s7, %s5
  // Predicated region
  $region2: #{alexnet_p1_forward.6} parent=0 // pred_check
    _
  $region3: #{alexnet_p1_forward.6} parent=0 // pred_check_branch
    %10 = sbr.rel (0) target = $region5
  $region4: #{alexnet_p1_forward.6} parent=0 // pred_region
    _
  $region5: #{alexnet_p1_forward.6} parent=0 // pred_fallthru
    _
  // Predicated region
  $region6: #{alexnet_p1_forward.6} parent=0 // pred_check
    _
  $region7: #{alexnet_p1_forward.6} parent=0 // pred_check_branch
    %12 = sbr.rel (0) target = $region9
  $region8: #{alexnet_p1_forward.6} parent=0 // pred_region
    _
  $region9: #{alexnet_p1_forward.6} parent=0 // pred_fallthru
    _
  // Predicated region
  $region10: #{alexnet_p1_forward.6} parent=0 // pred_check
    _
  $region11: #{alexnet_p1_forward.6} parent=0 // pred_check_branch
    %14 = sbr.rel (0) target = $region13
  $region12: #{alexnet_p1_forward.6} parent=0 // pred_region
    _
  $region13: #{alexnet_p1_forward.6} parent=0 // pred_fallthru
    _
  // Predicated region
  $region14: #{alexnet_p1_forward.6} parent=0 // pred_check
    _
  $region15: #{alexnet_p1_forward.6} parent=0 // pred_check_branch
    %16 = sbr.rel (0) target = $region17
  $region16: #{alexnet_p1_forward.6} parent=0 // pred_region
    _
  $region17: #{alexnet_p1_forward.6} parent=0 // pred_fallthru
    _
  %v18 = vld [vmem:[%s0] sm:$0xf]
  %v19 = vld [vmem:[%s0 + $0x4] sm:$0x7]
  %v20 = vld [vmem:[%s0 + $0x8] sm:$0xf]
  %v21 = vld [vmem:[%s0 + $0xc] sm:$0x7]
  %v22 = vld [vmem:[%s0 + $0x10] sm:$0xf]
  %v23 = vld [vmem:[%s0 + $0x14] sm:$0x7]
  %v24 = vld [vmem:[%s0 + $0x18] sm:$0xf]
  %v25 = vld [vmem:[%s0 + $0x1c] sm:$0x7]
  %v26 = vld [vmem:[%s0 + $0x20] sm:$0xf]
  %v27 = vld [vmem:[%s0 + $0x24] sm:$0x7]
  %v28 = vld [vmem:[%s0 + $0x28] sm:$0xf]
  %v29 = vld [vmem:[%s0 + $0x2c] sm:$0x7]
  %v30 = vld [vmem:[%s0 + $0x30] sm:$0xf]
  %v31 = vld [vmem:[%s0 + $0x34] sm:$0x7]
  %v32 = vld [vmem:[%s0 + $0x38] sm:$0xf]
  %v33 = vld [vmem:[%s0 + $0x3c] sm:$0x7]
  %v34 = vld [vmem:[%s0 + $0x40] sm:$0xf]
  %v35 = vld [vmem:[%s0 + $0x44] sm:$0x7]
  %v36 = vld [vmem:[%s0 + $0x48] sm:$0xf]
  %v37 = vld [vmem:[%s0 + $0x4c] sm:$0x7]
  %v38 = vld [vmem:[%s0 + $0x50] sm:$0xf]
  %v39 = vld [vmem:[%s0 + $0x54] sm:$0x7]
  %v40 = vld [vmem:[%s0 + $0x58] sm:$0xf]
  %v41 = vld [vmem:[%s0 + $0x5c] sm:$0x7]
  %v42 = vld [vmem:[%s0 + $0x60] sm:$0xf]
  %v43 = vld [vmem:[%s0 + $0x64] sm:$0x7]
  %v44 = vld [vmem:[%s0 + $0x70] sm:$0xf]
  %v45 = vld [vmem:[%s0 + $0x74] sm:$0x7]
  %v46 = vld [vmem:[%s0 + $0x78] sm:$0xf]
  %v47 = vld [vmem:[%s0 + $0x7c] sm:$0x7]
  %v48 = vld [vmem:[%s0 + $0x80] sm:$0xf]
  %v49 = vld [vmem:[%s0 + $0x84] sm:$0x7]
  %v50 = vld [vmem:[%s0 + $0x88] sm:$0xf]
  %v51 = vld [vmem:[%s0 + $0x8c] sm:$0x7]
  %v52 = vld [vmem:[%s0 + $0x90] sm:$0xf]
  %v53 = vld [vmem:[%s0 + $0x94] sm:$0x7]
  %v54 = vld [vmem:[%s0 + $0x98] sm:$0xf]
  %v55 = vld [vmem:[%s0 + $0x9c] sm:$0x7]
  %v56 = vld [vmem:[%s0 + $0xa0] sm:$0xf]
  %v57 = vld [vmem:[%s0 + $0xa4] sm:$0x7]
  %v58 = vld [vmem:[%s0 + $0xa8] sm:$0xf]
  %v59 = vld [vmem:[%s0 + $0xac] sm:$0x7]
  %v60 = vld [vmem:[%s0 + $0xb0] sm:$0xf]
  %v61 = vld [vmem:[%s0 + $0xb4] sm:$0x7]
  %v62 = vld [vmem:[%s0 + $0xb8] sm:$0xf]
  %v63 = vld [vmem:[%s0 + $0xbc] sm:$0x7]
  %v64 = vld [vmem:[%s0 + $0xc0] sm:$0xf]
  %v65 = vld [vmem:[%s0 + $0xc4] sm:$0x7]
  %v66 = vld [vmem:[%s0 + $0xc8] sm:$0xf]
  %v67 = vld [vmem:[%s0 + $0xcc] sm:$0x7]
  %v68 = vld [vmem:[%s0 + $0xd0] sm:$0xf]
  %v69 = vld [vmem:[%s0 + $0xd4] sm:$0x7]
  %vm70 = vsmask.f32 3328
  %vm71 = vsmask.f32 7440
  %vm72 = vmor %vm70, %vm71
  %v74 = vshrl.u32 %v18, 16
  %v76 = vrot.slane %v74, 4
  %v77 = vshll.u32 %v18, 16
  %v79 = vrot.slane %v77, 5
  %v80 = vor.u32 %v76, %v79
  %v81 = vrot.slane %v80, 4
  %v83 = vshll.u32 %v19, 16
  %v85 = vrot.slane %v83, 5
  %v86 = vsel %vm72, %v81, %v85
  %v87 = vshrl.u32 %v19, 16
  %v89 = vrot.slane %v87, 4
  %v90 = vor.u32 %v89, %v85
  %v91 = vrot.slane %v90, 4
  %v93 = vshrl.u32 %v20, 16
  %v95 = vrot.slane %v93, 4
  %v96 = vshll.u32 %v20, 16
  %v98 = vrot.slane %v96, 5
  %v99 = vor.u32 %v95, %v98
  %v100 = vrot.slane %v99, 4
  %v102 = vshll.u32 %v21, 16
  %v104 = vrot.slane %v102, 5
  %v105 = vsel %vm72, %v100, %v104
  %v106 = vshrl.u32 %v21, 16
  %v108 = vrot.slane %v106, 4
  %v109 = vor.u32 %v108, %v104
  %v110 = vrot.slane %v109, 4
  %v112 = vshrl.u32 %v22, 16
  %v114 = vrot.slane %v112, 4
  %v115 = vshll.u32 %v22, 16
  %v117 = vrot.slane %v115, 5
  %v118 = vor.u32 %v114, %v117
  %v119 = vrot.slane %v118, 4
  %v121 = vshll.u32 %v23, 16
  %v123 = vrot.slane %v121, 5
  %v124 = vsel %vm72, %v119, %v123
  %v125 = vshrl.u32 %v23, 16
  %v127 = vrot.slane %v125, 4
  %v128 = vor.u32 %v127, %v123
  %v129 = vrot.slane %v128, 4
  %v131 = vshrl.u32 %v24, 16
  %v133 = vrot.slane %v131, 4
  %v134 = vshll.u32 %v24, 16
  %v136 = vrot.slane %v134, 5
  %v137 = vor.u32 %v133, %v136
  %v138 = vrot.slane %v137, 4
  %v140 = vshll.u32 %v25, 16
  %v142 = vrot.slane %v140, 5
  %v143 = vsel %vm72, %v138, %v142
  %v144 = vshrl.u32 %v25, 16
  %v146 = vrot.slane %v144, 4
  %v147 = vor.u32 %v146, %v142
  %v148 = vrot.slane %v147, 4
  %v150 = vshrl.u32 %v26, 16
  %v152 = vrot.slane %v150, 4
  %v153 = vshll.u32 %v26, 16
  %v155 = vrot.slane %v153, 5
  %v156 = vor.u32 %v152, %v155
  %v157 = vrot.slane %v156, 4
  %v159 = vshll.u32 %v27, 16
  %v161 = vrot.slane %v159, 5
  %v162 = vsel %vm72, %v157, %v161
  %v163 = vshrl.u32 %v27, 16
  %v165 = vrot.slane %v163, 4
  %v166 = vor.u32 %v165, %v161
  %v167 = vrot.slane %v166, 4
  %v169 = vshrl.u32 %v28, 16
  %v171 = vrot.slane %v169, 4
  %v172 = vshll.u32 %v28, 16
  %v174 = vrot.slane %v172, 5
  %v175 = vor.u32 %v171, %v174
  %v176 = vrot.slane %v175, 4
  %v178 = vshll.u32 %v29, 16
  %v180 = vrot.slane %v178, 5
  %v181 = vsel %vm72, %v176, %v180
  %v182 = vshrl.u32 %v29, 16
  %v184 = vrot.slane %v182, 4
  %v185 = vor.u32 %v184, %v180
  %v186 = vrot.slane %v185, 4
  %v188 = vshrl.u32 %v30, 16
  %v190 = vrot.slane %v188, 4
  %v191 = vshll.u32 %v30, 16
  %v193 = vrot.slane %v191, 5
  %v194 = vor.u32 %v190, %v193
  %v195 = vrot.slane %v194, 4
  %v197 = vshll.u32 %v31, 16
  %v199 = vrot.slane %v197, 5
  %v200 = vsel %vm72, %v195, %v199
  %v201 = vshrl.u32 %v31, 16
  %v203 = vrot.slane %v201, 4
  %v204 = vor.u32 %v203, %v199
  %v205 = vrot.slane %v204, 4
  %v207 = vshrl.u32 %v32, 16
  %v209 = vrot.slane %v207, 4
  %v210 = vshll.u32 %v32, 16
  %v212 = vrot.slane %v210, 5
  %v213 = vor.u32 %v209, %v212
  %v214 = vrot.slane %v213, 4
  %v216 = vshll.u32 %v33, 16
  %v218 = vrot.slane %v216, 5
  %v219 = vsel %vm72, %v214, %v218
  %v220 = vshrl.u32 %v33, 16
  %v222 = vrot.slane %v220, 4
  %v223 = vor.u32 %v222, %v218
  %v224 = vrot.slane %v223, 4
  %v226 = vshrl.u32 %v34, 16
  %v228 = vrot.slane %v226, 4
  %v229 = vshll.u32 %v34, 16
  %v231 = vrot.slane %v229, 5
  %v232 = vor.u32 %v228, %v231
  %v233 = vrot.slane %v232, 4
  %v235 = vshll.u32 %v35, 16
  %v237 = vrot.slane %v235, 5
  %v238 = vsel %vm72, %v233, %v237
  %v239 = vshrl.u32 %v35, 16
  %v241 = vrot.slane %v239, 4
  %v242 = vor.u32 %v241, %v237
  %v243 = vrot.slane %v242, 4
  %v245 = vshrl.u32 %v36, 16
  %v247 = vrot.slane %v245, 4
  %v248 = vshll.u32 %v36, 16
  %v250 = vrot.slane %v248, 5
  %v251 = vor.u32 %v247, %v250
  %v252 = vrot.slane %v251, 4
  %v254 = vshll.u32 %v37, 16
  %v256 = vrot.slane %v254, 5
  %v257 = vsel %vm72, %v252, %v256
  %v258 = vshrl.u32 %v37, 16
  %v260 = vrot.slane %v258, 4
  %v261 = vor.u32 %v260, %v256
  %v262 = vrot.slane %v261, 4
  %v264 = vshrl.u32 %v38, 16
  %v266 = vrot.slane %v264, 4
  %v267 = vshll.u32 %v38, 16
  %v269 = vrot.slane %v267, 5
  %v270 = vor.u32 %v266, %v269
  %v271 = vrot.slane %v270, 4
  %v273 = vshll.u32 %v39, 16
  %v275 = vrot.slane %v273, 5
  %v276 = vsel %vm72, %v271, %v275
  %v277 = vshrl.u32 %v39, 16
  %v279 = vrot.slane %v277, 4
  %v280 = vor.u32 %v279, %v275
  %v281 = vrot.slane %v280, 4
  %v283 = vshrl.u32 %v40, 16
  %v285 = vrot.slane %v283, 4
  %v286 = vshll.u32 %v40, 16
  %v288 = vrot.slane %v286, 5
  %v289 = vor.u32 %v285, %v288
  %v290 = vrot.slane %v289, 4
  %v292 = vshll.u32 %v41, 16
  %v294 = vrot.slane %v292, 5
  %v295 = vsel %vm72, %v290, %v294
  %v296 = vshrl.u32 %v41, 16
  %v298 = vrot.slane %v296, 4
  %v299 = vor.u32 %v298, %v294
  %v300 = vrot.slane %v299, 4
  %v302 = vshrl.u32 %v42, 16
  %v304 = vrot.slane %v302, 4
  %v305 = vshll.u32 %v42, 16
  %v307 = vrot.slane %v305, 5
  %v308 = vor.u32 %v304, %v307
  %v309 = vrot.slane %v308, 4
  %v311 = vshll.u32 %v43, 16
  %v313 = vrot.slane %v311, 5
  %v314 = vsel %vm72, %v309, %v313
  %v315 = vshrl.u32 %v43, 16
  %v317 = vrot.slane %v315, 4
  %v318 = vor.u32 %v317, %v313
  %v319 = vrot.slane %v318, 4
  %v321 = vshrl.u32 %v44, 16
  %v323 = vrot.slane %v321, 4
  %v324 = vshll.u32 %v44, 16
  %v326 = vrot.slane %v324, 5
  %v327 = vor.u32 %v323, %v326
  %v328 = vrot.slane %v327, 4
  %v330 = vshll.u32 %v45, 16
  %v332 = vrot.slane %v330, 5
  %v333 = vsel %vm72, %v328, %v332
  %v334 = vshrl.u32 %v45, 16
  %v336 = vrot.slane %v334, 4
  %v337 = vor.u32 %v336, %v332
  %v338 = vrot.slane %v337, 4
  %v340 = vshrl.u32 %v46, 16
  %v342 = vrot.slane %v340, 4
  %v343 = vshll.u32 %v46, 16
  %v345 = vrot.slane %v343, 5
  %v346 = vor.u32 %v342, %v345
  %v347 = vrot.slane %v346, 4
  %v349 = vshll.u32 %v47, 16
  %v351 = vrot.slane %v349, 5
  %v352 = vsel %vm72, %v347, %v351
  %v353 = vshrl.u32 %v47, 16
  %v355 = vrot.slane %v353, 4
  %v356 = vor.u32 %v355, %v351
  %v357 = vrot.slane %v356, 4
  %v359 = vshrl.u32 %v48, 16
  %v361 = vrot.slane %v359, 4
  %v362 = vshll.u32 %v48, 16
  %v364 = vrot.slane %v362, 5
  %v365 = vor.u32 %v361, %v364
  %v366 = vrot.slane %v365, 4
  %v368 = vshll.u32 %v49, 16
  %v370 = vrot.slane %v368, 5
  %v371 = vsel %vm72, %v366, %v370
  %v372 = vshrl.u32 %v49, 16
  %v374 = vrot.slane %v372, 4
  %v375 = vor.u32 %v374, %v370
  %v376 = vrot.slane %v375, 4
  %v378 = vshrl.u32 %v50, 16
  %v380 = vrot.slane %v378, 4
  %v381 = vshll.u32 %v50, 16
  %v383 = vrot.slane %v381, 5
  %v384 = vor.u32 %v380, %v383
  %v385 = vrot.slane %v384, 4
  %v387 = vshll.u32 %v51, 16
  %v389 = vrot.slane %v387, 5
  %v390 = vsel %vm72, %v385, %v389
  %v391 = vshrl.u32 %v51, 16
  %v393 = vrot.slane %v391, 4
  %v394 = vor.u32 %v393, %v389
  %v395 = vrot.slane %v394, 4
  %v397 = vshrl.u32 %v52, 16
  %v399 = vrot.slane %v397, 4
  %v400 = vshll.u32 %v52, 16
  %v402 = vrot.slane %v400, 5
  %v403 = vor.u32 %v399, %v402
  %v404 = vrot.slane %v403, 4
  %v406 = vshll.u32 %v53, 16
  %v408 = vrot.slane %v406, 5
  %v409 = vsel %vm72, %v404, %v408
  %v410 = vshrl.u32 %v53, 16
  %v412 = vrot.slane %v410, 4
  %v413 = vor.u32 %v412, %v408
  %v414 = vrot.slane %v413, 4
  %v416 = vshrl.u32 %v54, 16
  %v418 = vrot.slane %v416, 4
  %v419 = vshll.u32 %v54, 16
  %v421 = vrot.slane %v419, 5
  %v422 = vor.u32 %v418, %v421
  %v423 = vrot.slane %v422, 4
  %v425 = vshll.u32 %v55, 16
  %v427 = vrot.slane %v425, 5
  %v428 = vsel %vm72, %v423, %v427
  %v429 = vshrl.u32 %v55, 16
  %v431 = vrot.slane %v429, 4
  %v432 = vor.u32 %v431, %v427
  %v433 = vrot.slane %v432, 4
  %v435 = vshrl.u32 %v56, 16
  %v437 = vrot.slane %v435, 4
  %v438 = vshll.u32 %v56, 16
  %v440 = vrot.slane %v438, 5
  %v441 = vor.u32 %v437, %v440
  %v442 = vrot.slane %v441, 4
  %v444 = vshll.u32 %v57, 16
  %v446 = vrot.slane %v444, 5
  %v447 = vsel %vm72, %v442, %v446
  %v448 = vshrl.u32 %v57, 16
  %v450 = vrot.slane %v448, 4
  %v451 = vor.u32 %v450, %v446
  %v452 = vrot.slane %v451, 4
  %v454 = vshrl.u32 %v58, 16
  %v456 = vrot.slane %v454, 4
  %v457 = vshll.u32 %v58, 16
  %v459 = vrot.slane %v457, 5
  %v460 = vor.u32 %v456, %v459
  %v461 = vrot.slane %v460, 4
  %v463 = vshll.u32 %v59, 16
  %v465 = vrot.slane %v463, 5
  %v466 = vsel %vm72, %v461, %v465
  %v467 = vshrl.u32 %v59, 16
  %v469 = vrot.slane %v467, 4
  %v470 = vor.u32 %v469, %v465
  %v471 = vrot.slane %v470, 4
  %v473 = vshrl.u32 %v60, 16
  %v475 = vrot.slane %v473, 4
  %v476 = vshll.u32 %v60, 16
  %v478 = vrot.slane %v476, 5
  %v479 = vor.u32 %v475, %v478
  %v480 = vrot.slane %v479, 4
  %v482 = vshll.u32 %v61, 16
  %v484 = vrot.slane %v482, 5
  %v485 = vsel %vm72, %v480, %v484
  %v486 = vshrl.u32 %v61, 16
  %v488 = vrot.slane %v486, 4
  %v489 = vor.u32 %v488, %v484
  %v490 = vrot.slane %v489, 4
  %v492 = vshrl.u32 %v62, 16
  %v494 = vrot.slane %v492, 4
  %v495 = vshll.u32 %v62, 16
  %v497 = vrot.slane %v495, 5
  %v498 = vor.u32 %v494, %v497
  %v499 = vrot.slane %v498, 4
  %v501 = vshll.u32 %v63, 16
  %v503 = vrot.slane %v501, 5
  %v504 = vsel %vm72, %v499, %v503
  %v505 = vshrl.u32 %v63, 16
  %v507 = vrot.slane %v505, 4
  %v508 = vor.u32 %v507, %v503
  %v509 = vrot.slane %v508, 4
  %v511 = vshrl.u32 %v64, 16
  %v513 = vrot.slane %v511, 4
  %v514 = vshll.u32 %v64, 16
  %v516 = vrot.slane %v514, 5
  %v517 = vor.u32 %v513, %v516
  %v518 = vrot.slane %v517, 4
  %v520 = vshll.u32 %v65, 16
  %v522 = vrot.slane %v520, 5
  %v523 = vsel %vm72, %v518, %v522
  %v524 = vshrl.u32 %v65, 16
  %v526 = vrot.slane %v524, 4
  %v527 = vor.u32 %v526, %v522
  %v528 = vrot.slane %v527, 4
  %v530 = vshrl.u32 %v66, 16
  %v532 = vrot.slane %v530, 4
  %v533 = vshll.u32 %v66, 16
  %v535 = vrot.slane %v533, 5
  %v536 = vor.u32 %v532, %v535
  %v537 = vrot.slane %v536, 4
  %v539 = vshll.u32 %v67, 16
  %v541 = vrot.slane %v539, 5
  %v542 = vsel %vm72, %v537, %v541
  %v543 = vshrl.u32 %v67, 16
  %v545 = vrot.slane %v543, 4
  %v546 = vor.u32 %v545, %v541
  %v547 = vrot.slane %v546, 4
  %v549 = vshrl.u32 %v68, 16
  %v551 = vrot.slane %v549, 4
  %v552 = vshll.u32 %v68, 16
  %v554 = vrot.slane %v552, 5
  %v555 = vor.u32 %v551, %v554
  %v556 = vrot.slane %v555, 4
  %v558 = vshll.u32 %v69, 16
  %v560 = vrot.slane %v558, 5
  %v561 = vsel %vm72, %v556, %v560
  %v562 = vshrl.u32 %v69, 16
  %v564 = vrot.slane %v562, 4
  %v565 = vor.u32 %v564, %v560
  %v566 = vrot.slane %v565, 4
  %v619 = vmax.bf16 %v18, %v86
  %v620 = vmax.bf16 %v19, %v91
  %v621 = vmax.bf16 %v20, %v105
  %v622 = vmax.bf16 %v21, %v110
  %v623 = vmax.bf16 %v22, %v124
  %v624 = vmax.bf16 %v23, %v129
  %v625 = vmax.bf16 %v24, %v143
  %v626 = vmax.bf16 %v25, %v148
  %v627 = vmax.bf16 %v26, %v162
  %v628 = vmax.bf16 %v27, %v167
  %v629 = vmax.bf16 %v28, %v181
  %v630 = vmax.bf16 %v29, %v186
  %v631 = vmax.bf16 %v30, %v200
  %v632 = vmax.bf16 %v31, %v205
  %v633 = vmax.bf16 %v32, %v219
  %v634 = vmax.bf16 %v33, %v224
  %v635 = vmax.bf16 %v34, %v238
  %v636 = vmax.bf16 %v35, %v243
  %v637 = vmax.bf16 %v36, %v257
  %v638 = vmax.bf16 %v37, %v262
  %v639 = vmax.bf16 %v38, %v276
  %v640 = vmax.bf16 %v39, %v281
  %v641 = vmax.bf16 %v40, %v295
  %v642 = vmax.bf16 %v41, %v300
  %v643 = vmax.bf16 %v42, %v314
  %v644 = vmax.bf16 %v43, %v319
  %v645 = vmax.bf16 %v44, %v333
  %v646 = vmax.bf16 %v45, %v338
  %v647 = vmax.bf16 %v46, %v352
  %v648 = vmax.bf16 %v47, %v357
  %v649 = vmax.bf16 %v48, %v371
  %v650 = vmax.bf16 %v49, %v376
  %v651 = vmax.bf16 %v50, %v390
  %v652 = vmax.bf16 %v51, %v395
  %v653 = vmax.bf16 %v52, %v409
  %v654 = vmax.bf16 %v53, %v414
  %v655 = vmax.bf16 %v54, %v428
  %v656 = vmax.bf16 %v55, %v433
  %v657 = vmax.bf16 %v56, %v447
  %v658 = vmax.bf16 %v57, %v452
  %v659 = vmax.bf16 %v58, %v466
  %v660 = vmax.bf16 %v59, %v471
  %v661 = vmax.bf16 %v60, %v485
  %v662 = vmax.bf16 %v61, %v490
  %v663 = vmax.bf16 %v62, %v504
  %v664 = vmax.bf16 %v63, %v509
  %v665 = vmax.bf16 %v64, %v523
  %v666 = vmax.bf16 %v65, %v528
  %v667 = vmax.bf16 %v66, %v542
  %v668 = vmax.bf16 %v67, %v547
  %v669 = vmax.bf16 %v68, %v561
  %v670 = vmax.bf16 %v69, %v566
  %s671 = scalar_lea.vmem %s0, 8
  %v672 = vld [vmem:[%s671] sm:$0xf]
  %v673 = vld [vmem:[%s671 + $0x4] sm:$0x7]
  %v674 = vld [vmem:[%s671 + $0x8] sm:$0xf]
  %v675 = vld [vmem:[%s671 + $0xc] sm:$0x7]
  %v676 = vld [vmem:[%s671 + $0x10] sm:$0xf]
  %v677 = vld [vmem:[%s671 + $0x14] sm:$0x7]
  %v678 = vld [vmem:[%s671 + $0x18] sm:$0xf]
  %v679 = vld [vmem:[%s671 + $0x1c] sm:$0x7]
  %v680 = vld [vmem:[%s671 + $0x20] sm:$0xf]
  %v681 = vld [vmem:[%s671 + $0x24] sm:$0x7]
  %v682 = vld [vmem:[%s671 + $0x28] sm:$0xf]
  %v683 = vld [vmem:[%s671 + $0x2c] sm:$0x7]
  %v684 = vld [vmem:[%s671 + $0x30] sm:$0xf]
  %v685 = vld [vmem:[%s671 + $0x34] sm:$0x7]
  %v686 = vld [vmem:[%s671 + $0x38] sm:$0xf]
  %v687 = vld [vmem:[%s671 + $0x3c] sm:$0x7]
  %v688 = vld [vmem:[%s671 + $0x40] sm:$0xf]
  %v689 = vld [vmem:[%s671 + $0x44] sm:$0x7]
  %v690 = vld [vmem:[%s671 + $0x48] sm:$0xf]
  %v691 = vld [vmem:[%s671 + $0x4c] sm:$0x7]
  %v692 = vld [vmem:[%s671 + $0x50] sm:$0xf]
  %v693 = vld [vmem:[%s671 + $0x54] sm:$0x7]
  %v694 = vld [vmem:[%s671 + $0x58] sm:$0xf]
  %v695 = vld [vmem:[%s671 + $0x5c] sm:$0x7]
  %v696 = vld [vmem:[%s671 + $0x60] sm:$0xf]
  %v697 = vld [vmem:[%s671 + $0x64] sm:$0x7]
  %v698 = vld [vmem:[%s671 + $0x70] sm:$0xf]
  %v699 = vld [vmem:[%s671 + $0x74] sm:$0x7]
  %v700 = vld [vmem:[%s671 + $0x78] sm:$0xf]
  %v701 = vld [vmem:[%s671 + $0x7c] sm:$0x7]
  %v702 = vld [vmem:[%s671 + $0x80] sm:$0xf]
  %v703 = vld [vmem:[%s671 + $0x84] sm:$0x7]
  %v704 = vld [vmem:[%s671 + $0x88] sm:$0xf]
  %v705 = vld [vmem:[%s671 + $0x8c] sm:$0x7]
  %v706 = vld [vmem:[%s671 + $0x90] sm:$0xf]
  %v707 = vld [vmem:[%s671 + $0x94] sm:$0x7]
  %v708 = vld [vmem:[%s671 + $0x98] sm:$0xf]
  %v709 = vld [vmem:[%s671 + $0x9c] sm:$0x7]
  %v710 = vld [vmem:[%s671 + $0xa0] sm:$0xf]
  %v711 = vld [vmem:[%s671 + $0xa4] sm:$0x7]
  %v712 = vld [vmem:[%s671 + $0xa8] sm:$0xf]
  %v713 = vld [vmem:[%s671 + $0xac] sm:$0x7]
  %v714 = vld [vmem:[%s671 + $0xb0] sm:$0xf]
  %v715 = vld [vmem:[%s671 + $0xb4] sm:$0x7]
  %v716 = vld [vmem:[%s671 + $0xb8] sm:$0xf]
  %v717 = vld [vmem:[%s671 + $0xbc] sm:$0x7]
  %v718 = vld [vmem:[%s671 + $0xc0] sm:$0xf]
  %v719 = vld [vmem:[%s671 + $0xc4] sm:$0x7]
  %v720 = vld [vmem:[%s671 + $0xc8] sm:$0xf]
  %v721 = vld [vmem:[%s671 + $0xcc] sm:$0x7]
  %v722 = vld [vmem:[%s671 + $0xd0] sm:$0xf]
  %v723 = vld [vmem:[%s671 + $0xd4] sm:$0x7]
  %v724 = vmax.bf16 %v619, %v672
  %v725 = vmax.bf16 %v620, %v673
  %v726 = vmax.bf16 %v621, %v674
  %v727 = vmax.bf16 %v622, %v675
  %v728 = vmax.bf16 %v623, %v676
  %v729 = vmax.bf16 %v624, %v677
  %v730 = vmax.bf16 %v625, %v678
  %v731 = vmax.bf16 %v626, %v679
  %v732 = vmax.bf16 %v627, %v680
  %v733 = vmax.bf16 %v628, %v681
  %v734 = vmax.bf16 %v629, %v682
  %v735 = vmax.bf16 %v630, %v683
  %v736 = vmax.bf16 %v631, %v684
  %v737 = vmax.bf16 %v632, %v685
  %v738 = vmax.bf16 %v633, %v686
  %v739 = vmax.bf16 %v634, %v687
  %v740 = vmax.bf16 %v635, %v688
  %v741 = vmax.bf16 %v636, %v689
  %v742 = vmax.bf16 %v637, %v690
  %v743 = vmax.bf16 %v638, %v691
  %v744 = vmax.bf16 %v639, %v692
  %v745 = vmax.bf16 %v640, %v693
  %v746 = vmax.bf16 %v641, %v694
  %v747 = vmax.bf16 %v642, %v695
  %v748 = vmax.bf16 %v643, %v696
  %v749 = vmax.bf16 %v644, %v697
  %v750 = vmax.bf16 %v645, %v698
  %v751 = vmax.bf16 %v646, %v699
  %v752 = vmax.bf16 %v647, %v700
  %v753 = vmax.bf16 %v648, %v701
  %v754 = vmax.bf16 %v649, %v702
  %v755 = vmax.bf16 %v650, %v703
  %v756 = vmax.bf16 %v651, %v704
  %v757 = vmax.bf16 %v652, %v705
  %v758 = vmax.bf16 %v653, %v706
  %v759 = vmax.bf16 %v654, %v707
  %v760 = vmax.bf16 %v655, %v708
  %v761 = vmax.bf16 %v656, %v709
  %v762 = vmax.bf16 %v657, %v710
  %v763 = vmax.bf16 %v658, %v711
  %v764 = vmax.bf16 %v659, %v712
  %v765 = vmax.bf16 %v660, %v713
  %v766 = vmax.bf16 %v661, %v714
  %v767 = vmax.bf16 %v662, %v715
  %v768 = vmax.bf16 %v663, %v716
  %v769 = vmax.bf16 %v664, %v717
  %v770 = vmax.bf16 %v665, %v718
  %v771 = vmax.bf16 %v666, %v719
  %v772 = vmax.bf16 %v667, %v720
  %v773 = vmax.bf16 %v668, %v721
  %v774 = vmax.bf16 %v669, %v722
  %v775 = vmax.bf16 %v670, %v723
  %v777 = vshrl.u32 %v672, 16
  %v779 = vrot.slane %v777, 4
  %v780 = vshll.u32 %v672, 16
  %v782 = vrot.slane %v780, 5
  %v783 = vor.u32 %v779, %v782
  %v784 = vrot.slane %v783, 4
  %v786 = vshll.u32 %v673, 16
  %v788 = vrot.slane %v786, 5
  %v789 = vsel %vm72, %v784, %v788
  %v790 = vshrl.u32 %v673, 16
  %v792 = vrot.slane %v790, 4
  %v793 = vor.u32 %v792, %v788
  %v794 = vrot.slane %v793, 4
  %v796 = vshrl.u32 %v674, 16
  %v798 = vrot.slane %v796, 4
  %v799 = vshll.u32 %v674, 16
  %v801 = vrot.slane %v799, 5
  %v802 = vor.u32 %v798, %v801
  %v803 = vrot.slane %v802, 4
  %v805 = vshll.u32 %v675, 16
  %v807 = vrot.slane %v805, 5
  %v808 = vsel %vm72, %v803, %v807
  %v809 = vshrl.u32 %v675, 16
  %v811 = vrot.slane %v809, 4
  %v812 = vor.u32 %v811, %v807
  %v813 = vrot.slane %v812, 4
  %v815 = vshrl.u32 %v676, 16
  %v817 = vrot.slane %v815, 4
  %v818 = vshll.u32 %v676, 16
  %v820 = vrot.slane %v818, 5
  %v821 = vor.u32 %v817, %v820
  %v822 = vrot.slane %v821, 4
  %v824 = vshll.u32 %v677, 16
  %v826 = vrot.slane %v824, 5
  %v827 = vsel %vm72, %v822, %v826
  %v828 = vshrl.u32 %v677, 16
  %v830 = vrot.slane %v828, 4
  %v831 = vor.u32 %v830, %v826
  %v832 = vrot.slane %v831, 4
  %v834 = vshrl.u32 %v678, 16
  %v836 = vrot.slane %v834, 4
  %v837 = vshll.u32 %v678, 16
  %v839 = vrot.slane %v837, 5
  %v840 = vor.u32 %v836, %v839
  %v841 = vrot.slane %v840, 4
  %v843 = vshll.u32 %v679, 16
  %v845 = vrot.slane %v843, 5
  %v846 = vsel %vm72, %v841, %v845
  %v847 = vshrl.u32 %v679, 16
  %v849 = vrot.slane %v847, 4
  %v850 = vor.u32 %v849, %v845
  %v851 = vrot.slane %v850, 4
  %v853 = vshrl.u32 %v680, 16
  %v855 = vrot.slane %v853, 4
  %v856 = vshll.u32 %v680, 16
  %v858 = vrot.slane %v856, 5
  %v859 = vor.u32 %v855, %v858
  %v860 = vrot.slane %v859, 4
  %v862 = vshll.u32 %v681, 16
  %v864 = vrot.slane %v862, 5
  %v865 = vsel %vm72, %v860, %v864
  %v866 = vshrl.u32 %v681, 16
  %v868 = vrot.slane %v866, 4
  %v869 = vor.u32 %v868, %v864
  %v870 = vrot.slane %v869, 4
  %v872 = vshrl.u32 %v682, 16
  %v874 = vrot.slane %v872, 4
  %v875 = vshll.u32 %v682, 16
  %v877 = vrot.slane %v875, 5
  %v878 = vor.u32 %v874, %v877
  %v879 = vrot.slane %v878, 4
  %v881 = vshll.u32 %v683, 16
  %v883 = vrot.slane %v881, 5
  %v884 = vsel %vm72, %v879, %v883
  %v885 = vshrl.u32 %v683, 16
  %v887 = vrot.slane %v885, 4
  %v888 = vor.u32 %v887, %v883
  %v889 = vrot.slane %v888, 4
  %v891 = vshrl.u32 %v684, 16
  %v893 = vrot.slane %v891, 4
  %v894 = vshll.u32 %v684, 16
  %v896 = vrot.slane %v894, 5
  %v897 = vor.u32 %v893, %v896
  %v898 = vrot.slane %v897, 4
  %v900 = vshll.u32 %v685, 16
  %v902 = vrot.slane %v900, 5
  %v903 = vsel %vm72, %v898, %v902
  %v904 = vshrl.u32 %v685, 16
  %v906 = vrot.slane %v904, 4
  %v907 = vor.u32 %v906, %v902
  %v908 = vrot.slane %v907, 4
  %v910 = vshrl.u32 %v686, 16
  %v912 = vrot.slane %v910, 4
  %v913 = vshll.u32 %v686, 16
  %v915 = vrot.slane %v913, 5
  %v916 = vor.u32 %v912, %v915
  %v917 = vrot.slane %v916, 4
  %v919 = vshll.u32 %v687, 16
  %v921 = vrot.slane %v919, 5
  %v922 = vsel %vm72, %v917, %v921
  %v923 = vshrl.u32 %v687, 16
  %v925 = vrot.slane %v923, 4
  %v926 = vor.u32 %v925, %v921
  %v927 = vrot.slane %v926, 4
  %v929 = vshrl.u32 %v688, 16
  %v931 = vrot.slane %v929, 4
  %v932 = vshll.u32 %v688, 16
  %v934 = vrot.slane %v932, 5
  %v935 = vor.u32 %v931, %v934
  %v936 = vrot.slane %v935, 4
  %v938 = vshll.u32 %v689, 16
  %v940 = vrot.slane %v938, 5
  %v941 = vsel %vm72, %v936, %v940
  %v942 = vshrl.u32 %v689, 16
  %v944 = vrot.slane %v942, 4
  %v945 = vor.u32 %v944, %v940
  %v946 = vrot.slane %v945, 4
  %v948 = vshrl.u32 %v690, 16
  %v950 = vrot.slane %v948, 4
  %v951 = vshll.u32 %v690, 16
  %v953 = vrot.slane %v951, 5
  %v954 = vor.u32 %v950, %v953
  %v955 = vrot.slane %v954, 4
  %v957 = vshll.u32 %v691, 16
  %v959 = vrot.slane %v957, 5
  %v960 = vsel %vm72, %v955, %v959
  %v961 = vshrl.u32 %v691, 16
  %v963 = vrot.slane %v961, 4
  %v964 = vor.u32 %v963, %v959
  %v965 = vrot.slane %v964, 4
  %v967 = vshrl.u32 %v692, 16
  %v969 = vrot.slane %v967, 4
  %v970 = vshll.u32 %v692, 16
  %v972 = vrot.slane %v970, 5
  %v973 = vor.u32 %v969, %v972
  %v974 = vrot.slane %v973, 4
  %v976 = vshll.u32 %v693, 16
  %v978 = vrot.slane %v976, 5
  %v979 = vsel %vm72, %v974, %v978
  %v980 = vshrl.u32 %v693, 16
  %v982 = vrot.slane %v980, 4
  %v983 = vor.u32 %v982, %v978
  %v984 = vrot.slane %v983, 4
  %v986 = vshrl.u32 %v694, 16
  %v988 = vrot.slane %v986, 4
  %v989 = vshll.u32 %v694, 16
  %v991 = vrot.slane %v989, 5
  %v992 = vor.u32 %v988, %v991
  %v993 = vrot.slane %v992, 4
  %v995 = vshll.u32 %v695, 16
  %v997 = vrot.slane %v995, 5
  %v998 = vsel %vm72, %v993, %v997
  %v999 = vshrl.u32 %v695, 16
  %v1001 = vrot.slane %v999, 4
  %v1002 = vor.u32 %v1001, %v997
  %v1003 = vrot.slane %v1002, 4
  %v1005 = vshrl.u32 %v696, 16
  %v1007 = vrot.slane %v1005, 4
  %v1008 = vshll.u32 %v696, 16
  %v1010 = vrot.slane %v1008, 5
  %v1011 = vor.u32 %v1007, %v1010
  %v1012 = vrot.slane %v1011, 4
  %v1014 = vshll.u32 %v697, 16
  %v1016 = vrot.slane %v1014, 5
  %v1017 = vsel %vm72, %v1012, %v1016
  %v1018 = vshrl.u32 %v697, 16
  %v1020 = vrot.slane %v1018, 4
  %v1021 = vor.u32 %v1020, %v1016
  %v1022 = vrot.slane %v1021, 4
  %v1024 = vshrl.u32 %v698, 16
  %v1026 = vrot.slane %v1024, 4
  %v1027 = vshll.u32 %v698, 16
  %v1029 = vrot.slane %v1027, 5
  %v1030 = vor.u32 %v1026, %v1029
  %v1031 = vrot.slane %v1030, 4
  %v1033 = vshll.u32 %v699, 16
  %v1035 = vrot.slane %v1033, 5
  %v1036 = vsel %vm72, %v1031, %v1035
  %v1037 = vshrl.u32 %v699, 16
  %v1039 = vrot.slane %v1037, 4
  %v1040 = vor.u32 %v1039, %v1035
  %v1041 = vrot.slane %v1040, 4
  %v1043 = vshrl.u32 %v700, 16
  %v1045 = vrot.slane %v1043, 4
  %v1046 = vshll.u32 %v700, 16
  %v1048 = vrot.slane %v1046, 5
  %v1049 = vor.u32 %v1045, %v1048
  %v1050 = vrot.slane %v1049, 4
  %v1052 = vshll.u32 %v701, 16
  %v1054 = vrot.slane %v1052, 5
  %v1055 = vsel %vm72, %v1050, %v1054
  %v1056 = vshrl.u32 %v701, 16
  %v1058 = vrot.slane %v1056, 4
  %v1059 = vor.u32 %v1058, %v1054
  %v1060 = vrot.slane %v1059, 4
  %v1062 = vshrl.u32 %v702, 16
  %v1064 = vrot.slane %v1062, 4
  %v1065 = vshll.u32 %v702, 16
  %v1067 = vrot.slane %v1065, 5
  %v1068 = vor.u32 %v1064, %v1067
  %v1069 = vrot.slane %v1068, 4
  %v1071 = vshll.u32 %v703, 16
  %v1073 = vrot.slane %v1071, 5
  %v1074 = vsel %vm72, %v1069, %v1073
  %v1075 = vshrl.u32 %v703, 16
  %v1077 = vrot.slane %v1075, 4
  %v1078 = vor.u32 %v1077, %v1073
  %v1079 = vrot.slane %v1078, 4
  %v1081 = vshrl.u32 %v704, 16
  %v1083 = vrot.slane %v1081, 4
  %v1084 = vshll.u32 %v704, 16
  %v1086 = vrot.slane %v1084, 5
  %v1087 = vor.u32 %v1083, %v1086
  %v1088 = vrot.slane %v1087, 4
  %v1090 = vshll.u32 %v705, 16
  %v1092 = vrot.slane %v1090, 5
  %v1093 = vsel %vm72, %v1088, %v1092
  %v1094 = vshrl.u32 %v705, 16
  %v1096 = vrot.slane %v1094, 4
  %v1097 = vor.u32 %v1096, %v1092
  %v1098 = vrot.slane %v1097, 4
  %v1100 = vshrl.u32 %v706, 16
  %v1102 = vrot.slane %v1100, 4
  %v1103 = vshll.u32 %v706, 16
  %v1105 = vrot.slane %v1103, 5
  %v1106 = vor.u32 %v1102, %v1105
  %v1107 = vrot.slane %v1106, 4
  %v1109 = vshll.u32 %v707, 16
  %v1111 = vrot.slane %v1109, 5
  %v1112 = vsel %vm72, %v1107, %v1111
  %v1113 = vshrl.u32 %v707, 16
  %v1115 = vrot.slane %v1113, 4
  %v1116 = vor.u32 %v1115, %v1111
  %v1117 = vrot.slane %v1116, 4
  %v1119 = vshrl.u32 %v708, 16
  %v1121 = vrot.slane %v1119, 4
  %v1122 = vshll.u32 %v708, 16
  %v1124 = vrot.slane %v1122, 5
  %v1125 = vor.u32 %v1121, %v1124
  %v1126 = vrot.slane %v1125, 4
  %v1128 = vshll.u32 %v709, 16
  %v1130 = vrot.slane %v1128, 5
  %v1131 = vsel %vm72, %v1126, %v1130
  %v1132 = vshrl.u32 %v709, 16
  %v1134 = vrot.slane %v1132, 4
  %v1135 = vor.u32 %v1134, %v1130
  %v1136 = vrot.slane %v1135, 4
  %v1138 = vshrl.u32 %v710, 16
  %v1140 = vrot.slane %v1138, 4
  %v1141 = vshll.u32 %v710, 16
  %v1143 = vrot.slane %v1141, 5
  %v1144 = vor.u32 %v1140, %v1143
  %v1145 = vrot.slane %v1144, 4
  %v1147 = vshll.u32 %v711, 16
  %v1149 = vrot.slane %v1147, 5
  %v1150 = vsel %vm72, %v1145, %v1149
  %v1151 = vshrl.u32 %v711, 16
  %v1153 = vrot.slane %v1151, 4
  %v1154 = vor.u32 %v1153, %v1149
  %v1155 = vrot.slane %v1154, 4
  %v1157 = vshrl.u32 %v712, 16
  %v1159 = vrot.slane %v1157, 4
  %v1160 = vshll.u32 %v712, 16
  %v1162 = vrot.slane %v1160, 5
  %v1163 = vor.u32 %v1159, %v1162
  %v1164 = vrot.slane %v1163, 4
  %v1166 = vshll.u32 %v713, 16
  %v1168 = vrot.slane %v1166, 5
  %v1169 = vsel %vm72, %v1164, %v1168
  %v1170 = vshrl.u32 %v713, 16
  %v1172 = vrot.slane %v1170, 4
  %v1173 = vor.u32 %v1172, %v1168
  %v1174 = vrot.slane %v1173, 4
  %v1176 = vshrl.u32 %v714, 16
  %v1178 = vrot.slane %v1176, 4
  %v1179 = vshll.u32 %v714, 16
  %v1181 = vrot.slane %v1179, 5
  %v1182 = vor.u32 %v1178, %v1181
  %v1183 = vrot.slane %v1182, 4
  %v1185 = vshll.u32 %v715, 16
  %v1187 = vrot.slane %v1185, 5
  %v1188 = vsel %vm72, %v1183, %v1187
  %v1189 = vshrl.u32 %v715, 16
  %v1191 = vrot.slane %v1189, 4
  %v1192 = vor.u32 %v1191, %v1187
  %v1193 = vrot.slane %v1192, 4
  %v1195 = vshrl.u32 %v716, 16
  %v1197 = vrot.slane %v1195, 4
  %v1198 = vshll.u32 %v716, 16
  %v1200 = vrot.slane %v1198, 5
  %v1201 = vor.u32 %v1197, %v1200
  %v1202 = vrot.slane %v1201, 4
  %v1204 = vshll.u32 %v717, 16
  %v1206 = vrot.slane %v1204, 5
  %v1207 = vsel %vm72, %v1202, %v1206
  %v1208 = vshrl.u32 %v717, 16
  %v1210 = vrot.slane %v1208, 4
  %v1211 = vor.u32 %v1210, %v1206
  %v1212 = vrot.slane %v1211, 4
  %v1214 = vshrl.u32 %v718, 16
  %v1216 = vrot.slane %v1214, 4
  %v1217 = vshll.u32 %v718, 16
  %v1219 = vrot.slane %v1217, 5
  %v1220 = vor.u32 %v1216, %v1219
  %v1221 = vrot.slane %v1220, 4
  %v1223 = vshll.u32 %v719, 16
  %v1225 = vrot.slane %v1223, 5
  %v1226 = vsel %vm72, %v1221, %v1225
  %v1227 = vshrl.u32 %v719, 16
  %v1229 = vrot.slane %v1227, 4
  %v1230 = vor.u32 %v1229, %v1225
  %v1231 = vrot.slane %v1230, 4
  %v1233 = vshrl.u32 %v720, 16
  %v1235 = vrot.slane %v1233, 4
  %v1236 = vshll.u32 %v720, 16
  %v1238 = vrot.slane %v1236, 5
  %v1239 = vor.u32 %v1235, %v1238
  %v1240 = vrot.slane %v1239, 4
  %v1242 = vshll.u32 %v721, 16
  %v1244 = vrot.slane %v1242, 5
  %v1245 = vsel %vm72, %v1240, %v1244
  %v1246 = vshrl.u32 %v721, 16
  %v1248 = vrot.slane %v1246, 4
  %v1249 = vor.u32 %v1248, %v1244
  %v1250 = vrot.slane %v1249, 4
  %v1252 = vshrl.u32 %v722, 16
  %v1254 = vrot.slane %v1252, 4
  %v1255 = vshll.u32 %v722, 16
  %v1257 = vrot.slane %v1255, 5
  %v1258 = vor.u32 %v1254, %v1257
  %v1259 = vrot.slane %v1258, 4
  %v1261 = vshll.u32 %v723, 16
  %v1263 = vrot.slane %v1261, 5
  %v1264 = vsel %vm72, %v1259, %v1263
  %v1265 = vshrl.u32 %v723, 16
  %v1267 = vrot.slane %v1265, 4
  %v1268 = vor.u32 %v1267, %v1263
  %v1269 = vrot.slane %v1268, 4
  %v1322 = vmax.bf16 %v724, %v789
  %v1323 = vmax.bf16 %v725, %v794
  %v1324 = vmax.bf16 %v726, %v808
  %v1325 = vmax.bf16 %v727, %v813
  %v1326 = vmax.bf16 %v728, %v827
  %v1327 = vmax.bf16 %v729, %v832
  %v1328 = vmax.bf16 %v730, %v846
  %v1329 = vmax.bf16 %v731, %v851
  %v1330 = vmax.bf16 %v732, %v865
  %v1331 = vmax.bf16 %v733, %v870
  %v1332 = vmax.bf16 %v734, %v884
  %v1333 = vmax.bf16 %v735, %v889
  %v1334 = vmax.bf16 %v736, %v903
  %v1335 = vmax.bf16 %v737, %v908
  %v1336 = vmax.bf16 %v738, %v922
  %v1337 = vmax.bf16 %v739, %v927
  %v1338 = vmax.bf16 %v740, %v941
  %v1339 = vmax.bf16 %v741, %v946
  %v1340 = vmax.bf16 %v742, %v960
  %v1341 = vmax.bf16 %v743, %v965
  %v1342 = vmax.bf16 %v744, %v979
  %v1343 = vmax.bf16 %v745, %v984
  %v1344 = vmax.bf16 %v746, %v998
  %v1345 = vmax.bf16 %v747, %v1003
  %v1346 = vmax.bf16 %v748, %v1017
  %v1347 = vmax.bf16 %v749, %v1022
  %v1348 = vmax.bf16 %v750, %v1036
  %v1349 = vmax.bf16 %v751, %v1041
  %v1350 = vmax.bf16 %v752, %v1055
  %v1351 = vmax.bf16 %v753, %v1060
  %v1352 = vmax.bf16 %v754, %v1074
  %v1353 = vmax.bf16 %v755, %v1079
  %v1354 = vmax.bf16 %v756, %v1093
  %v1355 = vmax.bf16 %v757, %v1098
  %v1356 = vmax.bf16 %v758, %v1112
  %v1357 = vmax.bf16 %v759, %v1117
  %v1358 = vmax.bf16 %v760, %v1131
  %v1359 = vmax.bf16 %v761, %v1136
  %v1360 = vmax.bf16 %v762, %v1150
  %v1361 = vmax.bf16 %v763, %v1155
  %v1362 = vmax.bf16 %v764, %v1169
  %v1363 = vmax.bf16 %v765, %v1174
  %v1364 = vmax.bf16 %v766, %v1188
  %v1365 = vmax.bf16 %v767, %v1193
  %v1366 = vmax.bf16 %v768, %v1207
  %v1367 = vmax.bf16 %v769, %v1212
  %v1368 = vmax.bf16 %v770, %v1226
  %v1369 = vmax.bf16 %v771, %v1231
  %v1370 = vmax.bf16 %v772, %v1245
  %v1371 = vmax.bf16 %v773, %v1250
  %v1372 = vmax.bf16 %v774, %v1264
  %v1373 = vmax.bf16 %v775, %v1269
  %v1374 = vld [vmem:[%s1] sm:$0xf]
  %v1375 = vld [vmem:[%s1 + $0x4] sm:$0x7]
  %v1376 = vld [vmem:[%s1 + $0x8] sm:$0xf]
  %v1377 = vld [vmem:[%s1 + $0xc] sm:$0x7]
  %v1378 = vld [vmem:[%s1 + $0x10] sm:$0xf]
  %v1379 = vld [vmem:[%s1 + $0x14] sm:$0x7]
  %v1380 = vld [vmem:[%s1 + $0x18] sm:$0xf]
  %v1381 = vld [vmem:[%s1 + $0x1c] sm:$0x7]
  %v1382 = vld [vmem:[%s1 + $0x20] sm:$0xf]
  %v1383 = vld [vmem:[%s1 + $0x24] sm:$0x7]
  %v1384 = vld [vmem:[%s1 + $0x28] sm:$0xf]
  %v1385 = vld [vmem:[%s1 + $0x2c] sm:$0x7]
  %v1386 = vld [vmem:[%s1 + $0x30] sm:$0xf]
  %v1387 = vld [vmem:[%s1 + $0x34] sm:$0x7]
  %v1388 = vld [vmem:[%s1 + $0x38] sm:$0xf]
  %v1389 = vld [vmem:[%s1 + $0x3c] sm:$0x7]
  %v1390 = vld [vmem:[%s1 + $0x40] sm:$0xf]
  %v1391 = vld [vmem:[%s1 + $0x44] sm:$0x7]
  %v1392 = vld [vmem:[%s1 + $0x48] sm:$0xf]
  %v1393 = vld [vmem:[%s1 + $0x4c] sm:$0x7]
  %v1394 = vld [vmem:[%s1 + $0x50] sm:$0xf]
  %v1395 = vld [vmem:[%s1 + $0x54] sm:$0x7]
  %v1396 = vld [vmem:[%s1 + $0x58] sm:$0xf]
  %v1397 = vld [vmem:[%s1 + $0x5c] sm:$0x7]
  %v1398 = vld [vmem:[%s1 + $0x60] sm:$0xf]
  %v1399 = vld [vmem:[%s1 + $0x64] sm:$0x7]
  %v1400 = vld [vmem:[%s1 + $0x70] sm:$0xf]
  %v1401 = vld [vmem:[%s1 + $0x74] sm:$0x7]
  %v1402 = vld [vmem:[%s1 + $0x78] sm:$0xf]
  %v1403 = vld [vmem:[%s1 + $0x7c] sm:$0x7]
  %v1404 = vld [vmem:[%s1 + $0x80] sm:$0xf]
  %v1405 = vld [vmem:[%s1 + $0x84] sm:$0x7]
  %v1406 = vld [vmem:[%s1 + $0x88] sm:$0xf]
  %v1407 = vld [vmem:[%s1 + $0x8c] sm:$0x7]
  %v1408 = vld [vmem:[%s1 + $0x90] sm:$0xf]
  %v1409 = vld [vmem:[%s1 + $0x94] sm:$0x7]
  %v1410 = vld [vmem:[%s1 + $0x98] sm:$0xf]
  %v1411 = vld [vmem:[%s1 + $0x9c] sm:$0x7]
  %v1412 = vld [vmem:[%s1 + $0xa0] sm:$0xf]
  %v1413 = vld [vmem:[%s1 + $0xa4] sm:$0x7]
  %v1414 = vld [vmem:[%s1 + $0xa8] sm:$0xf]
  %v1415 = vld [vmem:[%s1 + $0xac] sm:$0x7]
  %v1416 = vld [vmem:[%s1 + $0xb0] sm:$0xf]
  %v1417 = vld [vmem:[%s1 + $0xb4] sm:$0x7]
  %v1418 = vld [vmem:[%s1 + $0xb8] sm:$0xf]
  %v1419 = vld [vmem:[%s1 + $0xbc] sm:$0x7]
  %v1420 = vld [vmem:[%s1 + $0xc0] sm:$0xf]
  %v1421 = vld [vmem:[%s1 + $0xc4] sm:$0x7]
  %v1422 = vld [vmem:[%s1 + $0xc8] sm:$0xf]
  %v1423 = vld [vmem:[%s1 + $0xcc] sm:$0x7]
  %v1424 = vld [vmem:[%s1 + $0xd0] sm:$0xf]
  %v1425 = vld [vmem:[%s1 + $0xd4] sm:$0x7]
  %v1426 = vmax.bf16 %v1322, %v1374
  %v1427 = vmax.bf16 %v1323, %v1375
  %v1428 = vmax.bf16 %v1324, %v1376
  %v1429 = vmax.bf16 %v1325, %v1377
  %v1430 = vmax.bf16 %v1326, %v1378
  %v1431 = vmax.bf16 %v1327, %v1379
  %v1432 = vmax.bf16 %v1328, %v1380
  %v1433 = vmax.bf16 %v1329, %v1381
  %v1434 = vmax.bf16 %v1330, %v1382
  %v1435 = vmax.bf16 %v1331, %v1383
  %v1436 = vmax.bf16 %v1332, %v1384
  %v1437 = vmax.bf16 %v1333, %v1385
  %v1438 = vmax.bf16 %v1334, %v1386
  %v1439 = vmax.bf16 %v1335, %v1387
  %v1440 = vmax.bf16 %v1336, %v1388
  %v1441 = vmax.bf16 %v1337, %v1389
  %v1442 = vmax.bf16 %v1338, %v1390
  %v1443 = vmax.bf16 %v1339, %v1391
  %v1444 = vmax.bf16 %v1340, %v1392
  %v1445 = vmax.bf16 %v1341, %v1393
  %v1446 = vmax.bf16 %v1342, %v1394
  %v1447 = vmax.bf16 %v1343, %v1395
  %v1448 = vmax.bf16 %v1344, %v1396
  %v1449 = vmax.bf16 %v1345, %v1397
  %v1450 = vmax.bf16 %v1346, %v1398
  %v1451 = vmax.bf16 %v1347, %v1399
  %v1452 = vmax.bf16 %v1348, %v1400
  %v1453 = vmax.bf16 %v1349, %v1401
  %v1454 = vmax.bf16 %v1350, %v1402
  %v1455 = vmax.bf16 %v1351, %v1403
  %v1456 = vmax.bf16 %v1352, %v1404
  %v1457 = vmax.bf16 %v1353, %v1405
  %v1458 = vmax.bf16 %v1354, %v1406
  %v1459 = vmax.bf16 %v1355, %v1407
  %v1460 = vmax.bf16 %v1356, %v1408
  %v1461 = vmax.bf16 %v1357, %v1409
  %v1462 = vmax.bf16 %v1358, %v1410
  %v1463 = vmax.bf16 %v1359, %v1411
  %v1464 = vmax.bf16 %v1360, %v1412
  %v1465 = vmax.bf16 %v1361, %v1413
  %v1466 = vmax.bf16 %v1362, %v1414
  %v1467 = vmax.bf16 %v1363, %v1415
  %v1468 = vmax.bf16 %v1364, %v1416
  %v1469 = vmax.bf16 %v1365, %v1417
  %v1470 = vmax.bf16 %v1366, %v1418
  %v1471 = vmax.bf16 %v1367, %v1419
  %v1472 = vmax.bf16 %v1368, %v1420
  %v1473 = vmax.bf16 %v1369, %v1421
  %v1474 = vmax.bf16 %v1370, %v1422
  %v1475 = vmax.bf16 %v1371, %v1423
  %v1476 = vmax.bf16 %v1372, %v1424
  %v1477 = vmax.bf16 %v1373, %v1425
  %s1478 = scalar_lea.vmem %s1, 8
  %v1479 = vld [vmem:[%s1478] sm:$0xf]
  %v1480 = vld [vmem:[%s1478 + $0x4] sm:$0x7]
  %v1481 = vld [vmem:[%s1478 + $0x8] sm:$0xf]
  %v1482 = vld [vmem:[%s1478 + $0xc] sm:$0x7]
  %v1483 = vld [vmem:[%s1478 + $0x10] sm:$0xf]
  %v1484 = vld [vmem:[%s1478 + $0x14] sm:$0x7]
  %v1485 = vld [vmem:[%s1478 + $0x18] sm:$0xf]
  %v1486 = vld [vmem:[%s1478 + $0x1c] sm:$0x7]
  %v1487 = vld [vmem:[%s1478 + $0x20] sm:$0xf]
  %v1488 = vld [vmem:[%s1478 + $0x24] sm:$0x7]
  %v1489 = vld [vmem:[%s1478 + $0x28] sm:$0xf]
  %v1490 = vld [vmem:[%s1478 + $0x2c] sm:$0x7]
  %v1491 = vld [vmem:[%s1478 + $0x30] sm:$0xf]
  %v1492 = vld [vmem:[%s1478 + $0x34] sm:$0x7]
  %v1493 = vld [vmem:[%s1478 + $0x38] sm:$0xf]
  %v1494 = vld [vmem:[%s1478 + $0x3c] sm:$0x7]
  %v1495 = vld [vmem:[%s1478 + $0x40] sm:$0xf]
  %v1496 = vld [vmem:[%s1478 + $0x44] sm:$0x7]
  %v1497 = vld [vmem:[%s1478 + $0x48] sm:$0xf]
  %v1498 = vld [vmem:[%s1478 + $0x4c] sm:$0x7]
  %v1499 = vld [vmem:[%s1478 + $0x50] sm:$0xf]
  %v1500 = vld [vmem:[%s1478 + $0x54] sm:$0x7]
  %v1501 = vld [vmem:[%s1478 + $0x58] sm:$0xf]
  %v1502 = vld [vmem:[%s1478 + $0x5c] sm:$0x7]
  %v1503 = vld [vmem:[%s1478 + $0x60] sm:$0xf]
  %v1504 = vld [vmem:[%s1478 + $0x64] sm:$0x7]
  %v1505 = vld [vmem:[%s1478 + $0x70] sm:$0xf]
  %v1506 = vld [vmem:[%s1478 + $0x74] sm:$0x7]
  %v1507 = vld [vmem:[%s1478 + $0x78] sm:$0xf]
  %v1508 = vld [vmem:[%s1478 + $0x7c] sm:$0x7]
  %v1509 = vld [vmem:[%s1478 + $0x80] sm:$0xf]
  %v1510 = vld [vmem:[%s1478 + $0x84] sm:$0x7]
  %v1511 = vld [vmem:[%s1478 + $0x88] sm:$0xf]
  %v1512 = vld [vmem:[%s1478 + $0x8c] sm:$0x7]
  %v1513 = vld [vmem:[%s1478 + $0x90] sm:$0xf]
  %v1514 = vld [vmem:[%s1478 + $0x94] sm:$0x7]
  %v1515 = vld [vmem:[%s1478 + $0x98] sm:$0xf]
  %v1516 = vld [vmem:[%s1478 + $0x9c] sm:$0x7]
  %v1517 = vld [vmem:[%s1478 + $0xa0] sm:$0xf]
  %v1518 = vld [vmem:[%s1478 + $0xa4] sm:$0x7]
  %v1519 = vld [vmem:[%s1478 + $0xa8] sm:$0xf]
  %v1520 = vld [vmem:[%s1478 + $0xac] sm:$0x7]
  %v1521 = vld [vmem:[%s1478 + $0xb0] sm:$0xf]
  %v1522 = vld [vmem:[%s1478 + $0xb4] sm:$0x7]
  %v1523 = vld [vmem:[%s1478 + $0xb8] sm:$0xf]
  %v1524 = vld [vmem:[%s1478 + $0xbc] sm:$0x7]
  %v1525 = vld [vmem:[%s1478 + $0xc0] sm:$0xf]
  %v1526 = vld [vmem:[%s1478 + $0xc4] sm:$0x7]
  %v1527 = vld [vmem:[%s1478 + $0xc8] sm:$0xf]
  %v1528 = vld [vmem:[%s1478 + $0xcc] sm:$0x7]
  %v1529 = vld [vmem:[%s1478 + $0xd0] sm:$0xf]
  %v1530 = vld [vmem:[%s1478 + $0xd4] sm:$0x7]
  %v1531 = vmax.bf16 %v1426, %v1479
  %v1532 = vmax.bf16 %v1427, %v1480
  %v1533 = vmax.bf16 %v1428, %v1481
  %v1534 = vmax.bf16 %v1429, %v1482
  %v1535 = vmax.bf16 %v1430, %v1483
  %v1536 = vmax.bf16 %v1431, %v1484
  %v1537 = vmax.bf16 %v1432, %v1485
  %v1538 = vmax.bf16 %v1433, %v1486
  %v1539 = vmax.bf16 %v1434, %v1487
  %v1540 = vmax.bf16 %v1435, %v1488
  %v1541 = vmax.bf16 %v1436, %v1489
  %v1542 = vmax.bf16 %v1437, %v1490
  %v1543 = vmax.bf16 %v1438, %v1491
  %v1544 = vmax.bf16 %v1439, %v1492
  %v1545 = vmax.bf16 %v1440, %v1493
  %v1546 = vmax.bf16 %v1441, %v1494
  %v1547 = vmax.bf16 %v1442, %v1495
  %v1548 = vmax.bf16 %v1443, %v1496
  %v1549 = vmax.bf16 %v1444, %v1497
  %v1550 = vmax.bf16 %v1445, %v1498
  %v1551 = vmax.bf16 %v1446, %v1499
  %v1552 = vmax.bf16 %v1447, %v1500
  %v1553 = vmax.bf16 %v1448, %v1501
  %v1554 = vmax.bf16 %v1449, %v1502
  %v1555 = vmax.bf16 %v1450, %v1503
  %v1556 = vmax.bf16 %v1451, %v1504
  %v1557 = vmax.bf16 %v1452, %v1505
  %v1558 = vmax.bf16 %v1453, %v1506
  %v1559 = vmax.bf16 %v1454, %v1507
  %v1560 = vmax.bf16 %v1455, %v1508
  %v1561 = vmax.bf16 %v1456, %v1509
  %v1562 = vmax.bf16 %v1457, %v1510
  %v1563 = vmax.bf16 %v1458, %v1511
  %v1564 = vmax.bf16 %v1459, %v1512
  %v1565 = vmax.bf16 %v1460, %v1513
  %v1566 = vmax.bf16 %v1461, %v1514
  %v1567 = vmax.bf16 %v1462, %v1515
  %v1568 = vmax.bf16 %v1463, %v1516
  %v1569 = vmax.bf16 %v1464, %v1517
  %v1570 = vmax.bf16 %v1465, %v1518
  %v1571 = vmax.bf16 %v1466, %v1519
  %v1572 = vmax.bf16 %v1467, %v1520
  %v1573 = vmax.bf16 %v1468, %v1521
  %v1574 = vmax.bf16 %v1469, %v1522
  %v1575 = vmax.bf16 %v1470, %v1523
  %v1576 = vmax.bf16 %v1471, %v1524
  %v1577 = vmax.bf16 %v1472, %v1525
  %v1578 = vmax.bf16 %v1473, %v1526
  %v1579 = vmax.bf16 %v1474, %v1527
  %v1580 = vmax.bf16 %v1475, %v1528
  %v1581 = vmax.bf16 %v1476, %v1529
  %v1582 = vmax.bf16 %v1477, %v1530
  %v1583 = vld [vmem:[%s2] sm:$0xf]
  %v1584 = vld [vmem:[%s2 + $0x4] sm:$0x7]
  %v1585 = vld [vmem:[%s2 + $0x8] sm:$0xf]
  %v1586 = vld [vmem:[%s2 + $0xc] sm:$0x7]
  %v1587 = vld [vmem:[%s2 + $0x10] sm:$0xf]
  %v1588 = vld [vmem:[%s2 + $0x14] sm:$0x7]
  %v1589 = vld [vmem:[%s2 + $0x18] sm:$0xf]
  %v1590 = vld [vmem:[%s2 + $0x1c] sm:$0x7]
  %v1591 = vld [vmem:[%s2 + $0x20] sm:$0xf]
  %v1592 = vld [vmem:[%s2 + $0x24] sm:$0x7]
  %v1593 = vld [vmem:[%s2 + $0x28] sm:$0xf]
  %v1594 = vld [vmem:[%s2 + $0x2c] sm:$0x7]
  %v1595 = vld [vmem:[%s2 + $0x30] sm:$0xf]
  %v1596 = vld [vmem:[%s2 + $0x34] sm:$0x7]
  %v1597 = vld [vmem:[%s2 + $0x38] sm:$0xf]
  %v1598 = vld [vmem:[%s2 + $0x3c] sm:$0x7]
  %v1599 = vld [vmem:[%s2 + $0x40] sm:$0xf]
  %v1600 = vld [vmem:[%s2 + $0x44] sm:$0x7]
  %v1601 = vld [vmem:[%s2 + $0x48] sm:$0xf]
  %v1602 = vld [vmem:[%s2 + $0x4c] sm:$0x7]
  %v1603 = vld [vmem:[%s2 + $0x50] sm:$0xf]
  %v1604 = vld [vmem:[%s2 + $0x54] sm:$0x7]
  %v1605 = vld [vmem:[%s2 + $0x58] sm:$0xf]
  %v1606 = vld [vmem:[%s2 + $0x5c] sm:$0x7]
  %v1607 = vld [vmem:[%s2 + $0x60] sm:$0xf]
  %v1608 = vld [vmem:[%s2 + $0x64] sm:$0x7]
  %v1609 = vld [vmem:[%s2 + $0x68] sm:$0xf]
  %v1610 = vld [vmem:[%s2 + $0x6c] sm:$0x7]
  %v1611 = vld [vmem:[%s2 + $0x70] sm:$0xf]
  %v1612 = vld [vmem:[%s2 + $0x74] sm:$0x7]
  %v1613 = vld [vmem:[%s2 + $0x78] sm:$0xf]
  %v1614 = vld [vmem:[%s2 + $0x7c] sm:$0x7]
  %v1615 = vld [vmem:[%s2 + $0x80] sm:$0xf]
  %v1616 = vld [vmem:[%s2 + $0x84] sm:$0x7]
  %v1617 = vld [vmem:[%s2 + $0x88] sm:$0xf]
  %v1618 = vld [vmem:[%s2 + $0x8c] sm:$0x7]
  %v1619 = vld [vmem:[%s2 + $0x90] sm:$0xf]
  %v1620 = vld [vmem:[%s2 + $0x94] sm:$0x7]
  %v1621 = vld [vmem:[%s2 + $0x98] sm:$0xf]
  %v1622 = vld [vmem:[%s2 + $0x9c] sm:$0x7]
  %v1623 = vld [vmem:[%s2 + $0xa0] sm:$0xf]
  %v1624 = vld [vmem:[%s2 + $0xa4] sm:$0x7]
  %v1625 = vld [vmem:[%s2 + $0xa8] sm:$0xf]
  %v1626 = vld [vmem:[%s2 + $0xac] sm:$0x7]
  %v1627 = vld [vmem:[%s2 + $0xb0] sm:$0xf]
  %v1628 = vld [vmem:[%s2 + $0xb4] sm:$0x7]
  %v1629 = vld [vmem:[%s2 + $0xb8] sm:$0xf]
  %v1630 = vld [vmem:[%s2 + $0xbc] sm:$0x7]
  %v1631 = vld [vmem:[%s2 + $0xc0] sm:$0xf]
  %v1632 = vld [vmem:[%s2 + $0xc4] sm:$0x7]
  %v1633 = vld [vmem:[%s2 + $0xc8] sm:$0xf]
  %v1634 = vld [vmem:[%s2 + $0xcc] sm:$0x7]
  %v1635 = vmax.bf16 %v1531, %v1583
  %v1636 = vmax.bf16 %v1532, %v1584
  %v1637 = vmax.bf16 %v1533, %v1585
  %v1638 = vmax.bf16 %v1534, %v1586
  %v1639 = vmax.bf16 %v1535, %v1587
  %v1640 = vmax.bf16 %v1536, %v1588
  %v1641 = vmax.bf16 %v1537, %v1589
  %v1642 = vmax.bf16 %v1538, %v1590
  %v1643 = vmax.bf16 %v1539, %v1591
  %v1644 = vmax.bf16 %v1540, %v1592
  %v1645 = vmax.bf16 %v1541, %v1593
  %v1646 = vmax.bf16 %v1542, %v1594
  %v1647 = vmax.bf16 %v1543, %v1595
  %v1648 = vmax.bf16 %v1544, %v1596
  %v1649 = vmax.bf16 %v1545, %v1597
  %v1650 = vmax.bf16 %v1546, %v1598
  %v1651 = vmax.bf16 %v1547, %v1599
  %v1652 = vmax.bf16 %v1548, %v1600
  %v1653 = vmax.bf16 %v1549, %v1601
  %v1654 = vmax.bf16 %v1550, %v1602
  %v1655 = vmax.bf16 %v1551, %v1603
  %v1656 = vmax.bf16 %v1552, %v1604
  %v1657 = vmax.bf16 %v1553, %v1605
  %v1658 = vmax.bf16 %v1554, %v1606
  %v1659 = vmax.bf16 %v1555, %v1607
  %v1660 = vmax.bf16 %v1556, %v1608
  %v1661 = vmax.bf16 %v1557, %v1609
  %v1662 = vmax.bf16 %v1558, %v1610
  %v1663 = vmax.bf16 %v1559, %v1611
  %v1664 = vmax.bf16 %v1560, %v1612
  %v1665 = vmax.bf16 %v1561, %v1613
  %v1666 = vmax.bf16 %v1562, %v1614
  %v1667 = vmax.bf16 %v1563, %v1615
  %v1668 = vmax.bf16 %v1564, %v1616
  %v1669 = vmax.bf16 %v1565, %v1617
  %v1670 = vmax.bf16 %v1566, %v1618
  %v1671 = vmax.bf16 %v1567, %v1619
  %v1672 = vmax.bf16 %v1568, %v1620
  %v1673 = vmax.bf16 %v1569, %v1621
  %v1674 = vmax.bf16 %v1570, %v1622
  %v1675 = vmax.bf16 %v1571, %v1623
  %v1676 = vmax.bf16 %v1572, %v1624
  %v1677 = vmax.bf16 %v1573, %v1625
  %v1678 = vmax.bf16 %v1574, %v1626
  %v1679 = vmax.bf16 %v1575, %v1627
  %v1680 = vmax.bf16 %v1576, %v1628
  %v1681 = vmax.bf16 %v1577, %v1629
  %v1682 = vmax.bf16 %v1578, %v1630
  %v1683 = vmax.bf16 %v1579, %v1631
  %v1684 = vmax.bf16 %v1580, %v1632
  %v1685 = vmax.bf16 %v1581, %v1633
  %v1686 = vmax.bf16 %v1582, %v1634
  %v1688 = vshrl.u32 %v1583, 16
  %v1690 = vrot.slane %v1688, 4
  %v1691 = vshll.u32 %v1583, 16
  %v1693 = vrot.slane %v1691, 5
  %v1694 = vor.u32 %v1690, %v1693
  %v1695 = vrot.slane %v1694, 4
  %v1697 = vshll.u32 %v1584, 16
  %v1699 = vrot.slane %v1697, 5
  %v1700 = vsel %vm72, %v1695, %v1699
  %v1701 = vshrl.u32 %v1584, 16
  %v1703 = vrot.slane %v1701, 4
  %v1704 = vor.u32 %v1703, %v1699
  %v1705 = vrot.slane %v1704, 4
  %v1707 = vshrl.u32 %v1585, 16
  %v1709 = vrot.slane %v1707, 4
  %v1710 = vshll.u32 %v1585, 16
  %v1712 = vrot.slane %v1710, 5
  %v1713 = vor.u32 %v1709, %v1712
  %v1714 = vrot.slane %v1713, 4
  %v1716 = vshll.u32 %v1586, 16
  %v1718 = vrot.slane %v1716, 5
  %v1719 = vsel %vm72, %v1714, %v1718
  %v1720 = vshrl.u32 %v1586, 16
  %v1722 = vrot.slane %v1720, 4
  %v1723 = vor.u32 %v1722, %v1718
  %v1724 = vrot.slane %v1723, 4
  %v1726 = vshrl.u32 %v1587, 16
  %v1728 = vrot.slane %v1726, 4
  %v1729 = vshll.u32 %v1587, 16
  %v1731 = vrot.slane %v1729, 5
  %v1732 = vor.u32 %v1728, %v1731
  %v1733 = vrot.slane %v1732, 4
  %v1735 = vshll.u32 %v1588, 16
  %v1737 = vrot.slane %v1735, 5
  %v1738 = vsel %vm72, %v1733, %v1737
  %v1739 = vshrl.u32 %v1588, 16
  %v1741 = vrot.slane %v1739, 4
  %v1742 = vor.u32 %v1741, %v1737
  %v1743 = vrot.slane %v1742, 4
  %v1745 = vshrl.u32 %v1589, 16
  %v1747 = vrot.slane %v1745, 4
  %v1748 = vshll.u32 %v1589, 16
  %v1750 = vrot.slane %v1748, 5
  %v1751 = vor.u32 %v1747, %v1750
  %v1752 = vrot.slane %v1751, 4
  %v1754 = vshll.u32 %v1590, 16
  %v1756 = vrot.slane %v1754, 5
  %v1757 = vsel %vm72, %v1752, %v1756
  %v1758 = vshrl.u32 %v1590, 16
  %v1760 = vrot.slane %v1758, 4
  %v1761 = vor.u32 %v1760, %v1756
  %v1762 = vrot.slane %v1761, 4
  %v1764 = vshrl.u32 %v1591, 16
  %v1766 = vrot.slane %v1764, 4
  %v1767 = vshll.u32 %v1591, 16
  %v1769 = vrot.slane %v1767, 5
  %v1770 = vor.u32 %v1766, %v1769
  %v1771 = vrot.slane %v1770, 4
  %v1773 = vshll.u32 %v1592, 16
  %v1775 = vrot.slane %v1773, 5
  %v1776 = vsel %vm72, %v1771, %v1775
  %v1777 = vshrl.u32 %v1592, 16
  %v1779 = vrot.slane %v1777, 4
  %v1780 = vor.u32 %v1779, %v1775
  %v1781 = vrot.slane %v1780, 4
  %v1783 = vshrl.u32 %v1593, 16
  %v1785 = vrot.slane %v1783, 4
  %v1786 = vshll.u32 %v1593, 16
  %v1788 = vrot.slane %v1786, 5
  %v1789 = vor.u32 %v1785, %v1788
  %v1790 = vrot.slane %v1789, 4
  %v1792 = vshll.u32 %v1594, 16
  %v1794 = vrot.slane %v1792, 5
  %v1795 = vsel %vm72, %v1790, %v1794
  %v1796 = vshrl.u32 %v1594, 16
  %v1798 = vrot.slane %v1796, 4
  %v1799 = vor.u32 %v1798, %v1794
  %v1800 = vrot.slane %v1799, 4
  %v1802 = vshrl.u32 %v1595, 16
  %v1804 = vrot.slane %v1802, 4
  %v1805 = vshll.u32 %v1595, 16
  %v1807 = vrot.slane %v1805, 5
  %v1808 = vor.u32 %v1804, %v1807
  %v1809 = vrot.slane %v1808, 4
  %v1811 = vshll.u32 %v1596, 16
  %v1813 = vrot.slane %v1811, 5
  %v1814 = vsel %vm72, %v1809, %v1813
  %v1815 = vshrl.u32 %v1596, 16
  %v1817 = vrot.slane %v1815, 4
  %v1818 = vor.u32 %v1817, %v1813
  %v1819 = vrot.slane %v1818, 4
  %v1821 = vshrl.u32 %v1597, 16
  %v1823 = vrot.slane %v1821, 4
  %v1824 = vshll.u32 %v1597, 16
  %v1826 = vrot.slane %v1824, 5
  %v1827 = vor.u32 %v1823, %v1826
  %v1828 = vrot.slane %v1827, 4
  %v1830 = vshll.u32 %v1598, 16
  %v1832 = vrot.slane %v1830, 5
  %v1833 = vsel %vm72, %v1828, %v1832
  %v1834 = vshrl.u32 %v1598, 16
  %v1836 = vrot.slane %v1834, 4
  %v1837 = vor.u32 %v1836, %v1832
  %v1838 = vrot.slane %v1837, 4
  %v1840 = vshrl.u32 %v1599, 16
  %v1842 = vrot.slane %v1840, 4
  %v1843 = vshll.u32 %v1599, 16
  %v1845 = vrot.slane %v1843, 5
  %v1846 = vor.u32 %v1842, %v1845
  %v1847 = vrot.slane %v1846, 4
  %v1849 = vshll.u32 %v1600, 16
  %v1851 = vrot.slane %v1849, 5
  %v1852 = vsel %vm72, %v1847, %v1851
  %v1853 = vshrl.u32 %v1600, 16
  %v1855 = vrot.slane %v1853, 4
  %v1856 = vor.u32 %v1855, %v1851
  %v1857 = vrot.slane %v1856, 4
  %v1859 = vshrl.u32 %v1601, 16
  %v1861 = vrot.slane %v1859, 4
  %v1862 = vshll.u32 %v1601, 16
  %v1864 = vrot.slane %v1862, 5
  %v1865 = vor.u32 %v1861, %v1864
  %v1866 = vrot.slane %v1865, 4
  %v1868 = vshll.u32 %v1602, 16
  %v1870 = vrot.slane %v1868, 5
  %v1871 = vsel %vm72, %v1866, %v1870
  %v1872 = vshrl.u32 %v1602, 16
  %v1874 = vrot.slane %v1872, 4
  %v1875 = vor.u32 %v1874, %v1870
  %v1876 = vrot.slane %v1875, 4
  %v1878 = vshrl.u32 %v1603, 16
  %v1880 = vrot.slane %v1878, 4
  %v1881 = vshll.u32 %v1603, 16
  %v1883 = vrot.slane %v1881, 5
  %v1884 = vor.u32 %v1880, %v1883
  %v1885 = vrot.slane %v1884, 4
  %v1887 = vshll.u32 %v1604, 16
  %v1889 = vrot.slane %v1887, 5
  %v1890 = vsel %vm72, %v1885, %v1889
  %v1891 = vshrl.u32 %v1604, 16
  %v1893 = vrot.slane %v1891, 4
  %v1894 = vor.u32 %v1893, %v1889
  %v1895 = vrot.slane %v1894, 4
  %v1897 = vshrl.u32 %v1605, 16
  %v1899 = vrot.slane %v1897, 4
  %v1900 = vshll.u32 %v1605, 16
  %v1902 = vrot.slane %v1900, 5
  %v1903 = vor.u32 %v1899, %v1902
  %v1904 = vrot.slane %v1903, 4
  %v1906 = vshll.u32 %v1606, 16
  %v1908 = vrot.slane %v1906, 5
  %v1909 = vsel %vm72, %v1904, %v1908
  %v1910 = vshrl.u32 %v1606, 16
  %v1912 = vrot.slane %v1910, 4
  %v1913 = vor.u32 %v1912, %v1908
  %v1914 = vrot.slane %v1913, 4
  %v1916 = vshrl.u32 %v1607, 16
  %v1918 = vrot.slane %v1916, 4
  %v1919 = vshll.u32 %v1607, 16
  %v1921 = vrot.slane %v1919, 5
  %v1922 = vor.u32 %v1918, %v1921
  %v1923 = vrot.slane %v1922, 4
  %v1925 = vshll.u32 %v1608, 16
  %v1927 = vrot.slane %v1925, 5
  %v1928 = vsel %vm72, %v1923, %v1927
  %v1929 = vshrl.u32 %v1608, 16
  %v1931 = vrot.slane %v1929, 4
  %v1932 = vor.u32 %v1931, %v1927
  %v1933 = vrot.slane %v1932, 4
  %v1935 = vshrl.u32 %v1609, 16
  %v1937 = vrot.slane %v1935, 4
  %v1938 = vshll.u32 %v1609, 16
  %v1940 = vrot.slane %v1938, 5
  %v1941 = vor.u32 %v1937, %v1940
  %v1942 = vrot.slane %v1941, 4
  %v1944 = vshll.u32 %v1610, 16
  %v1946 = vrot.slane %v1944, 5
  %v1947 = vsel %vm72, %v1942, %v1946
  %v1948 = vshrl.u32 %v1610, 16
  %v1950 = vrot.slane %v1948, 4
  %v1951 = vor.u32 %v1950, %v1946
  %v1952 = vrot.slane %v1951, 4
  %v1954 = vshrl.u32 %v1611, 16
  %v1956 = vrot.slane %v1954, 4
  %v1957 = vshll.u32 %v1611, 16
  %v1959 = vrot.slane %v1957, 5
  %v1960 = vor.u32 %v1956, %v1959
  %v1961 = vrot.slane %v1960, 4
  %v1963 = vshll.u32 %v1612, 16
  %v1965 = vrot.slane %v1963, 5
  %v1966 = vsel %vm72, %v1961, %v1965
  %v1967 = vshrl.u32 %v1612, 16
  %v1969 = vrot.slane %v1967, 4
  %v1970 = vor.u32 %v1969, %v1965
  %v1971 = vrot.slane %v1970, 4
  %v1973 = vshrl.u32 %v1613, 16
  %v1975 = vrot.slane %v1973, 4
  %v1976 = vshll.u32 %v1613, 16
  %v1978 = vrot.slane %v1976, 5
  %v1979 = vor.u32 %v1975, %v1978
  %v1980 = vrot.slane %v1979, 4
  %v1982 = vshll.u32 %v1614, 16
  %v1984 = vrot.slane %v1982, 5
  %v1985 = vsel %vm72, %v1980, %v1984
  %v1986 = vshrl.u32 %v1614, 16
  %v1988 = vrot.slane %v1986, 4
  %v1989 = vor.u32 %v1988, %v1984
  %v1990 = vrot.slane %v1989, 4
  %v1992 = vshrl.u32 %v1615, 16
  %v1994 = vrot.slane %v1992, 4
  %v1995 = vshll.u32 %v1615, 16
  %v1997 = vrot.slane %v1995, 5
  %v1998 = vor.u32 %v1994, %v1997
  %v1999 = vrot.slane %v1998, 4
  %v2001 = vshll.u32 %v1616, 16
  %v2003 = vrot.slane %v2001, 5
  %v2004 = vsel %vm72, %v1999, %v2003
  %v2005 = vshrl.u32 %v1616, 16
  %v2007 = vrot.slane %v2005, 4
  %v2008 = vor.u32 %v2007, %v2003
  %v2009 = vrot.slane %v2008, 4
  %v2011 = vshrl.u32 %v1617, 16
  %v2013 = vrot.slane %v2011, 4
  %v2014 = vshll.u32 %v1617, 16
  %v2016 = vrot.slane %v2014, 5
  %v2017 = vor.u32 %v2013, %v2016
  %v2018 = vrot.slane %v2017, 4
  %v2020 = vshll.u32 %v1618, 16
  %v2022 = vrot.slane %v2020, 5
  %v2023 = vsel %vm72, %v2018, %v2022
  %v2024 = vshrl.u32 %v1618, 16
  %v2026 = vrot.slane %v2024, 4
  %v2027 = vor.u32 %v2026, %v2022
  %v2028 = vrot.slane %v2027, 4
  %v2030 = vshrl.u32 %v1619, 16
  %v2032 = vrot.slane %v2030, 4
  %v2033 = vshll.u32 %v1619, 16
  %v2035 = vrot.slane %v2033, 5
  %v2036 = vor.u32 %v2032, %v2035
  %v2037 = vrot.slane %v2036, 4
  %v2039 = vshll.u32 %v1620, 16
  %v2041 = vrot.slane %v2039, 5
  %v2042 = vsel %vm72, %v2037, %v2041
  %v2043 = vshrl.u32 %v1620, 16
  %v2045 = vrot.slane %v2043, 4
  %v2046 = vor.u32 %v2045, %v2041
  %v2047 = vrot.slane %v2046, 4
  %v2049 = vshrl.u32 %v1621, 16
  %v2051 = vrot.slane %v2049, 4
  %v2052 = vshll.u32 %v1621, 16
  %v2054 = vrot.slane %v2052, 5
  %v2055 = vor.u32 %v2051, %v2054
  %v2056 = vrot.slane %v2055, 4
  %v2058 = vshll.u32 %v1622, 16
  %v2060 = vrot.slane %v2058, 5
  %v2061 = vsel %vm72, %v2056, %v2060
  %v2062 = vshrl.u32 %v1622, 16
  %v2064 = vrot.slane %v2062, 4
  %v2065 = vor.u32 %v2064, %v2060
  %v2066 = vrot.slane %v2065, 4
  %v2068 = vshrl.u32 %v1623, 16
  %v2070 = vrot.slane %v2068, 4
  %v2071 = vshll.u32 %v1623, 16
  %v2073 = vrot.slane %v2071, 5
  %v2074 = vor.u32 %v2070, %v2073
  %v2075 = vrot.slane %v2074, 4
  %v2077 = vshll.u32 %v1624, 16
  %v2079 = vrot.slane %v2077, 5
  %v2080 = vsel %vm72, %v2075, %v2079
  %v2081 = vshrl.u32 %v1624, 16
  %v2083 = vrot.slane %v2081, 4
  %v2084 = vor.u32 %v2083, %v2079
  %v2085 = vrot.slane %v2084, 4
  %v2087 = vshrl.u32 %v1625, 16
  %v2089 = vrot.slane %v2087, 4
  %v2090 = vshll.u32 %v1625, 16
  %v2092 = vrot.slane %v2090, 5
  %v2093 = vor.u32 %v2089, %v2092
  %v2094 = vrot.slane %v2093, 4
  %v2096 = vshll.u32 %v1626, 16
  %v2098 = vrot.slane %v2096, 5
  %v2099 = vsel %vm72, %v2094, %v2098
  %v2100 = vshrl.u32 %v1626, 16
  %v2102 = vrot.slane %v2100, 4
  %v2103 = vor.u32 %v2102, %v2098
  %v2104 = vrot.slane %v2103, 4
  %v2106 = vshrl.u32 %v1627, 16
  %v2108 = vrot.slane %v2106, 4
  %v2109 = vshll.u32 %v1627, 16
  %v2111 = vrot.slane %v2109, 5
  %v2112 = vor.u32 %v2108, %v2111
  %v2113 = vrot.slane %v2112, 4
  %v2115 = vshll.u32 %v1628, 16
  %v2117 = vrot.slane %v2115, 5
  %v2118 = vsel %vm72, %v2113, %v2117
  %v2119 = vshrl.u32 %v1628, 16
  %v2121 = vrot.slane %v2119, 4
  %v2122 = vor.u32 %v2121, %v2117
  %v2123 = vrot.slane %v2122, 4
  %v2125 = vshrl.u32 %v1629, 16
  %v2127 = vrot.slane %v2125, 4
  %v2128 = vshll.u32 %v1629, 16
  %v2130 = vrot.slane %v2128, 5
  %v2131 = vor.u32 %v2127, %v2130
  %v2132 = vrot.slane %v2131, 4
  %v2134 = vshll.u32 %v1630, 16
  %v2136 = vrot.slane %v2134, 5
  %v2137 = vsel %vm72, %v2132, %v2136
  %v2138 = vshrl.u32 %v1630, 16
  %v2140 = vrot.slane %v2138, 4
  %v2141 = vor.u32 %v2140, %v2136
  %v2142 = vrot.slane %v2141, 4
  %v2144 = vshrl.u32 %v1631, 16
  %v2146 = vrot.slane %v2144, 4
  %v2147 = vshll.u32 %v1631, 16
  %v2149 = vrot.slane %v2147, 5
  %v2150 = vor.u32 %v2146, %v2149
  %v2151 = vrot.slane %v2150, 4
  %v2153 = vshll.u32 %v1632, 16
  %v2155 = vrot.slane %v2153, 5
  %v2156 = vsel %vm72, %v2151, %v2155
  %v2157 = vshrl.u32 %v1632, 16
  %v2159 = vrot.slane %v2157, 4
  %v2160 = vor.u32 %v2159, %v2155
  %v2161 = vrot.slane %v2160, 4
  %v2163 = vshrl.u32 %v1633, 16
  %v2165 = vrot.slane %v2163, 4
  %v2166 = vshll.u32 %v1633, 16
  %v2168 = vrot.slane %v2166, 5
  %v2169 = vor.u32 %v2165, %v2168
  %v2170 = vrot.slane %v2169, 4
  %v2172 = vshll.u32 %v1634, 16
  %v2174 = vrot.slane %v2172, 5
  %v2175 = vsel %vm72, %v2170, %v2174
  %v2176 = vshrl.u32 %v1634, 16
  %v2178 = vrot.slane %v2176, 4
  %v2179 = vor.u32 %v2178, %v2174
  %v2180 = vrot.slane %v2179, 4
  %v2233 = vmax.bf16 %v1635, %v1700
  %v2234 = vmax.bf16 %v1636, %v1705
  %v2235 = vmax.bf16 %v1637, %v1719
  %v2236 = vmax.bf16 %v1638, %v1724
  %v2237 = vmax.bf16 %v1639, %v1738
  %v2238 = vmax.bf16 %v1640, %v1743
  %v2239 = vmax.bf16 %v1641, %v1757
  %v2240 = vmax.bf16 %v1642, %v1762
  %v2241 = vmax.bf16 %v1643, %v1776
  %v2242 = vmax.bf16 %v1644, %v1781
  %v2243 = vmax.bf16 %v1645, %v1795
  %v2244 = vmax.bf16 %v1646, %v1800
  %v2245 = vmax.bf16 %v1647, %v1814
  %v2246 = vmax.bf16 %v1648, %v1819
  %v2247 = vmax.bf16 %v1649, %v1833
  %v2248 = vmax.bf16 %v1650, %v1838
  %v2249 = vmax.bf16 %v1651, %v1852
  %v2250 = vmax.bf16 %v1652, %v1857
  %v2251 = vmax.bf16 %v1653, %v1871
  %v2252 = vmax.bf16 %v1654, %v1876
  %v2253 = vmax.bf16 %v1655, %v1890
  %v2254 = vmax.bf16 %v1656, %v1895
  %v2255 = vmax.bf16 %v1657, %v1909
  %v2256 = vmax.bf16 %v1658, %v1914
  %v2257 = vmax.bf16 %v1659, %v1928
  %v2258 = vmax.bf16 %v1660, %v1933
  %v2259 = vmax.bf16 %v1661, %v1947
  %v2260 = vmax.bf16 %v1662, %v1952
  %v2261 = vmax.bf16 %v1663, %v1966
  %v2262 = vmax.bf16 %v1664, %v1971
  %v2263 = vmax.bf16 %v1665, %v1985
  %v2264 = vmax.bf16 %v1666, %v1990
  %v2265 = vmax.bf16 %v1667, %v2004
  %v2266 = vmax.bf16 %v1668, %v2009
  %v2267 = vmax.bf16 %v1669, %v2023
  %v2268 = vmax.bf16 %v1670, %v2028
  %v2269 = vmax.bf16 %v1671, %v2042
  %v2270 = vmax.bf16 %v1672, %v2047
  %v2271 = vmax.bf16 %v1673, %v2061
  %v2272 = vmax.bf16 %v1674, %v2066
  %v2273 = vmax.bf16 %v1675, %v2080
  %v2274 = vmax.bf16 %v1676, %v2085
  %v2275 = vmax.bf16 %v1677, %v2099
  %v2276 = vmax.bf16 %v1678, %v2104
  %v2277 = vmax.bf16 %v1679, %v2118
  %v2278 = vmax.bf16 %v1680, %v2123
  %v2279 = vmax.bf16 %v1681, %v2137
  %v2280 = vmax.bf16 %v1682, %v2142
  %v2281 = vmax.bf16 %v1683, %v2156
  %v2282 = vmax.bf16 %v1684, %v2161
  %v2283 = vmax.bf16 %v1685, %v2175
  %v2284 = vmax.bf16 %v1686, %v2180
  %v2285 = vld [vmem:[%s3] sm:$0xf]
  %v2286 = vld [vmem:[%s3 + $0x4] sm:$0x7]
  %v2287 = vld [vmem:[%s3 + $0x8] sm:$0xf]
  %v2288 = vld [vmem:[%s3 + $0xc] sm:$0x7]
  %v2289 = vld [vmem:[%s3 + $0x10] sm:$0xf]
  %v2290 = vld [vmem:[%s3 + $0x14] sm:$0x7]
  %v2291 = vld [vmem:[%s3 + $0x18] sm:$0xf]
  %v2292 = vld [vmem:[%s3 + $0x1c] sm:$0x7]
  %v2293 = vld [vmem:[%s3 + $0x20] sm:$0xf]
  %v2294 = vld [vmem:[%s3 + $0x24] sm:$0x7]
  %v2295 = vld [vmem:[%s3 + $0x28] sm:$0xf]
  %v2296 = vld [vmem:[%s3 + $0x2c] sm:$0x7]
  %v2297 = vld [vmem:[%s3 + $0x30] sm:$0xf]
  %v2298 = vld [vmem:[%s3 + $0x34] sm:$0x7]
  %v2299 = vld [vmem:[%s3 + $0x38] sm:$0xf]
  %v2300 = vld [vmem:[%s3 + $0x3c] sm:$0x7]
  %v2301 = vld [vmem:[%s3 + $0x40] sm:$0xf]
  %v2302 = vld [vmem:[%s3 + $0x44] sm:$0x7]
  %v2303 = vld [vmem:[%s3 + $0x48] sm:$0xf]
  %v2304 = vld [vmem:[%s3 + $0x4c] sm:$0x7]
  %v2305 = vld [vmem:[%s3 + $0x50] sm:$0xf]
  %v2306 = vld [vmem:[%s3 + $0x54] sm:$0x7]
  %v2307 = vld [vmem:[%s3 + $0x58] sm:$0xf]
  %v2308 = vld [vmem:[%s3 + $0x5c] sm:$0x7]
  %v2309 = vld [vmem:[%s3 + $0x60] sm:$0xf]
  %v2310 = vld [vmem:[%s3 + $0x64] sm:$0x7]
  %v2311 = vld [vmem:[%s3 + $0x68] sm:$0xf]
  %v2312 = vld [vmem:[%s3 + $0x6c] sm:$0x7]
  %v2313 = vld [vmem:[%s3 + $0x70] sm:$0xf]
  %v2314 = vld [vmem:[%s3 + $0x74] sm:$0x7]
  %v2315 = vld [vmem:[%s3 + $0x78] sm:$0xf]
  %v2316 = vld [vmem:[%s3 + $0x7c] sm:$0x7]
  %v2317 = vld [vmem:[%s3 + $0x80] sm:$0xf]
  %v2318 = vld [vmem:[%s3 + $0x84] sm:$0x7]
  %v2319 = vld [vmem:[%s3 + $0x88] sm:$0xf]
  %v2320 = vld [vmem:[%s3 + $0x8c] sm:$0x7]
  %v2321 = vld [vmem:[%s3 + $0x90] sm:$0xf]
  %v2322 = vld [vmem:[%s3 + $0x94] sm:$0x7]
  %v2323 = vld [vmem:[%s3 + $0x98] sm:$0xf]
  %v2324 = vld [vmem:[%s3 + $0x9c] sm:$0x7]
  %v2325 = vld [vmem:[%s3 + $0xa0] sm:$0xf]
  %v2326 = vld [vmem:[%s3 + $0xa4] sm:$0x7]
  %v2327 = vld [vmem:[%s3 + $0xa8] sm:$0xf]
  %v2328 = vld [vmem:[%s3 + $0xac] sm:$0x7]
  %v2329 = vld [vmem:[%s3 + $0xb0] sm:$0xf]
  %v2330 = vld [vmem:[%s3 + $0xb4] sm:$0x7]
  %v2331 = vld [vmem:[%s3 + $0xb8] sm:$0xf]
  %v2332 = vld [vmem:[%s3 + $0xbc] sm:$0x7]
  %v2333 = vld [vmem:[%s3 + $0xc0] sm:$0xf]
  %v2334 = vld [vmem:[%s3 + $0xc4] sm:$0x7]
  %v2335 = vld [vmem:[%s3 + $0xc8] sm:$0xf]
  %v2336 = vld [vmem:[%s3 + $0xcc] sm:$0x7]
  %v2337 = vmax.bf16 %v2233, %v2285
  %v2338 = vmax.bf16 %v2234, %v2286
  %v2339 = vmax.bf16 %v2235, %v2287
  %v2340 = vmax.bf16 %v2236, %v2288
  %v2341 = vmax.bf16 %v2237, %v2289
  %v2342 = vmax.bf16 %v2238, %v2290
  %v2343 = vmax.bf16 %v2239, %v2291
  %v2344 = vmax.bf16 %v2240, %v2292
  %v2345 = vmax.bf16 %v2241, %v2293
  %v2346 = vmax.bf16 %v2242, %v2294
  %v2347 = vmax.bf16 %v2243, %v2295
  %v2348 = vmax.bf16 %v2244, %v2296
  %v2349 = vmax.bf16 %v2245, %v2297
  %v2350 = vmax.bf16 %v2246, %v2298
  %v2351 = vmax.bf16 %v2247, %v2299
  %v2352 = vmax.bf16 %v2248, %v2300
  %v2353 = vmax.bf16 %v2249, %v2301
  %v2354 = vmax.bf16 %v2250, %v2302
  %v2355 = vmax.bf16 %v2251, %v2303
  %v2356 = vmax.bf16 %v2252, %v2304
  %v2357 = vmax.bf16 %v2253, %v2305
  %v2358 = vmax.bf16 %v2254, %v2306
  %v2359 = vmax.bf16 %v2255, %v2307
  %v2360 = vmax.bf16 %v2256, %v2308
  %v2361 = vmax.bf16 %v2257, %v2309
  %v2362 = vmax.bf16 %v2258, %v2310
  %v2363 = vmax.bf16 %v2259, %v2311
  %v2364 = vmax.bf16 %v2260, %v2312
  %v2365 = vmax.bf16 %v2261, %v2313
  %v2366 = vmax.bf16 %v2262, %v2314
  %v2367 = vmax.bf16 %v2263, %v2315
  %v2368 = vmax.bf16 %v2264, %v2316
  %v2369 = vmax.bf16 %v2265, %v2317
  %v2370 = vmax.bf16 %v2266, %v2318
  %v2371 = vmax.bf16 %v2267, %v2319
  %v2372 = vmax.bf16 %v2268, %v2320
  %v2373 = vmax.bf16 %v2269, %v2321
  %v2374 = vmax.bf16 %v2270, %v2322
  %v2375 = vmax.bf16 %v2271, %v2323
  %v2376 = vmax.bf16 %v2272, %v2324
  %v2377 = vmax.bf16 %v2273, %v2325
  %v2378 = vmax.bf16 %v2274, %v2326
  %v2379 = vmax.bf16 %v2275, %v2327
  %v2380 = vmax.bf16 %v2276, %v2328
  %v2381 = vmax.bf16 %v2277, %v2329
  %v2382 = vmax.bf16 %v2278, %v2330
  %v2383 = vmax.bf16 %v2279, %v2331
  %v2384 = vmax.bf16 %v2280, %v2332
  %v2385 = vmax.bf16 %v2281, %v2333
  %v2386 = vmax.bf16 %v2282, %v2334
  %v2387 = vmax.bf16 %v2283, %v2335
  %v2388 = vmax.bf16 %v2284, %v2336
  %v2389 = vmax.bf16 %v2337, 0
  %v2390 = vmax.bf16 %v2338, 0
  %v2391 = vmax.bf16 %v2339, 0
  %v2392 = vmax.bf16 %v2340, 0
  %v2393 = vmax.bf16 %v2341, 0
  %v2394 = vmax.bf16 %v2342, 0
  %v2395 = vmax.bf16 %v2343, 0
  %v2396 = vmax.bf16 %v2344, 0
  %v2397 = vmax.bf16 %v2345, 0
  %v2398 = vmax.bf16 %v2346, 0
  %v2399 = vmax.bf16 %v2347, 0
  %v2400 = vmax.bf16 %v2348, 0
  %v2401 = vmax.bf16 %v2349, 0
  %v2402 = vmax.bf16 %v2350, 0
  %v2403 = vmax.bf16 %v2351, 0
  %v2404 = vmax.bf16 %v2352, 0
  %v2405 = vmax.bf16 %v2353, 0
  %v2406 = vmax.bf16 %v2354, 0
  %v2407 = vmax.bf16 %v2355, 0
  %v2408 = vmax.bf16 %v2356, 0
  %v2409 = vmax.bf16 %v2357, 0
  %v2410 = vmax.bf16 %v2358, 0
  %v2411 = vmax.bf16 %v2359, 0
  %v2412 = vmax.bf16 %v2360, 0
  %v2413 = vmax.bf16 %v2361, 0
  %v2414 = vmax.bf16 %v2362, 0
  %v2415 = vmax.bf16 %v2363, 0
  %v2416 = vmax.bf16 %v2364, 0
  %v2417 = vmax.bf16 %v2365, 0
  %v2418 = vmax.bf16 %v2366, 0
  %v2419 = vmax.bf16 %v2367, 0
  %v2420 = vmax.bf16 %v2368, 0
  %v2421 = vmax.bf16 %v2369, 0
  %v2422 = vmax.bf16 %v2370, 0
  %v2423 = vmax.bf16 %v2371, 0
  %v2424 = vmax.bf16 %v2372, 0
  %v2425 = vmax.bf16 %v2373, 0
  %v2426 = vmax.bf16 %v2374, 0
  %v2427 = vmax.bf16 %v2375, 0
  %v2428 = vmax.bf16 %v2376, 0
  %v2429 = vmax.bf16 %v2377, 0
  %v2430 = vmax.bf16 %v2378, 0
  %v2431 = vmax.bf16 %v2379, 0
  %v2432 = vmax.bf16 %v2380, 0
  %v2433 = vmax.bf16 %v2381, 0
  %v2434 = vmax.bf16 %v2382, 0
  %v2435 = vmax.bf16 %v2383, 0
  %v2436 = vmax.bf16 %v2384, 0
  %v2437 = vmax.bf16 %v2385, 0
  %v2438 = vmax.bf16 %v2386, 0
  %v2439 = vmax.bf16 %v2387, 0
  %v2440 = vmax.bf16 %v2388, 0
  %2441 = vst [vmem:[%s4] sm:$0xf] %v2389
  %vm2442 = vcmask 1042432
  %vm2443 = vsmask.f32 2304
  %vm2444 = vmand %vm2442, %vm2443
  %v2445 = vld [vmem:[%s4 + $0x4] sm:$0x7]
  %v2446 = vsel %vm2444, %v2390, %v2445
  %2447 = vst [vmem:[%s4 + $0x4] sm:$0x7] %v2446
  %2448 = vst [vmem:[%s4 + $0x8] sm:$0xf] %v2391
  %v2449 = vld [vmem:[%s4 + $0xc] sm:$0x7]
  %v2450 = vsel %vm2444, %v2392, %v2449
  %2451 = vst [vmem:[%s4 + $0xc] sm:$0x7] %v2450
  %2452 = vst [vmem:[%s4 + $0x10] sm:$0xf] %v2393
  %v2453 = vld [vmem:[%s4 + $0x14] sm:$0x7]
  %v2454 = vsel %vm2444, %v2394, %v2453
  %2455 = vst [vmem:[%s4 + $0x14] sm:$0x7] %v2454
  %2456 = vst [vmem:[%s4 + $0x18] sm:$0xf] %v2395
  %v2457 = vld [vmem:[%s4 + $0x1c] sm:$0x7]
  %v2458 = vsel %vm2444, %v2396, %v2457
  %2459 = vst [vmem:[%s4 + $0x1c] sm:$0x7] %v2458
  %2460 = vst [vmem:[%s4 + $0x20] sm:$0xf] %v2397
  %v2461 = vld [vmem:[%s4 + $0x24] sm:$0x7]
  %v2462 = vsel %vm2444, %v2398, %v2461
  %2463 = vst [vmem:[%s4 + $0x24] sm:$0x7] %v2462
  %2464 = vst [vmem:[%s4 + $0x28] sm:$0xf] %v2399
  %v2465 = vld [vmem:[%s4 + $0x2c] sm:$0x7]
  %v2466 = vsel %vm2444, %v2400, %v2465
  %2467 = vst [vmem:[%s4 + $0x2c] sm:$0x7] %v2466
  %2468 = vst [vmem:[%s4 + $0x30] sm:$0xf] %v2401
  %v2469 = vld [vmem:[%s4 + $0x34] sm:$0x7]
  %v2470 = vsel %vm2444, %v2402, %v2469
  %2471 = vst [vmem:[%s4 + $0x34] sm:$0x7] %v2470
  %2472 = vst [vmem:[%s4 + $0x38] sm:$0xf] %v2403
  %v2473 = vld [vmem:[%s4 + $0x3c] sm:$0x7]
  %v2474 = vsel %vm2444, %v2404, %v2473
  %2475 = vst [vmem:[%s4 + $0x3c] sm:$0x7] %v2474
  %2476 = vst [vmem:[%s4 + $0x40] sm:$0xf] %v2405
  %v2477 = vld [vmem:[%s4 + $0x44] sm:$0x7]
  %v2478 = vsel %vm2444, %v2406, %v2477
  %2479 = vst [vmem:[%s4 + $0x44] sm:$0x7] %v2478
  %2480 = vst [vmem:[%s4 + $0x48] sm:$0xf] %v2407
  %v2481 = vld [vmem:[%s4 + $0x4c] sm:$0x7]
  %v2482 = vsel %vm2444, %v2408, %v2481
  %2483 = vst [vmem:[%s4 + $0x4c] sm:$0x7] %v2482
  %2484 = vst [vmem:[%s4 + $0x50] sm:$0xf] %v2409
  %v2485 = vld [vmem:[%s4 + $0x54] sm:$0x7]
  %v2486 = vsel %vm2444, %v2410, %v2485
  %2487 = vst [vmem:[%s4 + $0x54] sm:$0x7] %v2486
  %2488 = vst [vmem:[%s4 + $0x58] sm:$0xf] %v2411
  %v2489 = vld [vmem:[%s4 + $0x5c] sm:$0x7]
  %v2490 = vsel %vm2444, %v2412, %v2489
  %2491 = vst [vmem:[%s4 + $0x5c] sm:$0x7] %v2490
  %2492 = vst [vmem:[%s4 + $0x60] sm:$0xf] %v2413
  %v2493 = vld [vmem:[%s4 + $0x64] sm:$0x7]
  %v2494 = vsel %vm2444, %v2414, %v2493
  %2495 = vst [vmem:[%s4 + $0x64] sm:$0x7] %v2494
  %2496 = vst [vmem:[%s4 + $0x68] sm:$0xf] %v2415
  %v2497 = vld [vmem:[%s4 + $0x6c] sm:$0x7]
  %v2498 = vsel %vm2444, %v2416, %v2497
  %2499 = vst [vmem:[%s4 + $0x6c] sm:$0x7] %v2498
  %2500 = vst [vmem:[%s4 + $0x70] sm:$0xf] %v2417
  %v2501 = vld [vmem:[%s4 + $0x74] sm:$0x7]
  %v2502 = vsel %vm2444, %v2418, %v2501
  %2503 = vst [vmem:[%s4 + $0x74] sm:$0x7] %v2502
  %2504 = vst [vmem:[%s4 + $0x78] sm:$0xf] %v2419
  %v2505 = vld [vmem:[%s4 + $0x7c] sm:$0x7]
  %v2506 = vsel %vm2444, %v2420, %v2505
  %2507 = vst [vmem:[%s4 + $0x7c] sm:$0x7] %v2506
  %2508 = vst [vmem:[%s4 + $0x80] sm:$0xf] %v2421
  %v2509 = vld [vmem:[%s4 + $0x84] sm:$0x7]
  %v2510 = vsel %vm2444, %v2422, %v2509
  %2511 = vst [vmem:[%s4 + $0x84] sm:$0x7] %v2510
  %2512 = vst [vmem:[%s4 + $0x88] sm:$0xf] %v2423
  %v2513 = vld [vmem:[%s4 + $0x8c] sm:$0x7]
  %v2514 = vsel %vm2444, %v2424, %v2513
  %2515 = vst [vmem:[%s4 + $0x8c] sm:$0x7] %v2514
  %2516 = vst [vmem:[%s4 + $0x90] sm:$0xf] %v2425
  %v2517 = vld [vmem:[%s4 + $0x94] sm:$0x7]
  %v2518 = vsel %vm2444, %v2426, %v2517
  %2519 = vst [vmem:[%s4 + $0x94] sm:$0x7] %v2518
  %2520 = vst [vmem:[%s4 + $0x98] sm:$0xf] %v2427
  %v2521 = vld [vmem:[%s4 + $0x9c] sm:$0x7]
  %v2522 = vsel %vm2444, %v2428, %v2521
  %2523 = vst [vmem:[%s4 + $0x9c] sm:$0x7] %v2522
  %2524 = vst [vmem:[%s4 + $0xa0] sm:$0xf] %v2429
  %v2525 = vld [vmem:[%s4 + $0xa4] sm:$0x7]
  %v2526 = vsel %vm2444, %v2430, %v2525
  %2527 = vst [vmem:[%s4 + $0xa4] sm:$0x7] %v2526
  %2528 = vst [vmem:[%s4 + $0xa8] sm:$0xf] %v2431
  %v2529 = vld [vmem:[%s4 + $0xac] sm:$0x7]
  %v2530 = vsel %vm2444, %v2432, %v2529
  %2531 = vst [vmem:[%s4 + $0xac] sm:$0x7] %v2530
  %2532 = vst [vmem:[%s4 + $0xb0] sm:$0xf] %v2433
  %v2533 = vld [vmem:[%s4 + $0xb4] sm:$0x7]
  %v2534 = vsel %vm2444, %v2434, %v2533
  %2535 = vst [vmem:[%s4 + $0xb4] sm:$0x7] %v2534
  %2536 = vst [vmem:[%s4 + $0xb8] sm:$0xf] %v2435
  %v2537 = vld [vmem:[%s4 + $0xbc] sm:$0x7]
  %v2538 = vsel %vm2444, %v2436, %v2537
  %2539 = vst [vmem:[%s4 + $0xbc] sm:$0x7] %v2538
  %2540 = vst [vmem:[%s4 + $0xc0] sm:$0xf] %v2437
  %v2541 = vld [vmem:[%s4 + $0xc4] sm:$0x7]
  %v2542 = vsel %vm2444, %v2438, %v2541
  %2543 = vst [vmem:[%s4 + $0xc4] sm:$0x7] %v2542
  %2544 = vst [vmem:[%s4 + $0xc8] sm:$0xf] %v2439
  %v2545 = vld [vmem:[%s4 + $0xcc] sm:$0x7]
  %v2546 = vsel %vm2444, %v2440, %v2545
  %2547 = vst [vmem:[%s4 + $0xcc] sm:$0x7] %v2546
  // Predicated region
  $region18: #{alexnet_p1_forward.6} parent=0 // pred_check
    _
  $region19: #{alexnet_p1_forward.6} parent=0 // pred_check_branch
    %2549 = sbr.rel (0) target = $region21
  $region20: #{alexnet_p1_forward.6} parent=0 // pred_region
    _
  $region21: #{alexnet_p1_forward.6} parent=0 // pred_fallthru
    _
  // Predicated region
  $region22: #{alexnet_p1_forward.6} parent=0 // pred_check
    _
  $region23: #{alexnet_p1_forward.6} parent=0 // pred_check_branch
    %2551 = sbr.rel (0) target = $region25
  $region24: #{alexnet_p1_forward.6} parent=0 // pred_region
    _
  $region25: #{alexnet_p1_forward.6} parent=0 // pred_fallthru
    _

// kernel: alexnet_p1_forward.7
$region0: #{alexnet_p1_forward.7}
  #allocation0 [shape = 'u32[]', space=smem, size = 0x4, offset = 0x4, fixed_abs, tag = 'smem constant byte address 0x4 - core index']
  #allocation1 [shape = 'u32[144,128]{1,0:T(1,128)}', space=vmem, size = 0x12000, scoped, tag = 'internal scratch']
  %s0 = inlined_call_operand.vmem [shape: bf16[162,640], index: 0, kind: input, shape index: {}]
  %s1 = inlined_call_operand.vmem [shape: bf16[640,128], index: 1, kind: input, shape index: {}]
  %s2 = inlined_call_operand.vmem [shape: f32[2,128], index: 2, kind: input, shape index: {}]
  %s3 = inlined_call_operand.vmem [shape: bf16[162,128], index: 3, kind: output, shape index: {}]
  %s4 = sld [smem:[#allocation0]]
  $region22: #{alexnet_p1_forward.7} parent=0
    _
  %s6 = ssub.s32 1, %s4
  %s7 = scalar_select 0, %s6, %s4
  // Predicated region
  $region2: #{alexnet_p1_forward.7} parent=0 // pred_check
    _
  $region3: #{alexnet_p1_forward.7} parent=0 // pred_check_branch
    %9 = sbr.rel (0) target = $region5
  $region4: #{alexnet_p1_forward.7} parent=0 // pred_region
    _
  $region5: #{alexnet_p1_forward.7} parent=0 // pred_fallthru
    _
  // Predicated region
  $region6: #{alexnet_p1_forward.7} parent=0 // pred_check
    _
  $region7: #{alexnet_p1_forward.7} parent=0 // pred_check_branch
    %11 = sbr.rel (0) target = $region9
  $region8: #{alexnet_p1_forward.7} parent=0 // pred_region
    _
  $region9: #{alexnet_p1_forward.7} parent=0 // pred_fallthru
    _
  // Predicated region
  $region10: #{alexnet_p1_forward.7} parent=0 // pred_check
    _
  $region11: #{alexnet_p1_forward.7} parent=0 // pred_check_branch
    %13 = sbr.rel (0) target = $region13
  $region12: #{alexnet_p1_forward.7} parent=0 // pred_region
    _
  $region13: #{alexnet_p1_forward.7} parent=0 // pred_fallthru
    _
  %v15 = vld [vmem:[%s0] sm:$0xff]
  %v16 = vld [vmem:[%s0 + $0x8] sm:$0xff]
  %v17 = vld [vmem:[%s0 + $0x10] sm:$0xf]
  %v18 = vld [vmem:[%s0 + $0x14] sm:$0xff]
  %v19 = vld [vmem:[%s0 + $0x1c] sm:$0xff]
  %v20 = vld [vmem:[%s0 + $0x24] sm:$0xf]
  %v21 = vld [vmem:[%s0 + $0x28] sm:$0xff]
  %v22 = vld [vmem:[%s0 + $0x30] sm:$0xff]
  %v23 = vld [vmem:[%s0 + $0x38] sm:$0xf]
  %v24 = vld [vmem:[%s0 + $0x3c] sm:$0xff]
  %v25 = vld [vmem:[%s0 + $0x44] sm:$0xff]
  %v26 = vld [vmem:[%s0 + $0x4c] sm:$0xf]
  %v27 = vld [vmem:[%s0 + $0x50] sm:$0xff]
  %v28 = vld [vmem:[%s0 + $0x58] sm:$0xff]
  %v29 = vld [vmem:[%s0 + $0x60] sm:$0xf]
  %v30 = vld [vmem:[%s0 + $0x64] sm:$0xff]
  %v31 = vld [vmem:[%s0 + $0x6c] sm:$0xff]
  %v32 = vld [vmem:[%s0 + $0x74] sm:$0xf]
  %v33 = vld [vmem:[%s0 + $0x78] sm:$0xff]
  %v34 = vld [vmem:[%s0 + $0x80] sm:$0xff]
  %v35 = vld [vmem:[%s0 + $0x88] sm:$0xf]
  %v36 = vld [vmem:[%s0 + $0x8c] sm:$0xff]
  %v37 = vld [vmem:[%s0 + $0x94] sm:$0xff]
  %v38 = vld [vmem:[%s0 + $0x9c] sm:$0xf]
  %v39 = vld [vmem:[%s0 + $0xa0] sm:$0xff]
  %v40 = vld [vmem:[%s0 + $0xa8] sm:$0xff]
  %v41 = vld [vmem:[%s0 + $0xb0] sm:$0xf]
  %v42 = vld [vmem:[%s0 + $0xb4] sm:$0xff]
  %v43 = vld [vmem:[%s0 + $0xbc] sm:$0xff]
  %v44 = vld [vmem:[%s0 + $0xc4] sm:$0xf]
  %v45 = vld [vmem:[%s0 + $0xc8] sm:$0xff]
  %v46 = vld [vmem:[%s0 + $0xd0] sm:$0xff]
  %v47 = vld [vmem:[%s0 + $0xd8] sm:$0xf]
  %v48 = vld [vmem:[%s0 + $0xdc] sm:$0xff]
  %v49 = vld [vmem:[%s0 + $0xe4] sm:$0xff]
  %v50 = vld [vmem:[%s0 + $0xec] sm:$0xf]
  %v51 = vld [vmem:[%s0 + $0xf0] sm:$0xff]
  %v52 = vld [vmem:[%s0 + $0xf8] sm:$0xff]
  %v53 = vld [vmem:[%s0 + $0x100] sm:$0xf]
  %v54 = vld [vmem:[%s0 + $0x104] sm:$0xff]
  %v55 = vld [vmem:[%s0 + $0x10c] sm:$0xff]
  %v56 = vld [vmem:[%s0 + $0x114] sm:$0xf]
  %v57 = vld [vmem:[%s0 + $0x118] sm:$0xff]
  %v58 = vld [vmem:[%s0 + $0x120] sm:$0xff]
  %v59 = vld [vmem:[%s0 + $0x128] sm:$0xf]
  %v60 = vld [vmem:[%s0 + $0x12c] sm:$0xff]
  %v61 = vld [vmem:[%s0 + $0x134] sm:$0xff]
  %v62 = vld [vmem:[%s0 + $0x13c] sm:$0xf]
  %v63 = vld [vmem:[%s0 + $0x140] sm:$0xff]
  %v64 = vld [vmem:[%s0 + $0x148] sm:$0xff]
  %v65 = vld [vmem:[%s0 + $0x150] sm:$0xf]
  %v66 = vld [vmem:[%s0 + $0x154] sm:$0xff]
  %v67 = vld [vmem:[%s0 + $0x15c] sm:$0xff]
  %v68 = vld [vmem:[%s0 + $0x164] sm:$0xf]
  %v69 = vld [vmem:[%s0 + $0x168] sm:$0xff]
  %v70 = vld [vmem:[%s0 + $0x170] sm:$0xff]
  %v71 = vld [vmem:[%s0 + $0x178] sm:$0xf]
  %v72 = vld [vmem:[%s0 + $0x17c] sm:$0xff]
  %v73 = vld [vmem:[%s0 + $0x184] sm:$0xff]
  %v74 = vld [vmem:[%s0 + $0x18c] sm:$0xf]
  %v75 = vld [vmem:[%s0 + $0x190] sm:$0x11]
  %v76 = vld [vmem:[%s0 + $0x198] sm:$0x11]
  %v77 = vld [vmem:[%s0 + $0x1a0] sm:$0x1]
  %v78 = vld [vmem:[%s1] sm:$0xf]
  %v79 = vld [vmem:[%s1 + $0x4] sm:$0xf]
  %v80 = vld [vmem:[%s1 + $0x8] sm:$0xf]
  %v81 = vld [vmem:[%s1 + $0xc] sm:$0xf]
  %v82 = vld [vmem:[%s1 + $0x10] sm:$0xf]
  %v83 = vld [vmem:[%s1 + $0x14] sm:$0xf]
  %v84 = vld [vmem:[%s1 + $0x18] sm:$0xf]
  %v85 = vld [vmem:[%s1 + $0x1c] sm:$0xf]
  %v86 = vld [vmem:[%s1 + $0x20] sm:$0xf]
  %v87 = vld [vmem:[%s1 + $0x24] sm:$0xf]
  %v88 = vld [vmem:[%s1 + $0x28] sm:$0xf]
  %v89 = vld [vmem:[%s1 + $0x2c] sm:$0xf]
  %v90 = vld [vmem:[%s1 + $0x30] sm:$0xf]
  %v91 = vld [vmem:[%s1 + $0x34] sm:$0xf]
  %v92 = vld [vmem:[%s1 + $0x38] sm:$0xf]
  %v93 = vld [vmem:[%s1 + $0x3c] sm:$0xf]
  %v94 = vld [vmem:[%s1 + $0x40] sm:$0xf]
  %v95 = vld [vmem:[%s1 + $0x44] sm:$0xf]
  %v96 = vld [vmem:[%s1 + $0x48] sm:$0xf]
  %v97 = vld [vmem:[%s1 + $0x4c] sm:$0xf]
  %v98 = vld [vmem:[%s1 + $0x50] sm:$0xf]
  %v99 = vld [vmem:[%s1 + $0x54] sm:$0xf]
  %v100 = vld [vmem:[%s1 + $0x58] sm:$0xf]
  %v101 = vld [vmem:[%s1 + $0x5c] sm:$0xf]
  %v102 = vld [vmem:[%s1 + $0x60] sm:$0xf]
  %v103 = vld [vmem:[%s1 + $0x64] sm:$0xf]
  %v104 = vld [vmem:[%s1 + $0x68] sm:$0xf]
  %v105 = vld [vmem:[%s1 + $0x6c] sm:$0xf]
  %v106 = vld [vmem:[%s1 + $0x70] sm:$0xf]
  %v107 = vld [vmem:[%s1 + $0x74] sm:$0xf]
  %v108 = vld [vmem:[%s1 + $0x78] sm:$0xf]
  %v109 = vld [vmem:[%s1 + $0x7c] sm:$0xf]
  %v110 = vld [vmem:[%s1 + $0x80] sm:$0xf]
  %v111 = vld [vmem:[%s1 + $0x84] sm:$0xf]
  %v112 = vld [vmem:[%s1 + $0x88] sm:$0xf]
  %v113 = vld [vmem:[%s1 + $0x8c] sm:$0xf]
  %v114 = vld [vmem:[%s1 + $0x90] sm:$0xf]
  %v115 = vld [vmem:[%s1 + $0x94] sm:$0xf]
  %v116 = vld [vmem:[%s1 + $0x98] sm:$0xf]
  %v117 = vld [vmem:[%s1 + $0x9c] sm:$0xf]
  %v118 = vld [vmem:[%s1 + $0xa0] sm:$0xf]
  %v119 = vld [vmem:[%s1 + $0xa4] sm:$0xf]
  %v120 = vld [vmem:[%s1 + $0xa8] sm:$0xf]
  %v121 = vld [vmem:[%s1 + $0xac] sm:$0xf]
  %v122 = vld [vmem:[%s1 + $0xb0] sm:$0xf]
  %v123 = vld [vmem:[%s1 + $0xb4] sm:$0xf]
  %v124 = vld [vmem:[%s1 + $0xb8] sm:$0xf]
  %v125 = vld [vmem:[%s1 + $0xbc] sm:$0xf]
  %v126 = vld [vmem:[%s1 + $0xc0] sm:$0xf]
  %v127 = vld [vmem:[%s1 + $0xc4] sm:$0xf]
  %v128 = vld [vmem:[%s1 + $0xc8] sm:$0xf]
  %v129 = vld [vmem:[%s1 + $0xcc] sm:$0xf]
  %v130 = vld [vmem:[%s1 + $0xd0] sm:$0xf]
  %v131 = vld [vmem:[%s1 + $0xd4] sm:$0xf]
  %v132 = vld [vmem:[%s1 + $0xd8] sm:$0xf]
  %v133 = vld [vmem:[%s1 + $0xdc] sm:$0xf]
  %v134 = vld [vmem:[%s1 + $0xe0] sm:$0xf]
  %v135 = vld [vmem:[%s1 + $0xe4] sm:$0xf]
  %v136 = vld [vmem:[%s1 + $0xe8] sm:$0xf]
  %v137 = vld [vmem:[%s1 + $0xec] sm:$0xf]
  %v138 = vld [vmem:[%s1 + $0xf0] sm:$0xf]
  %v139 = vld [vmem:[%s1 + $0xf4] sm:$0xf]
  %v140 = vld [vmem:[%s1 + $0xf8] sm:$0xf]
  %v141 = vld [vmem:[%s1 + $0xfc] sm:$0xf]
  %v142 = vld [vmem:[%s1 + $0x100] sm:$0xf]
  %v143 = vld [vmem:[%s1 + $0x104] sm:$0xf]
  %v144 = vld [vmem:[%s1 + $0x108] sm:$0xf]
  %v145 = vld [vmem:[%s1 + $0x10c] sm:$0xf]
  %v146 = vld [vmem:[%s1 + $0x110] sm:$0xf]
  %v147 = vld [vmem:[%s1 + $0x114] sm:$0xf]
  %v148 = vld [vmem:[%s1 + $0x118] sm:$0xf]
  %v149 = vld [vmem:[%s1 + $0x11c] sm:$0xf]
  %v150 = vld [vmem:[%s1 + $0x120] sm:$0xf]
  %v151 = vld [vmem:[%s1 + $0x124] sm:$0xf]
  %v152 = vld [vmem:[%s1 + $0x128] sm:$0xf]
  %v153 = vld [vmem:[%s1 + $0x12c] sm:$0xf]
  %v154 = vld [vmem:[%s1 + $0x130] sm:$0xf]
  %v155 = vld [vmem:[%s1 + $0x134] sm:$0xf]
  %v156 = vld [vmem:[%s1 + $0x138] sm:$0xf]
  %v157 = vld [vmem:[%s1 + $0x13c] sm:$0xf]
  %v221 = vunpack.c.l.b16 %v15
  %v222 = vunpack.c.h.b16 %v15
  %v223 = vunpack.c.l.b16 %v16
  %v224 = vunpack.c.h.b16 %v16
  %v225 = vunpack.c.l.b16 %v17
  %v226 = vunpack.c.l.b16 %v18
  %v227 = vunpack.c.h.b16 %v18
  %v228 = vunpack.c.l.b16 %v19
  %v229 = vunpack.c.h.b16 %v19
  %v230 = vunpack.c.l.b16 %v20
  %v231 = vunpack.c.l.b16 %v21
  %v232 = vunpack.c.h.b16 %v21
  %v233 = vunpack.c.l.b16 %v22
  %v234 = vunpack.c.h.b16 %v22
  %v235 = vunpack.c.l.b16 %v23
  %v236 = vunpack.c.l.b16 %v24
  %v237 = vunpack.c.h.b16 %v24
  %v238 = vunpack.c.l.b16 %v25
  %v239 = vunpack.c.h.b16 %v25
  %v240 = vunpack.c.l.b16 %v26
  %v241 = vunpack.c.l.b16 %v27
  %v242 = vunpack.c.h.b16 %v27
  %v243 = vunpack.c.l.b16 %v28
  %v244 = vunpack.c.h.b16 %v28
  %v245 = vunpack.c.l.b16 %v29
  %v246 = vunpack.c.l.b16 %v30
  %v247 = vunpack.c.h.b16 %v30
  %v248 = vunpack.c.l.b16 %v31
  %v249 = vunpack.c.h.b16 %v31
  %v250 = vunpack.c.l.b16 %v32
  %v251 = vunpack.c.l.b16 %v33
  %v252 = vunpack.c.h.b16 %v33
  %v253 = vunpack.c.l.b16 %v34
  %v254 = vunpack.c.h.b16 %v34
  %v255 = vunpack.c.l.b16 %v35
  %v256 = vunpack.c.l.b16 %v36
  %v257 = vunpack.c.h.b16 %v36
  %v258 = vunpack.c.l.b16 %v37
  %v259 = vunpack.c.h.b16 %v37
  %v260 = vunpack.c.l.b16 %v38
  %v261 = vunpack.c.l.b16 %v39
  %v262 = vunpack.c.h.b16 %v39
  %v263 = vunpack.c.l.b16 %v40
  %v264 = vunpack.c.h.b16 %v40
  %v265 = vunpack.c.l.b16 %v41
  %v266 = vunpack.c.l.b16 %v42
  %v267 = vunpack.c.h.b16 %v42
  %v268 = vunpack.c.l.b16 %v43
  %v269 = vunpack.c.h.b16 %v43
  %v270 = vunpack.c.l.b16 %v44
  %v271 = vunpack.c.l.b16 %v45
  %v272 = vunpack.c.h.b16 %v45
  %v273 = vunpack.c.l.b16 %v46
  %v274 = vunpack.c.h.b16 %v46
  %v275 = vunpack.c.l.b16 %v47
  %v276 = vunpack.c.l.b16 %v48
  %v277 = vunpack.c.h.b16 %v48
  %v278 = vunpack.c.l.b16 %v49
  %v279 = vunpack.c.h.b16 %v49
  %v280 = vunpack.c.l.b16 %v50
  %v281 = vunpack.c.l.b16 %v51
  %v282 = vunpack.c.h.b16 %v51
  %v283 = vunpack.c.l.b16 %v52
  %v284 = vunpack.c.h.b16 %v52
  %v285 = vunpack.c.l.b16 %v53
  %v286 = vunpack.c.l.b16 %v54
  %v287 = vunpack.c.h.b16 %v54
  %v288 = vunpack.c.l.b16 %v55
  %v289 = vunpack.c.h.b16 %v55
  %v290 = vunpack.c.l.b16 %v56
  %v291 = vunpack.c.l.b16 %v57
  %v292 = vunpack.c.h.b16 %v57
  %v293 = vunpack.c.l.b16 %v58
  %v294 = vunpack.c.h.b16 %v58
  %v295 = vunpack.c.l.b16 %v59
  %v296 = vunpack.c.l.b16 %v60
  %v297 = vunpack.c.h.b16 %v60
  %v298 = vunpack.c.l.b16 %v61
  %v299 = vunpack.c.h.b16 %v61
  %v300 = vunpack.c.l.b16 %v62
  %v301 = vunpack.c.l.b16 %v63
  %v302 = vunpack.c.h.b16 %v63
  %v303 = vunpack.c.l.b16 %v64
  %v304 = vunpack.c.h.b16 %v64
  %v305 = vunpack.c.l.b16 %v65
  %v306 = vunpack.c.l.b16 %v66
  %v307 = vunpack.c.h.b16 %v66
  %v308 = vunpack.c.l.b16 %v67
  %v309 = vunpack.c.h.b16 %v67
  %v310 = vunpack.c.l.b16 %v68
  %v311 = vunpack.c.l.b16 %v69
  %v312 = vunpack.c.h.b16 %v69
  %v313 = vunpack.c.l.b16 %v70
  %v314 = vunpack.c.h.b16 %v70
  %v315 = vunpack.c.l.b16 %v71
  %v316 = vunpack.c.l.b16 %v72
  %v317 = vunpack.c.h.b16 %v72
  %v318 = vunpack.c.l.b16 %v73
  %v319 = vunpack.c.h.b16 %v73
  %v320 = vunpack.c.l.b16 %v74
  %v321 = vunpack.c.l.b16 %v75
  %v322 = vunpack.c.h.b16 %v75
  %v323 = vunpack.c.l.b16 %v76
  %v324 = vunpack.c.h.b16 %v76
  %v325 = vunpack.c.l.b16 %v77
  %v326 = vpack.c.b16 %v226, %v221
  %v327 = vpack.c.b16 %v227, %v222
  %v328 = vpack.c.b16 %v228, %v223
  %v329 = vpack.c.b16 %v229, %v224
  %v330 = vpack.c.b16 %v230, %v225
  %v331 = vpack.c.b16 %v236, %v231
  %v332 = vpack.c.b16 %v237, %v232
  %v333 = vpack.c.b16 %v238, %v233
  %v334 = vpack.c.b16 %v239, %v234
  %v335 = vpack.c.b16 %v240, %v235
  %v336 = vpack.c.b16 %v246, %v241
  %v337 = vpack.c.b16 %v247, %v242
  %v338 = vpack.c.b16 %v248, %v243
  %v339 = vpack.c.b16 %v249, %v244
  %v340 = vpack.c.b16 %v250, %v245
  %v341 = vpack.c.b16 %v256, %v251
  %v342 = vpack.c.b16 %v257, %v252
  %v343 = vpack.c.b16 %v258, %v253
  %v344 = vpack.c.b16 %v259, %v254
  %v345 = vpack.c.b16 %v260, %v255
  %v346 = vpack.c.b16 %v266, %v261
  %v347 = vpack.c.b16 %v267, %v262
  %v348 = vpack.c.b16 %v268, %v263
  %v349 = vpack.c.b16 %v269, %v264
  %v350 = vpack.c.b16 %v270, %v265
  %v351 = vpack.c.b16 %v276, %v271
  %v352 = vpack.c.b16 %v277, %v272
  %v353 = vpack.c.b16 %v278, %v273
  %v354 = vpack.c.b16 %v279, %v274
  %v355 = vpack.c.b16 %v280, %v275
  %v356 = vpack.c.b16 %v286, %v281
  %v357 = vpack.c.b16 %v287, %v282
  %v358 = vpack.c.b16 %v288, %v283
  %v359 = vpack.c.b16 %v289, %v284
  %v360 = vpack.c.b16 %v290, %v285
  %v361 = vpack.c.b16 %v296, %v291
  %v362 = vpack.c.b16 %v297, %v292
  %v363 = vpack.c.b16 %v298, %v293
  %v364 = vpack.c.b16 %v299, %v294
  %v365 = vpack.c.b16 %v300, %v295
  %v366 = vpack.c.b16 %v306, %v301
  %v367 = vpack.c.b16 %v307, %v302
  %v368 = vpack.c.b16 %v308, %v303
  %v369 = vpack.c.b16 %v309, %v304
  %v370 = vpack.c.b16 %v310, %v305
  %v371 = vpack.c.b16 %v316, %v311
  %v372 = vpack.c.b16 %v317, %v312
  %v373 = vpack.c.b16 %v318, %v313
  %v374 = vpack.c.b16 %v319, %v314
  %v375 = vpack.c.b16 %v320, %v315
  %v376 = vpack.c.b16 %v321, %v321
  %v377 = vpack.c.b16 %v322, %v322
  %v378 = vpack.c.b16 %v323, %v323
  %v379 = vpack.c.b16 %v324, %v324
  %v380 = vpack.c.b16 %v325, %v325
  %v516 = vunpack.c.l.b16 %v78
  %v517 = vunpack.c.l.b16 %v79
  %v518 = vunpack.c.l.b16 %v80
  %v519 = vunpack.c.l.b16 %v81
  %v520 = vunpack.c.l.b16 %v82
  %v521 = vunpack.c.l.b16 %v83
  %v522 = vunpack.c.l.b16 %v84
  %v523 = vunpack.c.l.b16 %v85
  %v524 = vunpack.c.l.b16 %v86
  %v525 = vunpack.c.l.b16 %v87
  %v526 = vunpack.c.l.b16 %v88
  %v527 = vunpack.c.l.b16 %v89
  %v528 = vunpack.c.l.b16 %v90
  %v529 = vunpack.c.l.b16 %v91
  %v530 = vunpack.c.l.b16 %v92
  %v531 = vunpack.c.l.b16 %v93
  %v532 = vunpack.c.l.b16 %v94
  %v533 = vunpack.c.l.b16 %v95
  %v534 = vunpack.c.l.b16 %v96
  %v535 = vunpack.c.l.b16 %v97
  %v536 = vunpack.c.l.b16 %v98
  %v537 = vunpack.c.l.b16 %v99
  %v538 = vunpack.c.l.b16 %v100
  %v539 = vunpack.c.l.b16 %v101
  %v540 = vunpack.c.l.b16 %v102
  %v541 = vunpack.c.l.b16 %v103
  %v542 = vunpack.c.l.b16 %v104
  %v543 = vunpack.c.l.b16 %v105
  %v544 = vunpack.c.l.b16 %v106
  %v545 = vunpack.c.l.b16 %v107
  %v546 = vunpack.c.l.b16 %v108
  %v547 = vunpack.c.l.b16 %v109
  %v548 = vunpack.c.l.b16 %v110
  %v549 = vunpack.c.l.b16 %v111
  %v550 = vunpack.c.l.b16 %v112
  %v551 = vunpack.c.l.b16 %v113
  %v552 = vunpack.c.l.b16 %v114
  %v553 = vunpack.c.l.b16 %v115
  %v554 = vunpack.c.l.b16 %v116
  %v555 = vunpack.c.l.b16 %v117
  %v556 = vunpack.c.l.b16 %v118
  %v557 = vunpack.c.l.b16 %v119
  %v558 = vunpack.c.l.b16 %v120
  %v559 = vunpack.c.l.b16 %v121
  %v560 = vunpack.c.l.b16 %v122
  %v561 = vunpack.c.l.b16 %v123
  %v562 = vunpack.c.l.b16 %v124
  %v563 = vunpack.c.l.b16 %v125
  %v564 = vunpack.c.l.b16 %v126
  %v565 = vunpack.c.l.b16 %v127
  %v566 = vunpack.c.l.b16 %v128
  %v567 = vunpack.c.l.b16 %v129
  %v568 = vunpack.c.l.b16 %v130
  %v569 = vunpack.c.l.b16 %v131
  %v570 = vunpack.c.l.b16 %v132
  %v571 = vunpack.c.l.b16 %v133
  %v572 = vunpack.c.l.b16 %v134
  %v573 = vunpack.c.l.b16 %v135
  %v574 = vunpack.c.l.b16 %v136
  %v575 = vunpack.c.l.b16 %v137
  %v576 = vunpack.c.l.b16 %v138
  %v577 = vunpack.c.l.b16 %v139
  %v578 = vunpack.c.l.b16 %v140
  %v579 = vunpack.c.l.b16 %v141
  %v580 = vunpack.c.l.b16 %v142
  %v581 = vunpack.c.l.b16 %v143
  %v582 = vunpack.c.l.b16 %v144
  %v583 = vunpack.c.l.b16 %v145
  %v584 = vunpack.c.l.b16 %v146
  %v585 = vunpack.c.l.b16 %v147
  %v586 = vunpack.c.l.b16 %v148
  %v587 = vunpack.c.l.b16 %v149
  %v588 = vunpack.c.l.b16 %v150
  %v589 = vunpack.c.l.b16 %v151
  %v590 = vunpack.c.l.b16 %v152
  %v591 = vunpack.c.l.b16 %v153
  %v592 = vunpack.c.l.b16 %v154
  %v593 = vunpack.c.l.b16 %v155
  %v594 = vunpack.c.l.b16 %v156
  %v595 = vunpack.c.l.b16 %v157
  %v596 = vpack.c.b16 %v517, %v516
  %v597 = vpack.c.b16 %v519, %v518
  %v598 = vpack.c.b16 %v521, %v520
  %v599 = vpack.c.b16 %v523, %v522
  %v600 = vpack.c.b16 %v525, %v524
  %v601 = vpack.c.b16 %v527, %v526
  %v602 = vpack.c.b16 %v529, %v528
  %v603 = vpack.c.b16 %v531, %v530
  %v604 = vpack.c.b16 %v533, %v532
  %v605 = vpack.c.b16 %v535, %v534
  %v606 = vpack.c.b16 %v537, %v536
  %v607 = vpack.c.b16 %v539, %v538
  %v608 = vpack.c.b16 %v541, %v540
  %v609 = vpack.c.b16 %v543, %v542
  %v610 = vpack.c.b16 %v545, %v544
  %v611 = vpack.c.b16 %v547, %v546
  %v612 = vpack.c.b16 %v549, %v548
  %v613 = vpack.c.b16 %v551, %v550
  %v614 = vpack.c.b16 %v553, %v552
  %v615 = vpack.c.b16 %v555, %v554
  %v616 = vpack.c.b16 %v557, %v556
  %v617 = vpack.c.b16 %v559, %v558
  %v618 = vpack.c.b16 %v561, %v560
  %v619 = vpack.c.b16 %v563, %v562
  %v620 = vpack.c.b16 %v565, %v564
  %v621 = vpack.c.b16 %v567, %v566
  %v622 = vpack.c.b16 %v569, %v568
  %v623 = vpack.c.b16 %v571, %v570
  %v624 = vpack.c.b16 %v573, %v572
  %v625 = vpack.c.b16 %v575, %v574
  %v626 = vpack.c.b16 %v577, %v576
  %v627 = vpack.c.b16 %v579, %v578
  %v628 = vpack.c.b16 %v581, %v580
  %v629 = vpack.c.b16 %v583, %v582
  %v630 = vpack.c.b16 %v585, %v584
  %v631 = vpack.c.b16 %v587, %v586
  %v632 = vpack.c.b16 %v589, %v588
  %v633 = vpack.c.b16 %v591, %v590
  %v634 = vpack.c.b16 %v593, %v592
  %v635 = vpack.c.b16 %v595, %v594
  %676 = vmatprep.subr.bf16.mxu0 0
  %677 = vmatpush1.bf16.msra.mxu0 %v596
  %678 = vmatprep.subr.bf16.mxu0 0
  %679 = vmatpush1.bf16.msra.mxu0 %v597
  %680 = vmatprep.subr.bf16.mxu0 0
  %681 = vmatpush1.bf16.msra.mxu0 %v598
  %682 = vmatprep.subr.bf16.mxu0 0
  %683 = vmatpush1.bf16.msra.mxu0 %v599
  %684 = vmatprep.subr.bf16.mxu0 0
  %685 = vmatpush1.bf16.msra.mxu0 %v600
  %686 = vmatprep.subr.bf16.mxu0 0
  %687 = vmatpush1.bf16.msra.mxu0 %v601
  %688 = vmatprep.subr.bf16.mxu0 0
  %689 = vmatpush1.bf16.msra.mxu0 %v602
  %690 = vmatprep.subr.bf16.mxu0 0
  %691 = vmatpush1.bf16.msra.mxu0 %v603
  %692 = vmatprep.subr.bf16.mxu0 0
  %693 = vmatpush1.bf16.msra.mxu0 %v604
  %694 = vmatprep.subr.bf16.mxu0 0
  %695 = vmatpush1.bf16.msra.mxu0 %v605
  %696 = vmatprep.subr.bf16.mxu0 0
  %697 = vmatpush1.bf16.msra.mxu0 %v606
  %698 = vmatprep.subr.bf16.mxu0 0
  %699 = vmatpush1.bf16.msra.mxu0 %v607
  %700 = vmatprep.subr.bf16.mxu0 0
  %701 = vmatpush1.bf16.msra.mxu0 %v608
  %702 = vmatprep.subr.bf16.mxu0 0
  %703 = vmatpush1.bf16.msra.mxu0 %v609
  %704 = vmatprep.subr.bf16.mxu0 0
  %705 = vmatpush1.bf16.msra.mxu0 %v610
  %706 = vmatprep.subr.bf16.mxu0 0
  %707 = vmatpush1.bf16.msra.mxu0 %v611
  %708 = vmatprep.mubr.bf16.mxu0 %v327
  %709 = vmatmul.mubr.bf16.gmra.mrb[0].mxu0 %v326
  %v710 = vpop.f32.mrb[0].mxu0
  %v711 = vadd.f32 0.0, %v710
  %v712 = vpop.f32.mrb[0].mxu0
  %v713 = vpop.f32.mrb[0].mxu0
  %v714 = vadd.f32 0.0, %v713
  %v715 = vpop.f32.mrb[0].mxu0
  %716 = vmatprep.mubr.bf16.mxu0 %v332
  %717 = vmatmul.mubr.bf16.gmra.mrb[0].mxu0 %v331
  %v718 = vpop.f32.mrb[0].mxu0
  %v719 = vadd.f32 0.0, %v718
  %v720 = vpop.f32.mrb[0].mxu0
  %v721 = vpop.f32.mrb[0].mxu0
  %v722 = vadd.f32 0.0, %v721
  %v723 = vpop.f32.mrb[0].mxu0
  %724 = vmatprep.mubr.bf16.mxu0 %v337
  %725 = vmatmul.mubr.bf16.gmra.mrb[0].mxu0 %v336
  %v726 = vpop.f32.mrb[0].mxu0
  %v727 = vadd.f32 0.0, %v726
  %v728 = vpop.f32.mrb[0].mxu0
  %v729 = vpop.f32.mrb[0].mxu0
  %v730 = vadd.f32 0.0, %v729
  %v731 = vpop.f32.mrb[0].mxu0
  %732 = vmatprep.mubr.bf16.mxu0 %v342
  %733 = vmatmul.mubr.bf16.gmra.mrb[0].mxu0 %v341
  %v734 = vpop.f32.mrb[0].mxu0
  %v735 = vadd.f32 0.0, %v734
  %v736 = vpop.f32.mrb[0].mxu0
  %v737 = vpop.f32.mrb[0].mxu0
  %v738 = vadd.f32 0.0, %v737
  %v739 = vpop.f32.mrb[0].mxu0
  %740 = vmatprep.mubr.bf16.mxu0 %v347
  %741 = vmatmul.mubr.bf16.gmra.mrb[0].mxu0 %v346
  %v742 = vpop.f32.mrb[0].mxu0
  %v743 = vadd.f32 0.0, %v742
  %v744 = vpop.f32.mrb[0].mxu0
  %v745 = vpop.f32.mrb[0].mxu0
  %v746 = vadd.f32 0.0, %v745
  %v747 = vpop.f32.mrb[0].mxu0
  %748 = vmatprep.mubr.bf16.mxu0 %v352
  %749 = vmatmul.mubr.bf16.gmra.mrb[0].mxu0 %v351
  %v750 = vpop.f32.mrb[0].mxu0
  %v751 = vadd.f32 0.0, %v750
  %v752 = vpop.f32.mrb[0].mxu0
  %v753 = vpop.f32.mrb[0].mxu0
  %v754 = vadd.f32 0.0, %v753
  %v755 = vpop.f32.mrb[0].mxu0
  %756 = vmatprep.mubr.bf16.mxu0 %v357
  %757 = vmatmul.mubr.bf16.gmra.mrb[0].mxu0 %v356
  %v758 = vpop.f32.mrb[0].mxu0
  %v759 = vadd.f32 0.0, %v758
  %v760 = vpop.f32.mrb[0].mxu0
  %v761 = vpop.f32.mrb[0].mxu0
  %v762 = vadd.f32 0.0, %v761
  %v763 = vpop.f32.mrb[0].mxu0
  %764 = vmatprep.mubr.bf16.mxu0 %v362
  %765 = vmatmul.mubr.bf16.gmra.mrb[0].mxu0 %v361
  %v766 = vpop.f32.mrb[0].mxu0
  %v767 = vadd.f32 0.0, %v766
  %v768 = vpop.f32.mrb[0].mxu0
  %v769 = vpop.f32.mrb[0].mxu0
  %v770 = vadd.f32 0.0, %v769
  %v771 = vpop.f32.mrb[0].mxu0
  %772 = vmatprep.mubr.bf16.mxu0 %v367
  %773 = vmatmul.mubr.bf16.gmra.mrb[0].mxu0 %v366
  %v774 = vpop.f32.mrb[0].mxu0
  %v775 = vadd.f32 0.0, %v774
  %v776 = vpop.f32.mrb[0].mxu0
  %v777 = vpop.f32.mrb[0].mxu0
  %v778 = vadd.f32 0.0, %v777
  %v779 = vpop.f32.mrb[0].mxu0
  %780 = vmatprep.mubr.bf16.mxu0 %v372
  %781 = vmatmul.mubr.bf16.gmra.mrb[0].mxu0 %v371
  %v782 = vpop.f32.mrb[0].mxu0
  %v783 = vadd.f32 0.0, %v782
  %v784 = vpop.f32.mrb[0].mxu0
  %v785 = vpop.f32.mrb[0].mxu0
  %v786 = vadd.f32 0.0, %v785
  %v787 = vpop.f32.mrb[0].mxu0
  %788 = vmatprep.mubr.bf16.mxu0 %v377
  %789 = vmatmul.mubr.bf16.gmra.mrb[0].mxu0 %v376
  %v790 = vpop.f32.mrb[0].mxu0
  %v791 = vadd.f32 0.0, %v790
  %v792 = vpop.f32.mrb[0].mxu0
  %v793 = vpop.f32.mrb[0].mxu0
  %v794 = vpop.f32.mrb[0].mxu0
  %795 = vdwg.mxu0
  %796 = vmatprep.subr.bf16.mxu0 0
  %797 = vmatpush1.bf16.msra.mxu0 %v612
  %798 = vmatprep.subr.bf16.mxu0 0
  %799 = vmatpush1.bf16.msra.mxu0 %v613
  %800 = vmatprep.subr.bf16.mxu0 0
  %801 = vmatpush1.bf16.msra.mxu0 %v614
  %802 = vmatprep.subr.bf16.mxu0 0
  %803 = vmatpush1.bf16.msra.mxu0 %v615
  %804 = vmatprep.subr.bf16.mxu0 0
  %805 = vmatpush1.bf16.msra.mxu0 %v616
  %806 = vmatprep.subr.bf16.mxu0 0
  %807 = vmatpush1.bf16.msra.mxu0 %v617
  %808 = vmatprep.subr.bf16.mxu0 0
  %809 = vmatpush1.bf16.msra.mxu0 %v618
  %810 = vmatprep.subr.bf16.mxu0 0
  %811 = vmatpush1.bf16.msra.mxu0 %v619
  %812 = vmatprep.subr.bf16.mxu0 0
  %813 = vmatpush1.bf16.msra.mxu0 %v620
  %814 = vmatprep.subr.bf16.mxu0 0
  %815 = vmatpush1.bf16.msra.mxu0 %v621
  %816 = vmatprep.subr.bf16.mxu0 0
  %817 = vmatpush1.bf16.msra.mxu0 %v622
  %818 = vmatprep.subr.bf16.mxu0 0
  %819 = vmatpush1.bf16.msra.mxu0 %v623
  %820 = vmatprep.subr.bf16.mxu0 0
  %821 = vmatpush1.bf16.msra.mxu0 %v624
  %822 = vmatprep.subr.bf16.mxu0 0
  %823 = vmatpush1.bf16.msra.mxu0 %v625
  %824 = vmatprep.subr.bf16.mxu0 0
  %825 = vmatpush1.bf16.msra.mxu0 %v626
  %826 = vmatprep.subr.bf16.mxu0 0
  %827 = vmatpush1.bf16.msra.mxu0 %v627
  %828 = vmatprep.mubr.bf16.mxu0 %v329
  %829 = vmatmul.mubr.bf16.gmra.mrb[0].mxu0 %v328
  %v830 = vpop.f32.mrb[0].mxu0
  %v831 = vadd.f32 %v711, %v830
  %v832 = vpop.f32.mrb[0].mxu0
  %v833 = vpop.f32.mrb[0].mxu0
  %v834 = vadd.f32 %v714, %v833
  %v835 = vpop.f32.mrb[0].mxu0
  %836 = vmatprep.mubr.bf16.mxu0 %v334
  %837 = vmatmul.mubr.bf16.gmra.mrb[0].mxu0 %v333
  %v838 = vpop.f32.mrb[0].mxu0
  %v839 = vadd.f32 %v719, %v838
  %v840 = vpop.f32.mrb[0].mxu0
  %v841 = vpop.f32.mrb[0].mxu0
  %v842 = vadd.f32 %v722, %v841
  %v843 = vpop.f32.mrb[0].mxu0
  %844 = vmatprep.mubr.bf16.mxu0 %v339
  %845 = vmatmul.mubr.bf16.gmra.mrb[0].mxu0 %v338
  %v846 = vpop.f32.mrb[0].mxu0
  %v847 = vadd.f32 %v727, %v846
  %v848 = vpop.f32.mrb[0].mxu0
  %v849 = vpop.f32.mrb[0].mxu0
  %v850 = vadd.f32 %v730, %v849
  %v851 = vpop.f32.mrb[0].mxu0
  %852 = vmatprep.mubr.bf16.mxu0 %v344
  %853 = vmatmul.mubr.bf16.gmra.mrb[0].mxu0 %v343
  %v854 = vpop.f32.mrb[0].mxu0
  %v855 = vadd.f32 %v735, %v854
  %v856 = vpop.f32.mrb[0].mxu0
  %v857 = vpop.f32.mrb[0].mxu0
  %v858 = vadd.f32 %v738, %v857
  %v859 = vpop.f32.mrb[0].mxu0
  %860 = vmatprep.mubr.bf16.mxu0 %v349
  %861 = vmatmul.mubr.bf16.gmra.mrb[0].mxu0 %v348
  %v862 = vpop.f32.mrb[0].mxu0
  %v863 = vadd.f32 %v743, %v862
  %v864 = vpop.f32.mrb[0].mxu0
  %v865 = vpop.f32.mrb[0].mxu0
  %v866 = vadd.f32 %v746, %v865
  %v867 = vpop.f32.mrb[0].mxu0
  %868 = vmatprep.mubr.bf16.mxu0 %v354
  %869 = vmatmul.mubr.bf16.gmra.mrb[0].mxu0 %v353
  %v870 = vpop.f32.mrb[0].mxu0
  %v871 = vadd.f32 %v751, %v870
  %v872 = vpop.f32.mrb[0].mxu0
  %v873 = vpop.f32.mrb[0].mxu0
  %v874 = vadd.f32 %v754, %v873
  %v875 = vpop.f32.mrb[0].mxu0
  %876 = vmatprep.mubr.bf16.mxu0 %v359
  %877 = vmatmul.mubr.bf16.gmra.mrb[0].mxu0 %v358
  %v878 = vpop.f32.mrb[0].mxu0
  %v879 = vadd.f32 %v759, %v878
  %v880 = vpop.f32.mrb[0].mxu0
  %v881 = vpop.f32.mrb[0].mxu0
  %v882 = vadd.f32 %v762, %v881
  %v883 = vpop.f32.mrb[0].mxu0
  %884 = vmatprep.mubr.bf16.mxu0 %v364
  %885 = vmatmul.mubr.bf16.gmra.mrb[0].mxu0 %v363
  %v886 = vpop.f32.mrb[0].mxu0
  %v887 = vadd.f32 %v767, %v886
  %v888 = vpop.f32.mrb[0].mxu0
  %v889 = vpop.f32.mrb[0].mxu0
  %v890 = vadd.f32 %v770, %v889
  %v891 = vpop.f32.mrb[0].mxu0
  %892 = vmatprep.mubr.bf16.mxu0 %v369
  %893 = vmatmul.mubr.bf16.gmra.mrb[0].mxu0 %v368
  %v894 = vpop.f32.mrb[0].mxu0
  %v895 = vadd.f32 %v775, %v894
  %v896 = vpop.f32.mrb[0].mxu0
  %v897 = vpop.f32.mrb[0].mxu0
  %v898 = vadd.f32 %v778, %v897
  %v899 = vpop.f32.mrb[0].mxu0
  %900 = vmatprep.mubr.bf16.mxu0 %v374
  %901 = vmatmul.mubr.bf16.gmra.mrb[0].mxu0 %v373
  %v902 = vpop.f32.mrb[0].mxu0
  %v903 = vadd.f32 %v783, %v902
  %v904 = vpop.f32.mrb[0].mxu0
  %v905 = vpop.f32.mrb[0].mxu0
  %v906 = vadd.f32 %v786, %v905
  %v907 = vpop.f32.mrb[0].mxu0
  %908 = vmatprep.mubr.bf16.mxu0 %v379
  %909 = vmatmul.mubr.bf16.gmra.mrb[0].mxu0 %v378
  %v910 = vpop.f32.mrb[0].mxu0
  %v911 = vadd.f32 %v791, %v910
  %v912 = vpop.f32.mrb[0].mxu0
  %v913 = vpop.f32.mrb[0].mxu0
  %v914 = vpop.f32.mrb[0].mxu0
  %915 = vdwg.mxu0
  %916 = vmatprep.subr.bf16.mxu0 0
  %917 = vmatpush1.bf16.msra.mxu0 %v628
  %918 = vmatprep.subr.bf16.mxu0 0
  %919 = vmatpush1.bf16.msra.mxu0 %v629
  %920 = vmatprep.subr.bf16.mxu0 0
  %921 = vmatpush1.bf16.msra.mxu0 %v630
  %922 = vmatprep.subr.bf16.mxu0 0
  %923 = vmatpush1.bf16.msra.mxu0 %v631
  %924 = vmatprep.subr.bf16.mxu0 0
  %925 = vmatpush1.bf16.msra.mxu0 %v632
  %926 = vmatprep.subr.bf16.mxu0 0
  %927 = vmatpush1.bf16.msra.mxu0 %v633
  %928 = vmatprep.subr.bf16.mxu0 0
  %929 = vmatpush1.bf16.msra.mxu0 %v634
  %930 = vmatprep.subr.bf16.mxu0 0
  %931 = vmatpush1.bf16.msra.mxu0 %v635
  %932 = vmatprep.subr.bf16.mxu0 0
  %933 = vmatpush1.bf16.msra.mxu0 0
  %934 = vmatprep.subr.bf16.mxu0 0
  %935 = vmatpush1.bf16.msra.mxu0 0
  %936 = vmatprep.subr.bf16.mxu0 0
  %937 = vmatpush1.bf16.msra.mxu0 0
  %938 = vmatprep.subr.bf16.mxu0 0
  %939 = vmatpush1.bf16.msra.mxu0 0
  %940 = vmatprep.subr.bf16.mxu0 0
  %941 = vmatpush1.bf16.msra.mxu0 0
  %942 = vmatprep.subr.bf16.mxu0 0
  %943 = vmatpush1.bf16.msra.mxu0 0
  %944 = vmatprep.subr.bf16.mxu0 0
  %945 = vmatpush1.bf16.msra.mxu0 0
  %946 = vmatprep.subr.bf16.mxu0 0
  %947 = vmatpush1.bf16.msra.mxu0 0
  %948 = vmatprep.mubr.bf16.mxu0 0
  %949 = vmatmul.mubr.bf16.gmra.mrb[0].mxu0 %v330
  %v950 = vpop.f32.mrb[0].mxu0
  %v951 = vadd.f32 %v831, %v950
  %v952 = vpop.f32.mrb[0].mxu0
  %v953 = vpop.f32.mrb[0].mxu0
  %v954 = vadd.f32 %v834, %v953
  %v955 = vpop.f32.mrb[0].mxu0
  %956 = vmatprep.mubr.bf16.mxu0 0
  %957 = vmatmul.mubr.bf16.gmra.mrb[0].mxu0 %v335
  %v958 = vpop.f32.mrb[0].mxu0
  %v959 = vadd.f32 %v839, %v958
  %v960 = vpop.f32.mrb[0].mxu0
  %v961 = vpop.f32.mrb[0].mxu0
  %v962 = vadd.f32 %v842, %v961
  %v963 = vpop.f32.mrb[0].mxu0
  %964 = vmatprep.mubr.bf16.mxu0 0
  %965 = vmatmul.mubr.bf16.gmra.mrb[0].mxu0 %v340
  %v966 = vpop.f32.mrb[0].mxu0
  %v967 = vadd.f32 %v847, %v966
  %v968 = vpop.f32.mrb[0].mxu0
  %v969 = vpop.f32.mrb[0].mxu0
  %v970 = vadd.f32 %v850, %v969
  %v971 = vpop.f32.mrb[0].mxu0
  %972 = vmatprep.mubr.bf16.mxu0 0
  %973 = vmatmul.mubr.bf16.gmra.mrb[0].mxu0 %v345
  %v974 = vpop.f32.mrb[0].mxu0
  %v975 = vadd.f32 %v855, %v974
  %v976 = vpop.f32.mrb[0].mxu0
  %v977 = vpop.f32.mrb[0].mxu0
  %v978 = vadd.f32 %v858, %v977
  %v979 = vpop.f32.mrb[0].mxu0
  %980 = vmatprep.mubr.bf16.mxu0 0
  %981 = vmatmul.mubr.bf16.gmra.mrb[0].mxu0 %v350
  %v982 = vpop.f32.mrb[0].mxu0
  %v983 = vadd.f32 %v863, %v982
  %v984 = vpop.f32.mrb[0].mxu0
  %v985 = vpop.f32.mrb[0].mxu0
  %v986 = vadd.f32 %v866, %v985
  %v987 = vpop.f32.mrb[0].mxu0
  %988 = vmatprep.mubr.bf16.mxu0 0
  %989 = vmatmul.mubr.bf16.gmra.mrb[0].mxu0 %v355
  %v990 = vpop.f32.mrb[0].mxu0
  %v991 = vadd.f32 %v871, %v990
  %v992 = vpop.f32.mrb[0].mxu0
  %v993 = vpop.f32.mrb[0].mxu0
  %v994 = vadd.f32 %v874, %v993
  %v995 = vpop.f32.mrb[0].mxu0
  %996 = vmatprep.mubr.bf16.mxu0 0
  %997 = vmatmul.mubr.bf16.gmra.mrb[0].mxu0 %v360
  %v998 = vpop.f32.mrb[0].mxu0
  %v999 = vadd.f32 %v879, %v998
  %v1000 = vpop.f32.mrb[0].mxu0
  %v1001 = vpop.f32.mrb[0].mxu0
  %v1002 = vadd.f32 %v882, %v1001
  %v1003 = vpop.f32.mrb[0].mxu0
  %1004 = vmatprep.mubr.bf16.mxu0 0
  %1005 = vmatmul.mubr.bf16.gmra.mrb[0].mxu0 %v365
  %v1006 = vpop.f32.mrb[0].mxu0
  %v1007 = vadd.f32 %v887, %v1006
  %v1008 = vpop.f32.mrb[0].mxu0
  %v1009 = vpop.f32.mrb[0].mxu0
  %v1010 = vadd.f32 %v890, %v1009
  %v1011 = vpop.f32.mrb[0].mxu0
  %1012 = vmatprep.mubr.bf16.mxu0 0
  %1013 = vmatmul.mubr.bf16.gmra.mrb[0].mxu0 %v370
  %v1014 = vpop.f32.mrb[0].mxu0
  %v1015 = vadd.f32 %v895, %v1014
  %v1016 = vpop.f32.mrb[0].mxu0
  %v1017 = vpop.f32.mrb[0].mxu0
  %v1018 = vadd.f32 %v898, %v1017
  %v1019 = vpop.f32.mrb[0].mxu0
  %1020 = vmatprep.mubr.bf16.mxu0 0
  %1021 = vmatmul.mubr.bf16.gmra.mrb[0].mxu0 %v375
  %v1022 = vpop.f32.mrb[0].mxu0
  %v1023 = vadd.f32 %v903, %v1022
  %v1024 = vpop.f32.mrb[0].mxu0
  %v1025 = vpop.f32.mrb[0].mxu0
  %v1026 = vadd.f32 %v906, %v1025
  %v1027 = vpop.f32.mrb[0].mxu0
  %1028 = vmatprep.mubr.bf16.mxu0 0
  %1029 = vmatmul.mubr.bf16.gmra.mrb[0].mxu0 %v380
  %v1030 = vpop.f32.mrb[0].mxu0
  %v1031 = vadd.f32 %v911, %v1030
  %v1032 = vpop.f32.mrb[0].mxu0
  %v1033 = vpop.f32.mrb[0].mxu0
  %v1034 = vpop.f32.mrb[0].mxu0
  %1035 = vdwg.mxu0
  %v1036 = vld [vmem:[%s2] sm:$0x1]
  %v1037 = vlaneseq
  %v1038 = vshrl.u32 %v1037, 7
  %v1039 = vsub.s32 0, %v1038
  %v1040 = vrot.slane %v1036, %v1039
  %v1041 = vmul.f32 %v951, %v1040
  %v1042 = vmul.f32 %v954, %v1040
  %v1043 = vmul.f32 %v959, %v1040
  %v1044 = vmul.f32 %v962, %v1040
  %v1045 = vmul.f32 %v967, %v1040
  %v1046 = vmul.f32 %v970, %v1040
  %v1047 = vmul.f32 %v975, %v1040
  %v1048 = vmul.f32 %v978, %v1040
  %v1049 = vmul.f32 %v983, %v1040
  %v1050 = vmul.f32 %v986, %v1040
  %v1051 = vmul.f32 %v991, %v1040
  %v1052 = vmul.f32 %v994, %v1040
  %v1053 = vmul.f32 %v999, %v1040
  %v1054 = vmul.f32 %v1002, %v1040
  %v1055 = vmul.f32 %v1007, %v1040
  %v1056 = vmul.f32 %v1010, %v1040
  %v1057 = vmul.f32 %v1015, %v1040
  %v1058 = vmul.f32 %v1018, %v1040
  %v1059 = vmul.f32 %v1023, %v1040
  %v1060 = vmul.f32 %v1026, %v1040
  %v1061 = vmul.f32 %v1031, %v1040
  %v1062 = vld [vmem:[%s2 + $0x1] sm:$0x1]
  %v1063 = vlaneseq
  %v1064 = vshrl.u32 %v1063, 7
  %v1065 = vsub.s32 0, %v1064
  %v1066 = vrot.slane %v1062, %v1065
  %v1067 = vadd.f32 %v1041, %v1066
  %v1068 = vadd.f32 %v1042, %v1066
  %v1069 = vadd.f32 %v1043, %v1066
  %v1070 = vadd.f32 %v1044, %v1066
  %v1071 = vadd.f32 %v1045, %v1066
  %v1072 = vadd.f32 %v1046, %v1066
  %v1073 = vadd.f32 %v1047, %v1066
  %v1074 = vadd.f32 %v1048, %v1066
  %v1075 = vadd.f32 %v1049, %v1066
  %v1076 = vadd.f32 %v1050, %v1066
  %v1077 = vadd.f32 %v1051, %v1066
  %v1078 = vadd.f32 %v1052, %v1066
  %v1079 = vadd.f32 %v1053, %v1066
  %v1080 = vadd.f32 %v1054, %v1066
  %v1081 = vadd.f32 %v1055, %v1066
  %v1082 = vadd.f32 %v1056, %v1066
  %v1083 = vadd.f32 %v1057, %v1066
  %v1084 = vadd.f32 %v1058, %v1066
  %v1085 = vadd.f32 %v1059, %v1066
  %v1086 = vadd.f32 %v1060, %v1066
  %v1087 = vadd.f32 %v1061, %v1066
  %v1088 = vpack.c.bf16 %v1068, %v1067
  %v1089 = vpack.c.bf16 %v1070, %v1069
  %v1090 = vpack.c.bf16 %v1072, %v1071
  %v1091 = vpack.c.bf16 %v1074, %v1073
  %v1092 = vpack.c.bf16 %v1076, %v1075
  %v1093 = vpack.c.bf16 %v1078, %v1077
  %v1094 = vpack.c.bf16 %v1080, %v1079
  %v1095 = vpack.c.bf16 %v1082, %v1081
  %v1096 = vpack.c.bf16 %v1084, %v1083
  %v1097 = vpack.c.bf16 %v1086, %v1085
  %v1098 = vpack.c.bf16 %v1087, %v1087
  %v1110 = vunpack.c.l.b16 %v1088
  %v1111 = vunpack.c.h.b16 %v1088
  %v1112 = vunpack.c.l.b16 %v1089
  %v1113 = vunpack.c.h.b16 %v1089
  %v1114 = vunpack.c.l.b16 %v1090
  %v1115 = vunpack.c.h.b16 %v1090
  %v1116 = vunpack.c.l.b16 %v1091
  %v1117 = vunpack.c.h.b16 %v1091
  %v1118 = vunpack.c.l.b16 %v1092
  %v1119 = vunpack.c.h.b16 %v1092
  %v1120 = vunpack.c.l.b16 %v1093
  %v1121 = vunpack.c.h.b16 %v1093
  %v1122 = vunpack.c.l.b16 %v1094
  %v1123 = vunpack.c.h.b16 %v1094
  %v1124 = vunpack.c.l.b16 %v1095
  %v1125 = vunpack.c.h.b16 %v1095
  %v1126 = vunpack.c.l.b16 %v1096
  %v1127 = vunpack.c.h.b16 %v1096
  %v1128 = vunpack.c.l.b16 %v1097
  %v1129 = vunpack.c.h.b16 %v1097
  %v1130 = vunpack.c.l.b16 %v1098
  %v1131 = vpack.c.b16 %v1110, %v1110
  %v1132 = vpack.c.b16 %v1111, %v1111
  %v1133 = vpack.c.b16 %v1112, %v1112
  %v1134 = vpack.c.b16 %v1113, %v1113
  %v1135 = vpack.c.b16 %v1114, %v1114
  %v1136 = vpack.c.b16 %v1115, %v1115
  %v1137 = vpack.c.b16 %v1116, %v1116
  %v1138 = vpack.c.b16 %v1117, %v1117
  %v1139 = vpack.c.b16 %v1118, %v1118
  %v1140 = vpack.c.b16 %v1119, %v1119
  %v1141 = vpack.c.b16 %v1120, %v1120
  %v1142 = vpack.c.b16 %v1121, %v1121
  %v1143 = vpack.c.b16 %v1122, %v1122
  %v1144 = vpack.c.b16 %v1123, %v1123
  %v1145 = vpack.c.b16 %v1124, %v1124
  %v1146 = vpack.c.b16 %v1125, %v1125
  %v1147 = vpack.c.b16 %v1126, %v1126
  %v1148 = vpack.c.b16 %v1127, %v1127
  %v1149 = vpack.c.b16 %v1128, %v1128
  %v1150 = vpack.c.b16 %v1129, %v1129
  %v1151 = vpack.c.b16 %v1130, %v1130
  %1173 = vst [vmem:[%s3] sm:$0xf] %v1131
  %1174 = vst [vmem:[%s3 + $0x4] sm:$0xf] %v1132
  %1175 = vst [vmem:[%s3 + $0x8] sm:$0xf] %v1133
  %1176 = vst [vmem:[%s3 + $0xc] sm:$0xf] %v1134
  %1177 = vst [vmem:[%s3 + $0x10] sm:$0xf] %v1135
  %1178 = vst [vmem:[%s3 + $0x14] sm:$0xf] %v1136
  %1179 = vst [vmem:[%s3 + $0x18] sm:$0xf] %v1137
  %1180 = vst [vmem:[%s3 + $0x1c] sm:$0xf] %v1138
  %1181 = vst [vmem:[%s3 + $0x20] sm:$0xf] %v1139
  %1182 = vst [vmem:[%s3 + $0x24] sm:$0xf] %v1140
  %1183 = vst [vmem:[%s3 + $0x28] sm:$0xf] %v1141
  %1184 = vst [vmem:[%s3 + $0x2c] sm:$0xf] %v1142
  %1185 = vst [vmem:[%s3 + $0x30] sm:$0xf] %v1143
  %1186 = vst [vmem:[%s3 + $0x34] sm:$0xf] %v1144
  %1187 = vst [vmem:[%s3 + $0x38] sm:$0xf] %v1145
  %1188 = vst [vmem:[%s3 + $0x3c] sm:$0xf] %v1146
  %1189 = vst [vmem:[%s3 + $0x40] sm:$0xf] %v1147
  %1190 = vst [vmem:[%s3 + $0x44] sm:$0xf] %v1148
  %1191 = vst [vmem:[%s3 + $0x48] sm:$0xf] %v1149
  %1192 = vst [vmem:[%s3 + $0x4c] sm:$0xf] %v1150
  %1193 = vst [vmem:[%s3 + $0x50] sm:$0x1] %v1151
  // Predicated region
  $region14: #{alexnet_p1_forward.7} parent=0 // pred_check
    _
  $region15: #{alexnet_p1_forward.7} parent=0 // pred_check_branch
    %1195 = sbr.rel (0) target = $region17
  $region16: #{alexnet_p1_forward.7} parent=0 // pred_region
    _
  $region17: #{alexnet_p1_forward.7} parent=0 // pred_fallthru
    _
  // Predicated region
  $region18: #{alexnet_p1_forward.7} parent=0 // pred_check
    _
  $region19: #{alexnet_p1_forward.7} parent=0 // pred_check_branch
    %1197 = sbr.rel (0) target = $region21
  $region20: #{alexnet_p1_forward.7} parent=0 // pred_region
    _
  $region21: #{alexnet_p1_forward.7} parent=0 // pred_fallthru
    _

// kernel: alexnet_p1_forward.8
$region0: #{alexnet_p1_forward.8}
  #allocation0 [shape = 'u32[]', space=smem, size = 0x4, offset = 0x4, fixed_abs, tag = 'smem constant byte address 0x4 - core index']
  #allocation1 [shape = 'u32[144,128]{1,0:T(1,128)}', space=vmem, size = 0x12000, scoped, tag = 'internal scratch']
  %s0 = inlined_call_operand.vmem [shape: bf16[2,5,5,128], index: 0, kind: input, shape index: {}]
  %s1 = inlined_call_operand.vmem [shape: bf16[2,5,4,128], index: 1, kind: input, shape index: {}]
  %s2 = inlined_call_operand.vmem [shape: bf16[2,4,5,128], index: 2, kind: input, shape index: {}]
  %s3 = inlined_call_operand.vmem [shape: bf16[2,4,4,128], index: 3, kind: input, shape index: {}]
  %s4 = inlined_call_operand.vmem [shape: bf16[2,4,4,128], index: 4, kind: output, shape index: {}]
  %s5 = sld [smem:[#allocation0]]
  $region26: #{alexnet_p1_forward.8} parent=0
    _
  %s7 = ssub.s32 1, %s5
  %s8 = scalar_select 0, %s7, %s5
  // Predicated region
  $region2: #{alexnet_p1_forward.8} parent=0 // pred_check
    _
  $region3: #{alexnet_p1_forward.8} parent=0 // pred_check_branch
    %10 = sbr.rel (0) target = $region5
  $region4: #{alexnet_p1_forward.8} parent=0 // pred_region
    _
  $region5: #{alexnet_p1_forward.8} parent=0 // pred_fallthru
    _
  // Predicated region
  $region6: #{alexnet_p1_forward.8} parent=0 // pred_check
    _
  $region7: #{alexnet_p1_forward.8} parent=0 // pred_check_branch
    %12 = sbr.rel (0) target = $region9
  $region8: #{alexnet_p1_forward.8} parent=0 // pred_region
    _
  $region9: #{alexnet_p1_forward.8} parent=0 // pred_fallthru
    _
  // Predicated region
  $region10: #{alexnet_p1_forward.8} parent=0 // pred_check
    _
  $region11: #{alexnet_p1_forward.8} parent=0 // pred_check_branch
    %14 = sbr.rel (0) target = $region13
  $region12: #{alexnet_p1_forward.8} parent=0 // pred_region
    _
  $region13: #{alexnet_p1_forward.8} parent=0 // pred_fallthru
    _
  // Predicated region
  $region14: #{alexnet_p1_forward.8} parent=0 // pred_check
    _
  $region15: #{alexnet_p1_forward.8} parent=0 // pred_check_branch
    %16 = sbr.rel (0) target = $region17
  $region16: #{alexnet_p1_forward.8} parent=0 // pred_region
    _
  $region17: #{alexnet_p1_forward.8} parent=0 // pred_fallthru
    _
  %v18 = vld [vmem:[%s0] sm:$0x3]
  %v19 = vld [vmem:[%s0 + $0x4] sm:$0x3]
  %v20 = vld [vmem:[%s0 + $0x8] sm:$0x3]
  %v21 = vld [vmem:[%s0 + $0xc] sm:$0x3]
  %v22 = vld [vmem:[%s0 + $0x14] sm:$0x3]
  %v23 = vld [vmem:[%s0 + $0x18] sm:$0x3]
  %v24 = vld [vmem:[%s0 + $0x1c] sm:$0x3]
  %v25 = vld [vmem:[%s0 + $0x20] sm:$0x3]
  %v26 = vld [vmem:[%s0] sm:$0x7]
  %v27 = vld [vmem:[%s0 + $0x4] sm:$0x7]
  %v28 = vld [vmem:[%s0 + $0x8] sm:$0x7]
  %v29 = vld [vmem:[%s0 + $0xc] sm:$0x7]
  %v30 = vld [vmem:[%s0 + $0x14] sm:$0x7]
  %v31 = vld [vmem:[%s0 + $0x18] sm:$0x7]
  %v32 = vld [vmem:[%s0 + $0x1c] sm:$0x7]
  %v33 = vld [vmem:[%s0 + $0x20] sm:$0x7]
  %v35 = vshrl.u32 %v26, 16
  %v37 = vrot.slane %v35, 4
  %v38 = vshll.u32 %v26, 16
  %v40 = vrot.slane %v38, 5
  %v41 = vor.u32 %v37, %v40
  %v42 = vrot.slane %v41, 4
  %v44 = vshrl.u32 %v27, 16
  %v46 = vrot.slane %v44, 4
  %v47 = vshll.u32 %v27, 16
  %v49 = vrot.slane %v47, 5
  %v50 = vor.u32 %v46, %v49
  %v51 = vrot.slane %v50, 4
  %v53 = vshrl.u32 %v28, 16
  %v55 = vrot.slane %v53, 4
  %v56 = vshll.u32 %v28, 16
  %v58 = vrot.slane %v56, 5
  %v59 = vor.u32 %v55, %v58
  %v60 = vrot.slane %v59, 4
  %v62 = vshrl.u32 %v29, 16
  %v64 = vrot.slane %v62, 4
  %v65 = vshll.u32 %v29, 16
  %v67 = vrot.slane %v65, 5
  %v68 = vor.u32 %v64, %v67
  %v69 = vrot.slane %v68, 4
  %v71 = vshrl.u32 %v30, 16
  %v73 = vrot.slane %v71, 4
  %v74 = vshll.u32 %v30, 16
  %v76 = vrot.slane %v74, 5
  %v77 = vor.u32 %v73, %v76
  %v78 = vrot.slane %v77, 4
  %v80 = vshrl.u32 %v31, 16
  %v82 = vrot.slane %v80, 4
  %v83 = vshll.u32 %v31, 16
  %v85 = vrot.slane %v83, 5
  %v86 = vor.u32 %v82, %v85
  %v87 = vrot.slane %v86, 4
  %v89 = vshrl.u32 %v32, 16
  %v91 = vrot.slane %v89, 4
  %v92 = vshll.u32 %v32, 16
  %v94 = vrot.slane %v92, 5
  %v95 = vor.u32 %v91, %v94
  %v96 = vrot.slane %v95, 4
  %v98 = vshrl.u32 %v33, 16
  %v100 = vrot.slane %v98, 4
  %v101 = vshll.u32 %v33, 16
  %v103 = vrot.slane %v101, 5
  %v104 = vor.u32 %v100, %v103
  %v105 = vrot.slane %v104, 4
  %v114 = vmax.bf16 %v18, %v42
  %v115 = vmax.bf16 %v19, %v51
  %v116 = vmax.bf16 %v20, %v60
  %v117 = vmax.bf16 %v21, %v69
  %v118 = vmax.bf16 %v22, %v78
  %v119 = vmax.bf16 %v23, %v87
  %v120 = vmax.bf16 %v24, %v96
  %v121 = vmax.bf16 %v25, %v105
  %s122 = scalar_lea.vmem %s0, 4
  %v123 = vld [vmem:[%s122] sm:$0x3]
  %v124 = vld [vmem:[%s122 + $0x4] sm:$0x3]
  %v125 = vld [vmem:[%s122 + $0x8] sm:$0x3]
  %v126 = vld [vmem:[%s122 + $0xc] sm:$0x3]
  %v127 = vld [vmem:[%s122 + $0x14] sm:$0x3]
  %v128 = vld [vmem:[%s122 + $0x18] sm:$0x3]
  %v129 = vld [vmem:[%s122 + $0x1c] sm:$0x3]
  %v130 = vld [vmem:[%s122 + $0x20] sm:$0x3]
  %v131 = vmax.bf16 %v114, %v123
  %v132 = vmax.bf16 %v115, %v124
  %v133 = vmax.bf16 %v116, %v125
  %v134 = vmax.bf16 %v117, %v126
  %v135 = vmax.bf16 %v118, %v127
  %v136 = vmax.bf16 %v119, %v128
  %v137 = vmax.bf16 %v120, %v129
  %v138 = vmax.bf16 %v121, %v130
  %v139 = vld [vmem:[%s122] sm:$0x7]
  %v140 = vld [vmem:[%s122 + $0x4] sm:$0x7]
  %v141 = vld [vmem:[%s122 + $0x8] sm:$0x7]
  %v142 = vld [vmem:[%s122 + $0xc] sm:$0x7]
  %v143 = vld [vmem:[%s122 + $0x14] sm:$0x7]
  %v144 = vld [vmem:[%s122 + $0x18] sm:$0x7]
  %v145 = vld [vmem:[%s122 + $0x1c] sm:$0x7]
  %v146 = vld [vmem:[%s122 + $0x20] sm:$0x7]
  %v148 = vshrl.u32 %v139, 16
  %v150 = vrot.slane %v148, 4
  %v151 = vshll.u32 %v139, 16
  %v153 = vrot.slane %v151, 5
  %v154 = vor.u32 %v150, %v153
  %v155 = vrot.slane %v154, 4
  %v157 = vshrl.u32 %v140, 16
  %v159 = vrot.slane %v157, 4
  %v160 = vshll.u32 %v140, 16
  %v162 = vrot.slane %v160, 5
  %v163 = vor.u32 %v159, %v162
  %v164 = vrot.slane %v163, 4
  %v166 = vshrl.u32 %v141, 16
  %v168 = vrot.slane %v166, 4
  %v169 = vshll.u32 %v141, 16
  %v171 = vrot.slane %v169, 5
  %v172 = vor.u32 %v168, %v171
  %v173 = vrot.slane %v172, 4
  %v175 = vshrl.u32 %v142, 16
  %v177 = vrot.slane %v175, 4
  %v178 = vshll.u32 %v142, 16
  %v180 = vrot.slane %v178, 5
  %v181 = vor.u32 %v177, %v180
  %v182 = vrot.slane %v181, 4
  %v184 = vshrl.u32 %v143, 16
  %v186 = vrot.slane %v184, 4
  %v187 = vshll.u32 %v143, 16
  %v189 = vrot.slane %v187, 5
  %v190 = vor.u32 %v186, %v189
  %v191 = vrot.slane %v190, 4
  %v193 = vshrl.u32 %v144, 16
  %v195 = vrot.slane %v193, 4
  %v196 = vshll.u32 %v144, 16
  %v198 = vrot.slane %v196, 5
  %v199 = vor.u32 %v195, %v198
  %v200 = vrot.slane %v199, 4
  %v202 = vshrl.u32 %v145, 16
  %v204 = vrot.slane %v202, 4
  %v205 = vshll.u32 %v145, 16
  %v207 = vrot.slane %v205, 5
  %v208 = vor.u32 %v204, %v207
  %v209 = vrot.slane %v208, 4
  %v211 = vshrl.u32 %v146, 16
  %v213 = vrot.slane %v211, 4
  %v214 = vshll.u32 %v146, 16
  %v216 = vrot.slane %v214, 5
  %v217 = vor.u32 %v213, %v216
  %v218 = vrot.slane %v217, 4
  %v227 = vmax.bf16 %v131, %v155
  %v228 = vmax.bf16 %v132, %v164
  %v229 = vmax.bf16 %v133, %v173
  %v230 = vmax.bf16 %v134, %v182
  %v231 = vmax.bf16 %v135, %v191
  %v232 = vmax.bf16 %v136, %v200
  %v233 = vmax.bf16 %v137, %v209
  %v234 = vmax.bf16 %v138, %v218
  %v235 = vld [vmem:[%s1] sm:$0x3]
  %v236 = vld [vmem:[%s1 + $0x2] sm:$0x3]
  %v237 = vld [vmem:[%s1 + $0x4] sm:$0x3]
  %v238 = vld [vmem:[%s1 + $0x6] sm:$0x3]
  %v239 = vld [vmem:[%s1 + $0xa] sm:$0x3]
  %v240 = vld [vmem:[%s1 + $0xc] sm:$0x3]
  %v241 = vld [vmem:[%s1 + $0xe] sm:$0x3]
  %v242 = vld [vmem:[%s1 + $0x10] sm:$0x3]
  %v243 = vmax.bf16 %v227, %v235
  %v244 = vmax.bf16 %v228, %v236
  %v245 = vmax.bf16 %v229, %v237
  %v246 = vmax.bf16 %v230, %v238
  %v247 = vmax.bf16 %v231, %v239
  %v248 = vmax.bf16 %v232, %v240
  %v249 = vmax.bf16 %v233, %v241
  %v250 = vmax.bf16 %v234, %v242
  %s251 = scalar_lea.vmem %s1, 2
  %v252 = vld [vmem:[%s251] sm:$0x3]
  %v253 = vld [vmem:[%s251 + $0x2] sm:$0x3]
  %v254 = vld [vmem:[%s251 + $0x4] sm:$0x3]
  %v255 = vld [vmem:[%s251 + $0x6] sm:$0x3]
  %v256 = vld [vmem:[%s251 + $0xa] sm:$0x3]
  %v257 = vld [vmem:[%s251 + $0xc] sm:$0x3]
  %v258 = vld [vmem:[%s251 + $0xe] sm:$0x3]
  %v259 = vld [vmem:[%s251 + $0x10] sm:$0x3]
  %v260 = vmax.bf16 %v243, %v252
  %v261 = vmax.bf16 %v244, %v253
  %v262 = vmax.bf16 %v245, %v254
  %v263 = vmax.bf16 %v246, %v255
  %v264 = vmax.bf16 %v247, %v256
  %v265 = vmax.bf16 %v248, %v257
  %v266 = vmax.bf16 %v249, %v258
  %v267 = vmax.bf16 %v250, %v259
  %v268 = vld [vmem:[%s2] sm:$0x3]
  %v269 = vld [vmem:[%s2 + $0x4] sm:$0x3]
  %v270 = vld [vmem:[%s2 + $0x8] sm:$0x3]
  %v271 = vld [vmem:[%s2 + $0xc] sm:$0x3]
  %v272 = vld [vmem:[%s2 + $0x10] sm:$0x3]
  %v273 = vld [vmem:[%s2 + $0x14] sm:$0x3]
  %v274 = vld [vmem:[%s2 + $0x18] sm:$0x3]
  %v275 = vld [vmem:[%s2 + $0x1c] sm:$0x3]
  %v276 = vmax.bf16 %v260, %v268
  %v277 = vmax.bf16 %v261, %v269
  %v278 = vmax.bf16 %v262, %v270
  %v279 = vmax.bf16 %v263, %v271
  %v280 = vmax.bf16 %v264, %v272
  %v281 = vmax.bf16 %v265, %v273
  %v282 = vmax.bf16 %v266, %v274
  %v283 = vmax.bf16 %v267, %v275
  %v284 = vld [vmem:[%s2] sm:$0x7]
  %v285 = vld [vmem:[%s2 + $0x4] sm:$0x7]
  %v286 = vld [vmem:[%s2 + $0x8] sm:$0x7]
  %v287 = vld [vmem:[%s2 + $0xc] sm:$0x7]
  %v288 = vld [vmem:[%s2 + $0x10] sm:$0x7]
  %v289 = vld [vmem:[%s2 + $0x14] sm:$0x7]
  %v290 = vld [vmem:[%s2 + $0x18] sm:$0x7]
  %v291 = vld [vmem:[%s2 + $0x1c] sm:$0x7]
  %v293 = vshrl.u32 %v284, 16
  %v295 = vrot.slane %v293, 4
  %v296 = vshll.u32 %v284, 16
  %v298 = vrot.slane %v296, 5
  %v299 = vor.u32 %v295, %v298
  %v300 = vrot.slane %v299, 4
  %v302 = vshrl.u32 %v285, 16
  %v304 = vrot.slane %v302, 4
  %v305 = vshll.u32 %v285, 16
  %v307 = vrot.slane %v305, 5
  %v308 = vor.u32 %v304, %v307
  %v309 = vrot.slane %v308, 4
  %v311 = vshrl.u32 %v286, 16
  %v313 = vrot.slane %v311, 4
  %v314 = vshll.u32 %v286, 16
  %v316 = vrot.slane %v314, 5
  %v317 = vor.u32 %v313, %v316
  %v318 = vrot.slane %v317, 4
  %v320 = vshrl.u32 %v287, 16
  %v322 = vrot.slane %v320, 4
  %v323 = vshll.u32 %v287, 16
  %v325 = vrot.slane %v323, 5
  %v326 = vor.u32 %v322, %v325
  %v327 = vrot.slane %v326, 4
  %v329 = vshrl.u32 %v288, 16
  %v331 = vrot.slane %v329, 4
  %v332 = vshll.u32 %v288, 16
  %v334 = vrot.slane %v332, 5
  %v335 = vor.u32 %v331, %v334
  %v336 = vrot.slane %v335, 4
  %v338 = vshrl.u32 %v289, 16
  %v340 = vrot.slane %v338, 4
  %v341 = vshll.u32 %v289, 16
  %v343 = vrot.slane %v341, 5
  %v344 = vor.u32 %v340, %v343
  %v345 = vrot.slane %v344, 4
  %v347 = vshrl.u32 %v290, 16
  %v349 = vrot.slane %v347, 4
  %v350 = vshll.u32 %v290, 16
  %v352 = vrot.slane %v350, 5
  %v353 = vor.u32 %v349, %v352
  %v354 = vrot.slane %v353, 4
  %v356 = vshrl.u32 %v291, 16
  %v358 = vrot.slane %v356, 4
  %v359 = vshll.u32 %v291, 16
  %v361 = vrot.slane %v359, 5
  %v362 = vor.u32 %v358, %v361
  %v363 = vrot.slane %v362, 4
  %v372 = vmax.bf16 %v276, %v300
  %v373 = vmax.bf16 %v277, %v309
  %v374 = vmax.bf16 %v278, %v318
  %v375 = vmax.bf16 %v279, %v327
  %v376 = vmax.bf16 %v280, %v336
  %v377 = vmax.bf16 %v281, %v345
  %v378 = vmax.bf16 %v282, %v354
  %v379 = vmax.bf16 %v283, %v363
  %v380 = vld [vmem:[%s3] sm:$0x3]
  %v381 = vld [vmem:[%s3 + $0x2] sm:$0x3]
  %v382 = vld [vmem:[%s3 + $0x4] sm:$0x3]
  %v383 = vld [vmem:[%s3 + $0x6] sm:$0x3]
  %v384 = vld [vmem:[%s3 + $0x8] sm:$0x3]
  %v385 = vld [vmem:[%s3 + $0xa] sm:$0x3]
  %v386 = vld [vmem:[%s3 + $0xc] sm:$0x3]
  %v387 = vld [vmem:[%s3 + $0xe] sm:$0x3]
  %v388 = vmax.bf16 %v372, %v380
  %v389 = vmax.bf16 %v373, %v381
  %v390 = vmax.bf16 %v374, %v382
  %v391 = vmax.bf16 %v375, %v383
  %v392 = vmax.bf16 %v376, %v384
  %v393 = vmax.bf16 %v377, %v385
  %v394 = vmax.bf16 %v378, %v386
  %v395 = vmax.bf16 %v379, %v387
  %v396 = vmax.bf16 %v388, 0
  %v397 = vmax.bf16 %v389, 0
  %v398 = vmax.bf16 %v390, 0
  %v399 = vmax.bf16 %v391, 0
  %v400 = vmax.bf16 %v392, 0
  %v401 = vmax.bf16 %v393, 0
  %v402 = vmax.bf16 %v394, 0
  %v403 = vmax.bf16 %v395, 0
  %404 = vst [vmem:[%s4] sm:$0x3] %v396
  %405 = vst [vmem:[%s4 + $0x2] sm:$0x3] %v397
  %406 = vst [vmem:[%s4 + $0x4] sm:$0x3] %v398
  %407 = vst [vmem:[%s4 + $0x6] sm:$0x3] %v399
  %408 = vst [vmem:[%s4 + $0x8] sm:$0x3] %v400
  %409 = vst [vmem:[%s4 + $0xa] sm:$0x3] %v401
  %410 = vst [vmem:[%s4 + $0xc] sm:$0x3] %v402
  %411 = vst [vmem:[%s4 + $0xe] sm:$0x3] %v403
  // Predicated region
  $region18: #{alexnet_p1_forward.8} parent=0 // pred_check
    _
  $region19: #{alexnet_p1_forward.8} parent=0 // pred_check_branch
    %413 = sbr.rel (0) target = $region21
  $region20: #{alexnet_p1_forward.8} parent=0 // pred_region
    _
  $region21: #{alexnet_p1_forward.8} parent=0 // pred_fallthru
    _
  // Predicated region
  $region22: #{alexnet_p1_forward.8} parent=0 // pred_check
    _
  $region23: #{alexnet_p1_forward.8} parent=0 // pred_check_branch
    %415 = sbr.rel (0) target = $region25
  $region24: #{alexnet_p1_forward.8} parent=0 // pred_region
    _
  $region25: #{alexnet_p1_forward.8} parent=0 // pred_fallthru
    _

// kernel: alexnet_p1_forward.9
$region0: #{alexnet_p1_forward.9}
  #allocation0 [shape = 'u32[]', space=smem, size = 0x4, offset = 0x4, fixed_abs, tag = 'smem constant byte address 0x4 - core index']
  #allocation1 [shape = 'u32[144,128]{1,0:T(1,128)}', space=vmem, size = 0x12000, scoped, tag = 'internal scratch']
  %s0 = inlined_call_operand.vmem [shape: bf16[8,640], index: 0, kind: input, shape index: {}]
  %s1 = inlined_call_operand.vmem [shape: bf16[640,128], index: 1, kind: input, shape index: {}]
  %s2 = inlined_call_operand.vmem [shape: f32[2,128], index: 2, kind: input, shape index: {}]
  %s3 = inlined_call_operand.vmem [shape: f32[8,128], index: 3, kind: output, shape index: {}]
  %s4 = sld [smem:[#allocation0]]
  $region22: #{alexnet_p1_forward.9} parent=0
    _
  %s6 = ssub.s32 1, %s4
  %s7 = scalar_select 0, %s6, %s4
  // Predicated region
  $region2: #{alexnet_p1_forward.9} parent=0 // pred_check
    _
  $region3: #{alexnet_p1_forward.9} parent=0 // pred_check_branch
    %9 = sbr.rel (0) target = $region5
  $region4: #{alexnet_p1_forward.9} parent=0 // pred_region
    _
  $region5: #{alexnet_p1_forward.9} parent=0 // pred_fallthru
    _
  // Predicated region
  $region6: #{alexnet_p1_forward.9} parent=0 // pred_check
    _
  $region7: #{alexnet_p1_forward.9} parent=0 // pred_check_branch
    %11 = sbr.rel (0) target = $region9
  $region8: #{alexnet_p1_forward.9} parent=0 // pred_region
    _
  $region9: #{alexnet_p1_forward.9} parent=0 // pred_fallthru
    _
  // Predicated region
  $region10: #{alexnet_p1_forward.9} parent=0 // pred_check
    _
  $region11: #{alexnet_p1_forward.9} parent=0 // pred_check_branch
    %13 = sbr.rel (0) target = $region13
  $region12: #{alexnet_p1_forward.9} parent=0 // pred_region
    _
  $region13: #{alexnet_p1_forward.9} parent=0 // pred_fallthru
    _
  %v15 = vld [vmem:[%s0] sm:$0xff]
  %v16 = vld [vmem:[%s0 + $0x8] sm:$0xff]
  %v17 = vld [vmem:[%s0 + $0x10] sm:$0xf]
  %v18 = vld [vmem:[%s1] sm:$0xf]
  %v19 = vld [vmem:[%s1 + $0x4] sm:$0xf]
  %v20 = vld [vmem:[%s1 + $0x8] sm:$0xf]
  %v21 = vld [vmem:[%s1 + $0xc] sm:$0xf]
  %v22 = vld [vmem:[%s1 + $0x10] sm:$0xf]
  %v23 = vld [vmem:[%s1 + $0x14] sm:$0xf]
  %v24 = vld [vmem:[%s1 + $0x18] sm:$0xf]
  %v25 = vld [vmem:[%s1 + $0x1c] sm:$0xf]
  %v26 = vld [vmem:[%s1 + $0x20] sm:$0xf]
  %v27 = vld [vmem:[%s1 + $0x24] sm:$0xf]
  %v28 = vld [vmem:[%s1 + $0x28] sm:$0xf]
  %v29 = vld [vmem:[%s1 + $0x2c] sm:$0xf]
  %v30 = vld [vmem:[%s1 + $0x30] sm:$0xf]
  %v31 = vld [vmem:[%s1 + $0x34] sm:$0xf]
  %v32 = vld [vmem:[%s1 + $0x38] sm:$0xf]
  %v33 = vld [vmem:[%s1 + $0x3c] sm:$0xf]
  %v34 = vld [vmem:[%s1 + $0x40] sm:$0xf]
  %v35 = vld [vmem:[%s1 + $0x44] sm:$0xf]
  %v36 = vld [vmem:[%s1 + $0x48] sm:$0xf]
  %v37 = vld [vmem:[%s1 + $0x4c] sm:$0xf]
  %v38 = vld [vmem:[%s1 + $0x50] sm:$0xf]
  %v39 = vld [vmem:[%s1 + $0x54] sm:$0xf]
  %v40 = vld [vmem:[%s1 + $0x58] sm:$0xf]
  %v41 = vld [vmem:[%s1 + $0x5c] sm:$0xf]
  %v42 = vld [vmem:[%s1 + $0x60] sm:$0xf]
  %v43 = vld [vmem:[%s1 + $0x64] sm:$0xf]
  %v44 = vld [vmem:[%s1 + $0x68] sm:$0xf]
  %v45 = vld [vmem:[%s1 + $0x6c] sm:$0xf]
  %v46 = vld [vmem:[%s1 + $0x70] sm:$0xf]
  %v47 = vld [vmem:[%s1 + $0x74] sm:$0xf]
  %v48 = vld [vmem:[%s1 + $0x78] sm:$0xf]
  %v49 = vld [vmem:[%s1 + $0x7c] sm:$0xf]
  %v50 = vld [vmem:[%s1 + $0x80] sm:$0xf]
  %v51 = vld [vmem:[%s1 + $0x84] sm:$0xf]
  %v52 = vld [vmem:[%s1 + $0x88] sm:$0xf]
  %v53 = vld [vmem:[%s1 + $0x8c] sm:$0xf]
  %v54 = vld [vmem:[%s1 + $0x90] sm:$0xf]
  %v55 = vld [vmem:[%s1 + $0x94] sm:$0xf]
  %v56 = vld [vmem:[%s1 + $0x98] sm:$0xf]
  %v57 = vld [vmem:[%s1 + $0x9c] sm:$0xf]
  %v58 = vld [vmem:[%s1 + $0xa0] sm:$0xf]
  %v59 = vld [vmem:[%s1 + $0xa4] sm:$0xf]
  %v60 = vld [vmem:[%s1 + $0xa8] sm:$0xf]
  %v61 = vld [vmem:[%s1 + $0xac] sm:$0xf]
  %v62 = vld [vmem:[%s1 + $0xb0] sm:$0xf]
  %v63 = vld [vmem:[%s1 + $0xb4] sm:$0xf]
  %v64 = vld [vmem:[%s1 + $0xb8] sm:$0xf]
  %v65 = vld [vmem:[%s1 + $0xbc] sm:$0xf]
  %v66 = vld [vmem:[%s1 + $0xc0] sm:$0xf]
  %v67 = vld [vmem:[%s1 + $0xc4] sm:$0xf]
  %v68 = vld [vmem:[%s1 + $0xc8] sm:$0xf]
  %v69 = vld [vmem:[%s1 + $0xcc] sm:$0xf]
  %v70 = vld [vmem:[%s1 + $0xd0] sm:$0xf]
  %v71 = vld [vmem:[%s1 + $0xd4] sm:$0xf]
  %v72 = vld [vmem:[%s1 + $0xd8] sm:$0xf]
  %v73 = vld [vmem:[%s1 + $0xdc] sm:$0xf]
  %v74 = vld [vmem:[%s1 + $0xe0] sm:$0xf]
  %v75 = vld [vmem:[%s1 + $0xe4] sm:$0xf]
  %v76 = vld [vmem:[%s1 + $0xe8] sm:$0xf]
  %v77 = vld [vmem:[%s1 + $0xec] sm:$0xf]
  %v78 = vld [vmem:[%s1 + $0xf0] sm:$0xf]
  %v79 = vld [vmem:[%s1 + $0xf4] sm:$0xf]
  %v80 = vld [vmem:[%s1 + $0xf8] sm:$0xf]
  %v81 = vld [vmem:[%s1 + $0xfc] sm:$0xf]
  %v82 = vld [vmem:[%s1 + $0x100] sm:$0xf]
  %v83 = vld [vmem:[%s1 + $0x104] sm:$0xf]
  %v84 = vld [vmem:[%s1 + $0x108] sm:$0xf]
  %v85 = vld [vmem:[%s1 + $0x10c] sm:$0xf]
  %v86 = vld [vmem:[%s1 + $0x110] sm:$0xf]
  %v87 = vld [vmem:[%s1 + $0x114] sm:$0xf]
  %v88 = vld [vmem:[%s1 + $0x118] sm:$0xf]
  %v89 = vld [vmem:[%s1 + $0x11c] sm:$0xf]
  %v90 = vld [vmem:[%s1 + $0x120] sm:$0xf]
  %v91 = vld [vmem:[%s1 + $0x124] sm:$0xf]
  %v92 = vld [vmem:[%s1 + $0x128] sm:$0xf]
  %v93 = vld [vmem:[%s1 + $0x12c] sm:$0xf]
  %v94 = vld [vmem:[%s1 + $0x130] sm:$0xf]
  %v95 = vld [vmem:[%s1 + $0x134] sm:$0xf]
  %v96 = vld [vmem:[%s1 + $0x138] sm:$0xf]
  %v97 = vld [vmem:[%s1 + $0x13c] sm:$0xf]
  %v101 = vunpack.c.l.b16 %v15
  %v102 = vunpack.c.h.b16 %v15
  %v103 = vunpack.c.l.b16 %v16
  %v104 = vunpack.c.h.b16 %v16
  %v105 = vunpack.c.l.b16 %v17
  %v106 = vpack.c.b16 %v101, %v101
  %v107 = vpack.c.b16 %v102, %v102
  %v108 = vpack.c.b16 %v103, %v103
  %v109 = vpack.c.b16 %v104, %v104
  %v110 = vpack.c.b16 %v105, %v105
  %v196 = vunpack.c.l.b16 %v18
  %v197 = vunpack.c.l.b16 %v19
  %v198 = vunpack.c.l.b16 %v20
  %v199 = vunpack.c.l.b16 %v21
  %v200 = vunpack.c.l.b16 %v22
  %v201 = vunpack.c.l.b16 %v23
  %v202 = vunpack.c.l.b16 %v24
  %v203 = vunpack.c.l.b16 %v25
  %v204 = vunpack.c.l.b16 %v26
  %v205 = vunpack.c.l.b16 %v27
  %v206 = vunpack.c.l.b16 %v28
  %v207 = vunpack.c.l.b16 %v29
  %v208 = vunpack.c.l.b16 %v30
  %v209 = vunpack.c.l.b16 %v31
  %v210 = vunpack.c.l.b16 %v32
  %v211 = vunpack.c.l.b16 %v33
  %v212 = vunpack.c.l.b16 %v34
  %v213 = vunpack.c.l.b16 %v35
  %v214 = vunpack.c.l.b16 %v36
  %v215 = vunpack.c.l.b16 %v37
  %v216 = vunpack.c.l.b16 %v38
  %v217 = vunpack.c.l.b16 %v39
  %v218 = vunpack.c.l.b16 %v40
  %v219 = vunpack.c.l.b16 %v41
  %v220 = vunpack.c.l.b16 %v42
  %v221 = vunpack.c.l.b16 %v43
  %v222 = vunpack.c.l.b16 %v44
  %v223 = vunpack.c.l.b16 %v45
  %v224 = vunpack.c.l.b16 %v46
  %v225 = vunpack.c.l.b16 %v47
  %v226 = vunpack.c.l.b16 %v48
  %v227 = vunpack.c.l.b16 %v49
  %v228 = vunpack.c.l.b16 %v50
  %v229 = vunpack.c.l.b16 %v51
  %v230 = vunpack.c.l.b16 %v52
  %v231 = vunpack.c.l.b16 %v53
  %v232 = vunpack.c.l.b16 %v54
  %v233 = vunpack.c.l.b16 %v55
  %v234 = vunpack.c.l.b16 %v56
  %v235 = vunpack.c.l.b16 %v57
  %v236 = vunpack.c.l.b16 %v58
  %v237 = vunpack.c.l.b16 %v59
  %v238 = vunpack.c.l.b16 %v60
  %v239 = vunpack.c.l.b16 %v61
  %v240 = vunpack.c.l.b16 %v62
  %v241 = vunpack.c.l.b16 %v63
  %v242 = vunpack.c.l.b16 %v64
  %v243 = vunpack.c.l.b16 %v65
  %v244 = vunpack.c.l.b16 %v66
  %v245 = vunpack.c.l.b16 %v67
  %v246 = vunpack.c.l.b16 %v68
  %v247 = vunpack.c.l.b16 %v69
  %v248 = vunpack.c.l.b16 %v70
  %v249 = vunpack.c.l.b16 %v71
  %v250 = vunpack.c.l.b16 %v72
  %v251 = vunpack.c.l.b16 %v73
  %v252 = vunpack.c.l.b16 %v74
  %v253 = vunpack.c.l.b16 %v75
  %v254 = vunpack.c.l.b16 %v76
  %v255 = vunpack.c.l.b16 %v77
  %v256 = vunpack.c.l.b16 %v78
  %v257 = vunpack.c.l.b16 %v79
  %v258 = vunpack.c.l.b16 %v80
  %v259 = vunpack.c.l.b16 %v81
  %v260 = vunpack.c.l.b16 %v82
  %v261 = vunpack.c.l.b16 %v83
  %v262 = vunpack.c.l.b16 %v84
  %v263 = vunpack.c.l.b16 %v85
  %v264 = vunpack.c.l.b16 %v86
  %v265 = vunpack.c.l.b16 %v87
  %v266 = vunpack.c.l.b16 %v88
  %v267 = vunpack.c.l.b16 %v89
  %v268 = vunpack.c.l.b16 %v90
  %v269 = vunpack.c.l.b16 %v91
  %v270 = vunpack.c.l.b16 %v92
  %v271 = vunpack.c.l.b16 %v93
  %v272 = vunpack.c.l.b16 %v94
  %v273 = vunpack.c.l.b16 %v95
  %v274 = vunpack.c.l.b16 %v96
  %v275 = vunpack.c.l.b16 %v97
  %v276 = vpack.c.b16 %v197, %v196
  %v277 = vpack.c.b16 %v199, %v198
  %v278 = vpack.c.b16 %v201, %v200
  %v279 = vpack.c.b16 %v203, %v202
  %v280 = vpack.c.b16 %v205, %v204
  %v281 = vpack.c.b16 %v207, %v206
  %v282 = vpack.c.b16 %v209, %v208
  %v283 = vpack.c.b16 %v211, %v210
  %v284 = vpack.c.b16 %v213, %v212
  %v285 = vpack.c.b16 %v215, %v214
  %v286 = vpack.c.b16 %v217, %v216
  %v287 = vpack.c.b16 %v219, %v218
  %v288 = vpack.c.b16 %v221, %v220
  %v289 = vpack.c.b16 %v223, %v222
  %v290 = vpack.c.b16 %v225, %v224
  %v291 = vpack.c.b16 %v227, %v226
  %v292 = vpack.c.b16 %v229, %v228
  %v293 = vpack.c.b16 %v231, %v230
  %v294 = vpack.c.b16 %v233, %v232
  %v295 = vpack.c.b16 %v235, %v234
  %v296 = vpack.c.b16 %v237, %v236
  %v297 = vpack.c.b16 %v239, %v238
  %v298 = vpack.c.b16 %v241, %v240
  %v299 = vpack.c.b16 %v243, %v242
  %v300 = vpack.c.b16 %v245, %v244
  %v301 = vpack.c.b16 %v247, %v246
  %v302 = vpack.c.b16 %v249, %v248
  %v303 = vpack.c.b16 %v251, %v250
  %v304 = vpack.c.b16 %v253, %v252
  %v305 = vpack.c.b16 %v255, %v254
  %v306 = vpack.c.b16 %v257, %v256
  %v307 = vpack.c.b16 %v259, %v258
  %v308 = vpack.c.b16 %v261, %v260
  %v309 = vpack.c.b16 %v263, %v262
  %v310 = vpack.c.b16 %v265, %v264
  %v311 = vpack.c.b16 %v267, %v266
  %v312 = vpack.c.b16 %v269, %v268
  %v313 = vpack.c.b16 %v271, %v270
  %v314 = vpack.c.b16 %v273, %v272
  %v315 = vpack.c.b16 %v275, %v274
  %356 = vmatprep.subr.bf16.mxu0 0
  %357 = vmatpush1.bf16.msra.mxu0 %v276
  %358 = vmatprep.subr.bf16.mxu0 0
  %359 = vmatpush1.bf16.msra.mxu0 %v277
  %360 = vmatprep.subr.bf16.mxu0 0
  %361 = vmatpush1.bf16.msra.mxu0 %v278
  %362 = vmatprep.subr.bf16.mxu0 0
  %363 = vmatpush1.bf16.msra.mxu0 %v279
  %364 = vmatprep.subr.bf16.mxu0 0
  %365 = vmatpush1.bf16.msra.mxu0 %v280
  %366 = vmatprep.subr.bf16.mxu0 0
  %367 = vmatpush1.bf16.msra.mxu0 %v281
  %368 = vmatprep.subr.bf16.mxu0 0
  %369 = vmatpush1.bf16.msra.mxu0 %v282
  %370 = vmatprep.subr.bf16.mxu0 0
  %371 = vmatpush1.bf16.msra.mxu0 %v283
  %372 = vmatprep.subr.bf16.mxu0 0
  %373 = vmatpush1.bf16.msra.mxu0 %v284
  %374 = vmatprep.subr.bf16.mxu0 0
  %375 = vmatpush1.bf16.msra.mxu0 %v285
  %376 = vmatprep.subr.bf16.mxu0 0
  %377 = vmatpush1.bf16.msra.mxu0 %v286
  %378 = vmatprep.subr.bf16.mxu0 0
  %379 = vmatpush1.bf16.msra.mxu0 %v287
  %380 = vmatprep.subr.bf16.mxu0 0
  %381 = vmatpush1.bf16.msra.mxu0 %v288
  %382 = vmatprep.subr.bf16.mxu0 0
  %383 = vmatpush1.bf16.msra.mxu0 %v289
  %384 = vmatprep.subr.bf16.mxu0 0
  %385 = vmatpush1.bf16.msra.mxu0 %v290
  %386 = vmatprep.subr.bf16.mxu0 0
  %387 = vmatpush1.bf16.msra.mxu0 %v291
  %388 = vmatprep.mubr.bf16.mxu0 %v107
  %389 = vmatmul.mubr.bf16.gmra.mrb[0].mxu0 %v106
  %v390 = vpop.f32.mrb[0].mxu0
  %v391 = vadd.f32 0.0, %v390
  %v392 = vpop.f32.mrb[0].mxu0
  %v393 = vpop.f32.mrb[0].mxu0
  %v394 = vpop.f32.mrb[0].mxu0
  %395 = vdwg.mxu0
  %396 = vmatprep.subr.bf16.mxu0 0
  %397 = vmatpush1.bf16.msra.mxu0 %v292
  %398 = vmatprep.subr.bf16.mxu0 0
  %399 = vmatpush1.bf16.msra.mxu0 %v293
  %400 = vmatprep.subr.bf16.mxu0 0
  %401 = vmatpush1.bf16.msra.mxu0 %v294
  %402 = vmatprep.subr.bf16.mxu0 0
  %403 = vmatpush1.bf16.msra.mxu0 %v295
  %404 = vmatprep.subr.bf16.mxu0 0
  %405 = vmatpush1.bf16.msra.mxu0 %v296
  %406 = vmatprep.subr.bf16.mxu0 0
  %407 = vmatpush1.bf16.msra.mxu0 %v297
  %408 = vmatprep.subr.bf16.mxu0 0
  %409 = vmatpush1.bf16.msra.mxu0 %v298
  %410 = vmatprep.subr.bf16.mxu0 0
  %411 = vmatpush1.bf16.msra.mxu0 %v299
  %412 = vmatprep.subr.bf16.mxu0 0
  %413 = vmatpush1.bf16.msra.mxu0 %v300
  %414 = vmatprep.subr.bf16.mxu0 0
  %415 = vmatpush1.bf16.msra.mxu0 %v301
  %416 = vmatprep.subr.bf16.mxu0 0
  %417 = vmatpush1.bf16.msra.mxu0 %v302
  %418 = vmatprep.subr.bf16.mxu0 0
  %419 = vmatpush1.bf16.msra.mxu0 %v303
  %420 = vmatprep.subr.bf16.mxu0 0
  %421 = vmatpush1.bf16.msra.mxu0 %v304
  %422 = vmatprep.subr.bf16.mxu0 0
  %423 = vmatpush1.bf16.msra.mxu0 %v305
  %424 = vmatprep.subr.bf16.mxu0 0
  %425 = vmatpush1.bf16.msra.mxu0 %v306
  %426 = vmatprep.subr.bf16.mxu0 0
  %427 = vmatpush1.bf16.msra.mxu0 %v307
  %428 = vmatprep.mubr.bf16.mxu0 %v109
  %429 = vmatmul.mubr.bf16.gmra.mrb[0].mxu0 %v108
  %v430 = vpop.f32.mrb[0].mxu0
  %v431 = vadd.f32 %v391, %v430
  %v432 = vpop.f32.mrb[0].mxu0
  %v433 = vpop.f32.mrb[0].mxu0
  %v434 = vpop.f32.mrb[0].mxu0
  %435 = vdwg.mxu0
  %436 = vmatprep.subr.bf16.mxu0 0
  %437 = vmatpush1.bf16.msra.mxu0 %v308
  %438 = vmatprep.subr.bf16.mxu0 0
  %439 = vmatpush1.bf16.msra.mxu0 %v309
  %440 = vmatprep.subr.bf16.mxu0 0
  %441 = vmatpush1.bf16.msra.mxu0 %v310
  %442 = vmatprep.subr.bf16.mxu0 0
  %443 = vmatpush1.bf16.msra.mxu0 %v311
  %444 = vmatprep.subr.bf16.mxu0 0
  %445 = vmatpush1.bf16.msra.mxu0 %v312
  %446 = vmatprep.subr.bf16.mxu0 0
  %447 = vmatpush1.bf16.msra.mxu0 %v313
  %448 = vmatprep.subr.bf16.mxu0 0
  %449 = vmatpush1.bf16.msra.mxu0 %v314
  %450 = vmatprep.subr.bf16.mxu0 0
  %451 = vmatpush1.bf16.msra.mxu0 %v315
  %452 = vmatprep.subr.bf16.mxu0 0
  %453 = vmatpush1.bf16.msra.mxu0 0
  %454 = vmatprep.subr.bf16.mxu0 0
  %455 = vmatpush1.bf16.msra.mxu0 0
  %456 = vmatprep.subr.bf16.mxu0 0
  %457 = vmatpush1.bf16.msra.mxu0 0
  %458 = vmatprep.subr.bf16.mxu0 0
  %459 = vmatpush1.bf16.msra.mxu0 0
  %460 = vmatprep.subr.bf16.mxu0 0
  %461 = vmatpush1.bf16.msra.mxu0 0
  %462 = vmatprep.subr.bf16.mxu0 0
  %463 = vmatpush1.bf16.msra.mxu0 0
  %464 = vmatprep.subr.bf16.mxu0 0
  %465 = vmatpush1.bf16.msra.mxu0 0
  %466 = vmatprep.subr.bf16.mxu0 0
  %467 = vmatpush1.bf16.msra.mxu0 0
  %468 = vmatprep.mubr.bf16.mxu0 0
  %469 = vmatmul.mubr.bf16.gmra.mrb[0].mxu0 %v110
  %v470 = vpop.f32.mrb[0].mxu0
  %v471 = vadd.f32 %v431, %v470
  %v472 = vpop.f32.mrb[0].mxu0
  %v473 = vpop.f32.mrb[0].mxu0
  %v474 = vpop.f32.mrb[0].mxu0
  %475 = vdwg.mxu0
  %v476 = vld [vmem:[%s2] sm:$0x1]
  %v477 = vlaneseq
  %v478 = vshrl.u32 %v477, 7
  %v479 = vsub.s32 0, %v478
  %v480 = vrot.slane %v476, %v479
  %v481 = vmul.f32 %v471, %v480
  %v482 = vld [vmem:[%s2 + $0x1] sm:$0x1]
  %v483 = vlaneseq
  %v484 = vshrl.u32 %v483, 7
  %v485 = vsub.s32 0, %v484
  %v486 = vrot.slane %v482, %v485
  %v487 = vadd.f32 %v481, %v486
  %v488 = vmax.f32 %v487, 0.0
  %489 = vst [vmem:[%s3] sm:$0xff] %v488
  // Predicated region
  $region14: #{alexnet_p1_forward.9} parent=0 // pred_check
    _
  $region15: #{alexnet_p1_forward.9} parent=0 // pred_check_branch
    %491 = sbr.rel (0) target = $region17
  $region16: #{alexnet_p1_forward.9} parent=0 // pred_region
    _
  $region17: #{alexnet_p1_forward.9} parent=0 // pred_fallthru
    _
  // Predicated region
  $region18: #{alexnet_p1_forward.9} parent=0 // pred_check
    _
  $region19: #{alexnet_p1_forward.9} parent=0 // pred_check_branch
    %493 = sbr.rel (0) target = $region21
  $region20: #{alexnet_p1_forward.9} parent=0 // pred_region
    _
  $region21: #{alexnet_p1_forward.9} parent=0 // pred_fallthru
    _

</llo_original>
